<compile_context>
chip_gen: v6e
topology: v6e:2x2x1
jax: 0.10.0
libtpu: 0.0.40
codegen_flags: <defaults>
</compile_context>

<pallas_src>
import jax
import jax.numpy as jnp
from jax.experimental import pallas as pl
from jax.experimental.pallas import tpu as pltpu

VALUE_RENORMAL = 10.0

# Model dims (from the PyTorch __init__)
IN_DIM = 52 * 4 + (54 * 3 + 20 * 4) + 16 * 4   # = 514
IN_DIM_PAD = 640                                # pad 514 -> 640 (5 * 128)
H0 = 1024
H1 = 256
P_DIM = 52
V_DIM = 1
HEAD_PAD = 128                                  # fused (policy | value) head, lane-dense

VMEM_LIMIT = 48 << 20                           # < 64 MiB physical VMEM on v7x


def _pick_batch_tile():
    """128 on v5e/older (4x128^2 MXU), 256 on v6e/v7x (2x256^2 MXU)."""
    try:
        kind = jax.devices()[0].device_kind.lower()
    except Exception:
        return 128
    if "v6" in kind or "v7" in kind:
        return 256
    return 128


TB = _pick_batch_tile()


def _pv_net_kernel(x_ref,
                   w0, b0, w1, b1, w2, b2,
                   w3, b3, w4, b4, w5, b5,
                   w6, b6, w7, b7, w8, b8,
                   wh, bh,
                   out_ref):
    def lin(h, w_r, b_r):
        # bf16 x bf16 -> f32 accumulation on the MXU; bias add in f32.
        return jnp.dot(h.astype(jnp.bfloat16), w_r[...],
                       preferred_element_type=jnp.float32) + b_r[...]

    def relu(a):
        return jnp.maximum(a, 0.0)

    x = x_ref[...]                                        # (TB, 640) f32, zero-padded lanes
    h = relu(lin(x, w0, b0))                              # (TB, 1024)
    h = relu(lin(h, w1, b1))                              # (TB, 1024)
    h = relu(lin(h, w2, b2))                              # (TB, 256)

    h = relu(lin(relu(lin(h, w3, b3)), w4, b4)) + h       # residual block 1
    h = relu(lin(relu(lin(h, w5, b5)), w6, b6)) + h       # residual block 2
    h = relu(lin(relu(lin(h, w7, b7)), w8, b8)) + h       # residual block 3

    out_ref[...] = lin(h, wh, bh)                         # (TB, 128): [policy(52) | value(1) | zeros]


_PARAM_ORDER = ["w0", "b0", "w1", "b1", "w2", "b2",
                "w3", "b3", "w4", "b4", "w5", "b5",
                "w6", "b6", "w7", "b7", "w8", "b8",
                "wh", "bh"]


def prepare_params(params):
    """One-time (outside jit) packing: pad w0, fuse p/v heads, cast weights to bf16."""
    prep = {}
    w0 = jnp.zeros((IN_DIM_PAD, H0), jnp.float32).at[:IN_DIM, :].set(params["w0"])
    prep["w0"] = w0.astype(jnp.bfloat16)
    prep["b0"] = params["b0"].astype(jnp.float32)
    for n in range(1, 9):
        prep[f"w{n}"] = params[f"w{n}"].astype(jnp.bfloat16)
        prep[f"b{n}"] = params[f"b{n}"].astype(jnp.float32)
    wh = jnp.zeros((H1, HEAD_PAD), jnp.float32)
    wh = wh.at[:, :P_DIM].set(params["wp"])
    wh = wh.at[:, P_DIM:P_DIM + V_DIM].set(params["wv"])
    bh = jnp.zeros((1, HEAD_PAD), jnp.float32)
    bh = bh.at[:, :P_DIM].set(params["bp"])
    bh = bh.at[:, P_DIM:P_DIM + V_DIM].set(params["bv"])
    prep["wh"] = wh.astype(jnp.bfloat16)
    prep["bh"] = bh
    return prep


@jax.jit
def pv_net_forward(x, prep):
    """x: (B, 514) float32.  prep: output of prepare_params()."""
    B = x.shape[0]
    B_pad = ((B + TB - 1) // TB) * TB

    # Per-call input padding (batch -> multiple of TB, features 514 -> 640).
    x_pad = jnp.zeros((B_pad, IN_DIM_PAD), jnp.float32).at[:B, :IN_DIM].set(x)

    flat_params = [prep[name] for name in _PARAM_ORDER]

    # Weights / biases: whole array, same block every grid step (DMA'd once).
    weight_specs = [pl.BlockSpec(p.shape, lambda i: (0, 0)) for p in flat_params]
    in_specs = [pl.BlockSpec((TB, IN_DIM_PAD), lambda i: (i, 0))] + weight_specs
    out_spec = pl.BlockSpec((TB, HEAD_PAD), lambda i: (i, 0))

    out = pl.pallas_call(
        _pv_net_kernel,
        out_shape=jax.ShapeDtypeStruct((B_pad, HEAD_PAD), jnp.float32),
        grid_spec=pltpu.PrefetchScalarGridSpec(
            num_scalar_prefetch=0,
            grid=(B_pad // TB,),
            in_specs=in_specs,
            out_specs=out_spec,
        ),
        compiler_params=pltpu.CompilerParams(
            dimension_semantics=("parallel",),   # batch tiles shard across TCs (v7x megacore)
            vmem_limit_bytes=VMEM_LIMIT,
        ),
    )(x_pad, *flat_params)

    p = out[:B, :P_DIM]
    v = out[:B, P_DIM:P_DIM + V_DIM] * VALUE_RENORMAL
    return p, v


def init_params(seed=42):
    """Deterministic synthetic parameters (PyTorch Linear shapes, pre-transposed to (in, out))."""
    key = jax.random.PRNGKey(seed)
    dims = {
        "0": (IN_DIM, H0), "1": (H0, H0), "2": (H0, H1),
        "3": (H1, H1), "4": (H1, H1), "5": (H1, H1),
        "6": (H1, H1), "7": (H1, H1), "8": (H1, H1),
        "p": (H1, P_DIM), "v": (H1, V_DIM),
    }
    params = {}
    for name, (din, dout) in dims.items():
        key, kw, kb = jax.random.split(key, 3)
        scale = 1.0 / jnp.sqrt(jnp.float32(din))
        params[f"w{name}"] = jax.random.normal(kw, (din, dout), jnp.float32) * scale
        params[f"b{name}"] = jax.random.normal(kb, (1, dout), jnp.float32) * 0.01
    return params


def reference_forward(x, params):
    """Pure-JAX reference mirroring the PyTorch forward with the same bf16 matmul policy."""
    relu = lambda a: jnp.maximum(a, 0.0)

    def lin(h, n):
        return jnp.dot(h.astype(jnp.bfloat16),
                       params[f"w{n}"].astype(jnp.bfloat16),
                       preferred_element_type=jnp.float32) + params[f"b{n}"]

    h = relu(lin(x, "0"))
    h = relu(lin(h, "1"))
    h = relu(lin(h, "2"))
    h = relu(lin(relu(lin(h, "3")), "4")) + h
    h = relu(lin(relu(lin(h, "5")), "6")) + h
    h = relu(lin(relu(lin(h, "7")), "8")) + h
    p = lin(h, "p")
    v = lin(h, "v") * VALUE_RENORMAL
    return p, v


if __name__ == "__main__":
    B = 8
    key = jax.random.PRNGKey(0)
    x = jax.random.normal(key, (B, IN_DIM), jnp.float32)

    raw_params = init_params(seed=42)
    prep = prepare_params(raw_params)        # one-time packing, outside the jitted path

    p, v = pv_net_forward(x, prep)
    p, v = jax.block_until_ready((p, v))

    p_ref, v_ref = reference_forward(x, raw_params)
    assert p.shape == (B, P_DIM) and v.shape == (B, V_DIM)
    assert jnp.allclose(p, p_ref, atol=2e-2, rtol=2e-2)
    assert jnp.allclose(v, v_ref, atol=2e-2, rtol=2e-2)

    print("KERNEL_OK")
</pallas_src>

<mosaic_0001>
module attributes {stable_mosaic.version = 11 : i64} {
  func.func @_pv_net_kernel(%arg0: i32, %arg1: memref<128x640xf32, #tpu.memory_space<vmem>>, %arg2: memref<640x1024xbf16, #tpu.memory_space<vmem>>, %arg3: memref<1x1024xf32, #tpu.memory_space<vmem>>, %arg4: memref<1024x1024xbf16, #tpu.memory_space<vmem>>, %arg5: memref<1x1024xf32, #tpu.memory_space<vmem>>, %arg6: memref<1024x256xbf16, #tpu.memory_space<vmem>>, %arg7: memref<1x256xf32, #tpu.memory_space<vmem>>, %arg8: memref<256x256xbf16, #tpu.memory_space<vmem>>, %arg9: memref<1x256xf32, #tpu.memory_space<vmem>>, %arg10: memref<256x256xbf16, #tpu.memory_space<vmem>>, %arg11: memref<1x256xf32, #tpu.memory_space<vmem>>, %arg12: memref<256x256xbf16, #tpu.memory_space<vmem>>, %arg13: memref<1x256xf32, #tpu.memory_space<vmem>>, %arg14: memref<256x256xbf16, #tpu.memory_space<vmem>>, %arg15: memref<1x256xf32, #tpu.memory_space<vmem>>, %arg16: memref<256x256xbf16, #tpu.memory_space<vmem>>, %arg17: memref<1x256xf32, #tpu.memory_space<vmem>>, %arg18: memref<256x256xbf16, #tpu.memory_space<vmem>>, %arg19: memref<1x256xf32, #tpu.memory_space<vmem>>, %arg20: memref<256x128xbf16, #tpu.memory_space<vmem>>, %arg21: memref<1x128xf32, #tpu.memory_space<vmem>>, %arg22: memref<128x128xf32, #tpu.memory_space<vmem>>) attributes {dimension_semantics = [#tpu.dimension_semantics<parallel>], iteration_bounds = array<i64: 1>, scalar_prefetch = 0 : i64, scratch_operands = 0 : i64, tpu.core_type = #tpu.core_type<tc>, window_params = [{transform_indices = @transform_0, window_bounds = array<i64: 128, 640>}, {pipeline_mode = #tpu.pipeline_mode<synchronous>, transform_indices = @transform_1, window_bounds = array<i64: 640, 1024>}, {pipeline_mode = #tpu.pipeline_mode<synchronous>, transform_indices = @transform_2, window_bounds = array<i64: 1, 1024>}, {pipeline_mode = #tpu.pipeline_mode<synchronous>, transform_indices = @transform_3, window_bounds = array<i64: 1024, 1024>}, {pipeline_mode = #tpu.pipeline_mode<synchronous>, transform_indices = @transform_4, window_bounds = array<i64: 1, 1024>}, {pipeline_mode = #tpu.pipeline_mode<synchronous>, transform_indices = @transform_5, window_bounds = array<i64: 1024, 256>}, {pipeline_mode = #tpu.pipeline_mode<synchronous>, transform_indices = @transform_6, window_bounds = array<i64: 1, 256>}, {pipeline_mode = #tpu.pipeline_mode<synchronous>, transform_indices = @transform_7, window_bounds = array<i64: 256, 256>}, {pipeline_mode = #tpu.pipeline_mode<synchronous>, transform_indices = @transform_8, window_bounds = array<i64: 1, 256>}, {pipeline_mode = #tpu.pipeline_mode<synchronous>, transform_indices = @transform_9, window_bounds = array<i64: 256, 256>}, {pipeline_mode = #tpu.pipeline_mode<synchronous>, transform_indices = @transform_10, window_bounds = array<i64: 1, 256>}, {pipeline_mode = #tpu.pipeline_mode<synchronous>, transform_indices = @transform_11, window_bounds = array<i64: 256, 256>}, {pipeline_mode = #tpu.pipeline_mode<synchronous>, transform_indices = @transform_12, window_bounds = array<i64: 1, 256>}, {pipeline_mode = #tpu.pipeline_mode<synchronous>, transform_indices = @transform_13, window_bounds = array<i64: 256, 256>}, {pipeline_mode = #tpu.pipeline_mode<synchronous>, transform_indices = @transform_14, window_bounds = array<i64: 1, 256>}, {pipeline_mode = #tpu.pipeline_mode<synchronous>, transform_indices = @transform_15, window_bounds = array<i64: 256, 256>}, {pipeline_mode = #tpu.pipeline_mode<synchronous>, transform_indices = @transform_16, window_bounds = array<i64: 1, 256>}, {pipeline_mode = #tpu.pipeline_mode<synchronous>, transform_indices = @transform_17, window_bounds = array<i64: 256, 256>}, {pipeline_mode = #tpu.pipeline_mode<synchronous>, transform_indices = @transform_18, window_bounds = array<i64: 1, 256>}, {pipeline_mode = #tpu.pipeline_mode<synchronous>, transform_indices = @transform_19, window_bounds = array<i64: 256, 128>}, {pipeline_mode = #tpu.pipeline_mode<synchronous>, transform_indices = @transform_20, window_bounds = array<i64: 1, 128>}, {transform_indices = @transform_21, window_bounds = array<i64: 128, 128>}]} {
    %c0 = arith.constant 0 : index
    %c0_0 = arith.constant 0 : index
    %0 = vector.load %arg1[%c0, %c0_0] : memref<128x640xf32, #tpu.memory_space<vmem>>, vector<128x640xf32>
    %1 = arith.truncf %0 : vector<128x640xf32> to vector<128x640xbf16>
    %c0_1 = arith.constant 0 : index
    %c0_2 = arith.constant 0 : index
    %2 = vector.load %arg2[%c0_1, %c0_2] : memref<640x1024xbf16, #tpu.memory_space<vmem>>, vector<640x1024xbf16>
    %cst = arith.constant dense<0.000000e+00> : vector<128x1024xf32>
    %3 = tpu.matmul %1, %2, %cst {dimension_numbers = #tpu.dot_dimension_numbers<[1], [0], [0], [1], [0, 0, 1, 1], [], []>} : vector<128x640xbf16>, vector<640x1024xbf16>, vector<128x1024xf32> -> vector<128x1024xf32>
    %c0_3 = arith.constant 0 : index
    %c0_4 = arith.constant 0 : index
    %4 = vector.load %arg3[%c0_3, %c0_4] : memref<1x1024xf32, #tpu.memory_space<vmem>>, vector<1x1024xf32>
    %5 = vector.broadcast %4 : vector<1x1024xf32> to vector<128x1024xf32>
    %6 = arith.addf %3, %5 : vector<128x1024xf32>
    %cst_5 = arith.constant 0.000000e+00 : f32
    %7 = vector.broadcast %cst_5 : f32 to vector<128x1024xf32>
    %8 = arith.maximumf %6, %7 : vector<128x1024xf32>
    %9 = arith.truncf %8 : vector<128x1024xf32> to vector<128x1024xbf16>
    %c0_6 = arith.constant 0 : index
    %c0_7 = arith.constant 0 : index
    %10 = vector.load %arg4[%c0_6, %c0_7] : memref<1024x1024xbf16, #tpu.memory_space<vmem>>, vector<1024x1024xbf16>
    %cst_8 = arith.constant dense<0.000000e+00> : vector<128x1024xf32>
    %11 = tpu.matmul %9, %10, %cst_8 {dimension_numbers = #tpu.dot_dimension_numbers<[1], [0], [0], [1], [0, 0, 1, 1], [], []>} : vector<128x1024xbf16>, vector<1024x1024xbf16>, vector<128x1024xf32> -> vector<128x1024xf32>
    %c0_9 = arith.constant 0 : index
    %c0_10 = arith.constant 0 : index
    %12 = vector.load %arg5[%c0_9, %c0_10] : memref<1x1024xf32, #tpu.memory_space<vmem>>, vector<1x1024xf32>
    %13 = vector.broadcast %12 : vector<1x1024xf32> to vector<128x1024xf32>
    %14 = arith.addf %11, %13 : vector<128x1024xf32>
    %cst_11 = arith.constant 0.000000e+00 : f32
    %15 = vector.broadcast %cst_11 : f32 to vector<128x1024xf32>
    %16 = arith.maximumf %14, %15 : vector<128x1024xf32>
    %17 = arith.truncf %16 : vector<128x1024xf32> to vector<128x1024xbf16>
    %c0_12 = arith.constant 0 : index
    %c0_13 = arith.constant 0 : index
    %18 = vector.load %arg6[%c0_12, %c0_13] : memref<1024x256xbf16, #tpu.memory_space<vmem>>, vector<1024x256xbf16>
    %cst_14 = arith.constant dense<0.000000e+00> : vector<128x256xf32>
    %19 = tpu.matmul %17, %18, %cst_14 {dimension_numbers = #tpu.dot_dimension_numbers<[1], [0], [0], [1], [0, 0, 1, 1], [], []>} : vector<128x1024xbf16>, vector<1024x256xbf16>, vector<128x256xf32> -> vector<128x256xf32>
    %c0_15 = arith.constant 0 : index
    %c0_16 = arith.constant 0 : index
    %20 = vector.load %arg7[%c0_15, %c0_16] : memref<1x256xf32, #tpu.memory_space<vmem>>, vector<1x256xf32>
    %21 = vector.broadcast %20 : vector<1x256xf32> to vector<128x256xf32>
    %22 = arith.addf %19, %21 : vector<128x256xf32>
    %cst_17 = arith.constant 0.000000e+00 : f32
    %23 = vector.broadcast %cst_17 : f32 to vector<128x256xf32>
    %24 = arith.maximumf %22, %23 : vector<128x256xf32>
    %25 = arith.truncf %24 : vector<128x256xf32> to vector<128x256xbf16>
    %c0_18 = arith.constant 0 : index
    %c0_19 = arith.constant 0 : index
    %26 = vector.load %arg8[%c0_18, %c0_19] : memref<256x256xbf16, #tpu.memory_space<vmem>>, vector<256x256xbf16>
    %cst_20 = arith.constant dense<0.000000e+00> : vector<128x256xf32>
    %27 = tpu.matmul %25, %26, %cst_20 {dimension_numbers = #tpu.dot_dimension_numbers<[1], [0], [0], [1], [0, 0, 1, 1], [], []>} : vector<128x256xbf16>, vector<256x256xbf16>, vector<128x256xf32> -> vector<128x256xf32>
    %c0_21 = arith.constant 0 : index
    %c0_22 = arith.constant 0 : index
    %28 = vector.load %arg9[%c0_21, %c0_22] : memref<1x256xf32, #tpu.memory_space<vmem>>, vector<1x256xf32>
    %29 = vector.broadcast %28 : vector<1x256xf32> to vector<128x256xf32>
    %30 = arith.addf %27, %29 : vector<128x256xf32>
    %cst_23 = arith.constant 0.000000e+00 : f32
    %31 = vector.broadcast %cst_23 : f32 to vector<128x256xf32>
    %32 = arith.maximumf %30, %31 : vector<128x256xf32>
    %33 = arith.truncf %32 : vector<128x256xf32> to vector<128x256xbf16>
    %c0_24 = arith.constant 0 : index
    %c0_25 = arith.constant 0 : index
    %34 = vector.load %arg10[%c0_24, %c0_25] : memref<256x256xbf16, #tpu.memory_space<vmem>>, vector<256x256xbf16>
    %cst_26 = arith.constant dense<0.000000e+00> : vector<128x256xf32>
    %35 = tpu.matmul %33, %34, %cst_26 {dimension_numbers = #tpu.dot_dimension_numbers<[1], [0], [0], [1], [0, 0, 1, 1], [], []>} : vector<128x256xbf16>, vector<256x256xbf16>, vector<128x256xf32> -> vector<128x256xf32>
    %c0_27 = arith.constant 0 : index
    %c0_28 = arith.constant 0 : index
    %36 = vector.load %arg11[%c0_27, %c0_28] : memref<1x256xf32, #tpu.memory_space<vmem>>, vector<1x256xf32>
    %37 = vector.broadcast %36 : vector<1x256xf32> to vector<128x256xf32>
    %38 = arith.addf %35, %37 : vector<128x256xf32>
    %cst_29 = arith.constant 0.000000e+00 : f32
    %39 = vector.broadcast %cst_29 : f32 to vector<128x256xf32>
    %40 = arith.maximumf %38, %39 : vector<128x256xf32>
    %41 = arith.addf %40, %24 : vector<128x256xf32>
    %42 = arith.truncf %41 : vector<128x256xf32> to vector<128x256xbf16>
    %c0_30 = arith.constant 0 : index
    %c0_31 = arith.constant 0 : index
    %43 = vector.load %arg12[%c0_30, %c0_31] : memref<256x256xbf16, #tpu.memory_space<vmem>>, vector<256x256xbf16>
    %cst_32 = arith.constant dense<0.000000e+00> : vector<128x256xf32>
    %44 = tpu.matmul %42, %43, %cst_32 {dimension_numbers = #tpu.dot_dimension_numbers<[1], [0], [0], [1], [0, 0, 1, 1], [], []>} : vector<128x256xbf16>, vector<256x256xbf16>, vector<128x256xf32> -> vector<128x256xf32>
    %c0_33 = arith.constant 0 : index
    %c0_34 = arith.constant 0 : index
    %45 = vector.load %arg13[%c0_33, %c0_34] : memref<1x256xf32, #tpu.memory_space<vmem>>, vector<1x256xf32>
    %46 = vector.broadcast %45 : vector<1x256xf32> to vector<128x256xf32>
    %47 = arith.addf %44, %46 : vector<128x256xf32>
    %cst_35 = arith.constant 0.000000e+00 : f32
    %48 = vector.broadcast %cst_35 : f32 to vector<128x256xf32>
    %49 = arith.maximumf %47, %48 : vector<128x256xf32>
    %50 = arith.truncf %49 : vector<128x256xf32> to vector<128x256xbf16>
    %c0_36 = arith.constant 0 : index
    %c0_37 = arith.constant 0 : index
    %51 = vector.load %arg14[%c0_36, %c0_37] : memref<256x256xbf16, #tpu.memory_space<vmem>>, vector<256x256xbf16>
    %cst_38 = arith.constant dense<0.000000e+00> : vector<128x256xf32>
    %52 = tpu.matmul %50, %51, %cst_38 {dimension_numbers = #tpu.dot_dimension_numbers<[1], [0], [0], [1], [0, 0, 1, 1], [], []>} : vector<128x256xbf16>, vector<256x256xbf16>, vector<128x256xf32> -> vector<128x256xf32>
    %c0_39 = arith.constant 0 : index
    %c0_40 = arith.constant 0 : index
    %53 = vector.load %arg15[%c0_39, %c0_40] : memref<1x256xf32, #tpu.memory_space<vmem>>, vector<1x256xf32>
    %54 = vector.broadcast %53 : vector<1x256xf32> to vector<128x256xf32>
    %55 = arith.addf %52, %54 : vector<128x256xf32>
    %cst_41 = arith.constant 0.000000e+00 : f32
    %56 = vector.broadcast %cst_41 : f32 to vector<128x256xf32>
    %57 = arith.maximumf %55, %56 : vector<128x256xf32>
    %58 = arith.addf %57, %41 : vector<128x256xf32>
    %59 = arith.truncf %58 : vector<128x256xf32> to vector<128x256xbf16>
    %c0_42 = arith.constant 0 : index
    %c0_43 = arith.constant 0 : index
    %60 = vector.load %arg16[%c0_42, %c0_43] : memref<256x256xbf16, #tpu.memory_space<vmem>>, vector<256x256xbf16>
    %cst_44 = arith.constant dense<0.000000e+00> : vector<128x256xf32>
    %61 = tpu.matmul %59, %60, %cst_44 {dimension_numbers = #tpu.dot_dimension_numbers<[1], [0], [0], [1], [0, 0, 1, 1], [], []>} : vector<128x256xbf16>, vector<256x256xbf16>, vector<128x256xf32> -> vector<128x256xf32>
    %c0_45 = arith.constant 0 : index
    %c0_46 = arith.constant 0 : index
    %62 = vector.load %arg17[%c0_45, %c0_46] : memref<1x256xf32, #tpu.memory_space<vmem>>, vector<1x256xf32>
    %63 = vector.broadcast %62 : vector<1x256xf32> to vector<128x256xf32>
    %64 = arith.addf %61, %63 : vector<128x256xf32>
    %cst_47 = arith.constant 0.000000e+00 : f32
    %65 = vector.broadcast %cst_47 : f32 to vector<128x256xf32>
    %66 = arith.maximumf %64, %65 : vector<128x256xf32>
    %67 = arith.truncf %66 : vector<128x256xf32> to vector<128x256xbf16>
    %c0_48 = arith.constant 0 : index
    %c0_49 = arith.constant 0 : index
    %68 = vector.load %arg18[%c0_48, %c0_49] : memref<256x256xbf16, #tpu.memory_space<vmem>>, vector<256x256xbf16>
    %cst_50 = arith.constant dense<0.000000e+00> : vector<128x256xf32>
    %69 = tpu.matmul %67, %68, %cst_50 {dimension_numbers = #tpu.dot_dimension_numbers<[1], [0], [0], [1], [0, 0, 1, 1], [], []>} : vector<128x256xbf16>, vector<256x256xbf16>, vector<128x256xf32> -> vector<128x256xf32>
    %c0_51 = arith.constant 0 : index
    %c0_52 = arith.constant 0 : index
    %70 = vector.load %arg19[%c0_51, %c0_52] : memref<1x256xf32, #tpu.memory_space<vmem>>, vector<1x256xf32>
    %71 = vector.broadcast %70 : vector<1x256xf32> to vector<128x256xf32>
    %72 = arith.addf %69, %71 : vector<128x256xf32>
    %cst_53 = arith.constant 0.000000e+00 : f32
    %73 = vector.broadcast %cst_53 : f32 to vector<128x256xf32>
    %74 = arith.maximumf %72, %73 : vector<128x256xf32>
    %75 = arith.addf %74, %58 : vector<128x256xf32>
    %76 = arith.truncf %75 : vector<128x256xf32> to vector<128x256xbf16>
    %c0_54 = arith.constant 0 : index
    %c0_55 = arith.constant 0 : index
    %77 = vector.load %arg20[%c0_54, %c0_55] : memref<256x128xbf16, #tpu.memory_space<vmem>>, vector<256x128xbf16>
    %cst_56 = arith.constant dense<0.000000e+00> : vector<128x128xf32>
    %78 = tpu.matmul %76, %77, %cst_56 {dimension_numbers = #tpu.dot_dimension_numbers<[1], [0], [0], [1], [0, 0, 1, 1], [], []>} : vector<128x256xbf16>, vector<256x128xbf16>, vector<128x128xf32> -> vector<128x128xf32>
    %c0_57 = arith.constant 0 : index
    %c0_58 = arith.constant 0 : index
    %79 = vector.load %arg21[%c0_57, %c0_58] : memref<1x128xf32, #tpu.memory_space<vmem>>, vector<1x128xf32>
    %80 = vector.broadcast %79 : vector<1x128xf32> to vector<128x128xf32>
    %81 = arith.addf %78, %80 : vector<128x128xf32>
    %c0_59 = arith.constant 0 : index
    %c0_60 = arith.constant 0 : index
    %82 = vector.load %arg22[%c0_59, %c0_60] : memref<128x128xf32, #tpu.memory_space<vmem>>, vector<128x128xf32>
    tpu.vector_store %arg22[%c0_59, %c0_60], %81 {strides = array<i32>} : memref<128x128xf32, #tpu.memory_space<vmem>>, vector<128x128xf32>,
    return
  }
  func.func @transform_0(%arg0: i32) -> (i32, i32) {
    %c0_i32 = arith.constant 0 : i32
    %c0_i32_0 = arith.constant 0 : i32
    return %arg0, %c0_i32 : i32, i32
  }
  func.func @transform_1(%arg0: i32) -> (i32, i32) {
    %c0_i32 = arith.constant 0 : i32
    %c0_i32_0 = arith.constant 0 : i32
    %c0_i32_1 = arith.constant 0 : i32
    return %c0_i32, %c0_i32_0 : i32, i32
  }
  func.func @transform_2(%arg0: i32) -> (i32, i32) {
    %c0_i32 = arith.constant 0 : i32
    %c0_i32_0 = arith.constant 0 : i32
    %c0_i32_1 = arith.constant 0 : i32
    return %c0_i32, %c0_i32_0 : i32, i32
  }
  func.func @transform_3(%arg0: i32) -> (i32, i32) {
    %c0_i32 = arith.constant 0 : i32
    %c0_i32_0 = arith.constant 0 : i32
    %c0_i32_1 = arith.constant 0 : i32
    return %c0_i32, %c0_i32_0 : i32, i32
  }
  func.func @transform_4(%arg0: i32) -> (i32, i32) {
    %c0_i32 = arith.constant 0 : i32
    %c0_i32_0 = arith.constant 0 : i32
    %c0_i32_1 = arith.constant 0 : i32
    return %c0_i32, %c0_i32_0 : i32, i32
  }
  func.func @transform_5(%arg0: i32) -> (i32, i32) {
    %c0_i32 = arith.constant 0 : i32
    %c0_i32_0 = arith.constant 0 : i32
    %c0_i32_1 = arith.constant 0 : i32
    return %c0_i32, %c0_i32_0 : i32, i32
  }
  func.func @transform_6(%arg0: i32) -> (i32, i32) {
    %c0_i32 = arith.constant 0 : i32
    %c0_i32_0 = arith.constant 0 : i32
    %c0_i32_1 = arith.constant 0 : i32
    return %c0_i32, %c0_i32_0 : i32, i32
  }
  func.func @transform_7(%arg0: i32) -> (i32, i32) {
    %c0_i32 = arith.constant 0 : i32
    %c0_i32_0 = arith.constant 0 : i32
    %c0_i32_1 = arith.constant 0 : i32
    return %c0_i32, %c0_i32_0 : i32, i32
  }
  func.func @transform_8(%arg0: i32) -> (i32, i32) {
    %c0_i32 = arith.constant 0 : i32
    %c0_i32_0 = arith.constant 0 : i32
    %c0_i32_1 = arith.constant 0 : i32
    return %c0_i32, %c0_i32_0 : i32, i32
  }
  func.func @transform_9(%arg0: i32) -> (i32, i32) {
    %c0_i32 = arith.constant 0 : i32
    %c0_i32_0 = arith.constant 0 : i32
    %c0_i32_1 = arith.constant 0 : i32
    return %c0_i32, %c0_i32_0 : i32, i32
  }
  func.func @transform_10(%arg0: i32) -> (i32, i32) {
    %c0_i32 = arith.constant 0 : i32
    %c0_i32_0 = arith.constant 0 : i32
    %c0_i32_1 = arith.constant 0 : i32
    return %c0_i32, %c0_i32_0 : i32, i32
  }
  func.func @transform_11(%arg0: i32) -> (i32, i32) {
    %c0_i32 = arith.constant 0 : i32
    %c0_i32_0 = arith.constant 0 : i32
    %c0_i32_1 = arith.constant 0 : i32
    return %c0_i32, %c0_i32_0 : i32, i32
  }
  func.func @transform_12(%arg0: i32) -> (i32, i32) {
    %c0_i32 = arith.constant 0 : i32
    %c0_i32_0 = arith.constant 0 : i32
    %c0_i32_1 = arith.constant 0 : i32
    return %c0_i32, %c0_i32_0 : i32, i32
  }
  func.func @transform_13(%arg0: i32) -> (i32, i32) {
    %c0_i32 = arith.constant 0 : i32
    %c0_i32_0 = arith.constant 0 : i32
    %c0_i32_1 = arith.constant 0 : i32
    return %c0_i32, %c0_i32_0 : i32, i32
  }
  func.func @transform_14(%arg0: i32) -> (i32, i32) {
    %c0_i32 = arith.constant 0 : i32
    %c0_i32_0 = arith.constant 0 : i32
    %c0_i32_1 = arith.constant 0 : i32
    return %c0_i32, %c0_i32_0 : i32, i32
  }
  func.func @transform_15(%arg0: i32) -> (i32, i32) {
    %c0_i32 = arith.constant 0 : i32
    %c0_i32_0 = arith.constant 0 : i32
    %c0_i32_1 = arith.constant 0 : i32
    return %c0_i32, %c0_i32_0 : i32, i32
  }
  func.func @transform_16(%arg0: i32) -> (i32, i32) {
    %c0_i32 = arith.constant 0 : i32
    %c0_i32_0 = arith.constant 0 : i32
    %c0_i32_1 = arith.constant 0 : i32
    return %c0_i32, %c0_i32_0 : i32, i32
  }
  func.func @transform_17(%arg0: i32) -> (i32, i32) {
    %c0_i32 = arith.constant 0 : i32
    %c0_i32_0 = arith.constant 0 : i32
    %c0_i32_1 = arith.constant 0 : i32
    return %c0_i32, %c0_i32_0 : i32, i32
  }
  func.func @transform_18(%arg0: i32) -> (i32, i32) {
    %c0_i32 = arith.constant 0 : i32
    %c0_i32_0 = arith.constant 0 : i32
    %c0_i32_1 = arith.constant 0 : i32
    return %c0_i32, %c0_i32_0 : i32, i32
  }
  func.func @transform_19(%arg0: i32) -> (i32, i32) {
    %c0_i32 = arith.constant 0 : i32
    %c0_i32_0 = arith.constant 0 : i32
    %c0_i32_1 = arith.constant 0 : i32
    return %c0_i32, %c0_i32_0 : i32, i32
  }
  func.func @transform_20(%arg0: i32) -> (i32, i32) {
    %c0_i32 = arith.constant 0 : i32
    %c0_i32_0 = arith.constant 0 : i32
    %c0_i32_1 = arith.constant 0 : i32
    return %c0_i32, %c0_i32_0 : i32, i32
  }
  func.func @transform_21(%arg0: i32) -> (i32, i32) {
    %c0_i32 = arith.constant 0 : i32
    %c0_i32_0 = arith.constant 0 : i32
    return %arg0, %c0_i32 : i32, i32
  }
}

</mosaic_0001>

<llo_original>
// kernel: pv_net_forward.1
$region0: #{pv_net_forward.1}
  #allocation0 [shape = 'u32[]', space=smem, size = 0x4, offset = 0x4, fixed_abs, tag = 'smem constant byte address 0x4 - core index']
  #allocation1 [shape = 'u32[144,128]{1,0:T(1,128)}', space=vmem, size = 0x12000, scoped, tag = 'internal scratch']
  %s0 = inlined_call_operand.vmem [shape: f32[128,640], index: 0, kind: input, shape index: {}]
  %s1 = inlined_call_operand.hbm [shape: bf16[640,1024], index: 1, kind: input, shape index: {}]
  %s2 = inlined_call_operand.hbm [shape: f32[1,1024], index: 2, kind: input, shape index: {}]
  %s3 = inlined_call_operand.hbm [shape: bf16[1024,1024], index: 3, kind: input, shape index: {}]
  %s4 = inlined_call_operand.hbm [shape: f32[1,1024], index: 4, kind: input, shape index: {}]
  %s5 = inlined_call_operand.hbm [shape: bf16[1024,256], index: 5, kind: input, shape index: {}]
  %s6 = inlined_call_operand.hbm [shape: f32[1,256], index: 6, kind: input, shape index: {}]
  %s7 = inlined_call_operand.hbm [shape: bf16[256,256], index: 7, kind: input, shape index: {}]
  %s8 = inlined_call_operand.hbm [shape: f32[1,256], index: 8, kind: input, shape index: {}]
  %s9 = inlined_call_operand.hbm [shape: bf16[256,256], index: 9, kind: input, shape index: {}]
  %s10 = inlined_call_operand.hbm [shape: f32[1,256], index: 10, kind: input, shape index: {}]
  %s11 = inlined_call_operand.hbm [shape: bf16[256,256], index: 11, kind: input, shape index: {}]
  %s12 = inlined_call_operand.hbm [shape: f32[1,256], index: 12, kind: input, shape index: {}]
  %s13 = inlined_call_operand.hbm [shape: bf16[256,256], index: 13, kind: input, shape index: {}]
  %s14 = inlined_call_operand.hbm [shape: f32[1,256], index: 14, kind: input, shape index: {}]
  %s15 = inlined_call_operand.hbm [shape: bf16[256,256], index: 15, kind: input, shape index: {}]
  %s16 = inlined_call_operand.hbm [shape: f32[1,256], index: 16, kind: input, shape index: {}]
  %s17 = inlined_call_operand.hbm [shape: bf16[256,256], index: 17, kind: input, shape index: {}]
  %s18 = inlined_call_operand.hbm [shape: f32[1,256], index: 18, kind: input, shape index: {}]
  %s19 = inlined_call_operand.hbm [shape: bf16[256,128], index: 19, kind: input, shape index: {}]
  %s20 = inlined_call_operand.hbm [shape: f32[1,128], index: 20, kind: input, shape index: {}]
  %s21 = inlined_call_operand.vmem [shape: f32[128,128], index: 21, kind: output, shape index: {}]
  %s22 = sld [smem:[#allocation0]]
  $region174: #{pv_net_forward.1} parent=0
    _
  %s24 = ssub.s32 1, %s22
  %s25 = scalar_select 0, %s24, %s22
  $region1: #{pv_net_forward.1} parent=0
    #allocation2 [shape = 'u8[1310720]{0}', space=vmem, size = 0x140000, scoped, tag = 'input window, operand 1, single buffered']
    #allocation3 [shape = 's32[1]{0}', space=sflag, size = 0x4, scoped, tag = 'scoped memory for pv_net_forward.1']
    #allocation4 [shape = 'u8[4096]{0}', space=vmem, size = 0x1000, scoped, tag = 'input window, operand 2, single buffered']
    #allocation5 [shape = 's32[1]{0}', space=sflag, size = 0x4, scoped, tag = 'scoped memory for pv_net_forward.1']
    #allocation6 [shape = 'u8[2097152]{0}', space=vmem, size = 0x200000, scoped, tag = 'input window, operand 3, single buffered']
    #allocation7 [shape = 'u8[4096]{0}', space=vmem, size = 0x1000, scoped, tag = 'input window, operand 4, single buffered']
    #allocation8 [shape = 's32[1]{0}', space=sflag, size = 0x4, scoped, tag = 'scoped memory for pv_net_forward.1']
    #allocation9 [shape = 'u8[524288]{0}', space=vmem, size = 0x80000, scoped, tag = 'input window, operand 5, single buffered']
    #allocation10 [shape = 'u8[1024]{0}', space=vmem, size = 0x400, scoped, tag = 'input window, operand 6, single buffered']
    #allocation11 [shape = 's32[1]{0}', space=sflag, size = 0x4, scoped, tag = 'scoped memory for pv_net_forward.1']
    #allocation12 [shape = 'u8[131072]{0}', space=vmem, size = 0x20000, scoped, tag = 'input window, operand 7, single buffered']
    #allocation13 [shape = 'u8[1024]{0}', space=vmem, size = 0x400, scoped, tag = 'input window, operand 8, single buffered']
    #allocation14 [shape = 's32[1]{0}', space=sflag, size = 0x4, scoped, tag = 'scoped memory for pv_net_forward.1']
    #allocation15 [shape = 'u8[131072]{0}', space=vmem, size = 0x20000, scoped, tag = 'input window, operand 9, single buffered']
    #allocation16 [shape = 'u8[1024]{0}', space=vmem, size = 0x400, scoped, tag = 'input window, operand 10, single buffered']
    #allocation17 [shape = 's32[1]{0}', space=sflag, size = 0x4, scoped, tag = 'scoped memory for pv_net_forward.1']
    #allocation18 [shape = 'u8[131072]{0}', space=vmem, size = 0x20000, scoped, tag = 'input window, operand 11, single buffered']
    #allocation19 [shape = 'u8[1024]{0}', space=vmem, size = 0x400, scoped, tag = 'input window, operand 12, single buffered']
    #allocation20 [shape = 's32[1]{0}', space=sflag, size = 0x4, scoped, tag = 'scoped memory for pv_net_forward.1']
    #allocation21 [shape = 'u8[131072]{0}', space=vmem, size = 0x20000, scoped, tag = 'input window, operand 13, single buffered']
    #allocation22 [shape = 'u8[1024]{0}', space=vmem, size = 0x400, scoped, tag = 'input window, operand 14, single buffered']
    #allocation23 [shape = 's32[1]{0}', space=sflag, size = 0x4, scoped, tag = 'scoped memory for pv_net_forward.1']
    #allocation24 [shape = 'u8[131072]{0}', space=vmem, size = 0x20000, scoped, tag = 'input window, operand 15, single buffered']
    #allocation25 [shape = 'u8[1024]{0}', space=vmem, size = 0x400, scoped, tag = 'input window, operand 16, single buffered']
    #allocation26 [shape = 's32[1]{0}', space=sflag, size = 0x4, scoped, tag = 'scoped memory for pv_net_forward.1']
    #allocation27 [shape = 'u8[131072]{0}', space=vmem, size = 0x20000, scoped, tag = 'input window, operand 17, single buffered']
    #allocation28 [shape = 'u8[1024]{0}', space=vmem, size = 0x400, scoped, tag = 'input window, operand 18, single buffered']
    #allocation29 [shape = 's32[1]{0}', space=sflag, size = 0x4, scoped, tag = 'scoped memory for pv_net_forward.1']
    #allocation30 [shape = 'u8[65536]{0}', space=vmem, size = 0x10000, scoped, tag = 'input window, operand 19, single buffered']
    #allocation31 [shape = 'u8[512]{0}', space=vmem, size = 0x400, scoped, tag = 'input window, operand 20, single buffered']
    #allocation32 [shape = 's32[1]{0}', space=sflag, size = 0x4, scoped, tag = 'scoped memory for pv_net_forward.1']
    %26 = vsyncpa [#allocation3], 0
    %27 = vsyncpa [#allocation5], 0
    %28 = vsyncpa [#allocation8], 0
    %29 = vsyncpa [#allocation11], 0
    %30 = vsyncpa [#allocation14], 0
    %31 = vsyncpa [#allocation17], 0
    %32 = vsyncpa [#allocation20], 0
    %33 = vsyncpa [#allocation23], 0
    %34 = vsyncpa [#allocation26], 0
    %35 = vsyncpa [#allocation29], 0
    %36 = vsyncpa [#allocation32], 0
    // Predicated region
    $region2: #{pv_net_forward.1} parent=1 // pred_check
      _
    $region3: #{pv_net_forward.1} parent=1 // pred_check_branch
      %38 = sbr.rel (0) target = $region5
    $region4: #{pv_net_forward.1} parent=1 // pred_region
      _
    $region5: #{pv_net_forward.1} parent=1 // pred_fallthru
      _
    // Predicated region
    $region6: #{pv_net_forward.1} parent=1 // pred_check
      _
    $region7: #{pv_net_forward.1} parent=1 // pred_check_branch
      %40 = sbr.rel (0) target = $region9
    $region8: #{pv_net_forward.1} parent=1 // pred_region
      %s42 = ssub.s32 40960, 40960
      %43 = vsyncadd [#allocation3], %s42
      %s44 = sshll.u32 [#allocation2], 4
      %s45 = int_to_ptr.vmem [resolvable:$true] %s44
      %50 = dma.hbm_to_vmem [thread:$0]  %s1, 40960, %s45, [#allocation3], 512, 512, 32
    $region9: #{pv_net_forward.1} parent=1 // pred_fallthru
      _
    // Predicated region
    $region10: #{pv_net_forward.1} parent=1 // pred_check
      _
    $region11: #{pv_net_forward.1} parent=1 // pred_check_branch
      %52 = sbr.rel (0) target = $region13
    $region12: #{pv_net_forward.1} parent=1 // pred_region
      %s54 = ssub.s32 128, 128
      %55 = vsyncadd [#allocation5], %s54
      %s57 = sshll.u32 [#allocation4], 4
      %s58 = int_to_ptr.vmem [resolvable:$true] %s57
      %60 = dma.hbm_to_vmem [thread:$0]  %s2, 128, %s58, [#allocation5]
    $region13: #{pv_net_forward.1} parent=1 // pred_fallthru
      _
    // Predicated region
    $region14: #{pv_net_forward.1} parent=1 // pred_check
      _
    $region15: #{pv_net_forward.1} parent=1 // pred_check_branch
      %62 = sbr.rel (0) target = $region17
    $region16: #{pv_net_forward.1} parent=1 // pred_region
      %s64 = ssub.s32 65536, 65536
      %65 = vsyncadd [#allocation5], %s64
      %s66 = sshll.u32 [#allocation6], 4
      %s67 = int_to_ptr.vmem [resolvable:$true] %s66
      %72 = dma.hbm_to_vmem [thread:$0]  %s3, 65536, %s67, [#allocation5], 512, 512, 32
    $region17: #{pv_net_forward.1} parent=1 // pred_fallthru
      _
    // Predicated region
    $region18: #{pv_net_forward.1} parent=1 // pred_check
      _
    $region19: #{pv_net_forward.1} parent=1 // pred_check_branch
      %74 = sbr.rel (0) target = $region21
    $region20: #{pv_net_forward.1} parent=1 // pred_region
      %s76 = ssub.s32 128, 128
      %77 = vsyncadd [#allocation8], %s76
      %s79 = sshll.u32 [#allocation7], 4
      %s80 = int_to_ptr.vmem [resolvable:$true] %s79
      %82 = dma.hbm_to_vmem [thread:$0]  %s4, 128, %s80, [#allocation8]
    $region21: #{pv_net_forward.1} parent=1 // pred_fallthru
      _
    // Predicated region
    $region22: #{pv_net_forward.1} parent=1 // pred_check
      _
    $region23: #{pv_net_forward.1} parent=1 // pred_check_branch
      %84 = sbr.rel (0) target = $region25
    $region24: #{pv_net_forward.1} parent=1 // pred_region
      %s86 = ssub.s32 16384, 16384
      %87 = vsyncadd [#allocation8], %s86
      %s88 = sshll.u32 [#allocation9], 4
      %s89 = int_to_ptr.vmem [resolvable:$true] %s88
      %94 = dma.hbm_to_vmem [thread:$0]  %s5, 16384, %s89, [#allocation8], 128, 128, 8
    $region25: #{pv_net_forward.1} parent=1 // pred_fallthru
      _
    // Predicated region
    $region26: #{pv_net_forward.1} parent=1 // pred_check
      _
    $region27: #{pv_net_forward.1} parent=1 // pred_check_branch
      %96 = sbr.rel (0) target = $region29
    $region28: #{pv_net_forward.1} parent=1 // pred_region
      %s98 = ssub.s32 32, 32
      %99 = vsyncadd [#allocation11], %s98
      %s101 = sshll.u32 [#allocation10], 4
      %s102 = int_to_ptr.vmem [resolvable:$true] %s101
      %104 = dma.hbm_to_vmem [thread:$0]  %s6, 32, %s102, [#allocation11]
    $region29: #{pv_net_forward.1} parent=1 // pred_fallthru
      _
    // Predicated region
    $region30: #{pv_net_forward.1} parent=1 // pred_check
      _
    $region31: #{pv_net_forward.1} parent=1 // pred_check_branch
      %106 = sbr.rel (0) target = $region33
    $region32: #{pv_net_forward.1} parent=1 // pred_region
      %s108 = ssub.s32 4096, 4096
      %109 = vsyncadd [#allocation11], %s108
      %s110 = sshll.u32 [#allocation12], 4
      %s111 = int_to_ptr.vmem [resolvable:$true] %s110
      %116 = dma.hbm_to_vmem [thread:$0]  %s7, 4096, %s111, [#allocation11], 128, 128, 8
    $region33: #{pv_net_forward.1} parent=1 // pred_fallthru
      _
    // Predicated region
    $region34: #{pv_net_forward.1} parent=1 // pred_check
      _
    $region35: #{pv_net_forward.1} parent=1 // pred_check_branch
      %118 = sbr.rel (0) target = $region37
    $region36: #{pv_net_forward.1} parent=1 // pred_region
      %s120 = ssub.s32 32, 32
      %121 = vsyncadd [#allocation14], %s120
      %s123 = sshll.u32 [#allocation13], 4
      %s124 = int_to_ptr.vmem [resolvable:$true] %s123
      %126 = dma.hbm_to_vmem [thread:$0]  %s8, 32, %s124, [#allocation14]
    $region37: #{pv_net_forward.1} parent=1 // pred_fallthru
      _
    // Predicated region
    $region38: #{pv_net_forward.1} parent=1 // pred_check
      _
    $region39: #{pv_net_forward.1} parent=1 // pred_check_branch
      %128 = sbr.rel (0) target = $region41
    $region40: #{pv_net_forward.1} parent=1 // pred_region
      %s130 = ssub.s32 4096, 4096
      %131 = vsyncadd [#allocation14], %s130
      %s132 = sshll.u32 [#allocation15], 4
      %s133 = int_to_ptr.vmem [resolvable:$true] %s132
      %138 = dma.hbm_to_vmem [thread:$0]  %s9, 4096, %s133, [#allocation14], 128, 128, 8
    $region41: #{pv_net_forward.1} parent=1 // pred_fallthru
      _
    // Predicated region
    $region42: #{pv_net_forward.1} parent=1 // pred_check
      _
    $region43: #{pv_net_forward.1} parent=1 // pred_check_branch
      %140 = sbr.rel (0) target = $region45
    $region44: #{pv_net_forward.1} parent=1 // pred_region
      %s142 = ssub.s32 32, 32
      %143 = vsyncadd [#allocation17], %s142
      %s145 = sshll.u32 [#allocation16], 4
      %s146 = int_to_ptr.vmem [resolvable:$true] %s145
      %148 = dma.hbm_to_vmem [thread:$0]  %s10, 32, %s146, [#allocation17]
    $region45: #{pv_net_forward.1} parent=1 // pred_fallthru
      _
    // Predicated region
    $region46: #{pv_net_forward.1} parent=1 // pred_check
      _
    $region47: #{pv_net_forward.1} parent=1 // pred_check_branch
      %150 = sbr.rel (0) target = $region49
    $region48: #{pv_net_forward.1} parent=1 // pred_region
      %s152 = ssub.s32 4096, 4096
      %153 = vsyncadd [#allocation17], %s152
      %s154 = sshll.u32 [#allocation18], 4
      %s155 = int_to_ptr.vmem [resolvable:$true] %s154
      %160 = dma.hbm_to_vmem [thread:$0]  %s11, 4096, %s155, [#allocation17], 128, 128, 8
    $region49: #{pv_net_forward.1} parent=1 // pred_fallthru
      _
    // Predicated region
    $region50: #{pv_net_forward.1} parent=1 // pred_check
      _
    $region51: #{pv_net_forward.1} parent=1 // pred_check_branch
      %162 = sbr.rel (0) target = $region53
    $region52: #{pv_net_forward.1} parent=1 // pred_region
      %s164 = ssub.s32 32, 32
      %165 = vsyncadd [#allocation20], %s164
      %s167 = sshll.u32 [#allocation19], 4
      %s168 = int_to_ptr.vmem [resolvable:$true] %s167
      %170 = dma.hbm_to_vmem [thread:$0]  %s12, 32, %s168, [#allocation20]
    $region53: #{pv_net_forward.1} parent=1 // pred_fallthru
      _
    // Predicated region
    $region54: #{pv_net_forward.1} parent=1 // pred_check
      _
    $region55: #{pv_net_forward.1} parent=1 // pred_check_branch
      %172 = sbr.rel (0) target = $region57
    $region56: #{pv_net_forward.1} parent=1 // pred_region
      %s174 = ssub.s32 4096, 4096
      %175 = vsyncadd [#allocation20], %s174
      %s176 = sshll.u32 [#allocation21], 4
      %s177 = int_to_ptr.vmem [resolvable:$true] %s176
      %182 = dma.hbm_to_vmem [thread:$0]  %s13, 4096, %s177, [#allocation20], 128, 128, 8
    $region57: #{pv_net_forward.1} parent=1 // pred_fallthru
      _
    // Predicated region
    $region58: #{pv_net_forward.1} parent=1 // pred_check
      _
    $region59: #{pv_net_forward.1} parent=1 // pred_check_branch
      %184 = sbr.rel (0) target = $region61
    $region60: #{pv_net_forward.1} parent=1 // pred_region
      %s186 = ssub.s32 32, 32
      %187 = vsyncadd [#allocation23], %s186
      %s189 = sshll.u32 [#allocation22], 4
      %s190 = int_to_ptr.vmem [resolvable:$true] %s189
      %192 = dma.hbm_to_vmem [thread:$0]  %s14, 32, %s190, [#allocation23]
    $region61: #{pv_net_forward.1} parent=1 // pred_fallthru
      _
    // Predicated region
    $region62: #{pv_net_forward.1} parent=1 // pred_check
      _
    $region63: #{pv_net_forward.1} parent=1 // pred_check_branch
      %194 = sbr.rel (0) target = $region65
    $region64: #{pv_net_forward.1} parent=1 // pred_region
      %s196 = ssub.s32 4096, 4096
      %197 = vsyncadd [#allocation23], %s196
      %s198 = sshll.u32 [#allocation24], 4
      %s199 = int_to_ptr.vmem [resolvable:$true] %s198
      %204 = dma.hbm_to_vmem [thread:$0]  %s15, 4096, %s199, [#allocation23], 128, 128, 8
    $region65: #{pv_net_forward.1} parent=1 // pred_fallthru
      _
    // Predicated region
    $region66: #{pv_net_forward.1} parent=1 // pred_check
      _
    $region67: #{pv_net_forward.1} parent=1 // pred_check_branch
      %206 = sbr.rel (0) target = $region69
    $region68: #{pv_net_forward.1} parent=1 // pred_region
      %s208 = ssub.s32 32, 32
      %209 = vsyncadd [#allocation26], %s208
      %s211 = sshll.u32 [#allocation25], 4
      %s212 = int_to_ptr.vmem [resolvable:$true] %s211
      %214 = dma.hbm_to_vmem [thread:$0]  %s16, 32, %s212, [#allocation26]
    $region69: #{pv_net_forward.1} parent=1 // pred_fallthru
      _
    // Predicated region
    $region70: #{pv_net_forward.1} parent=1 // pred_check
      _
    $region71: #{pv_net_forward.1} parent=1 // pred_check_branch
      %216 = sbr.rel (0) target = $region73
    $region72: #{pv_net_forward.1} parent=1 // pred_region
      %s218 = ssub.s32 4096, 4096
      %219 = vsyncadd [#allocation26], %s218
      %s220 = sshll.u32 [#allocation27], 4
      %s221 = int_to_ptr.vmem [resolvable:$true] %s220
      %226 = dma.hbm_to_vmem [thread:$0]  %s17, 4096, %s221, [#allocation26], 128, 128, 8
    $region73: #{pv_net_forward.1} parent=1 // pred_fallthru
      _
    // Predicated region
    $region74: #{pv_net_forward.1} parent=1 // pred_check
      _
    $region75: #{pv_net_forward.1} parent=1 // pred_check_branch
      %228 = sbr.rel (0) target = $region77
    $region76: #{pv_net_forward.1} parent=1 // pred_region
      %s230 = ssub.s32 32, 32
      %231 = vsyncadd [#allocation29], %s230
      %s233 = sshll.u32 [#allocation28], 4
      %s234 = int_to_ptr.vmem [resolvable:$true] %s233
      %236 = dma.hbm_to_vmem [thread:$0]  %s18, 32, %s234, [#allocation29]
    $region77: #{pv_net_forward.1} parent=1 // pred_fallthru
      _
    // Predicated region
    $region78: #{pv_net_forward.1} parent=1 // pred_check
      _
    $region79: #{pv_net_forward.1} parent=1 // pred_check_branch
      %238 = sbr.rel (0) target = $region81
    $region80: #{pv_net_forward.1} parent=1 // pred_region
      %s240 = ssub.s32 2048, 2048
      %241 = vsyncadd [#allocation29], %s240
      %s242 = sshll.u32 [#allocation30], 4
      %s243 = int_to_ptr.vmem [resolvable:$true] %s242
      %248 = dma.hbm_to_vmem [thread:$0]  %s19, 2048, %s243, [#allocation29], 64, 64, 4
    $region81: #{pv_net_forward.1} parent=1 // pred_fallthru
      _
    // Predicated region
    $region82: #{pv_net_forward.1} parent=1 // pred_check
      _
    $region83: #{pv_net_forward.1} parent=1 // pred_check_branch
      %250 = sbr.rel (0) target = $region85
    $region84: #{pv_net_forward.1} parent=1 // pred_region
      %s252 = ssub.s32 16, 16
      %253 = vsyncadd [#allocation32], %s252
      %s255 = sshll.u32 [#allocation31], 4
      %s256 = int_to_ptr.vmem [resolvable:$true] %s255
      %258 = dma.hbm_to_vmem [thread:$0]  %s20, 16, %s256, [#allocation32]
    $region85: #{pv_net_forward.1} parent=1 // pred_fallthru
      _
    // Predicated region
    $region86: #{pv_net_forward.1} parent=1 // pred_check
      _
    $region87: #{pv_net_forward.1} parent=1 // pred_check_branch
      %260 = sbr.rel (0) target = $region89
    $region88: #{pv_net_forward.1} parent=1 // pred_region
      %261 = dma.done [#allocation3], 40960
    $region89: #{pv_net_forward.1} parent=1 // pred_fallthru
      _
    // Predicated region
    $region90: #{pv_net_forward.1} parent=1 // pred_check
      _
    $region91: #{pv_net_forward.1} parent=1 // pred_check_branch
      %263 = sbr.rel (0) target = $region93
    $region92: #{pv_net_forward.1} parent=1 // pred_region
      %264 = dma.done [#allocation5], 128
    $region93: #{pv_net_forward.1} parent=1 // pred_fallthru
      _
    // Predicated region
    $region94: #{pv_net_forward.1} parent=1 // pred_check
      _
    $region95: #{pv_net_forward.1} parent=1 // pred_check_branch
      %266 = sbr.rel (0) target = $region97
    $region96: #{pv_net_forward.1} parent=1 // pred_region
      %267 = dma.done [#allocation5], 65536
    $region97: #{pv_net_forward.1} parent=1 // pred_fallthru
      _
    // Predicated region
    $region98: #{pv_net_forward.1} parent=1 // pred_check
      _
    $region99: #{pv_net_forward.1} parent=1 // pred_check_branch
      %269 = sbr.rel (0) target = $region101
    $region100: #{pv_net_forward.1} parent=1 // pred_region
      %270 = dma.done [#allocation8], 128
    $region101: #{pv_net_forward.1} parent=1 // pred_fallthru
      _
    // Predicated region
    $region102: #{pv_net_forward.1} parent=1 // pred_check
      _
    $region103: #{pv_net_forward.1} parent=1 // pred_check_branch
      %272 = sbr.rel (0) target = $region105
    $region104: #{pv_net_forward.1} parent=1 // pred_region
      %273 = dma.done [#allocation8], 16384
    $region105: #{pv_net_forward.1} parent=1 // pred_fallthru
      _
    // Predicated region
    $region106: #{pv_net_forward.1} parent=1 // pred_check
      _
    $region107: #{pv_net_forward.1} parent=1 // pred_check_branch
      %275 = sbr.rel (0) target = $region109
    $region108: #{pv_net_forward.1} parent=1 // pred_region
      %276 = dma.done [#allocation11], 32
    $region109: #{pv_net_forward.1} parent=1 // pred_fallthru
      _
    // Predicated region
    $region110: #{pv_net_forward.1} parent=1 // pred_check
      _
    $region111: #{pv_net_forward.1} parent=1 // pred_check_branch
      %278 = sbr.rel (0) target = $region113
    $region112: #{pv_net_forward.1} parent=1 // pred_region
      %279 = dma.done [#allocation11], 4096
    $region113: #{pv_net_forward.1} parent=1 // pred_fallthru
      _
    // Predicated region
    $region114: #{pv_net_forward.1} parent=1 // pred_check
      _
    $region115: #{pv_net_forward.1} parent=1 // pred_check_branch
      %281 = sbr.rel (0) target = $region117
    $region116: #{pv_net_forward.1} parent=1 // pred_region
      %282 = dma.done [#allocation14], 32
    $region117: #{pv_net_forward.1} parent=1 // pred_fallthru
      _
    // Predicated region
    $region118: #{pv_net_forward.1} parent=1 // pred_check
      _
    $region119: #{pv_net_forward.1} parent=1 // pred_check_branch
      %284 = sbr.rel (0) target = $region121
    $region120: #{pv_net_forward.1} parent=1 // pred_region
      %285 = dma.done [#allocation14], 4096
    $region121: #{pv_net_forward.1} parent=1 // pred_fallthru
      _
    // Predicated region
    $region122: #{pv_net_forward.1} parent=1 // pred_check
      _
    $region123: #{pv_net_forward.1} parent=1 // pred_check_branch
      %287 = sbr.rel (0) target = $region125
    $region124: #{pv_net_forward.1} parent=1 // pred_region
      %288 = dma.done [#allocation17], 32
    $region125: #{pv_net_forward.1} parent=1 // pred_fallthru
      _
    // Predicated region
    $region126: #{pv_net_forward.1} parent=1 // pred_check
      _
    $region127: #{pv_net_forward.1} parent=1 // pred_check_branch
      %290 = sbr.rel (0) target = $region129
    $region128: #{pv_net_forward.1} parent=1 // pred_region
      %291 = dma.done [#allocation17], 4096
    $region129: #{pv_net_forward.1} parent=1 // pred_fallthru
      _
    // Predicated region
    $region130: #{pv_net_forward.1} parent=1 // pred_check
      _
    $region131: #{pv_net_forward.1} parent=1 // pred_check_branch
      %293 = sbr.rel (0) target = $region133
    $region132: #{pv_net_forward.1} parent=1 // pred_region
      %294 = dma.done [#allocation20], 32
    $region133: #{pv_net_forward.1} parent=1 // pred_fallthru
      _
    // Predicated region
    $region134: #{pv_net_forward.1} parent=1 // pred_check
      _
    $region135: #{pv_net_forward.1} parent=1 // pred_check_branch
      %296 = sbr.rel (0) target = $region137
    $region136: #{pv_net_forward.1} parent=1 // pred_region
      %297 = dma.done [#allocation20], 4096
    $region137: #{pv_net_forward.1} parent=1 // pred_fallthru
      _
    // Predicated region
    $region138: #{pv_net_forward.1} parent=1 // pred_check
      _
    $region139: #{pv_net_forward.1} parent=1 // pred_check_branch
      %299 = sbr.rel (0) target = $region141
    $region140: #{pv_net_forward.1} parent=1 // pred_region
      %300 = dma.done [#allocation23], 32
    $region141: #{pv_net_forward.1} parent=1 // pred_fallthru
      _
    // Predicated region
    $region142: #{pv_net_forward.1} parent=1 // pred_check
      _
    $region143: #{pv_net_forward.1} parent=1 // pred_check_branch
      %302 = sbr.rel (0) target = $region145
    $region144: #{pv_net_forward.1} parent=1 // pred_region
      %303 = dma.done [#allocation23], 4096
    $region145: #{pv_net_forward.1} parent=1 // pred_fallthru
      _
    // Predicated region
    $region146: #{pv_net_forward.1} parent=1 // pred_check
      _
    $region147: #{pv_net_forward.1} parent=1 // pred_check_branch
      %305 = sbr.rel (0) target = $region149
    $region148: #{pv_net_forward.1} parent=1 // pred_region
      %306 = dma.done [#allocation26], 32
    $region149: #{pv_net_forward.1} parent=1 // pred_fallthru
      _
    // Predicated region
    $region150: #{pv_net_forward.1} parent=1 // pred_check
      _
    $region151: #{pv_net_forward.1} parent=1 // pred_check_branch
      %308 = sbr.rel (0) target = $region153
    $region152: #{pv_net_forward.1} parent=1 // pred_region
      %309 = dma.done [#allocation26], 4096
    $region153: #{pv_net_forward.1} parent=1 // pred_fallthru
      _
    // Predicated region
    $region154: #{pv_net_forward.1} parent=1 // pred_check
      _
    $region155: #{pv_net_forward.1} parent=1 // pred_check_branch
      %311 = sbr.rel (0) target = $region157
    $region156: #{pv_net_forward.1} parent=1 // pred_region
      %312 = dma.done [#allocation29], 32
    $region157: #{pv_net_forward.1} parent=1 // pred_fallthru
      _
    // Predicated region
    $region158: #{pv_net_forward.1} parent=1 // pred_check
      _
    $region159: #{pv_net_forward.1} parent=1 // pred_check_branch
      %314 = sbr.rel (0) target = $region161
    $region160: #{pv_net_forward.1} parent=1 // pred_region
      %315 = dma.done [#allocation29], 2048
    $region161: #{pv_net_forward.1} parent=1 // pred_fallthru
      _
    // Predicated region
    $region162: #{pv_net_forward.1} parent=1 // pred_check
      _
    $region163: #{pv_net_forward.1} parent=1 // pred_check_branch
      %317 = sbr.rel (0) target = $region165
    $region164: #{pv_net_forward.1} parent=1 // pred_region
      %318 = dma.done [#allocation32], 16
    $region165: #{pv_net_forward.1} parent=1 // pred_fallthru
      _
    %v320 = vld [vmem:[%s0] sm:$0xff]
    %v321 = vld [vmem:[%s0 + $0x8] sm:$0xff]
    %v322 = vld [vmem:[%s0 + $0x10] sm:$0xff]
    %v323 = vld [vmem:[%s0 + $0x18] sm:$0xff]
    %v324 = vld [vmem:[%s0 + $0x20] sm:$0xff]
    %v325 = vld [vmem:[%s0 + $0x28] sm:$0xff]
    %v326 = vld [vmem:[%s0 + $0x30] sm:$0xff]
    %v327 = vld [vmem:[%s0 + $0x38] sm:$0xff]
    %v328 = vld [vmem:[%s0 + $0x40] sm:$0xff]
    %v329 = vld [vmem:[%s0 + $0x48] sm:$0xff]
    %v330 = vld [vmem:[%s0 + $0x50] sm:$0xff]
    %v331 = vld [vmem:[%s0 + $0x58] sm:$0xff]
    %v332 = vld [vmem:[%s0 + $0x60] sm:$0xff]
    %v333 = vld [vmem:[%s0 + $0x68] sm:$0xff]
    %v334 = vld [vmem:[%s0 + $0x70] sm:$0xff]
    %v335 = vld [vmem:[%s0 + $0x78] sm:$0xff]
    %v336 = vld [vmem:[%s0 + $0x80] sm:$0xff]
    %v337 = vld [vmem:[%s0 + $0x88] sm:$0xff]
    %v338 = vld [vmem:[%s0 + $0x90] sm:$0xff]
    %v339 = vld [vmem:[%s0 + $0x98] sm:$0xff]
    %v340 = vld [vmem:[%s0 + $0xa0] sm:$0xff]
    %v341 = vld [vmem:[%s0 + $0xa8] sm:$0xff]
    %v342 = vld [vmem:[%s0 + $0xb0] sm:$0xff]
    %v343 = vld [vmem:[%s0 + $0xb8] sm:$0xff]
    %v344 = vld [vmem:[%s0 + $0xc0] sm:$0xff]
    %v345 = vld [vmem:[%s0 + $0xc8] sm:$0xff]
    %v346 = vld [vmem:[%s0 + $0xd0] sm:$0xff]
    %v347 = vld [vmem:[%s0 + $0xd8] sm:$0xff]
    %v348 = vld [vmem:[%s0 + $0xe0] sm:$0xff]
    %v349 = vld [vmem:[%s0 + $0xe8] sm:$0xff]
    %v350 = vld [vmem:[%s0 + $0xf0] sm:$0xff]
    %v351 = vld [vmem:[%s0 + $0xf8] sm:$0xff]
    %v352 = vld [vmem:[%s0 + $0x100] sm:$0xff]
    %v353 = vld [vmem:[%s0 + $0x108] sm:$0xff]
    %v354 = vld [vmem:[%s0 + $0x110] sm:$0xff]
    %v355 = vld [vmem:[%s0 + $0x118] sm:$0xff]
    %v356 = vld [vmem:[%s0 + $0x120] sm:$0xff]
    %v357 = vld [vmem:[%s0 + $0x128] sm:$0xff]
    %v358 = vld [vmem:[%s0 + $0x130] sm:$0xff]
    %v359 = vld [vmem:[%s0 + $0x138] sm:$0xff]
    %v360 = vld [vmem:[%s0 + $0x140] sm:$0xff]
    %v361 = vld [vmem:[%s0 + $0x148] sm:$0xff]
    %v362 = vld [vmem:[%s0 + $0x150] sm:$0xff]
    %v363 = vld [vmem:[%s0 + $0x158] sm:$0xff]
    %v364 = vld [vmem:[%s0 + $0x160] sm:$0xff]
    %v365 = vld [vmem:[%s0 + $0x168] sm:$0xff]
    %v366 = vld [vmem:[%s0 + $0x170] sm:$0xff]
    %v367 = vld [vmem:[%s0 + $0x178] sm:$0xff]
    %v368 = vld [vmem:[%s0 + $0x180] sm:$0xff]
    %v369 = vld [vmem:[%s0 + $0x188] sm:$0xff]
    %v370 = vld [vmem:[%s0 + $0x190] sm:$0xff]
    %v371 = vld [vmem:[%s0 + $0x198] sm:$0xff]
    %v372 = vld [vmem:[%s0 + $0x1a0] sm:$0xff]
    %v373 = vld [vmem:[%s0 + $0x1a8] sm:$0xff]
    %v374 = vld [vmem:[%s0 + $0x1b0] sm:$0xff]
    %v375 = vld [vmem:[%s0 + $0x1b8] sm:$0xff]
    %v376 = vld [vmem:[%s0 + $0x1c0] sm:$0xff]
    %v377 = vld [vmem:[%s0 + $0x1c8] sm:$0xff]
    %v378 = vld [vmem:[%s0 + $0x1d0] sm:$0xff]
    %v379 = vld [vmem:[%s0 + $0x1d8] sm:$0xff]
    %v380 = vld [vmem:[%s0 + $0x1e0] sm:$0xff]
    %v381 = vld [vmem:[%s0 + $0x1e8] sm:$0xff]
    %v382 = vld [vmem:[%s0 + $0x1f0] sm:$0xff]
    %v383 = vld [vmem:[%s0 + $0x1f8] sm:$0xff]
    %v384 = vld [vmem:[%s0 + $0x200] sm:$0xff]
    %v385 = vld [vmem:[%s0 + $0x208] sm:$0xff]
    %v386 = vld [vmem:[%s0 + $0x210] sm:$0xff]
    %v387 = vld [vmem:[%s0 + $0x218] sm:$0xff]
    %v388 = vld [vmem:[%s0 + $0x220] sm:$0xff]
    %v389 = vld [vmem:[%s0 + $0x228] sm:$0xff]
    %v390 = vld [vmem:[%s0 + $0x230] sm:$0xff]
    %v391 = vld [vmem:[%s0 + $0x238] sm:$0xff]
    %v392 = vld [vmem:[%s0 + $0x240] sm:$0xff]
    %v393 = vld [vmem:[%s0 + $0x248] sm:$0xff]
    %v394 = vld [vmem:[%s0 + $0x250] sm:$0xff]
    %v395 = vld [vmem:[%s0 + $0x258] sm:$0xff]
    %v396 = vld [vmem:[%s0 + $0x260] sm:$0xff]
    %v397 = vld [vmem:[%s0 + $0x268] sm:$0xff]
    %v398 = vld [vmem:[%s0 + $0x270] sm:$0xff]
    %v399 = vld [vmem:[%s0 + $0x278] sm:$0xff]
    %v400 = vpack.c.bf16 %v325, %v320
    %v401 = vpack.c.bf16 %v326, %v321
    %v402 = vpack.c.bf16 %v327, %v322
    %v403 = vpack.c.bf16 %v328, %v323
    %v404 = vpack.c.bf16 %v329, %v324
    %v405 = vpack.c.bf16 %v335, %v330
    %v406 = vpack.c.bf16 %v336, %v331
    %v407 = vpack.c.bf16 %v337, %v332
    %v408 = vpack.c.bf16 %v338, %v333
    %v409 = vpack.c.bf16 %v339, %v334
    %v410 = vpack.c.bf16 %v345, %v340
    %v411 = vpack.c.bf16 %v346, %v341
    %v412 = vpack.c.bf16 %v347, %v342
    %v413 = vpack.c.bf16 %v348, %v343
    %v414 = vpack.c.bf16 %v349, %v344
    %v415 = vpack.c.bf16 %v355, %v350
    %v416 = vpack.c.bf16 %v356, %v351
    %v417 = vpack.c.bf16 %v357, %v352
    %v418 = vpack.c.bf16 %v358, %v353
    %v419 = vpack.c.bf16 %v359, %v354
    %v420 = vpack.c.bf16 %v365, %v360
    %v421 = vpack.c.bf16 %v366, %v361
    %v422 = vpack.c.bf16 %v367, %v362
    %v423 = vpack.c.bf16 %v368, %v363
    %v424 = vpack.c.bf16 %v369, %v364
    %v425 = vpack.c.bf16 %v375, %v370
    %v426 = vpack.c.bf16 %v376, %v371
    %v427 = vpack.c.bf16 %v377, %v372
    %v428 = vpack.c.bf16 %v378, %v373
    %v429 = vpack.c.bf16 %v379, %v374
    %v430 = vpack.c.bf16 %v385, %v380
    %v431 = vpack.c.bf16 %v386, %v381
    %v432 = vpack.c.bf16 %v387, %v382
    %v433 = vpack.c.bf16 %v388, %v383
    %v434 = vpack.c.bf16 %v389, %v384
    %v435 = vpack.c.bf16 %v395, %v390
    %v436 = vpack.c.bf16 %v396, %v391
    %v437 = vpack.c.bf16 %v397, %v392
    %v438 = vpack.c.bf16 %v398, %v393
    %v439 = vpack.c.bf16 %v399, %v394
    %v440 = vld [vmem:[#allocation2] sm:$0xff]
    %v441 = vld [vmem:[#allocation2 + $0x8] sm:$0xff]
    %v442 = vld [vmem:[#allocation2 + $0x10] sm:$0xff]
    %v443 = vld [vmem:[#allocation2 + $0x18] sm:$0xff]
    %v444 = vld [vmem:[#allocation2 + $0x20] sm:$0xff]
    %v445 = vld [vmem:[#allocation2 + $0x28] sm:$0xff]
    %v446 = vld [vmem:[#allocation2 + $0x30] sm:$0xff]
    %v447 = vld [vmem:[#allocation2 + $0x38] sm:$0xff]
    %v448 = vld [vmem:[#allocation2 + $0x40] sm:$0xff]
    %v449 = vld [vmem:[#allocation2 + $0x48] sm:$0xff]
    %v450 = vld [vmem:[#allocation2 + $0x50] sm:$0xff]
    %v451 = vld [vmem:[#allocation2 + $0x58] sm:$0xff]
    %v452 = vld [vmem:[#allocation2 + $0x60] sm:$0xff]
    %v453 = vld [vmem:[#allocation2 + $0x68] sm:$0xff]
    %v454 = vld [vmem:[#allocation2 + $0x70] sm:$0xff]
    %v455 = vld [vmem:[#allocation2 + $0x78] sm:$0xff]
    %v456 = vld [vmem:[#allocation2 + $0x80] sm:$0xff]
    %v457 = vld [vmem:[#allocation2 + $0x88] sm:$0xff]
    %v458 = vld [vmem:[#allocation2 + $0x90] sm:$0xff]
    %v459 = vld [vmem:[#allocation2 + $0x98] sm:$0xff]
    %v460 = vld [vmem:[#allocation2 + $0xa0] sm:$0xff]
    %v461 = vld [vmem:[#allocation2 + $0xa8] sm:$0xff]
    %v462 = vld [vmem:[#allocation2 + $0xb0] sm:$0xff]
    %v463 = vld [vmem:[#allocation2 + $0xb8] sm:$0xff]
    %v464 = vld [vmem:[#allocation2 + $0xc0] sm:$0xff]
    %v465 = vld [vmem:[#allocation2 + $0xc8] sm:$0xff]
    %v466 = vld [vmem:[#allocation2 + $0xd0] sm:$0xff]
    %v467 = vld [vmem:[#allocation2 + $0xd8] sm:$0xff]
    %v468 = vld [vmem:[#allocation2 + $0xe0] sm:$0xff]
    %v469 = vld [vmem:[#allocation2 + $0xe8] sm:$0xff]
    %v470 = vld [vmem:[#allocation2 + $0xf0] sm:$0xff]
    %v471 = vld [vmem:[#allocation2 + $0xf8] sm:$0xff]
    %v472 = vld [vmem:[#allocation2 + $0x100] sm:$0xff]
    %v473 = vld [vmem:[#allocation2 + $0x108] sm:$0xff]
    %v474 = vld [vmem:[#allocation2 + $0x110] sm:$0xff]
    %v475 = vld [vmem:[#allocation2 + $0x118] sm:$0xff]
    %v476 = vld [vmem:[#allocation2 + $0x120] sm:$0xff]
    %v477 = vld [vmem:[#allocation2 + $0x128] sm:$0xff]
    %v478 = vld [vmem:[#allocation2 + $0x130] sm:$0xff]
    %v479 = vld [vmem:[#allocation2 + $0x138] sm:$0xff]
    %v480 = vld [vmem:[#allocation2 + $0x140] sm:$0xff]
    %v481 = vld [vmem:[#allocation2 + $0x148] sm:$0xff]
    %v482 = vld [vmem:[#allocation2 + $0x150] sm:$0xff]
    %v483 = vld [vmem:[#allocation2 + $0x158] sm:$0xff]
    %v484 = vld [vmem:[#allocation2 + $0x160] sm:$0xff]
    %v485 = vld [vmem:[#allocation2 + $0x168] sm:$0xff]
    %v486 = vld [vmem:[#allocation2 + $0x170] sm:$0xff]
    %v487 = vld [vmem:[#allocation2 + $0x178] sm:$0xff]
    %v488 = vld [vmem:[#allocation2 + $0x180] sm:$0xff]
    %v489 = vld [vmem:[#allocation2 + $0x188] sm:$0xff]
    %v490 = vld [vmem:[#allocation2 + $0x190] sm:$0xff]
    %v491 = vld [vmem:[#allocation2 + $0x198] sm:$0xff]
    %v492 = vld [vmem:[#allocation2 + $0x1a0] sm:$0xff]
    %v493 = vld [vmem:[#allocation2 + $0x1a8] sm:$0xff]
    %v494 = vld [vmem:[#allocation2 + $0x1b0] sm:$0xff]
    %v495 = vld [vmem:[#allocation2 + $0x1b8] sm:$0xff]
    %v496 = vld [vmem:[#allocation2 + $0x1c0] sm:$0xff]
    %v497 = vld [vmem:[#allocation2 + $0x1c8] sm:$0xff]
    %v498 = vld [vmem:[#allocation2 + $0x1d0] sm:$0xff]
    %v499 = vld [vmem:[#allocation2 + $0x1d8] sm:$0xff]
    %v500 = vld [vmem:[#allocation2 + $0x1e0] sm:$0xff]
    %v501 = vld [vmem:[#allocation2 + $0x1e8] sm:$0xff]
    %v502 = vld [vmem:[#allocation2 + $0x1f0] sm:$0xff]
    %v503 = vld [vmem:[#allocation2 + $0x1f8] sm:$0xff]
    %v504 = vld [vmem:[#allocation2 + $0x200] sm:$0xff]
    %v505 = vld [vmem:[#allocation2 + $0x208] sm:$0xff]
    %v506 = vld [vmem:[#allocation2 + $0x210] sm:$0xff]
    %v507 = vld [vmem:[#allocation2 + $0x218] sm:$0xff]
    %v508 = vld [vmem:[#allocation2 + $0x220] sm:$0xff]
    %v509 = vld [vmem:[#allocation2 + $0x228] sm:$0xff]
    %v510 = vld [vmem:[#allocation2 + $0x230] sm:$0xff]
    %v511 = vld [vmem:[#allocation2 + $0x238] sm:$0xff]
    %v512 = vld [vmem:[#allocation2 + $0x240] sm:$0xff]
    %v513 = vld [vmem:[#allocation2 + $0x248] sm:$0xff]
    %v514 = vld [vmem:[#allocation2 + $0x250] sm:$0xff]
    %v515 = vld [vmem:[#allocation2 + $0x258] sm:$0xff]
    %v516 = vld [vmem:[#allocation2 + $0x260] sm:$0xff]
    %v517 = vld [vmem:[#allocation2 + $0x268] sm:$0xff]
    %v518 = vld [vmem:[#allocation2 + $0x270] sm:$0xff]
    %v519 = vld [vmem:[#allocation2 + $0x278] sm:$0xff]
    %v520 = vld [vmem:[#allocation2 + $0x280] sm:$0xff]
    %v521 = vld [vmem:[#allocation2 + $0x288] sm:$0xff]
    %v522 = vld [vmem:[#allocation2 + $0x290] sm:$0xff]
    %v523 = vld [vmem:[#allocation2 + $0x298] sm:$0xff]
    %v524 = vld [vmem:[#allocation2 + $0x2a0] sm:$0xff]
    %v525 = vld [vmem:[#allocation2 + $0x2a8] sm:$0xff]
    %v526 = vld [vmem:[#allocation2 + $0x2b0] sm:$0xff]
    %v527 = vld [vmem:[#allocation2 + $0x2b8] sm:$0xff]
    %v528 = vld [vmem:[#allocation2 + $0x2c0] sm:$0xff]
    %v529 = vld [vmem:[#allocation2 + $0x2c8] sm:$0xff]
    %v530 = vld [vmem:[#allocation2 + $0x2d0] sm:$0xff]
    %v531 = vld [vmem:[#allocation2 + $0x2d8] sm:$0xff]
    %v532 = vld [vmem:[#allocation2 + $0x2e0] sm:$0xff]
    %v533 = vld [vmem:[#allocation2 + $0x2e8] sm:$0xff]
    %v534 = vld [vmem:[#allocation2 + $0x2f0] sm:$0xff]
    %v535 = vld [vmem:[#allocation2 + $0x2f8] sm:$0xff]
    %v536 = vld [vmem:[#allocation2 + $0x300] sm:$0xff]
    %v537 = vld [vmem:[#allocation2 + $0x308] sm:$0xff]
    %v538 = vld [vmem:[#allocation2 + $0x310] sm:$0xff]
    %v539 = vld [vmem:[#allocation2 + $0x318] sm:$0xff]
    %v540 = vld [vmem:[#allocation2 + $0x320] sm:$0xff]
    %v541 = vld [vmem:[#allocation2 + $0x328] sm:$0xff]
    %v542 = vld [vmem:[#allocation2 + $0x330] sm:$0xff]
    %v543 = vld [vmem:[#allocation2 + $0x338] sm:$0xff]
    %v544 = vld [vmem:[#allocation2 + $0x340] sm:$0xff]
    %v545 = vld [vmem:[#allocation2 + $0x348] sm:$0xff]
    %v546 = vld [vmem:[#allocation2 + $0x350] sm:$0xff]
    %v547 = vld [vmem:[#allocation2 + $0x358] sm:$0xff]
    %v548 = vld [vmem:[#allocation2 + $0x360] sm:$0xff]
    %v549 = vld [vmem:[#allocation2 + $0x368] sm:$0xff]
    %v550 = vld [vmem:[#allocation2 + $0x370] sm:$0xff]
    %v551 = vld [vmem:[#allocation2 + $0x378] sm:$0xff]
    %v552 = vld [vmem:[#allocation2 + $0x380] sm:$0xff]
    %v553 = vld [vmem:[#allocation2 + $0x388] sm:$0xff]
    %v554 = vld [vmem:[#allocation2 + $0x390] sm:$0xff]
    %v555 = vld [vmem:[#allocation2 + $0x398] sm:$0xff]
    %v556 = vld [vmem:[#allocation2 + $0x3a0] sm:$0xff]
    %v557 = vld [vmem:[#allocation2 + $0x3a8] sm:$0xff]
    %v558 = vld [vmem:[#allocation2 + $0x3b0] sm:$0xff]
    %v559 = vld [vmem:[#allocation2 + $0x3b8] sm:$0xff]
    %v560 = vld [vmem:[#allocation2 + $0x3c0] sm:$0xff]
    %v561 = vld [vmem:[#allocation2 + $0x3c8] sm:$0xff]
    %v562 = vld [vmem:[#allocation2 + $0x3d0] sm:$0xff]
    %v563 = vld [vmem:[#allocation2 + $0x3d8] sm:$0xff]
    %v564 = vld [vmem:[#allocation2 + $0x3e0] sm:$0xff]
    %v565 = vld [vmem:[#allocation2 + $0x3e8] sm:$0xff]
    %v566 = vld [vmem:[#allocation2 + $0x3f0] sm:$0xff]
    %v567 = vld [vmem:[#allocation2 + $0x3f8] sm:$0xff]
    %v568 = vld [vmem:[#allocation2 + $0x400] sm:$0xff]
    %v569 = vld [vmem:[#allocation2 + $0x408] sm:$0xff]
    %v570 = vld [vmem:[#allocation2 + $0x410] sm:$0xff]
    %v571 = vld [vmem:[#allocation2 + $0x418] sm:$0xff]
    %v572 = vld [vmem:[#allocation2 + $0x420] sm:$0xff]
    %v573 = vld [vmem:[#allocation2 + $0x428] sm:$0xff]
    %v574 = vld [vmem:[#allocation2 + $0x430] sm:$0xff]
    %v575 = vld [vmem:[#allocation2 + $0x438] sm:$0xff]
    %v576 = vld [vmem:[#allocation2 + $0x440] sm:$0xff]
    %v577 = vld [vmem:[#allocation2 + $0x448] sm:$0xff]
    %v578 = vld [vmem:[#allocation2 + $0x450] sm:$0xff]
    %v579 = vld [vmem:[#allocation2 + $0x458] sm:$0xff]
    %v580 = vld [vmem:[#allocation2 + $0x460] sm:$0xff]
    %v581 = vld [vmem:[#allocation2 + $0x468] sm:$0xff]
    %v582 = vld [vmem:[#allocation2 + $0x470] sm:$0xff]
    %v583 = vld [vmem:[#allocation2 + $0x478] sm:$0xff]
    %v584 = vld [vmem:[#allocation2 + $0x480] sm:$0xff]
    %v585 = vld [vmem:[#allocation2 + $0x488] sm:$0xff]
    %v586 = vld [vmem:[#allocation2 + $0x490] sm:$0xff]
    %v587 = vld [vmem:[#allocation2 + $0x498] sm:$0xff]
    %v588 = vld [vmem:[#allocation2 + $0x4a0] sm:$0xff]
    %v589 = vld [vmem:[#allocation2 + $0x4a8] sm:$0xff]
    %v590 = vld [vmem:[#allocation2 + $0x4b0] sm:$0xff]
    %v591 = vld [vmem:[#allocation2 + $0x4b8] sm:$0xff]
    %v592 = vld [vmem:[#allocation2 + $0x4c0] sm:$0xff]
    %v593 = vld [vmem:[#allocation2 + $0x4c8] sm:$0xff]
    %v594 = vld [vmem:[#allocation2 + $0x4d0] sm:$0xff]
    %v595 = vld [vmem:[#allocation2 + $0x4d8] sm:$0xff]
    %v596 = vld [vmem:[#allocation2 + $0x4e0] sm:$0xff]
    %v597 = vld [vmem:[#allocation2 + $0x4e8] sm:$0xff]
    %v598 = vld [vmem:[#allocation2 + $0x4f0] sm:$0xff]
    %v599 = vld [vmem:[#allocation2 + $0x4f8] sm:$0xff]
    %v600 = vld [vmem:[#allocation2 + $0x500] sm:$0xff]
    %v601 = vld [vmem:[#allocation2 + $0x508] sm:$0xff]
    %v602 = vld [vmem:[#allocation2 + $0x510] sm:$0xff]
    %v603 = vld [vmem:[#allocation2 + $0x518] sm:$0xff]
    %v604 = vld [vmem:[#allocation2 + $0x520] sm:$0xff]
    %v605 = vld [vmem:[#allocation2 + $0x528] sm:$0xff]
    %v606 = vld [vmem:[#allocation2 + $0x530] sm:$0xff]
    %v607 = vld [vmem:[#allocation2 + $0x538] sm:$0xff]
    %v608 = vld [vmem:[#allocation2 + $0x540] sm:$0xff]
    %v609 = vld [vmem:[#allocation2 + $0x548] sm:$0xff]
    %v610 = vld [vmem:[#allocation2 + $0x550] sm:$0xff]
    %v611 = vld [vmem:[#allocation2 + $0x558] sm:$0xff]
    %v612 = vld [vmem:[#allocation2 + $0x560] sm:$0xff]
    %v613 = vld [vmem:[#allocation2 + $0x568] sm:$0xff]
    %v614 = vld [vmem:[#allocation2 + $0x570] sm:$0xff]
    %v615 = vld [vmem:[#allocation2 + $0x578] sm:$0xff]
    %v616 = vld [vmem:[#allocation2 + $0x580] sm:$0xff]
    %v617 = vld [vmem:[#allocation2 + $0x588] sm:$0xff]
    %v618 = vld [vmem:[#allocation2 + $0x590] sm:$0xff]
    %v619 = vld [vmem:[#allocation2 + $0x598] sm:$0xff]
    %v620 = vld [vmem:[#allocation2 + $0x5a0] sm:$0xff]
    %v621 = vld [vmem:[#allocation2 + $0x5a8] sm:$0xff]
    %v622 = vld [vmem:[#allocation2 + $0x5b0] sm:$0xff]
    %v623 = vld [vmem:[#allocation2 + $0x5b8] sm:$0xff]
    %v624 = vld [vmem:[#allocation2 + $0x5c0] sm:$0xff]
    %v625 = vld [vmem:[#allocation2 + $0x5c8] sm:$0xff]
    %v626 = vld [vmem:[#allocation2 + $0x5d0] sm:$0xff]
    %v627 = vld [vmem:[#allocation2 + $0x5d8] sm:$0xff]
    %v628 = vld [vmem:[#allocation2 + $0x5e0] sm:$0xff]
    %v629 = vld [vmem:[#allocation2 + $0x5e8] sm:$0xff]
    %v630 = vld [vmem:[#allocation2 + $0x5f0] sm:$0xff]
    %v631 = vld [vmem:[#allocation2 + $0x5f8] sm:$0xff]
    %v632 = vld [vmem:[#allocation2 + $0x600] sm:$0xff]
    %v633 = vld [vmem:[#allocation2 + $0x608] sm:$0xff]
    %v634 = vld [vmem:[#allocation2 + $0x610] sm:$0xff]
    %v635 = vld [vmem:[#allocation2 + $0x618] sm:$0xff]
    %v636 = vld [vmem:[#allocation2 + $0x620] sm:$0xff]
    %v637 = vld [vmem:[#allocation2 + $0x628] sm:$0xff]
    %v638 = vld [vmem:[#allocation2 + $0x630] sm:$0xff]
    %v639 = vld [vmem:[#allocation2 + $0x638] sm:$0xff]
    %v640 = vld [vmem:[#allocation2 + $0x640] sm:$0xff]
    %v641 = vld [vmem:[#allocation2 + $0x648] sm:$0xff]
    %v642 = vld [vmem:[#allocation2 + $0x650] sm:$0xff]
    %v643 = vld [vmem:[#allocation2 + $0x658] sm:$0xff]
    %v644 = vld [vmem:[#allocation2 + $0x660] sm:$0xff]
    %v645 = vld [vmem:[#allocation2 + $0x668] sm:$0xff]
    %v646 = vld [vmem:[#allocation2 + $0x670] sm:$0xff]
    %v647 = vld [vmem:[#allocation2 + $0x678] sm:$0xff]
    %v648 = vld [vmem:[#allocation2 + $0x680] sm:$0xff]
    %v649 = vld [vmem:[#allocation2 + $0x688] sm:$0xff]
    %v650 = vld [vmem:[#allocation2 + $0x690] sm:$0xff]
    %v651 = vld [vmem:[#allocation2 + $0x698] sm:$0xff]
    %v652 = vld [vmem:[#allocation2 + $0x6a0] sm:$0xff]
    %v653 = vld [vmem:[#allocation2 + $0x6a8] sm:$0xff]
    %v654 = vld [vmem:[#allocation2 + $0x6b0] sm:$0xff]
    %v655 = vld [vmem:[#allocation2 + $0x6b8] sm:$0xff]
    %v656 = vld [vmem:[#allocation2 + $0x6c0] sm:$0xff]
    %v657 = vld [vmem:[#allocation2 + $0x6c8] sm:$0xff]
    %v658 = vld [vmem:[#allocation2 + $0x6d0] sm:$0xff]
    %v659 = vld [vmem:[#allocation2 + $0x6d8] sm:$0xff]
    %v660 = vld [vmem:[#allocation2 + $0x6e0] sm:$0xff]
    %v661 = vld [vmem:[#allocation2 + $0x6e8] sm:$0xff]
    %v662 = vld [vmem:[#allocation2 + $0x6f0] sm:$0xff]
    %v663 = vld [vmem:[#allocation2 + $0x6f8] sm:$0xff]
    %v664 = vld [vmem:[#allocation2 + $0x700] sm:$0xff]
    %v665 = vld [vmem:[#allocation2 + $0x708] sm:$0xff]
    %v666 = vld [vmem:[#allocation2 + $0x710] sm:$0xff]
    %v667 = vld [vmem:[#allocation2 + $0x718] sm:$0xff]
    %v668 = vld [vmem:[#allocation2 + $0x720] sm:$0xff]
    %v669 = vld [vmem:[#allocation2 + $0x728] sm:$0xff]
    %v670 = vld [vmem:[#allocation2 + $0x730] sm:$0xff]
    %v671 = vld [vmem:[#allocation2 + $0x738] sm:$0xff]
    %v672 = vld [vmem:[#allocation2 + $0x740] sm:$0xff]
    %v673 = vld [vmem:[#allocation2 + $0x748] sm:$0xff]
    %v674 = vld [vmem:[#allocation2 + $0x750] sm:$0xff]
    %v675 = vld [vmem:[#allocation2 + $0x758] sm:$0xff]
    %v676 = vld [vmem:[#allocation2 + $0x760] sm:$0xff]
    %v677 = vld [vmem:[#allocation2 + $0x768] sm:$0xff]
    %v678 = vld [vmem:[#allocation2 + $0x770] sm:$0xff]
    %v679 = vld [vmem:[#allocation2 + $0x778] sm:$0xff]
    %v680 = vld [vmem:[#allocation2 + $0x780] sm:$0xff]
    %v681 = vld [vmem:[#allocation2 + $0x788] sm:$0xff]
    %v682 = vld [vmem:[#allocation2 + $0x790] sm:$0xff]
    %v683 = vld [vmem:[#allocation2 + $0x798] sm:$0xff]
    %v684 = vld [vmem:[#allocation2 + $0x7a0] sm:$0xff]
    %v685 = vld [vmem:[#allocation2 + $0x7a8] sm:$0xff]
    %v686 = vld [vmem:[#allocation2 + $0x7b0] sm:$0xff]
    %v687 = vld [vmem:[#allocation2 + $0x7b8] sm:$0xff]
    %v688 = vld [vmem:[#allocation2 + $0x7c0] sm:$0xff]
    %v689 = vld [vmem:[#allocation2 + $0x7c8] sm:$0xff]
    %v690 = vld [vmem:[#allocation2 + $0x7d0] sm:$0xff]
    %v691 = vld [vmem:[#allocation2 + $0x7d8] sm:$0xff]
    %v692 = vld [vmem:[#allocation2 + $0x7e0] sm:$0xff]
    %v693 = vld [vmem:[#allocation2 + $0x7e8] sm:$0xff]
    %v694 = vld [vmem:[#allocation2 + $0x7f0] sm:$0xff]
    %v695 = vld [vmem:[#allocation2 + $0x7f8] sm:$0xff]
    %v696 = vld [vmem:[#allocation2 + $0x800] sm:$0xff]
    %v697 = vld [vmem:[#allocation2 + $0x808] sm:$0xff]
    %v698 = vld [vmem:[#allocation2 + $0x810] sm:$0xff]
    %v699 = vld [vmem:[#allocation2 + $0x818] sm:$0xff]
    %v700 = vld [vmem:[#allocation2 + $0x820] sm:$0xff]
    %v701 = vld [vmem:[#allocation2 + $0x828] sm:$0xff]
    %v702 = vld [vmem:[#allocation2 + $0x830] sm:$0xff]
    %v703 = vld [vmem:[#allocation2 + $0x838] sm:$0xff]
    %v704 = vld [vmem:[#allocation2 + $0x840] sm:$0xff]
    %v705 = vld [vmem:[#allocation2 + $0x848] sm:$0xff]
    %v706 = vld [vmem:[#allocation2 + $0x850] sm:$0xff]
    %v707 = vld [vmem:[#allocation2 + $0x858] sm:$0xff]
    %v708 = vld [vmem:[#allocation2 + $0x860] sm:$0xff]
    %v709 = vld [vmem:[#allocation2 + $0x868] sm:$0xff]
    %v710 = vld [vmem:[#allocation2 + $0x870] sm:$0xff]
    %v711 = vld [vmem:[#allocation2 + $0x878] sm:$0xff]
    %v712 = vld [vmem:[#allocation2 + $0x880] sm:$0xff]
    %v713 = vld [vmem:[#allocation2 + $0x888] sm:$0xff]
    %v714 = vld [vmem:[#allocation2 + $0x890] sm:$0xff]
    %v715 = vld [vmem:[#allocation2 + $0x898] sm:$0xff]
    %v716 = vld [vmem:[#allocation2 + $0x8a0] sm:$0xff]
    %v717 = vld [vmem:[#allocation2 + $0x8a8] sm:$0xff]
    %v718 = vld [vmem:[#allocation2 + $0x8b0] sm:$0xff]
    %v719 = vld [vmem:[#allocation2 + $0x8b8] sm:$0xff]
    %v720 = vld [vmem:[#allocation2 + $0x8c0] sm:$0xff]
    %v721 = vld [vmem:[#allocation2 + $0x8c8] sm:$0xff]
    %v722 = vld [vmem:[#allocation2 + $0x8d0] sm:$0xff]
    %v723 = vld [vmem:[#allocation2 + $0x8d8] sm:$0xff]
    %v724 = vld [vmem:[#allocation2 + $0x8e0] sm:$0xff]
    %v725 = vld [vmem:[#allocation2 + $0x8e8] sm:$0xff]
    %v726 = vld [vmem:[#allocation2 + $0x8f0] sm:$0xff]
    %v727 = vld [vmem:[#allocation2 + $0x8f8] sm:$0xff]
    %v728 = vld [vmem:[#allocation2 + $0x900] sm:$0xff]
    %v729 = vld [vmem:[#allocation2 + $0x908] sm:$0xff]
    %v730 = vld [vmem:[#allocation2 + $0x910] sm:$0xff]
    %v731 = vld [vmem:[#allocation2 + $0x918] sm:$0xff]
    %v732 = vld [vmem:[#allocation2 + $0x920] sm:$0xff]
    %v733 = vld [vmem:[#allocation2 + $0x928] sm:$0xff]
    %v734 = vld [vmem:[#allocation2 + $0x930] sm:$0xff]
    %v735 = vld [vmem:[#allocation2 + $0x938] sm:$0xff]
    %v736 = vld [vmem:[#allocation2 + $0x940] sm:$0xff]
    %v737 = vld [vmem:[#allocation2 + $0x948] sm:$0xff]
    %v738 = vld [vmem:[#allocation2 + $0x950] sm:$0xff]
    %v739 = vld [vmem:[#allocation2 + $0x958] sm:$0xff]
    %v740 = vld [vmem:[#allocation2 + $0x960] sm:$0xff]
    %v741 = vld [vmem:[#allocation2 + $0x968] sm:$0xff]
    %v742 = vld [vmem:[#allocation2 + $0x970] sm:$0xff]
    %v743 = vld [vmem:[#allocation2 + $0x978] sm:$0xff]
    %v744 = vld [vmem:[#allocation2 + $0x980] sm:$0xff]
    %v745 = vld [vmem:[#allocation2 + $0x988] sm:$0xff]
    %v746 = vld [vmem:[#allocation2 + $0x990] sm:$0xff]
    %v747 = vld [vmem:[#allocation2 + $0x998] sm:$0xff]
    %v748 = vld [vmem:[#allocation2 + $0x9a0] sm:$0xff]
    %v749 = vld [vmem:[#allocation2 + $0x9a8] sm:$0xff]
    %v750 = vld [vmem:[#allocation2 + $0x9b0] sm:$0xff]
    %v751 = vld [vmem:[#allocation2 + $0x9b8] sm:$0xff]
    %v752 = vld [vmem:[#allocation2 + $0x9c0] sm:$0xff]
    %v753 = vld [vmem:[#allocation2 + $0x9c8] sm:$0xff]
    %v754 = vld [vmem:[#allocation2 + $0x9d0] sm:$0xff]
    %v755 = vld [vmem:[#allocation2 + $0x9d8] sm:$0xff]
    %v756 = vld [vmem:[#allocation2 + $0x9e0] sm:$0xff]
    %v757 = vld [vmem:[#allocation2 + $0x9e8] sm:$0xff]
    %v758 = vld [vmem:[#allocation2 + $0x9f0] sm:$0xff]
    %v759 = vld [vmem:[#allocation2 + $0x9f8] sm:$0xff]
    %v760 = vld [vmem:[#allocation4] sm:$0xff]
    %v762 = vlaneseq
    %v763 = vshrl.u32 %v762, 7
    %v764 = vsub.s32 0, %v763
    %v765 = vrot.slane %v760, %v764
    %v766 = vlaneseq
    %v767 = vshrl.u32 %v766, 7
    %v768 = vsub.s32 1, %v767
    %v769 = vrot.slane %v760, %v768
    %v770 = vlaneseq
    %v771 = vshrl.u32 %v770, 7
    %v772 = vsub.s32 2, %v771
    %v773 = vrot.slane %v760, %v772
    %v774 = vlaneseq
    %v775 = vshrl.u32 %v774, 7
    %v776 = vsub.s32 3, %v775
    %v777 = vrot.slane %v760, %v776
    %v778 = vlaneseq
    %v779 = vshrl.u32 %v778, 7
    %v780 = vsub.s32 4, %v779
    %v781 = vrot.slane %v760, %v780
    %v782 = vlaneseq
    %v783 = vshrl.u32 %v782, 7
    %v784 = vsub.s32 5, %v783
    %v785 = vrot.slane %v760, %v784
    %v786 = vlaneseq
    %v787 = vshrl.u32 %v786, 7
    %v788 = vsub.s32 6, %v787
    %v789 = vrot.slane %v760, %v788
    %v790 = vlaneseq
    %v791 = vshrl.u32 %v790, 7
    %v792 = vsub.s32 7, %v791
    %v793 = vrot.slane %v760, %v792
    %v1122 = vunpack.c.l.b16 %v440
    %v1123 = vunpack.c.h.b16 %v440
    %v1124 = vunpack.c.l.b16 %v441
    %v1125 = vunpack.c.h.b16 %v441
    %v1126 = vunpack.c.l.b16 %v442
    %v1127 = vunpack.c.h.b16 %v442
    %v1128 = vunpack.c.l.b16 %v443
    %v1129 = vunpack.c.h.b16 %v443
    %v1130 = vunpack.c.l.b16 %v444
    %v1131 = vunpack.c.h.b16 %v444
    %v1132 = vunpack.c.l.b16 %v445
    %v1133 = vunpack.c.h.b16 %v445
    %v1134 = vunpack.c.l.b16 %v446
    %v1135 = vunpack.c.h.b16 %v446
    %v1136 = vunpack.c.l.b16 %v447
    %v1137 = vunpack.c.h.b16 %v447
    %v1138 = vunpack.c.l.b16 %v448
    %v1139 = vunpack.c.h.b16 %v448
    %v1140 = vunpack.c.l.b16 %v449
    %v1141 = vunpack.c.h.b16 %v449
    %v1142 = vunpack.c.l.b16 %v450
    %v1143 = vunpack.c.h.b16 %v450
    %v1144 = vunpack.c.l.b16 %v451
    %v1145 = vunpack.c.h.b16 %v451
    %v1146 = vunpack.c.l.b16 %v452
    %v1147 = vunpack.c.h.b16 %v452
    %v1148 = vunpack.c.l.b16 %v453
    %v1149 = vunpack.c.h.b16 %v453
    %v1150 = vunpack.c.l.b16 %v454
    %v1151 = vunpack.c.h.b16 %v454
    %v1152 = vunpack.c.l.b16 %v455
    %v1153 = vunpack.c.h.b16 %v455
    %v1154 = vunpack.c.l.b16 %v456
    %v1155 = vunpack.c.h.b16 %v456
    %v1156 = vunpack.c.l.b16 %v457
    %v1157 = vunpack.c.h.b16 %v457
    %v1158 = vunpack.c.l.b16 %v458
    %v1159 = vunpack.c.h.b16 %v458
    %v1160 = vunpack.c.l.b16 %v459
    %v1161 = vunpack.c.h.b16 %v459
    %v1162 = vunpack.c.l.b16 %v460
    %v1163 = vunpack.c.h.b16 %v460
    %v1164 = vunpack.c.l.b16 %v461
    %v1165 = vunpack.c.h.b16 %v461
    %v1166 = vunpack.c.l.b16 %v462
    %v1167 = vunpack.c.h.b16 %v462
    %v1168 = vunpack.c.l.b16 %v463
    %v1169 = vunpack.c.h.b16 %v463
    %v1170 = vunpack.c.l.b16 %v464
    %v1171 = vunpack.c.h.b16 %v464
    %v1172 = vunpack.c.l.b16 %v465
    %v1173 = vunpack.c.h.b16 %v465
    %v1174 = vunpack.c.l.b16 %v466
    %v1175 = vunpack.c.h.b16 %v466
    %v1176 = vunpack.c.l.b16 %v467
    %v1177 = vunpack.c.h.b16 %v467
    %v1178 = vunpack.c.l.b16 %v468
    %v1179 = vunpack.c.h.b16 %v468
    %v1180 = vunpack.c.l.b16 %v469
    %v1181 = vunpack.c.h.b16 %v469
    %v1182 = vunpack.c.l.b16 %v470
    %v1183 = vunpack.c.h.b16 %v470
    %v1184 = vunpack.c.l.b16 %v471
    %v1185 = vunpack.c.h.b16 %v471
    %v1186 = vunpack.c.l.b16 %v472
    %v1187 = vunpack.c.h.b16 %v472
    %v1188 = vunpack.c.l.b16 %v473
    %v1189 = vunpack.c.h.b16 %v473
    %v1190 = vunpack.c.l.b16 %v474
    %v1191 = vunpack.c.h.b16 %v474
    %v1192 = vunpack.c.l.b16 %v475
    %v1193 = vunpack.c.h.b16 %v475
    %v1194 = vunpack.c.l.b16 %v476
    %v1195 = vunpack.c.h.b16 %v476
    %v1196 = vunpack.c.l.b16 %v477
    %v1197 = vunpack.c.h.b16 %v477
    %v1198 = vunpack.c.l.b16 %v478
    %v1199 = vunpack.c.h.b16 %v478
    %v1200 = vunpack.c.l.b16 %v479
    %v1201 = vunpack.c.h.b16 %v479
    %v1202 = vunpack.c.l.b16 %v480
    %v1203 = vunpack.c.h.b16 %v480
    %v1204 = vunpack.c.l.b16 %v481
    %v1205 = vunpack.c.h.b16 %v481
    %v1206 = vunpack.c.l.b16 %v482
    %v1207 = vunpack.c.h.b16 %v482
    %v1208 = vunpack.c.l.b16 %v483
    %v1209 = vunpack.c.h.b16 %v483
    %v1210 = vunpack.c.l.b16 %v484
    %v1211 = vunpack.c.h.b16 %v484
    %v1212 = vunpack.c.l.b16 %v485
    %v1213 = vunpack.c.h.b16 %v485
    %v1214 = vunpack.c.l.b16 %v486
    %v1215 = vunpack.c.h.b16 %v486
    %v1216 = vunpack.c.l.b16 %v487
    %v1217 = vunpack.c.h.b16 %v487
    %v1218 = vunpack.c.l.b16 %v488
    %v1219 = vunpack.c.h.b16 %v488
    %v1220 = vunpack.c.l.b16 %v489
    %v1221 = vunpack.c.h.b16 %v489
    %v1222 = vunpack.c.l.b16 %v490
    %v1223 = vunpack.c.h.b16 %v490
    %v1224 = vunpack.c.l.b16 %v491
    %v1225 = vunpack.c.h.b16 %v491
    %v1226 = vunpack.c.l.b16 %v492
    %v1227 = vunpack.c.h.b16 %v492
    %v1228 = vunpack.c.l.b16 %v493
    %v1229 = vunpack.c.h.b16 %v493
    %v1230 = vunpack.c.l.b16 %v494
    %v1231 = vunpack.c.h.b16 %v494
    %v1232 = vunpack.c.l.b16 %v495
    %v1233 = vunpack.c.h.b16 %v495
    %v1234 = vunpack.c.l.b16 %v496
    %v1235 = vunpack.c.h.b16 %v496
    %v1236 = vunpack.c.l.b16 %v497
    %v1237 = vunpack.c.h.b16 %v497
    %v1238 = vunpack.c.l.b16 %v498
    %v1239 = vunpack.c.h.b16 %v498
    %v1240 = vunpack.c.l.b16 %v499
    %v1241 = vunpack.c.h.b16 %v499
    %v1242 = vunpack.c.l.b16 %v500
    %v1243 = vunpack.c.h.b16 %v500
    %v1244 = vunpack.c.l.b16 %v501
    %v1245 = vunpack.c.h.b16 %v501
    %v1246 = vunpack.c.l.b16 %v502
    %v1247 = vunpack.c.h.b16 %v502
    %v1248 = vunpack.c.l.b16 %v503
    %v1249 = vunpack.c.h.b16 %v503
    %v1250 = vunpack.c.l.b16 %v504
    %v1251 = vunpack.c.h.b16 %v504
    %v1252 = vunpack.c.l.b16 %v505
    %v1253 = vunpack.c.h.b16 %v505
    %v1254 = vunpack.c.l.b16 %v506
    %v1255 = vunpack.c.h.b16 %v506
    %v1256 = vunpack.c.l.b16 %v507
    %v1257 = vunpack.c.h.b16 %v507
    %v1258 = vunpack.c.l.b16 %v508
    %v1259 = vunpack.c.h.b16 %v508
    %v1260 = vunpack.c.l.b16 %v509
    %v1261 = vunpack.c.h.b16 %v509
    %v1262 = vunpack.c.l.b16 %v510
    %v1263 = vunpack.c.h.b16 %v510
    %v1264 = vunpack.c.l.b16 %v511
    %v1265 = vunpack.c.h.b16 %v511
    %v1266 = vunpack.c.l.b16 %v512
    %v1267 = vunpack.c.h.b16 %v512
    %v1268 = vunpack.c.l.b16 %v513
    %v1269 = vunpack.c.h.b16 %v513
    %v1270 = vunpack.c.l.b16 %v514
    %v1271 = vunpack.c.h.b16 %v514
    %v1272 = vunpack.c.l.b16 %v515
    %v1273 = vunpack.c.h.b16 %v515
    %v1274 = vunpack.c.l.b16 %v516
    %v1275 = vunpack.c.h.b16 %v516
    %v1276 = vunpack.c.l.b16 %v517
    %v1277 = vunpack.c.h.b16 %v517
    %v1278 = vunpack.c.l.b16 %v518
    %v1279 = vunpack.c.h.b16 %v518
    %v1280 = vunpack.c.l.b16 %v519
    %v1281 = vunpack.c.h.b16 %v519
    %v1282 = vunpack.c.l.b16 %v520
    %v1283 = vunpack.c.h.b16 %v520
    %v1284 = vunpack.c.l.b16 %v521
    %v1285 = vunpack.c.h.b16 %v521
    %v1286 = vunpack.c.l.b16 %v522
    %v1287 = vunpack.c.h.b16 %v522
    %v1288 = vunpack.c.l.b16 %v523
    %v1289 = vunpack.c.h.b16 %v523
    %v1290 = vunpack.c.l.b16 %v524
    %v1291 = vunpack.c.h.b16 %v524
    %v1292 = vunpack.c.l.b16 %v525
    %v1293 = vunpack.c.h.b16 %v525
    %v1294 = vunpack.c.l.b16 %v526
    %v1295 = vunpack.c.h.b16 %v526
    %v1296 = vunpack.c.l.b16 %v527
    %v1297 = vunpack.c.h.b16 %v527
    %v1298 = vunpack.c.l.b16 %v528
    %v1299 = vunpack.c.h.b16 %v528
    %v1300 = vunpack.c.l.b16 %v529
    %v1301 = vunpack.c.h.b16 %v529
    %v1302 = vunpack.c.l.b16 %v530
    %v1303 = vunpack.c.h.b16 %v530
    %v1304 = vunpack.c.l.b16 %v531
    %v1305 = vunpack.c.h.b16 %v531
    %v1306 = vunpack.c.l.b16 %v532
    %v1307 = vunpack.c.h.b16 %v532
    %v1308 = vunpack.c.l.b16 %v533
    %v1309 = vunpack.c.h.b16 %v533
    %v1310 = vunpack.c.l.b16 %v534
    %v1311 = vunpack.c.h.b16 %v534
    %v1312 = vunpack.c.l.b16 %v535
    %v1313 = vunpack.c.h.b16 %v535
    %v1314 = vunpack.c.l.b16 %v536
    %v1315 = vunpack.c.h.b16 %v536
    %v1316 = vunpack.c.l.b16 %v537
    %v1317 = vunpack.c.h.b16 %v537
    %v1318 = vunpack.c.l.b16 %v538
    %v1319 = vunpack.c.h.b16 %v538
    %v1320 = vunpack.c.l.b16 %v539
    %v1321 = vunpack.c.h.b16 %v539
    %v1322 = vunpack.c.l.b16 %v540
    %v1323 = vunpack.c.h.b16 %v540
    %v1324 = vunpack.c.l.b16 %v541
    %v1325 = vunpack.c.h.b16 %v541
    %v1326 = vunpack.c.l.b16 %v542
    %v1327 = vunpack.c.h.b16 %v542
    %v1328 = vunpack.c.l.b16 %v543
    %v1329 = vunpack.c.h.b16 %v543
    %v1330 = vunpack.c.l.b16 %v544
    %v1331 = vunpack.c.h.b16 %v544
    %v1332 = vunpack.c.l.b16 %v545
    %v1333 = vunpack.c.h.b16 %v545
    %v1334 = vunpack.c.l.b16 %v546
    %v1335 = vunpack.c.h.b16 %v546
    %v1336 = vunpack.c.l.b16 %v547
    %v1337 = vunpack.c.h.b16 %v547
    %v1338 = vunpack.c.l.b16 %v548
    %v1339 = vunpack.c.h.b16 %v548
    %v1340 = vunpack.c.l.b16 %v549
    %v1341 = vunpack.c.h.b16 %v549
    %v1342 = vunpack.c.l.b16 %v550
    %v1343 = vunpack.c.h.b16 %v550
    %v1344 = vunpack.c.l.b16 %v551
    %v1345 = vunpack.c.h.b16 %v551
    %v1346 = vunpack.c.l.b16 %v552
    %v1347 = vunpack.c.h.b16 %v552
    %v1348 = vunpack.c.l.b16 %v553
    %v1349 = vunpack.c.h.b16 %v553
    %v1350 = vunpack.c.l.b16 %v554
    %v1351 = vunpack.c.h.b16 %v554
    %v1352 = vunpack.c.l.b16 %v555
    %v1353 = vunpack.c.h.b16 %v555
    %v1354 = vunpack.c.l.b16 %v556
    %v1355 = vunpack.c.h.b16 %v556
    %v1356 = vunpack.c.l.b16 %v557
    %v1357 = vunpack.c.h.b16 %v557
    %v1358 = vunpack.c.l.b16 %v558
    %v1359 = vunpack.c.h.b16 %v558
    %v1360 = vunpack.c.l.b16 %v559
    %v1361 = vunpack.c.h.b16 %v559
    %v1362 = vunpack.c.l.b16 %v560
    %v1363 = vunpack.c.h.b16 %v560
    %v1364 = vunpack.c.l.b16 %v561
    %v1365 = vunpack.c.h.b16 %v561
    %v1366 = vunpack.c.l.b16 %v562
    %v1367 = vunpack.c.h.b16 %v562
    %v1368 = vunpack.c.l.b16 %v563
    %v1369 = vunpack.c.h.b16 %v563
    %v1370 = vunpack.c.l.b16 %v564
    %v1371 = vunpack.c.h.b16 %v564
    %v1372 = vunpack.c.l.b16 %v565
    %v1373 = vunpack.c.h.b16 %v565
    %v1374 = vunpack.c.l.b16 %v566
    %v1375 = vunpack.c.h.b16 %v566
    %v1376 = vunpack.c.l.b16 %v567
    %v1377 = vunpack.c.h.b16 %v567
    %v1378 = vunpack.c.l.b16 %v568
    %v1379 = vunpack.c.h.b16 %v568
    %v1380 = vunpack.c.l.b16 %v569
    %v1381 = vunpack.c.h.b16 %v569
    %v1382 = vunpack.c.l.b16 %v570
    %v1383 = vunpack.c.h.b16 %v570
    %v1384 = vunpack.c.l.b16 %v571
    %v1385 = vunpack.c.h.b16 %v571
    %v1386 = vunpack.c.l.b16 %v572
    %v1387 = vunpack.c.h.b16 %v572
    %v1388 = vunpack.c.l.b16 %v573
    %v1389 = vunpack.c.h.b16 %v573
    %v1390 = vunpack.c.l.b16 %v574
    %v1391 = vunpack.c.h.b16 %v574
    %v1392 = vunpack.c.l.b16 %v575
    %v1393 = vunpack.c.h.b16 %v575
    %v1394 = vunpack.c.l.b16 %v576
    %v1395 = vunpack.c.h.b16 %v576
    %v1396 = vunpack.c.l.b16 %v577
    %v1397 = vunpack.c.h.b16 %v577
    %v1398 = vunpack.c.l.b16 %v578
    %v1399 = vunpack.c.h.b16 %v578
    %v1400 = vunpack.c.l.b16 %v579
    %v1401 = vunpack.c.h.b16 %v579
    %v1402 = vunpack.c.l.b16 %v580
    %v1403 = vunpack.c.h.b16 %v580
    %v1404 = vunpack.c.l.b16 %v581
    %v1405 = vunpack.c.h.b16 %v581
    %v1406 = vunpack.c.l.b16 %v582
    %v1407 = vunpack.c.h.b16 %v582
    %v1408 = vunpack.c.l.b16 %v583
    %v1409 = vunpack.c.h.b16 %v583
    %v1410 = vunpack.c.l.b16 %v584
    %v1411 = vunpack.c.h.b16 %v584
    %v1412 = vunpack.c.l.b16 %v585
    %v1413 = vunpack.c.h.b16 %v585
    %v1414 = vunpack.c.l.b16 %v586
    %v1415 = vunpack.c.h.b16 %v586
    %v1416 = vunpack.c.l.b16 %v587
    %v1417 = vunpack.c.h.b16 %v587
    %v1418 = vunpack.c.l.b16 %v588
    %v1419 = vunpack.c.h.b16 %v588
    %v1420 = vunpack.c.l.b16 %v589
    %v1421 = vunpack.c.h.b16 %v589
    %v1422 = vunpack.c.l.b16 %v590
    %v1423 = vunpack.c.h.b16 %v590
    %v1424 = vunpack.c.l.b16 %v591
    %v1425 = vunpack.c.h.b16 %v591
    %v1426 = vunpack.c.l.b16 %v592
    %v1427 = vunpack.c.h.b16 %v592
    %v1428 = vunpack.c.l.b16 %v593
    %v1429 = vunpack.c.h.b16 %v593
    %v1430 = vunpack.c.l.b16 %v594
    %v1431 = vunpack.c.h.b16 %v594
    %v1432 = vunpack.c.l.b16 %v595
    %v1433 = vunpack.c.h.b16 %v595
    %v1434 = vunpack.c.l.b16 %v596
    %v1435 = vunpack.c.h.b16 %v596
    %v1436 = vunpack.c.l.b16 %v597
    %v1437 = vunpack.c.h.b16 %v597
    %v1438 = vunpack.c.l.b16 %v598
    %v1439 = vunpack.c.h.b16 %v598
    %v1440 = vunpack.c.l.b16 %v599
    %v1441 = vunpack.c.h.b16 %v599
    %v1442 = vunpack.c.l.b16 %v600
    %v1443 = vunpack.c.h.b16 %v600
    %v1444 = vunpack.c.l.b16 %v601
    %v1445 = vunpack.c.h.b16 %v601
    %v1446 = vunpack.c.l.b16 %v602
    %v1447 = vunpack.c.h.b16 %v602
    %v1448 = vunpack.c.l.b16 %v603
    %v1449 = vunpack.c.h.b16 %v603
    %v1450 = vunpack.c.l.b16 %v604
    %v1451 = vunpack.c.h.b16 %v604
    %v1452 = vunpack.c.l.b16 %v605
    %v1453 = vunpack.c.h.b16 %v605
    %v1454 = vunpack.c.l.b16 %v606
    %v1455 = vunpack.c.h.b16 %v606
    %v1456 = vunpack.c.l.b16 %v607
    %v1457 = vunpack.c.h.b16 %v607
    %v1458 = vunpack.c.l.b16 %v608
    %v1459 = vunpack.c.h.b16 %v608
    %v1460 = vunpack.c.l.b16 %v609
    %v1461 = vunpack.c.h.b16 %v609
    %v1462 = vunpack.c.l.b16 %v610
    %v1463 = vunpack.c.h.b16 %v610
    %v1464 = vunpack.c.l.b16 %v611
    %v1465 = vunpack.c.h.b16 %v611
    %v1466 = vunpack.c.l.b16 %v612
    %v1467 = vunpack.c.h.b16 %v612
    %v1468 = vunpack.c.l.b16 %v613
    %v1469 = vunpack.c.h.b16 %v613
    %v1470 = vunpack.c.l.b16 %v614
    %v1471 = vunpack.c.h.b16 %v614
    %v1472 = vunpack.c.l.b16 %v615
    %v1473 = vunpack.c.h.b16 %v615
    %v1474 = vunpack.c.l.b16 %v616
    %v1475 = vunpack.c.h.b16 %v616
    %v1476 = vunpack.c.l.b16 %v617
    %v1477 = vunpack.c.h.b16 %v617
    %v1478 = vunpack.c.l.b16 %v618
    %v1479 = vunpack.c.h.b16 %v618
    %v1480 = vunpack.c.l.b16 %v619
    %v1481 = vunpack.c.h.b16 %v619
    %v1482 = vunpack.c.l.b16 %v620
    %v1483 = vunpack.c.h.b16 %v620
    %v1484 = vunpack.c.l.b16 %v621
    %v1485 = vunpack.c.h.b16 %v621
    %v1486 = vunpack.c.l.b16 %v622
    %v1487 = vunpack.c.h.b16 %v622
    %v1488 = vunpack.c.l.b16 %v623
    %v1489 = vunpack.c.h.b16 %v623
    %v1490 = vunpack.c.l.b16 %v624
    %v1491 = vunpack.c.h.b16 %v624
    %v1492 = vunpack.c.l.b16 %v625
    %v1493 = vunpack.c.h.b16 %v625
    %v1494 = vunpack.c.l.b16 %v626
    %v1495 = vunpack.c.h.b16 %v626
    %v1496 = vunpack.c.l.b16 %v627
    %v1497 = vunpack.c.h.b16 %v627
    %v1498 = vunpack.c.l.b16 %v628
    %v1499 = vunpack.c.h.b16 %v628
    %v1500 = vunpack.c.l.b16 %v629
    %v1501 = vunpack.c.h.b16 %v629
    %v1502 = vunpack.c.l.b16 %v630
    %v1503 = vunpack.c.h.b16 %v630
    %v1504 = vunpack.c.l.b16 %v631
    %v1505 = vunpack.c.h.b16 %v631
    %v1506 = vunpack.c.l.b16 %v632
    %v1507 = vunpack.c.h.b16 %v632
    %v1508 = vunpack.c.l.b16 %v633
    %v1509 = vunpack.c.h.b16 %v633
    %v1510 = vunpack.c.l.b16 %v634
    %v1511 = vunpack.c.h.b16 %v634
    %v1512 = vunpack.c.l.b16 %v635
    %v1513 = vunpack.c.h.b16 %v635
    %v1514 = vunpack.c.l.b16 %v636
    %v1515 = vunpack.c.h.b16 %v636
    %v1516 = vunpack.c.l.b16 %v637
    %v1517 = vunpack.c.h.b16 %v637
    %v1518 = vunpack.c.l.b16 %v638
    %v1519 = vunpack.c.h.b16 %v638
    %v1520 = vunpack.c.l.b16 %v639
    %v1521 = vunpack.c.h.b16 %v639
    %v1522 = vunpack.c.l.b16 %v640
    %v1523 = vunpack.c.h.b16 %v640
    %v1524 = vunpack.c.l.b16 %v641
    %v1525 = vunpack.c.h.b16 %v641
    %v1526 = vunpack.c.l.b16 %v642
    %v1527 = vunpack.c.h.b16 %v642
    %v1528 = vunpack.c.l.b16 %v643
    %v1529 = vunpack.c.h.b16 %v643
    %v1530 = vunpack.c.l.b16 %v644
    %v1531 = vunpack.c.h.b16 %v644
    %v1532 = vunpack.c.l.b16 %v645
    %v1533 = vunpack.c.h.b16 %v645
    %v1534 = vunpack.c.l.b16 %v646
    %v1535 = vunpack.c.h.b16 %v646
    %v1536 = vunpack.c.l.b16 %v647
    %v1537 = vunpack.c.h.b16 %v647
    %v1538 = vunpack.c.l.b16 %v648
    %v1539 = vunpack.c.h.b16 %v648
    %v1540 = vunpack.c.l.b16 %v649
    %v1541 = vunpack.c.h.b16 %v649
    %v1542 = vunpack.c.l.b16 %v650
    %v1543 = vunpack.c.h.b16 %v650
    %v1544 = vunpack.c.l.b16 %v651
    %v1545 = vunpack.c.h.b16 %v651
    %v1546 = vunpack.c.l.b16 %v652
    %v1547 = vunpack.c.h.b16 %v652
    %v1548 = vunpack.c.l.b16 %v653
    %v1549 = vunpack.c.h.b16 %v653
    %v1550 = vunpack.c.l.b16 %v654
    %v1551 = vunpack.c.h.b16 %v654
    %v1552 = vunpack.c.l.b16 %v655
    %v1553 = vunpack.c.h.b16 %v655
    %v1554 = vunpack.c.l.b16 %v656
    %v1555 = vunpack.c.h.b16 %v656
    %v1556 = vunpack.c.l.b16 %v657
    %v1557 = vunpack.c.h.b16 %v657
    %v1558 = vunpack.c.l.b16 %v658
    %v1559 = vunpack.c.h.b16 %v658
    %v1560 = vunpack.c.l.b16 %v659
    %v1561 = vunpack.c.h.b16 %v659
    %v1562 = vunpack.c.l.b16 %v660
    %v1563 = vunpack.c.h.b16 %v660
    %v1564 = vunpack.c.l.b16 %v661
    %v1565 = vunpack.c.h.b16 %v661
    %v1566 = vunpack.c.l.b16 %v662
    %v1567 = vunpack.c.h.b16 %v662
    %v1568 = vunpack.c.l.b16 %v663
    %v1569 = vunpack.c.h.b16 %v663
    %v1570 = vunpack.c.l.b16 %v664
    %v1571 = vunpack.c.h.b16 %v664
    %v1572 = vunpack.c.l.b16 %v665
    %v1573 = vunpack.c.h.b16 %v665
    %v1574 = vunpack.c.l.b16 %v666
    %v1575 = vunpack.c.h.b16 %v666
    %v1576 = vunpack.c.l.b16 %v667
    %v1577 = vunpack.c.h.b16 %v667
    %v1578 = vunpack.c.l.b16 %v668
    %v1579 = vunpack.c.h.b16 %v668
    %v1580 = vunpack.c.l.b16 %v669
    %v1581 = vunpack.c.h.b16 %v669
    %v1582 = vunpack.c.l.b16 %v670
    %v1583 = vunpack.c.h.b16 %v670
    %v1584 = vunpack.c.l.b16 %v671
    %v1585 = vunpack.c.h.b16 %v671
    %v1586 = vunpack.c.l.b16 %v672
    %v1587 = vunpack.c.h.b16 %v672
    %v1588 = vunpack.c.l.b16 %v673
    %v1589 = vunpack.c.h.b16 %v673
    %v1590 = vunpack.c.l.b16 %v674
    %v1591 = vunpack.c.h.b16 %v674
    %v1592 = vunpack.c.l.b16 %v675
    %v1593 = vunpack.c.h.b16 %v675
    %v1594 = vunpack.c.l.b16 %v676
    %v1595 = vunpack.c.h.b16 %v676
    %v1596 = vunpack.c.l.b16 %v677
    %v1597 = vunpack.c.h.b16 %v677
    %v1598 = vunpack.c.l.b16 %v678
    %v1599 = vunpack.c.h.b16 %v678
    %v1600 = vunpack.c.l.b16 %v679
    %v1601 = vunpack.c.h.b16 %v679
    %v1602 = vunpack.c.l.b16 %v680
    %v1603 = vunpack.c.h.b16 %v680
    %v1604 = vunpack.c.l.b16 %v681
    %v1605 = vunpack.c.h.b16 %v681
    %v1606 = vunpack.c.l.b16 %v682
    %v1607 = vunpack.c.h.b16 %v682
    %v1608 = vunpack.c.l.b16 %v683
    %v1609 = vunpack.c.h.b16 %v683
    %v1610 = vunpack.c.l.b16 %v684
    %v1611 = vunpack.c.h.b16 %v684
    %v1612 = vunpack.c.l.b16 %v685
    %v1613 = vunpack.c.h.b16 %v685
    %v1614 = vunpack.c.l.b16 %v686
    %v1615 = vunpack.c.h.b16 %v686
    %v1616 = vunpack.c.l.b16 %v687
    %v1617 = vunpack.c.h.b16 %v687
    %v1618 = vunpack.c.l.b16 %v688
    %v1619 = vunpack.c.h.b16 %v688
    %v1620 = vunpack.c.l.b16 %v689
    %v1621 = vunpack.c.h.b16 %v689
    %v1622 = vunpack.c.l.b16 %v690
    %v1623 = vunpack.c.h.b16 %v690
    %v1624 = vunpack.c.l.b16 %v691
    %v1625 = vunpack.c.h.b16 %v691
    %v1626 = vunpack.c.l.b16 %v692
    %v1627 = vunpack.c.h.b16 %v692
    %v1628 = vunpack.c.l.b16 %v693
    %v1629 = vunpack.c.h.b16 %v693
    %v1630 = vunpack.c.l.b16 %v694
    %v1631 = vunpack.c.h.b16 %v694
    %v1632 = vunpack.c.l.b16 %v695
    %v1633 = vunpack.c.h.b16 %v695
    %v1634 = vunpack.c.l.b16 %v696
    %v1635 = vunpack.c.h.b16 %v696
    %v1636 = vunpack.c.l.b16 %v697
    %v1637 = vunpack.c.h.b16 %v697
    %v1638 = vunpack.c.l.b16 %v698
    %v1639 = vunpack.c.h.b16 %v698
    %v1640 = vunpack.c.l.b16 %v699
    %v1641 = vunpack.c.h.b16 %v699
    %v1642 = vunpack.c.l.b16 %v700
    %v1643 = vunpack.c.h.b16 %v700
    %v1644 = vunpack.c.l.b16 %v701
    %v1645 = vunpack.c.h.b16 %v701
    %v1646 = vunpack.c.l.b16 %v702
    %v1647 = vunpack.c.h.b16 %v702
    %v1648 = vunpack.c.l.b16 %v703
    %v1649 = vunpack.c.h.b16 %v703
    %v1650 = vunpack.c.l.b16 %v704
    %v1651 = vunpack.c.h.b16 %v704
    %v1652 = vunpack.c.l.b16 %v705
    %v1653 = vunpack.c.h.b16 %v705
    %v1654 = vunpack.c.l.b16 %v706
    %v1655 = vunpack.c.h.b16 %v706
    %v1656 = vunpack.c.l.b16 %v707
    %v1657 = vunpack.c.h.b16 %v707
    %v1658 = vunpack.c.l.b16 %v708
    %v1659 = vunpack.c.h.b16 %v708
    %v1660 = vunpack.c.l.b16 %v709
    %v1661 = vunpack.c.h.b16 %v709
    %v1662 = vunpack.c.l.b16 %v710
    %v1663 = vunpack.c.h.b16 %v710
    %v1664 = vunpack.c.l.b16 %v711
    %v1665 = vunpack.c.h.b16 %v711
    %v1666 = vunpack.c.l.b16 %v712
    %v1667 = vunpack.c.h.b16 %v712
    %v1668 = vunpack.c.l.b16 %v713
    %v1669 = vunpack.c.h.b16 %v713
    %v1670 = vunpack.c.l.b16 %v714
    %v1671 = vunpack.c.h.b16 %v714
    %v1672 = vunpack.c.l.b16 %v715
    %v1673 = vunpack.c.h.b16 %v715
    %v1674 = vunpack.c.l.b16 %v716
    %v1675 = vunpack.c.h.b16 %v716
    %v1676 = vunpack.c.l.b16 %v717
    %v1677 = vunpack.c.h.b16 %v717
    %v1678 = vunpack.c.l.b16 %v718
    %v1679 = vunpack.c.h.b16 %v718
    %v1680 = vunpack.c.l.b16 %v719
    %v1681 = vunpack.c.h.b16 %v719
    %v1682 = vunpack.c.l.b16 %v720
    %v1683 = vunpack.c.h.b16 %v720
    %v1684 = vunpack.c.l.b16 %v721
    %v1685 = vunpack.c.h.b16 %v721
    %v1686 = vunpack.c.l.b16 %v722
    %v1687 = vunpack.c.h.b16 %v722
    %v1688 = vunpack.c.l.b16 %v723
    %v1689 = vunpack.c.h.b16 %v723
    %v1690 = vunpack.c.l.b16 %v724
    %v1691 = vunpack.c.h.b16 %v724
    %v1692 = vunpack.c.l.b16 %v725
    %v1693 = vunpack.c.h.b16 %v725
    %v1694 = vunpack.c.l.b16 %v726
    %v1695 = vunpack.c.h.b16 %v726
    %v1696 = vunpack.c.l.b16 %v727
    %v1697 = vunpack.c.h.b16 %v727
    %v1698 = vunpack.c.l.b16 %v728
    %v1699 = vunpack.c.h.b16 %v728
    %v1700 = vunpack.c.l.b16 %v729
    %v1701 = vunpack.c.h.b16 %v729
    %v1702 = vunpack.c.l.b16 %v730
    %v1703 = vunpack.c.h.b16 %v730
    %v1704 = vunpack.c.l.b16 %v731
    %v1705 = vunpack.c.h.b16 %v731
    %v1706 = vunpack.c.l.b16 %v732
    %v1707 = vunpack.c.h.b16 %v732
    %v1708 = vunpack.c.l.b16 %v733
    %v1709 = vunpack.c.h.b16 %v733
    %v1710 = vunpack.c.l.b16 %v734
    %v1711 = vunpack.c.h.b16 %v734
    %v1712 = vunpack.c.l.b16 %v735
    %v1713 = vunpack.c.h.b16 %v735
    %v1714 = vunpack.c.l.b16 %v736
    %v1715 = vunpack.c.h.b16 %v736
    %v1716 = vunpack.c.l.b16 %v737
    %v1717 = vunpack.c.h.b16 %v737
    %v1718 = vunpack.c.l.b16 %v738
    %v1719 = vunpack.c.h.b16 %v738
    %v1720 = vunpack.c.l.b16 %v739
    %v1721 = vunpack.c.h.b16 %v739
    %v1722 = vunpack.c.l.b16 %v740
    %v1723 = vunpack.c.h.b16 %v740
    %v1724 = vunpack.c.l.b16 %v741
    %v1725 = vunpack.c.h.b16 %v741
    %v1726 = vunpack.c.l.b16 %v742
    %v1727 = vunpack.c.h.b16 %v742
    %v1728 = vunpack.c.l.b16 %v743
    %v1729 = vunpack.c.h.b16 %v743
    %v1730 = vunpack.c.l.b16 %v744
    %v1731 = vunpack.c.h.b16 %v744
    %v1732 = vunpack.c.l.b16 %v745
    %v1733 = vunpack.c.h.b16 %v745
    %v1734 = vunpack.c.l.b16 %v746
    %v1735 = vunpack.c.h.b16 %v746
    %v1736 = vunpack.c.l.b16 %v747
    %v1737 = vunpack.c.h.b16 %v747
    %v1738 = vunpack.c.l.b16 %v748
    %v1739 = vunpack.c.h.b16 %v748
    %v1740 = vunpack.c.l.b16 %v749
    %v1741 = vunpack.c.h.b16 %v749
    %v1742 = vunpack.c.l.b16 %v750
    %v1743 = vunpack.c.h.b16 %v750
    %v1744 = vunpack.c.l.b16 %v751
    %v1745 = vunpack.c.h.b16 %v751
    %v1746 = vunpack.c.l.b16 %v752
    %v1747 = vunpack.c.h.b16 %v752
    %v1748 = vunpack.c.l.b16 %v753
    %v1749 = vunpack.c.h.b16 %v753
    %v1750 = vunpack.c.l.b16 %v754
    %v1751 = vunpack.c.h.b16 %v754
    %v1752 = vunpack.c.l.b16 %v755
    %v1753 = vunpack.c.h.b16 %v755
    %v1754 = vunpack.c.l.b16 %v756
    %v1755 = vunpack.c.h.b16 %v756
    %v1756 = vunpack.c.l.b16 %v757
    %v1757 = vunpack.c.h.b16 %v757
    %v1758 = vunpack.c.l.b16 %v758
    %v1759 = vunpack.c.h.b16 %v758
    %v1760 = vunpack.c.l.b16 %v759
    %v1761 = vunpack.c.h.b16 %v759
    %v1762 = vpack.c.b16 %v1130, %v1122
    %v1763 = vpack.c.b16 %v1131, %v1123
    %v1764 = vpack.c.b16 %v1132, %v1124
    %v1765 = vpack.c.b16 %v1133, %v1125
    %v1766 = vpack.c.b16 %v1134, %v1126
    %v1767 = vpack.c.b16 %v1135, %v1127
    %v1768 = vpack.c.b16 %v1136, %v1128
    %v1769 = vpack.c.b16 %v1137, %v1129
    %v1770 = vpack.c.b16 %v1146, %v1138
    %v1771 = vpack.c.b16 %v1147, %v1139
    %v1772 = vpack.c.b16 %v1148, %v1140
    %v1773 = vpack.c.b16 %v1149, %v1141
    %v1774 = vpack.c.b16 %v1150, %v1142
    %v1775 = vpack.c.b16 %v1151, %v1143
    %v1776 = vpack.c.b16 %v1152, %v1144
    %v1777 = vpack.c.b16 %v1153, %v1145
    %v1778 = vpack.c.b16 %v1162, %v1154
    %v1779 = vpack.c.b16 %v1163, %v1155
    %v1780 = vpack.c.b16 %v1164, %v1156
    %v1781 = vpack.c.b16 %v1165, %v1157
    %v1782 = vpack.c.b16 %v1166, %v1158
    %v1783 = vpack.c.b16 %v1167, %v1159
    %v1784 = vpack.c.b16 %v1168, %v1160
    %v1785 = vpack.c.b16 %v1169, %v1161
    %v1786 = vpack.c.b16 %v1178, %v1170
    %v1787 = vpack.c.b16 %v1179, %v1171
    %v1788 = vpack.c.b16 %v1180, %v1172
    %v1789 = vpack.c.b16 %v1181, %v1173
    %v1790 = vpack.c.b16 %v1182, %v1174
    %v1791 = vpack.c.b16 %v1183, %v1175
    %v1792 = vpack.c.b16 %v1184, %v1176
    %v1793 = vpack.c.b16 %v1185, %v1177
    %v1794 = vpack.c.b16 %v1194, %v1186
    %v1795 = vpack.c.b16 %v1195, %v1187
    %v1796 = vpack.c.b16 %v1196, %v1188
    %v1797 = vpack.c.b16 %v1197, %v1189
    %v1798 = vpack.c.b16 %v1198, %v1190
    %v1799 = vpack.c.b16 %v1199, %v1191
    %v1800 = vpack.c.b16 %v1200, %v1192
    %v1801 = vpack.c.b16 %v1201, %v1193
    %v1802 = vpack.c.b16 %v1210, %v1202
    %v1803 = vpack.c.b16 %v1211, %v1203
    %v1804 = vpack.c.b16 %v1212, %v1204
    %v1805 = vpack.c.b16 %v1213, %v1205
    %v1806 = vpack.c.b16 %v1214, %v1206
    %v1807 = vpack.c.b16 %v1215, %v1207
    %v1808 = vpack.c.b16 %v1216, %v1208
    %v1809 = vpack.c.b16 %v1217, %v1209
    %v1810 = vpack.c.b16 %v1226, %v1218
    %v1811 = vpack.c.b16 %v1227, %v1219
    %v1812 = vpack.c.b16 %v1228, %v1220
    %v1813 = vpack.c.b16 %v1229, %v1221
    %v1814 = vpack.c.b16 %v1230, %v1222
    %v1815 = vpack.c.b16 %v1231, %v1223
    %v1816 = vpack.c.b16 %v1232, %v1224
    %v1817 = vpack.c.b16 %v1233, %v1225
    %v1818 = vpack.c.b16 %v1242, %v1234
    %v1819 = vpack.c.b16 %v1243, %v1235
    %v1820 = vpack.c.b16 %v1244, %v1236
    %v1821 = vpack.c.b16 %v1245, %v1237
    %v1822 = vpack.c.b16 %v1246, %v1238
    %v1823 = vpack.c.b16 %v1247, %v1239
    %v1824 = vpack.c.b16 %v1248, %v1240
    %v1825 = vpack.c.b16 %v1249, %v1241
    %v1826 = vpack.c.b16 %v1258, %v1250
    %v1827 = vpack.c.b16 %v1259, %v1251
    %v1828 = vpack.c.b16 %v1260, %v1252
    %v1829 = vpack.c.b16 %v1261, %v1253
    %v1830 = vpack.c.b16 %v1262, %v1254
    %v1831 = vpack.c.b16 %v1263, %v1255
    %v1832 = vpack.c.b16 %v1264, %v1256
    %v1833 = vpack.c.b16 %v1265, %v1257
    %v1834 = vpack.c.b16 %v1274, %v1266
    %v1835 = vpack.c.b16 %v1275, %v1267
    %v1836 = vpack.c.b16 %v1276, %v1268
    %v1837 = vpack.c.b16 %v1277, %v1269
    %v1838 = vpack.c.b16 %v1278, %v1270
    %v1839 = vpack.c.b16 %v1279, %v1271
    %v1840 = vpack.c.b16 %v1280, %v1272
    %v1841 = vpack.c.b16 %v1281, %v1273
    %v1842 = vpack.c.b16 %v1290, %v1282
    %v1843 = vpack.c.b16 %v1291, %v1283
    %v1844 = vpack.c.b16 %v1292, %v1284
    %v1845 = vpack.c.b16 %v1293, %v1285
    %v1846 = vpack.c.b16 %v1294, %v1286
    %v1847 = vpack.c.b16 %v1295, %v1287
    %v1848 = vpack.c.b16 %v1296, %v1288
    %v1849 = vpack.c.b16 %v1297, %v1289
    %v1850 = vpack.c.b16 %v1306, %v1298
    %v1851 = vpack.c.b16 %v1307, %v1299
    %v1852 = vpack.c.b16 %v1308, %v1300
    %v1853 = vpack.c.b16 %v1309, %v1301
    %v1854 = vpack.c.b16 %v1310, %v1302
    %v1855 = vpack.c.b16 %v1311, %v1303
    %v1856 = vpack.c.b16 %v1312, %v1304
    %v1857 = vpack.c.b16 %v1313, %v1305
    %v1858 = vpack.c.b16 %v1322, %v1314
    %v1859 = vpack.c.b16 %v1323, %v1315
    %v1860 = vpack.c.b16 %v1324, %v1316
    %v1861 = vpack.c.b16 %v1325, %v1317
    %v1862 = vpack.c.b16 %v1326, %v1318
    %v1863 = vpack.c.b16 %v1327, %v1319
    %v1864 = vpack.c.b16 %v1328, %v1320
    %v1865 = vpack.c.b16 %v1329, %v1321
    %v1866 = vpack.c.b16 %v1338, %v1330
    %v1867 = vpack.c.b16 %v1339, %v1331
    %v1868 = vpack.c.b16 %v1340, %v1332
    %v1869 = vpack.c.b16 %v1341, %v1333
    %v1870 = vpack.c.b16 %v1342, %v1334
    %v1871 = vpack.c.b16 %v1343, %v1335
    %v1872 = vpack.c.b16 %v1344, %v1336
    %v1873 = vpack.c.b16 %v1345, %v1337
    %v1874 = vpack.c.b16 %v1354, %v1346
    %v1875 = vpack.c.b16 %v1355, %v1347
    %v1876 = vpack.c.b16 %v1356, %v1348
    %v1877 = vpack.c.b16 %v1357, %v1349
    %v1878 = vpack.c.b16 %v1358, %v1350
    %v1879 = vpack.c.b16 %v1359, %v1351
    %v1880 = vpack.c.b16 %v1360, %v1352
    %v1881 = vpack.c.b16 %v1361, %v1353
    %v1882 = vpack.c.b16 %v1370, %v1362
    %v1883 = vpack.c.b16 %v1371, %v1363
    %v1884 = vpack.c.b16 %v1372, %v1364
    %v1885 = vpack.c.b16 %v1373, %v1365
    %v1886 = vpack.c.b16 %v1374, %v1366
    %v1887 = vpack.c.b16 %v1375, %v1367
    %v1888 = vpack.c.b16 %v1376, %v1368
    %v1889 = vpack.c.b16 %v1377, %v1369
    %v1890 = vpack.c.b16 %v1386, %v1378
    %v1891 = vpack.c.b16 %v1387, %v1379
    %v1892 = vpack.c.b16 %v1388, %v1380
    %v1893 = vpack.c.b16 %v1389, %v1381
    %v1894 = vpack.c.b16 %v1390, %v1382
    %v1895 = vpack.c.b16 %v1391, %v1383
    %v1896 = vpack.c.b16 %v1392, %v1384
    %v1897 = vpack.c.b16 %v1393, %v1385
    %v1898 = vpack.c.b16 %v1402, %v1394
    %v1899 = vpack.c.b16 %v1403, %v1395
    %v1900 = vpack.c.b16 %v1404, %v1396
    %v1901 = vpack.c.b16 %v1405, %v1397
    %v1902 = vpack.c.b16 %v1406, %v1398
    %v1903 = vpack.c.b16 %v1407, %v1399
    %v1904 = vpack.c.b16 %v1408, %v1400
    %v1905 = vpack.c.b16 %v1409, %v1401
    %v1906 = vpack.c.b16 %v1418, %v1410
    %v1907 = vpack.c.b16 %v1419, %v1411
    %v1908 = vpack.c.b16 %v1420, %v1412
    %v1909 = vpack.c.b16 %v1421, %v1413
    %v1910 = vpack.c.b16 %v1422, %v1414
    %v1911 = vpack.c.b16 %v1423, %v1415
    %v1912 = vpack.c.b16 %v1424, %v1416
    %v1913 = vpack.c.b16 %v1425, %v1417
    %v1914 = vpack.c.b16 %v1434, %v1426
    %v1915 = vpack.c.b16 %v1435, %v1427
    %v1916 = vpack.c.b16 %v1436, %v1428
    %v1917 = vpack.c.b16 %v1437, %v1429
    %v1918 = vpack.c.b16 %v1438, %v1430
    %v1919 = vpack.c.b16 %v1439, %v1431
    %v1920 = vpack.c.b16 %v1440, %v1432
    %v1921 = vpack.c.b16 %v1441, %v1433
    %v1922 = vpack.c.b16 %v1450, %v1442
    %v1923 = vpack.c.b16 %v1451, %v1443
    %v1924 = vpack.c.b16 %v1452, %v1444
    %v1925 = vpack.c.b16 %v1453, %v1445
    %v1926 = vpack.c.b16 %v1454, %v1446
    %v1927 = vpack.c.b16 %v1455, %v1447
    %v1928 = vpack.c.b16 %v1456, %v1448
    %v1929 = vpack.c.b16 %v1457, %v1449
    %v1930 = vpack.c.b16 %v1466, %v1458
    %v1931 = vpack.c.b16 %v1467, %v1459
    %v1932 = vpack.c.b16 %v1468, %v1460
    %v1933 = vpack.c.b16 %v1469, %v1461
    %v1934 = vpack.c.b16 %v1470, %v1462
    %v1935 = vpack.c.b16 %v1471, %v1463
    %v1936 = vpack.c.b16 %v1472, %v1464
    %v1937 = vpack.c.b16 %v1473, %v1465
    %v1938 = vpack.c.b16 %v1482, %v1474
    %v1939 = vpack.c.b16 %v1483, %v1475
    %v1940 = vpack.c.b16 %v1484, %v1476
    %v1941 = vpack.c.b16 %v1485, %v1477
    %v1942 = vpack.c.b16 %v1486, %v1478
    %v1943 = vpack.c.b16 %v1487, %v1479
    %v1944 = vpack.c.b16 %v1488, %v1480
    %v1945 = vpack.c.b16 %v1489, %v1481
    %v1946 = vpack.c.b16 %v1498, %v1490
    %v1947 = vpack.c.b16 %v1499, %v1491
    %v1948 = vpack.c.b16 %v1500, %v1492
    %v1949 = vpack.c.b16 %v1501, %v1493
    %v1950 = vpack.c.b16 %v1502, %v1494
    %v1951 = vpack.c.b16 %v1503, %v1495
    %v1952 = vpack.c.b16 %v1504, %v1496
    %v1953 = vpack.c.b16 %v1505, %v1497
    %v1954 = vpack.c.b16 %v1514, %v1506
    %v1955 = vpack.c.b16 %v1515, %v1507
    %v1956 = vpack.c.b16 %v1516, %v1508
    %v1957 = vpack.c.b16 %v1517, %v1509
    %v1958 = vpack.c.b16 %v1518, %v1510
    %v1959 = vpack.c.b16 %v1519, %v1511
    %v1960 = vpack.c.b16 %v1520, %v1512
    %v1961 = vpack.c.b16 %v1521, %v1513
    %v1962 = vpack.c.b16 %v1530, %v1522
    %v1963 = vpack.c.b16 %v1531, %v1523
    %v1964 = vpack.c.b16 %v1532, %v1524
    %v1965 = vpack.c.b16 %v1533, %v1525
    %v1966 = vpack.c.b16 %v1534, %v1526
    %v1967 = vpack.c.b16 %v1535, %v1527
    %v1968 = vpack.c.b16 %v1536, %v1528
    %v1969 = vpack.c.b16 %v1537, %v1529
    %v1970 = vpack.c.b16 %v1546, %v1538
    %v1971 = vpack.c.b16 %v1547, %v1539
    %v1972 = vpack.c.b16 %v1548, %v1540
    %v1973 = vpack.c.b16 %v1549, %v1541
    %v1974 = vpack.c.b16 %v1550, %v1542
    %v1975 = vpack.c.b16 %v1551, %v1543
    %v1976 = vpack.c.b16 %v1552, %v1544
    %v1977 = vpack.c.b16 %v1553, %v1545
    %v1978 = vpack.c.b16 %v1562, %v1554
    %v1979 = vpack.c.b16 %v1563, %v1555
    %v1980 = vpack.c.b16 %v1564, %v1556
    %v1981 = vpack.c.b16 %v1565, %v1557
    %v1982 = vpack.c.b16 %v1566, %v1558
    %v1983 = vpack.c.b16 %v1567, %v1559
    %v1984 = vpack.c.b16 %v1568, %v1560
    %v1985 = vpack.c.b16 %v1569, %v1561
    %v1986 = vpack.c.b16 %v1578, %v1570
    %v1987 = vpack.c.b16 %v1579, %v1571
    %v1988 = vpack.c.b16 %v1580, %v1572
    %v1989 = vpack.c.b16 %v1581, %v1573
    %v1990 = vpack.c.b16 %v1582, %v1574
    %v1991 = vpack.c.b16 %v1583, %v1575
    %v1992 = vpack.c.b16 %v1584, %v1576
    %v1993 = vpack.c.b16 %v1585, %v1577
    %v1994 = vpack.c.b16 %v1594, %v1586
    %v1995 = vpack.c.b16 %v1595, %v1587
    %v1996 = vpack.c.b16 %v1596, %v1588
    %v1997 = vpack.c.b16 %v1597, %v1589
    %v1998 = vpack.c.b16 %v1598, %v1590
    %v1999 = vpack.c.b16 %v1599, %v1591
    %v2000 = vpack.c.b16 %v1600, %v1592
    %v2001 = vpack.c.b16 %v1601, %v1593
    %v2002 = vpack.c.b16 %v1610, %v1602
    %v2003 = vpack.c.b16 %v1611, %v1603
    %v2004 = vpack.c.b16 %v1612, %v1604
    %v2005 = vpack.c.b16 %v1613, %v1605
    %v2006 = vpack.c.b16 %v1614, %v1606
    %v2007 = vpack.c.b16 %v1615, %v1607
    %v2008 = vpack.c.b16 %v1616, %v1608
    %v2009 = vpack.c.b16 %v1617, %v1609
    %v2010 = vpack.c.b16 %v1626, %v1618
    %v2011 = vpack.c.b16 %v1627, %v1619
    %v2012 = vpack.c.b16 %v1628, %v1620
    %v2013 = vpack.c.b16 %v1629, %v1621
    %v2014 = vpack.c.b16 %v1630, %v1622
    %v2015 = vpack.c.b16 %v1631, %v1623
    %v2016 = vpack.c.b16 %v1632, %v1624
    %v2017 = vpack.c.b16 %v1633, %v1625
    %v2018 = vpack.c.b16 %v1642, %v1634
    %v2019 = vpack.c.b16 %v1643, %v1635
    %v2020 = vpack.c.b16 %v1644, %v1636
    %v2021 = vpack.c.b16 %v1645, %v1637
    %v2022 = vpack.c.b16 %v1646, %v1638
    %v2023 = vpack.c.b16 %v1647, %v1639
    %v2024 = vpack.c.b16 %v1648, %v1640
    %v2025 = vpack.c.b16 %v1649, %v1641
    %v2026 = vpack.c.b16 %v1658, %v1650
    %v2027 = vpack.c.b16 %v1659, %v1651
    %v2028 = vpack.c.b16 %v1660, %v1652
    %v2029 = vpack.c.b16 %v1661, %v1653
    %v2030 = vpack.c.b16 %v1662, %v1654
    %v2031 = vpack.c.b16 %v1663, %v1655
    %v2032 = vpack.c.b16 %v1664, %v1656
    %v2033 = vpack.c.b16 %v1665, %v1657
    %v2034 = vpack.c.b16 %v1674, %v1666
    %v2035 = vpack.c.b16 %v1675, %v1667
    %v2036 = vpack.c.b16 %v1676, %v1668
    %v2037 = vpack.c.b16 %v1677, %v1669
    %v2038 = vpack.c.b16 %v1678, %v1670
    %v2039 = vpack.c.b16 %v1679, %v1671
    %v2040 = vpack.c.b16 %v1680, %v1672
    %v2041 = vpack.c.b16 %v1681, %v1673
    %v2042 = vpack.c.b16 %v1690, %v1682
    %v2043 = vpack.c.b16 %v1691, %v1683
    %v2044 = vpack.c.b16 %v1692, %v1684
    %v2045 = vpack.c.b16 %v1693, %v1685
    %v2046 = vpack.c.b16 %v1694, %v1686
    %v2047 = vpack.c.b16 %v1695, %v1687
    %v2048 = vpack.c.b16 %v1696, %v1688
    %v2049 = vpack.c.b16 %v1697, %v1689
    %v2050 = vpack.c.b16 %v1706, %v1698
    %v2051 = vpack.c.b16 %v1707, %v1699
    %v2052 = vpack.c.b16 %v1708, %v1700
    %v2053 = vpack.c.b16 %v1709, %v1701
    %v2054 = vpack.c.b16 %v1710, %v1702
    %v2055 = vpack.c.b16 %v1711, %v1703
    %v2056 = vpack.c.b16 %v1712, %v1704
    %v2057 = vpack.c.b16 %v1713, %v1705
    %v2058 = vpack.c.b16 %v1722, %v1714
    %v2059 = vpack.c.b16 %v1723, %v1715
    %v2060 = vpack.c.b16 %v1724, %v1716
    %v2061 = vpack.c.b16 %v1725, %v1717
    %v2062 = vpack.c.b16 %v1726, %v1718
    %v2063 = vpack.c.b16 %v1727, %v1719
    %v2064 = vpack.c.b16 %v1728, %v1720
    %v2065 = vpack.c.b16 %v1729, %v1721
    %v2066 = vpack.c.b16 %v1738, %v1730
    %v2067 = vpack.c.b16 %v1739, %v1731
    %v2068 = vpack.c.b16 %v1740, %v1732
    %v2069 = vpack.c.b16 %v1741, %v1733
    %v2070 = vpack.c.b16 %v1742, %v1734
    %v2071 = vpack.c.b16 %v1743, %v1735
    %v2072 = vpack.c.b16 %v1744, %v1736
    %v2073 = vpack.c.b16 %v1745, %v1737
    %v2074 = vpack.c.b16 %v1754, %v1746
    %v2075 = vpack.c.b16 %v1755, %v1747
    %v2076 = vpack.c.b16 %v1756, %v1748
    %v2077 = vpack.c.b16 %v1757, %v1749
    %v2078 = vpack.c.b16 %v1758, %v1750
    %v2079 = vpack.c.b16 %v1759, %v1751
    %v2080 = vpack.c.b16 %v1760, %v1752
    %v2081 = vpack.c.b16 %v1761, %v1753
    %2402 = vmatprep.subr.bf16.mxu0 %v1819
    %2403 = vmatpush1.bf16.msra.mxu0 %v1818
    %2404 = vmatprep.subr.bf16.mxu0 %v1811
    %2405 = vmatpush1.bf16.msra.mxu0 %v1810
    %2406 = vmatprep.subr.bf16.mxu0 %v1803
    %2407 = vmatpush1.bf16.msra.mxu0 %v1802
    %2408 = vmatprep.subr.bf16.mxu0 %v1795
    %2409 = vmatpush1.bf16.msra.mxu0 %v1794
    %2410 = vmatprep.subr.bf16.mxu0 %v1787
    %2411 = vmatpush1.bf16.msra.mxu0 %v1786
    %2412 = vmatprep.subr.bf16.mxu0 %v1779
    %2413 = vmatpush1.bf16.msra.mxu0 %v1778
    %2414 = vmatprep.subr.bf16.mxu0 %v1771
    %2415 = vmatpush1.bf16.msra.mxu0 %v1770
    %2416 = vmatprep.subr.bf16.mxu0 %v1763
    %2417 = vmatpush1.bf16.msra.mxu0 %v1762
    %2418 = vmatprep.subr.bf16.mxu0 %v1883
    %2419 = vmatpush2.bf16.msra.mxu0 %v1882
    %2420 = vmatprep.subr.bf16.mxu0 %v1875
    %2421 = vmatpush2.bf16.msra.mxu0 %v1874
    %2422 = vmatprep.subr.bf16.mxu0 %v1867
    %2423 = vmatpush2.bf16.msra.mxu0 %v1866
    %2424 = vmatprep.subr.bf16.mxu0 %v1859
    %2425 = vmatpush2.bf16.msra.mxu0 %v1858
    %2426 = vmatprep.subr.bf16.mxu0 %v1851
    %2427 = vmatpush2.bf16.msra.mxu0 %v1850
    %2428 = vmatprep.subr.bf16.mxu0 %v1843
    %2429 = vmatpush2.bf16.msra.mxu0 %v1842
    %2430 = vmatprep.subr.bf16.mxu0 %v1835
    %2431 = vmatpush2.bf16.msra.mxu0 %v1834
    %2432 = vmatprep.subr.bf16.mxu0 %v1827
    %2433 = vmatpush2.bf16.msra.mxu0 %v1826
    %2434 = vmatprep.mubr.bf16.mxu0 %v401
    %2435 = vmatmul.mubr.bf16.gmra.mxu0 %v400
    %v2436 = vpop.f32.mrf.mxu0
    %v2437 = vadd.f32 %v765, %v2436
    %v2438 = vpop.f32.mrf.mxu0
    %v2439 = vadd.f32 %v769, %v2438
    %v2440 = vpop.f32.mrf.mxu0
    %v2441 = vadd.f32 %v765, %v2440
    %v2442 = vpop.f32.mrf.mxu0
    %v2443 = vadd.f32 %v769, %v2442
    %2444 = vmatprep.mubr.bf16.mxu0 %v406
    %2445 = vmatmul.mubr.bf16.gmra.mxu0 %v405
    %v2446 = vpop.f32.mrf.mxu0
    %v2447 = vadd.f32 %v765, %v2446
    %v2448 = vpop.f32.mrf.mxu0
    %v2449 = vadd.f32 %v769, %v2448
    %v2450 = vpop.f32.mrf.mxu0
    %v2451 = vadd.f32 %v765, %v2450
    %v2452 = vpop.f32.mrf.mxu0
    %v2453 = vadd.f32 %v769, %v2452
    %2454 = vmatprep.mubr.bf16.mxu0 %v411
    %2455 = vmatmul.mubr.bf16.gmra.mxu0 %v410
    %v2456 = vpop.f32.mrf.mxu0
    %v2457 = vadd.f32 %v765, %v2456
    %v2458 = vpop.f32.mrf.mxu0
    %v2459 = vadd.f32 %v769, %v2458
    %v2460 = vpop.f32.mrf.mxu0
    %v2461 = vadd.f32 %v765, %v2460
    %v2462 = vpop.f32.mrf.mxu0
    %v2463 = vadd.f32 %v769, %v2462
    %2464 = vmatprep.mubr.bf16.mxu0 %v416
    %2465 = vmatmul.mubr.bf16.gmra.mxu0 %v415
    %v2466 = vpop.f32.mrf.mxu0
    %v2467 = vadd.f32 %v765, %v2466
    %v2468 = vpop.f32.mrf.mxu0
    %v2469 = vadd.f32 %v769, %v2468
    %v2470 = vpop.f32.mrf.mxu0
    %v2471 = vadd.f32 %v765, %v2470
    %v2472 = vpop.f32.mrf.mxu0
    %v2473 = vadd.f32 %v769, %v2472
    %2474 = vmatprep.mubr.bf16.mxu0 %v421
    %2475 = vmatmul.mubr.bf16.gmra.mxu0 %v420
    %v2476 = vpop.f32.mrf.mxu0
    %v2477 = vadd.f32 %v765, %v2476
    %v2478 = vpop.f32.mrf.mxu0
    %v2479 = vadd.f32 %v769, %v2478
    %v2480 = vpop.f32.mrf.mxu0
    %v2481 = vadd.f32 %v765, %v2480
    %v2482 = vpop.f32.mrf.mxu0
    %v2483 = vadd.f32 %v769, %v2482
    %2484 = vmatprep.mubr.bf16.mxu0 %v426
    %2485 = vmatmul.mubr.bf16.gmra.mxu0 %v425
    %v2486 = vpop.f32.mrf.mxu0
    %v2487 = vadd.f32 %v765, %v2486
    %v2488 = vpop.f32.mrf.mxu0
    %v2489 = vadd.f32 %v769, %v2488
    %v2490 = vpop.f32.mrf.mxu0
    %v2491 = vadd.f32 %v765, %v2490
    %v2492 = vpop.f32.mrf.mxu0
    %v2493 = vadd.f32 %v769, %v2492
    %2494 = vmatprep.mubr.bf16.mxu0 %v431
    %2495 = vmatmul.mubr.bf16.gmra.mxu0 %v430
    %v2496 = vpop.f32.mrf.mxu0
    %v2497 = vadd.f32 %v765, %v2496
    %v2498 = vpop.f32.mrf.mxu0
    %v2499 = vadd.f32 %v769, %v2498
    %v2500 = vpop.f32.mrf.mxu0
    %v2501 = vadd.f32 %v765, %v2500
    %v2502 = vpop.f32.mrf.mxu0
    %v2503 = vadd.f32 %v769, %v2502
    %2504 = vmatprep.mubr.bf16.mxu0 %v436
    %2505 = vmatmul.mubr.bf16.gmra.mxu0 %v435
    %v2506 = vpop.f32.mrf.mxu0
    %v2507 = vadd.f32 %v765, %v2506
    %v2508 = vpop.f32.mrf.mxu0
    %v2509 = vadd.f32 %v769, %v2508
    %v2510 = vpop.f32.mrf.mxu0
    %v2511 = vadd.f32 %v765, %v2510
    %v2512 = vpop.f32.mrf.mxu0
    %v2513 = vadd.f32 %v769, %v2512
    %2514 = vdwg.mxu0
    %2515 = vmatprep.subr.bf16.mxu0 %v1947
    %2516 = vmatpush1.bf16.msra.mxu0 %v1946
    %2517 = vmatprep.subr.bf16.mxu0 %v1939
    %2518 = vmatpush1.bf16.msra.mxu0 %v1938
    %2519 = vmatprep.subr.bf16.mxu0 %v1931
    %2520 = vmatpush1.bf16.msra.mxu0 %v1930
    %2521 = vmatprep.subr.bf16.mxu0 %v1923
    %2522 = vmatpush1.bf16.msra.mxu0 %v1922
    %2523 = vmatprep.subr.bf16.mxu0 %v1915
    %2524 = vmatpush1.bf16.msra.mxu0 %v1914
    %2525 = vmatprep.subr.bf16.mxu0 %v1907
    %2526 = vmatpush1.bf16.msra.mxu0 %v1906
    %2527 = vmatprep.subr.bf16.mxu0 %v1899
    %2528 = vmatpush1.bf16.msra.mxu0 %v1898
    %2529 = vmatprep.subr.bf16.mxu0 %v1891
    %2530 = vmatpush1.bf16.msra.mxu0 %v1890
    %2531 = vmatprep.subr.bf16.mxu0 %v2011
    %2532 = vmatpush2.bf16.msra.mxu0 %v2010
    %2533 = vmatprep.subr.bf16.mxu0 %v2003
    %2534 = vmatpush2.bf16.msra.mxu0 %v2002
    %2535 = vmatprep.subr.bf16.mxu0 %v1995
    %2536 = vmatpush2.bf16.msra.mxu0 %v1994
    %2537 = vmatprep.subr.bf16.mxu0 %v1987
    %2538 = vmatpush2.bf16.msra.mxu0 %v1986
    %2539 = vmatprep.subr.bf16.mxu0 %v1979
    %2540 = vmatpush2.bf16.msra.mxu0 %v1978
    %2541 = vmatprep.subr.bf16.mxu0 %v1971
    %2542 = vmatpush2.bf16.msra.mxu0 %v1970
    %2543 = vmatprep.subr.bf16.mxu0 %v1963
    %2544 = vmatpush2.bf16.msra.mxu0 %v1962
    %2545 = vmatprep.subr.bf16.mxu0 %v1955
    %2546 = vmatpush2.bf16.msra.mxu0 %v1954
    %2547 = vmatprep.mubr.bf16.mxu0 %v403
    %2548 = vmatmul.mubr.bf16.gmra.mxu0 %v402
    %v2549 = vpop.f32.mrf.mxu0
    %v2550 = vadd.f32 %v2437, %v2549
    %v2551 = vpop.f32.mrf.mxu0
    %v2552 = vadd.f32 %v2439, %v2551
    %v2553 = vpop.f32.mrf.mxu0
    %v2554 = vadd.f32 %v2441, %v2553
    %v2555 = vpop.f32.mrf.mxu0
    %v2556 = vadd.f32 %v2443, %v2555
    %2557 = vmatprep.mubr.bf16.mxu0 %v408
    %2558 = vmatmul.mubr.bf16.gmra.mxu0 %v407
    %v2559 = vpop.f32.mrf.mxu0
    %v2560 = vadd.f32 %v2447, %v2559
    %v2561 = vpop.f32.mrf.mxu0
    %v2562 = vadd.f32 %v2449, %v2561
    %v2563 = vpop.f32.mrf.mxu0
    %v2564 = vadd.f32 %v2451, %v2563
    %v2565 = vpop.f32.mrf.mxu0
    %v2566 = vadd.f32 %v2453, %v2565
    %2567 = vmatprep.mubr.bf16.mxu0 %v413
    %2568 = vmatmul.mubr.bf16.gmra.mxu0 %v412
    %v2569 = vpop.f32.mrf.mxu0
    %v2570 = vadd.f32 %v2457, %v2569
    %v2571 = vpop.f32.mrf.mxu0
    %v2572 = vadd.f32 %v2459, %v2571
    %v2573 = vpop.f32.mrf.mxu0
    %v2574 = vadd.f32 %v2461, %v2573
    %v2575 = vpop.f32.mrf.mxu0
    %v2576 = vadd.f32 %v2463, %v2575
    %2577 = vmatprep.mubr.bf16.mxu0 %v418
    %2578 = vmatmul.mubr.bf16.gmra.mxu0 %v417
    %v2579 = vpop.f32.mrf.mxu0
    %v2580 = vadd.f32 %v2467, %v2579
    %v2581 = vpop.f32.mrf.mxu0
    %v2582 = vadd.f32 %v2469, %v2581
    %v2583 = vpop.f32.mrf.mxu0
    %v2584 = vadd.f32 %v2471, %v2583
    %v2585 = vpop.f32.mrf.mxu0
    %v2586 = vadd.f32 %v2473, %v2585
    %2587 = vmatprep.mubr.bf16.mxu0 %v423
    %2588 = vmatmul.mubr.bf16.gmra.mxu0 %v422
    %v2589 = vpop.f32.mrf.mxu0
    %v2590 = vadd.f32 %v2477, %v2589
    %v2591 = vpop.f32.mrf.mxu0
    %v2592 = vadd.f32 %v2479, %v2591
    %v2593 = vpop.f32.mrf.mxu0
    %v2594 = vadd.f32 %v2481, %v2593
    %v2595 = vpop.f32.mrf.mxu0
    %v2596 = vadd.f32 %v2483, %v2595
    %2597 = vmatprep.mubr.bf16.mxu0 %v428
    %2598 = vmatmul.mubr.bf16.gmra.mxu0 %v427
    %v2599 = vpop.f32.mrf.mxu0
    %v2600 = vadd.f32 %v2487, %v2599
    %v2601 = vpop.f32.mrf.mxu0
    %v2602 = vadd.f32 %v2489, %v2601
    %v2603 = vpop.f32.mrf.mxu0
    %v2604 = vadd.f32 %v2491, %v2603
    %v2605 = vpop.f32.mrf.mxu0
    %v2606 = vadd.f32 %v2493, %v2605
    %2607 = vmatprep.mubr.bf16.mxu0 %v433
    %2608 = vmatmul.mubr.bf16.gmra.mxu0 %v432
    %v2609 = vpop.f32.mrf.mxu0
    %v2610 = vadd.f32 %v2497, %v2609
    %v2611 = vpop.f32.mrf.mxu0
    %v2612 = vadd.f32 %v2499, %v2611
    %v2613 = vpop.f32.mrf.mxu0
    %v2614 = vadd.f32 %v2501, %v2613
    %v2615 = vpop.f32.mrf.mxu0
    %v2616 = vadd.f32 %v2503, %v2615
    %2617 = vmatprep.mubr.bf16.mxu0 %v438
    %2618 = vmatmul.mubr.bf16.gmra.mxu0 %v437
    %v2619 = vpop.f32.mrf.mxu0
    %v2620 = vadd.f32 %v2507, %v2619
    %v2621 = vpop.f32.mrf.mxu0
    %v2622 = vadd.f32 %v2509, %v2621
    %v2623 = vpop.f32.mrf.mxu0
    %v2624 = vadd.f32 %v2511, %v2623
    %v2625 = vpop.f32.mrf.mxu0
    %v2626 = vadd.f32 %v2513, %v2625
    %2627 = vdwg.mxu0
    %2628 = vmatprep.subr.bf16.mxu0 %v2075
    %2629 = vmatpush1.bf16.msra.mxu0 %v2074
    %2630 = vmatprep.subr.bf16.mxu0 %v2067
    %2631 = vmatpush1.bf16.msra.mxu0 %v2066
    %2632 = vmatprep.subr.bf16.mxu0 %v2059
    %2633 = vmatpush1.bf16.msra.mxu0 %v2058
    %2634 = vmatprep.subr.bf16.mxu0 %v2051
    %2635 = vmatpush1.bf16.msra.mxu0 %v2050
    %2636 = vmatprep.subr.bf16.mxu0 %v2043
    %2637 = vmatpush1.bf16.msra.mxu0 %v2042
    %2638 = vmatprep.subr.bf16.mxu0 %v2035
    %2639 = vmatpush1.bf16.msra.mxu0 %v2034
    %2640 = vmatprep.subr.bf16.mxu0 %v2027
    %2641 = vmatpush1.bf16.msra.mxu0 %v2026
    %2642 = vmatprep.subr.bf16.mxu0 %v2019
    %2643 = vmatpush1.bf16.msra.mxu0 %v2018
    %2644 = vmatprep.subr.bf16.mxu0 0
    %2645 = vmatpush2.bf16.msra.mxu0 0
    %2646 = vmatprep.subr.bf16.mxu0 0
    %2647 = vmatpush2.bf16.msra.mxu0 0
    %2648 = vmatprep.subr.bf16.mxu0 0
    %2649 = vmatpush2.bf16.msra.mxu0 0
    %2650 = vmatprep.subr.bf16.mxu0 0
    %2651 = vmatpush2.bf16.msra.mxu0 0
    %2652 = vmatprep.subr.bf16.mxu0 0
    %2653 = vmatpush2.bf16.msra.mxu0 0
    %2654 = vmatprep.subr.bf16.mxu0 0
    %2655 = vmatpush2.bf16.msra.mxu0 0
    %2656 = vmatprep.subr.bf16.mxu0 0
    %2657 = vmatpush2.bf16.msra.mxu0 0
    %2658 = vmatprep.subr.bf16.mxu0 0
    %2659 = vmatpush2.bf16.msra.mxu0 0
    %2660 = vmatprep.mubr.bf16.mxu0 0
    %2661 = vmatmul.mubr.bf16.gmra.mxu0 %v404
    %v2662 = vpop.f32.mrf.mxu0
    %v2663 = vadd.f32 %v2550, %v2662
    %v2664 = vpop.f32.mrf.mxu0
    %v2665 = vadd.f32 %v2552, %v2664
    %v2666 = vpop.f32.mrf.mxu0
    %v2667 = vadd.f32 %v2554, %v2666
    %v2668 = vpop.f32.mrf.mxu0
    %v2669 = vadd.f32 %v2556, %v2668
    %2670 = vmatprep.mubr.bf16.mxu0 0
    %2671 = vmatmul.mubr.bf16.gmra.mxu0 %v409
    %v2672 = vpop.f32.mrf.mxu0
    %v2673 = vadd.f32 %v2560, %v2672
    %v2674 = vpop.f32.mrf.mxu0
    %v2675 = vadd.f32 %v2562, %v2674
    %v2676 = vpop.f32.mrf.mxu0
    %v2677 = vadd.f32 %v2564, %v2676
    %v2678 = vpop.f32.mrf.mxu0
    %v2679 = vadd.f32 %v2566, %v2678
    %2680 = vmatprep.mubr.bf16.mxu0 0
    %2681 = vmatmul.mubr.bf16.gmra.mxu0 %v414
    %v2682 = vpop.f32.mrf.mxu0
    %v2683 = vadd.f32 %v2570, %v2682
    %v2684 = vpop.f32.mrf.mxu0
    %v2685 = vadd.f32 %v2572, %v2684
    %v2686 = vpop.f32.mrf.mxu0
    %v2687 = vadd.f32 %v2574, %v2686
    %v2688 = vpop.f32.mrf.mxu0
    %v2689 = vadd.f32 %v2576, %v2688
    %2690 = vmatprep.mubr.bf16.mxu0 0
    %2691 = vmatmul.mubr.bf16.gmra.mxu0 %v419
    %v2692 = vpop.f32.mrf.mxu0
    %v2693 = vadd.f32 %v2580, %v2692
    %v2694 = vpop.f32.mrf.mxu0
    %v2695 = vadd.f32 %v2582, %v2694
    %v2696 = vpop.f32.mrf.mxu0
    %v2697 = vadd.f32 %v2584, %v2696
    %v2698 = vpop.f32.mrf.mxu0
    %v2699 = vadd.f32 %v2586, %v2698
    %2700 = vmatprep.mubr.bf16.mxu0 0
    %2701 = vmatmul.mubr.bf16.gmra.mxu0 %v424
    %v2702 = vpop.f32.mrf.mxu0
    %v2703 = vadd.f32 %v2590, %v2702
    %v2704 = vpop.f32.mrf.mxu0
    %v2705 = vadd.f32 %v2592, %v2704
    %v2706 = vpop.f32.mrf.mxu0
    %v2707 = vadd.f32 %v2594, %v2706
    %v2708 = vpop.f32.mrf.mxu0
    %v2709 = vadd.f32 %v2596, %v2708
    %2710 = vmatprep.mubr.bf16.mxu0 0
    %2711 = vmatmul.mubr.bf16.gmra.mxu0 %v429
    %v2712 = vpop.f32.mrf.mxu0
    %v2713 = vadd.f32 %v2600, %v2712
    %v2714 = vpop.f32.mrf.mxu0
    %v2715 = vadd.f32 %v2602, %v2714
    %v2716 = vpop.f32.mrf.mxu0
    %v2717 = vadd.f32 %v2604, %v2716
    %v2718 = vpop.f32.mrf.mxu0
    %v2719 = vadd.f32 %v2606, %v2718
    %2720 = vmatprep.mubr.bf16.mxu0 0
    %2721 = vmatmul.mubr.bf16.gmra.mxu0 %v434
    %v2722 = vpop.f32.mrf.mxu0
    %v2723 = vadd.f32 %v2610, %v2722
    %v2724 = vpop.f32.mrf.mxu0
    %v2725 = vadd.f32 %v2612, %v2724
    %v2726 = vpop.f32.mrf.mxu0
    %v2727 = vadd.f32 %v2614, %v2726
    %v2728 = vpop.f32.mrf.mxu0
    %v2729 = vadd.f32 %v2616, %v2728
    %2730 = vmatprep.mubr.bf16.mxu0 0
    %2731 = vmatmul.mubr.bf16.gmra.mxu0 %v439
    %v2732 = vpop.f32.mrf.mxu0
    %v2733 = vadd.f32 %v2620, %v2732
    %v2734 = vpop.f32.mrf.mxu0
    %v2735 = vadd.f32 %v2622, %v2734
    %v2736 = vpop.f32.mrf.mxu0
    %v2737 = vadd.f32 %v2624, %v2736
    %v2738 = vpop.f32.mrf.mxu0
    %v2739 = vadd.f32 %v2626, %v2738
    %2740 = vdwg.mxu0
    %2741 = vmatprep.subr.bf16.mxu0 %v1821
    %2742 = vmatpush1.bf16.msra.mxu0 %v1820
    %2743 = vmatprep.subr.bf16.mxu0 %v1813
    %2744 = vmatpush1.bf16.msra.mxu0 %v1812
    %2745 = vmatprep.subr.bf16.mxu0 %v1805
    %2746 = vmatpush1.bf16.msra.mxu0 %v1804
    %2747 = vmatprep.subr.bf16.mxu0 %v1797
    %2748 = vmatpush1.bf16.msra.mxu0 %v1796
    %2749 = vmatprep.subr.bf16.mxu0 %v1789
    %2750 = vmatpush1.bf16.msra.mxu0 %v1788
    %2751 = vmatprep.subr.bf16.mxu0 %v1781
    %2752 = vmatpush1.bf16.msra.mxu0 %v1780
    %2753 = vmatprep.subr.bf16.mxu0 %v1773
    %2754 = vmatpush1.bf16.msra.mxu0 %v1772
    %2755 = vmatprep.subr.bf16.mxu0 %v1765
    %2756 = vmatpush1.bf16.msra.mxu0 %v1764
    %2757 = vmatprep.subr.bf16.mxu0 %v1885
    %2758 = vmatpush2.bf16.msra.mxu0 %v1884
    %2759 = vmatprep.subr.bf16.mxu0 %v1877
    %2760 = vmatpush2.bf16.msra.mxu0 %v1876
    %2761 = vmatprep.subr.bf16.mxu0 %v1869
    %2762 = vmatpush2.bf16.msra.mxu0 %v1868
    %2763 = vmatprep.subr.bf16.mxu0 %v1861
    %2764 = vmatpush2.bf16.msra.mxu0 %v1860
    %2765 = vmatprep.subr.bf16.mxu0 %v1853
    %2766 = vmatpush2.bf16.msra.mxu0 %v1852
    %2767 = vmatprep.subr.bf16.mxu0 %v1845
    %2768 = vmatpush2.bf16.msra.mxu0 %v1844
    %2769 = vmatprep.subr.bf16.mxu0 %v1837
    %2770 = vmatpush2.bf16.msra.mxu0 %v1836
    %2771 = vmatprep.subr.bf16.mxu0 %v1829
    %2772 = vmatpush2.bf16.msra.mxu0 %v1828
    %2773 = vmatprep.mubr.bf16.mxu0 %v401
    %2774 = vmatmul.mubr.bf16.gmra.mxu0 %v400
    %v2775 = vpop.f32.mrf.mxu0
    %v2776 = vadd.f32 %v773, %v2775
    %v2777 = vpop.f32.mrf.mxu0
    %v2778 = vadd.f32 %v777, %v2777
    %v2779 = vpop.f32.mrf.mxu0
    %v2780 = vadd.f32 %v773, %v2779
    %v2781 = vpop.f32.mrf.mxu0
    %v2782 = vadd.f32 %v777, %v2781
    %2783 = vmatprep.mubr.bf16.mxu0 %v406
    %2784 = vmatmul.mubr.bf16.gmra.mxu0 %v405
    %v2785 = vpop.f32.mrf.mxu0
    %v2786 = vadd.f32 %v773, %v2785
    %v2787 = vpop.f32.mrf.mxu0
    %v2788 = vadd.f32 %v777, %v2787
    %v2789 = vpop.f32.mrf.mxu0
    %v2790 = vadd.f32 %v773, %v2789
    %v2791 = vpop.f32.mrf.mxu0
    %v2792 = vadd.f32 %v777, %v2791
    %2793 = vmatprep.mubr.bf16.mxu0 %v411
    %2794 = vmatmul.mubr.bf16.gmra.mxu0 %v410
    %v2795 = vpop.f32.mrf.mxu0
    %v2796 = vadd.f32 %v773, %v2795
    %v2797 = vpop.f32.mrf.mxu0
    %v2798 = vadd.f32 %v777, %v2797
    %v2799 = vpop.f32.mrf.mxu0
    %v2800 = vadd.f32 %v773, %v2799
    %v2801 = vpop.f32.mrf.mxu0
    %v2802 = vadd.f32 %v777, %v2801
    %2803 = vmatprep.mubr.bf16.mxu0 %v416
    %2804 = vmatmul.mubr.bf16.gmra.mxu0 %v415
    %v2805 = vpop.f32.mrf.mxu0
    %v2806 = vadd.f32 %v773, %v2805
    %v2807 = vpop.f32.mrf.mxu0
    %v2808 = vadd.f32 %v777, %v2807
    %v2809 = vpop.f32.mrf.mxu0
    %v2810 = vadd.f32 %v773, %v2809
    %v2811 = vpop.f32.mrf.mxu0
    %v2812 = vadd.f32 %v777, %v2811
    %2813 = vmatprep.mubr.bf16.mxu0 %v421
    %2814 = vmatmul.mubr.bf16.gmra.mxu0 %v420
    %v2815 = vpop.f32.mrf.mxu0
    %v2816 = vadd.f32 %v773, %v2815
    %v2817 = vpop.f32.mrf.mxu0
    %v2818 = vadd.f32 %v777, %v2817
    %v2819 = vpop.f32.mrf.mxu0
    %v2820 = vadd.f32 %v773, %v2819
    %v2821 = vpop.f32.mrf.mxu0
    %v2822 = vadd.f32 %v777, %v2821
    %2823 = vmatprep.mubr.bf16.mxu0 %v426
    %2824 = vmatmul.mubr.bf16.gmra.mxu0 %v425
    %v2825 = vpop.f32.mrf.mxu0
    %v2826 = vadd.f32 %v773, %v2825
    %v2827 = vpop.f32.mrf.mxu0
    %v2828 = vadd.f32 %v777, %v2827
    %v2829 = vpop.f32.mrf.mxu0
    %v2830 = vadd.f32 %v773, %v2829
    %v2831 = vpop.f32.mrf.mxu0
    %v2832 = vadd.f32 %v777, %v2831
    %2833 = vmatprep.mubr.bf16.mxu0 %v431
    %2834 = vmatmul.mubr.bf16.gmra.mxu0 %v430
    %v2835 = vpop.f32.mrf.mxu0
    %v2836 = vadd.f32 %v773, %v2835
    %v2837 = vpop.f32.mrf.mxu0
    %v2838 = vadd.f32 %v777, %v2837
    %v2839 = vpop.f32.mrf.mxu0
    %v2840 = vadd.f32 %v773, %v2839
    %v2841 = vpop.f32.mrf.mxu0
    %v2842 = vadd.f32 %v777, %v2841
    %2843 = vmatprep.mubr.bf16.mxu0 %v436
    %2844 = vmatmul.mubr.bf16.gmra.mxu0 %v435
    %v2845 = vpop.f32.mrf.mxu0
    %v2846 = vadd.f32 %v773, %v2845
    %v2847 = vpop.f32.mrf.mxu0
    %v2848 = vadd.f32 %v777, %v2847
    %v2849 = vpop.f32.mrf.mxu0
    %v2850 = vadd.f32 %v773, %v2849
    %v2851 = vpop.f32.mrf.mxu0
    %v2852 = vadd.f32 %v777, %v2851
    %2853 = vdwg.mxu0
    %2854 = vmatprep.subr.bf16.mxu0 %v1949
    %2855 = vmatpush1.bf16.msra.mxu0 %v1948
    %2856 = vmatprep.subr.bf16.mxu0 %v1941
    %2857 = vmatpush1.bf16.msra.mxu0 %v1940
    %2858 = vmatprep.subr.bf16.mxu0 %v1933
    %2859 = vmatpush1.bf16.msra.mxu0 %v1932
    %2860 = vmatprep.subr.bf16.mxu0 %v1925
    %2861 = vmatpush1.bf16.msra.mxu0 %v1924
    %2862 = vmatprep.subr.bf16.mxu0 %v1917
    %2863 = vmatpush1.bf16.msra.mxu0 %v1916
    %2864 = vmatprep.subr.bf16.mxu0 %v1909
    %2865 = vmatpush1.bf16.msra.mxu0 %v1908
    %2866 = vmatprep.subr.bf16.mxu0 %v1901
    %2867 = vmatpush1.bf16.msra.mxu0 %v1900
    %2868 = vmatprep.subr.bf16.mxu0 %v1893
    %2869 = vmatpush1.bf16.msra.mxu0 %v1892
    %2870 = vmatprep.subr.bf16.mxu0 %v2013
    %2871 = vmatpush2.bf16.msra.mxu0 %v2012
    %2872 = vmatprep.subr.bf16.mxu0 %v2005
    %2873 = vmatpush2.bf16.msra.mxu0 %v2004
    %2874 = vmatprep.subr.bf16.mxu0 %v1997
    %2875 = vmatpush2.bf16.msra.mxu0 %v1996
    %2876 = vmatprep.subr.bf16.mxu0 %v1989
    %2877 = vmatpush2.bf16.msra.mxu0 %v1988
    %2878 = vmatprep.subr.bf16.mxu0 %v1981
    %2879 = vmatpush2.bf16.msra.mxu0 %v1980
    %2880 = vmatprep.subr.bf16.mxu0 %v1973
    %2881 = vmatpush2.bf16.msra.mxu0 %v1972
    %2882 = vmatprep.subr.bf16.mxu0 %v1965
    %2883 = vmatpush2.bf16.msra.mxu0 %v1964
    %2884 = vmatprep.subr.bf16.mxu0 %v1957
    %2885 = vmatpush2.bf16.msra.mxu0 %v1956
    %2886 = vmatprep.mubr.bf16.mxu0 %v403
    %2887 = vmatmul.mubr.bf16.gmra.mxu0 %v402
    %v2888 = vpop.f32.mrf.mxu0
    %v2889 = vadd.f32 %v2776, %v2888
    %v2890 = vpop.f32.mrf.mxu0
    %v2891 = vadd.f32 %v2778, %v2890
    %v2892 = vpop.f32.mrf.mxu0
    %v2893 = vadd.f32 %v2780, %v2892
    %v2894 = vpop.f32.mrf.mxu0
    %v2895 = vadd.f32 %v2782, %v2894
    %2896 = vmatprep.mubr.bf16.mxu0 %v408
    %2897 = vmatmul.mubr.bf16.gmra.mxu0 %v407
    %v2898 = vpop.f32.mrf.mxu0
    %v2899 = vadd.f32 %v2786, %v2898
    %v2900 = vpop.f32.mrf.mxu0
    %v2901 = vadd.f32 %v2788, %v2900
    %v2902 = vpop.f32.mrf.mxu0
    %v2903 = vadd.f32 %v2790, %v2902
    %v2904 = vpop.f32.mrf.mxu0
    %v2905 = vadd.f32 %v2792, %v2904
    %2906 = vmatprep.mubr.bf16.mxu0 %v413
    %2907 = vmatmul.mubr.bf16.gmra.mxu0 %v412
    %v2908 = vpop.f32.mrf.mxu0
    %v2909 = vadd.f32 %v2796, %v2908
    %v2910 = vpop.f32.mrf.mxu0
    %v2911 = vadd.f32 %v2798, %v2910
    %v2912 = vpop.f32.mrf.mxu0
    %v2913 = vadd.f32 %v2800, %v2912
    %v2914 = vpop.f32.mrf.mxu0
    %v2915 = vadd.f32 %v2802, %v2914
    %2916 = vmatprep.mubr.bf16.mxu0 %v418
    %2917 = vmatmul.mubr.bf16.gmra.mxu0 %v417
    %v2918 = vpop.f32.mrf.mxu0
    %v2919 = vadd.f32 %v2806, %v2918
    %v2920 = vpop.f32.mrf.mxu0
    %v2921 = vadd.f32 %v2808, %v2920
    %v2922 = vpop.f32.mrf.mxu0
    %v2923 = vadd.f32 %v2810, %v2922
    %v2924 = vpop.f32.mrf.mxu0
    %v2925 = vadd.f32 %v2812, %v2924
    %2926 = vmatprep.mubr.bf16.mxu0 %v423
    %2927 = vmatmul.mubr.bf16.gmra.mxu0 %v422
    %v2928 = vpop.f32.mrf.mxu0
    %v2929 = vadd.f32 %v2816, %v2928
    %v2930 = vpop.f32.mrf.mxu0
    %v2931 = vadd.f32 %v2818, %v2930
    %v2932 = vpop.f32.mrf.mxu0
    %v2933 = vadd.f32 %v2820, %v2932
    %v2934 = vpop.f32.mrf.mxu0
    %v2935 = vadd.f32 %v2822, %v2934
    %2936 = vmatprep.mubr.bf16.mxu0 %v428
    %2937 = vmatmul.mubr.bf16.gmra.mxu0 %v427
    %v2938 = vpop.f32.mrf.mxu0
    %v2939 = vadd.f32 %v2826, %v2938
    %v2940 = vpop.f32.mrf.mxu0
    %v2941 = vadd.f32 %v2828, %v2940
    %v2942 = vpop.f32.mrf.mxu0
    %v2943 = vadd.f32 %v2830, %v2942
    %v2944 = vpop.f32.mrf.mxu0
    %v2945 = vadd.f32 %v2832, %v2944
    %2946 = vmatprep.mubr.bf16.mxu0 %v433
    %2947 = vmatmul.mubr.bf16.gmra.mxu0 %v432
    %v2948 = vpop.f32.mrf.mxu0
    %v2949 = vadd.f32 %v2836, %v2948
    %v2950 = vpop.f32.mrf.mxu0
    %v2951 = vadd.f32 %v2838, %v2950
    %v2952 = vpop.f32.mrf.mxu0
    %v2953 = vadd.f32 %v2840, %v2952
    %v2954 = vpop.f32.mrf.mxu0
    %v2955 = vadd.f32 %v2842, %v2954
    %2956 = vmatprep.mubr.bf16.mxu0 %v438
    %2957 = vmatmul.mubr.bf16.gmra.mxu0 %v437
    %v2958 = vpop.f32.mrf.mxu0
    %v2959 = vadd.f32 %v2846, %v2958
    %v2960 = vpop.f32.mrf.mxu0
    %v2961 = vadd.f32 %v2848, %v2960
    %v2962 = vpop.f32.mrf.mxu0
    %v2963 = vadd.f32 %v2850, %v2962
    %v2964 = vpop.f32.mrf.mxu0
    %v2965 = vadd.f32 %v2852, %v2964
    %2966 = vdwg.mxu0
    %2967 = vmatprep.subr.bf16.mxu0 %v2077
    %2968 = vmatpush1.bf16.msra.mxu0 %v2076
    %2969 = vmatprep.subr.bf16.mxu0 %v2069
    %2970 = vmatpush1.bf16.msra.mxu0 %v2068
    %2971 = vmatprep.subr.bf16.mxu0 %v2061
    %2972 = vmatpush1.bf16.msra.mxu0 %v2060
    %2973 = vmatprep.subr.bf16.mxu0 %v2053
    %2974 = vmatpush1.bf16.msra.mxu0 %v2052
    %2975 = vmatprep.subr.bf16.mxu0 %v2045
    %2976 = vmatpush1.bf16.msra.mxu0 %v2044
    %2977 = vmatprep.subr.bf16.mxu0 %v2037
    %2978 = vmatpush1.bf16.msra.mxu0 %v2036
    %2979 = vmatprep.subr.bf16.mxu0 %v2029
    %2980 = vmatpush1.bf16.msra.mxu0 %v2028
    %2981 = vmatprep.subr.bf16.mxu0 %v2021
    %2982 = vmatpush1.bf16.msra.mxu0 %v2020
    %2983 = vmatprep.subr.bf16.mxu0 0
    %2984 = vmatpush2.bf16.msra.mxu0 0
    %2985 = vmatprep.subr.bf16.mxu0 0
    %2986 = vmatpush2.bf16.msra.mxu0 0
    %2987 = vmatprep.subr.bf16.mxu0 0
    %2988 = vmatpush2.bf16.msra.mxu0 0
    %2989 = vmatprep.subr.bf16.mxu0 0
    %2990 = vmatpush2.bf16.msra.mxu0 0
    %2991 = vmatprep.subr.bf16.mxu0 0
    %2992 = vmatpush2.bf16.msra.mxu0 0
    %2993 = vmatprep.subr.bf16.mxu0 0
    %2994 = vmatpush2.bf16.msra.mxu0 0
    %2995 = vmatprep.subr.bf16.mxu0 0
    %2996 = vmatpush2.bf16.msra.mxu0 0
    %2997 = vmatprep.subr.bf16.mxu0 0
    %2998 = vmatpush2.bf16.msra.mxu0 0
    %2999 = vmatprep.mubr.bf16.mxu0 0
    %3000 = vmatmul.mubr.bf16.gmra.mxu0 %v404
    %v3001 = vpop.f32.mrf.mxu0
    %v3002 = vadd.f32 %v2889, %v3001
    %v3003 = vpop.f32.mrf.mxu0
    %v3004 = vadd.f32 %v2891, %v3003
    %v3005 = vpop.f32.mrf.mxu0
    %v3006 = vadd.f32 %v2893, %v3005
    %v3007 = vpop.f32.mrf.mxu0
    %v3008 = vadd.f32 %v2895, %v3007
    %3009 = vmatprep.mubr.bf16.mxu0 0
    %3010 = vmatmul.mubr.bf16.gmra.mxu0 %v409
    %v3011 = vpop.f32.mrf.mxu0
    %v3012 = vadd.f32 %v2899, %v3011
    %v3013 = vpop.f32.mrf.mxu0
    %v3014 = vadd.f32 %v2901, %v3013
    %v3015 = vpop.f32.mrf.mxu0
    %v3016 = vadd.f32 %v2903, %v3015
    %v3017 = vpop.f32.mrf.mxu0
    %v3018 = vadd.f32 %v2905, %v3017
    %3019 = vmatprep.mubr.bf16.mxu0 0
    %3020 = vmatmul.mubr.bf16.gmra.mxu0 %v414
    %v3021 = vpop.f32.mrf.mxu0
    %v3022 = vadd.f32 %v2909, %v3021
    %v3023 = vpop.f32.mrf.mxu0
    %v3024 = vadd.f32 %v2911, %v3023
    %v3025 = vpop.f32.mrf.mxu0
    %v3026 = vadd.f32 %v2913, %v3025
    %v3027 = vpop.f32.mrf.mxu0
    %v3028 = vadd.f32 %v2915, %v3027
    %3029 = vmatprep.mubr.bf16.mxu0 0
    %3030 = vmatmul.mubr.bf16.gmra.mxu0 %v419
    %v3031 = vpop.f32.mrf.mxu0
    %v3032 = vadd.f32 %v2919, %v3031
    %v3033 = vpop.f32.mrf.mxu0
    %v3034 = vadd.f32 %v2921, %v3033
    %v3035 = vpop.f32.mrf.mxu0
    %v3036 = vadd.f32 %v2923, %v3035
    %v3037 = vpop.f32.mrf.mxu0
    %v3038 = vadd.f32 %v2925, %v3037
    %3039 = vmatprep.mubr.bf16.mxu0 0
    %3040 = vmatmul.mubr.bf16.gmra.mxu0 %v424
    %v3041 = vpop.f32.mrf.mxu0
    %v3042 = vadd.f32 %v2929, %v3041
    %v3043 = vpop.f32.mrf.mxu0
    %v3044 = vadd.f32 %v2931, %v3043
    %v3045 = vpop.f32.mrf.mxu0
    %v3046 = vadd.f32 %v2933, %v3045
    %v3047 = vpop.f32.mrf.mxu0
    %v3048 = vadd.f32 %v2935, %v3047
    %3049 = vmatprep.mubr.bf16.mxu0 0
    %3050 = vmatmul.mubr.bf16.gmra.mxu0 %v429
    %v3051 = vpop.f32.mrf.mxu0
    %v3052 = vadd.f32 %v2939, %v3051
    %v3053 = vpop.f32.mrf.mxu0
    %v3054 = vadd.f32 %v2941, %v3053
    %v3055 = vpop.f32.mrf.mxu0
    %v3056 = vadd.f32 %v2943, %v3055
    %v3057 = vpop.f32.mrf.mxu0
    %v3058 = vadd.f32 %v2945, %v3057
    %3059 = vmatprep.mubr.bf16.mxu0 0
    %3060 = vmatmul.mubr.bf16.gmra.mxu0 %v434
    %v3061 = vpop.f32.mrf.mxu0
    %v3062 = vadd.f32 %v2949, %v3061
    %v3063 = vpop.f32.mrf.mxu0
    %v3064 = vadd.f32 %v2951, %v3063
    %v3065 = vpop.f32.mrf.mxu0
    %v3066 = vadd.f32 %v2953, %v3065
    %v3067 = vpop.f32.mrf.mxu0
    %v3068 = vadd.f32 %v2955, %v3067
    %3069 = vmatprep.mubr.bf16.mxu0 0
    %3070 = vmatmul.mubr.bf16.gmra.mxu0 %v439
    %v3071 = vpop.f32.mrf.mxu0
    %v3072 = vadd.f32 %v2959, %v3071
    %v3073 = vpop.f32.mrf.mxu0
    %v3074 = vadd.f32 %v2961, %v3073
    %v3075 = vpop.f32.mrf.mxu0
    %v3076 = vadd.f32 %v2963, %v3075
    %v3077 = vpop.f32.mrf.mxu0
    %v3078 = vadd.f32 %v2965, %v3077
    %3079 = vdwg.mxu0
    %3080 = vmatprep.subr.bf16.mxu0 %v1823
    %3081 = vmatpush1.bf16.msra.mxu0 %v1822
    %3082 = vmatprep.subr.bf16.mxu0 %v1815
    %3083 = vmatpush1.bf16.msra.mxu0 %v1814
    %3084 = vmatprep.subr.bf16.mxu0 %v1807
    %3085 = vmatpush1.bf16.msra.mxu0 %v1806
    %3086 = vmatprep.subr.bf16.mxu0 %v1799
    %3087 = vmatpush1.bf16.msra.mxu0 %v1798
    %3088 = vmatprep.subr.bf16.mxu0 %v1791
    %3089 = vmatpush1.bf16.msra.mxu0 %v1790
    %3090 = vmatprep.subr.bf16.mxu0 %v1783
    %3091 = vmatpush1.bf16.msra.mxu0 %v1782
    %3092 = vmatprep.subr.bf16.mxu0 %v1775
    %3093 = vmatpush1.bf16.msra.mxu0 %v1774
    %3094 = vmatprep.subr.bf16.mxu0 %v1767
    %3095 = vmatpush1.bf16.msra.mxu0 %v1766
    %3096 = vmatprep.subr.bf16.mxu0 %v1887
    %3097 = vmatpush2.bf16.msra.mxu0 %v1886
    %3098 = vmatprep.subr.bf16.mxu0 %v1879
    %3099 = vmatpush2.bf16.msra.mxu0 %v1878
    %3100 = vmatprep.subr.bf16.mxu0 %v1871
    %3101 = vmatpush2.bf16.msra.mxu0 %v1870
    %3102 = vmatprep.subr.bf16.mxu0 %v1863
    %3103 = vmatpush2.bf16.msra.mxu0 %v1862
    %3104 = vmatprep.subr.bf16.mxu0 %v1855
    %3105 = vmatpush2.bf16.msra.mxu0 %v1854
    %3106 = vmatprep.subr.bf16.mxu0 %v1847
    %3107 = vmatpush2.bf16.msra.mxu0 %v1846
    %3108 = vmatprep.subr.bf16.mxu0 %v1839
    %3109 = vmatpush2.bf16.msra.mxu0 %v1838
    %3110 = vmatprep.subr.bf16.mxu0 %v1831
    %3111 = vmatpush2.bf16.msra.mxu0 %v1830
    %3112 = vmatprep.mubr.bf16.mxu0 %v401
    %3113 = vmatmul.mubr.bf16.gmra.mxu0 %v400
    %v3114 = vpop.f32.mrf.mxu0
    %v3115 = vadd.f32 %v781, %v3114
    %v3116 = vpop.f32.mrf.mxu0
    %v3117 = vadd.f32 %v785, %v3116
    %v3118 = vpop.f32.mrf.mxu0
    %v3119 = vadd.f32 %v781, %v3118
    %v3120 = vpop.f32.mrf.mxu0
    %v3121 = vadd.f32 %v785, %v3120
    %3122 = vmatprep.mubr.bf16.mxu0 %v406
    %3123 = vmatmul.mubr.bf16.gmra.mxu0 %v405
    %v3124 = vpop.f32.mrf.mxu0
    %v3125 = vadd.f32 %v781, %v3124
    %v3126 = vpop.f32.mrf.mxu0
    %v3127 = vadd.f32 %v785, %v3126
    %v3128 = vpop.f32.mrf.mxu0
    %v3129 = vadd.f32 %v781, %v3128
    %v3130 = vpop.f32.mrf.mxu0
    %v3131 = vadd.f32 %v785, %v3130
    %3132 = vmatprep.mubr.bf16.mxu0 %v411
    %3133 = vmatmul.mubr.bf16.gmra.mxu0 %v410
    %v3134 = vpop.f32.mrf.mxu0
    %v3135 = vadd.f32 %v781, %v3134
    %v3136 = vpop.f32.mrf.mxu0
    %v3137 = vadd.f32 %v785, %v3136
    %v3138 = vpop.f32.mrf.mxu0
    %v3139 = vadd.f32 %v781, %v3138
    %v3140 = vpop.f32.mrf.mxu0
    %v3141 = vadd.f32 %v785, %v3140
    %3142 = vmatprep.mubr.bf16.mxu0 %v416
    %3143 = vmatmul.mubr.bf16.gmra.mxu0 %v415
    %v3144 = vpop.f32.mrf.mxu0
    %v3145 = vadd.f32 %v781, %v3144
    %v3146 = vpop.f32.mrf.mxu0
    %v3147 = vadd.f32 %v785, %v3146
    %v3148 = vpop.f32.mrf.mxu0
    %v3149 = vadd.f32 %v781, %v3148
    %v3150 = vpop.f32.mrf.mxu0
    %v3151 = vadd.f32 %v785, %v3150
    %3152 = vmatprep.mubr.bf16.mxu0 %v421
    %3153 = vmatmul.mubr.bf16.gmra.mxu0 %v420
    %v3154 = vpop.f32.mrf.mxu0
    %v3155 = vadd.f32 %v781, %v3154
    %v3156 = vpop.f32.mrf.mxu0
    %v3157 = vadd.f32 %v785, %v3156
    %v3158 = vpop.f32.mrf.mxu0
    %v3159 = vadd.f32 %v781, %v3158
    %v3160 = vpop.f32.mrf.mxu0
    %v3161 = vadd.f32 %v785, %v3160
    %3162 = vmatprep.mubr.bf16.mxu0 %v426
    %3163 = vmatmul.mubr.bf16.gmra.mxu0 %v425
    %v3164 = vpop.f32.mrf.mxu0
    %v3165 = vadd.f32 %v781, %v3164
    %v3166 = vpop.f32.mrf.mxu0
    %v3167 = vadd.f32 %v785, %v3166
    %v3168 = vpop.f32.mrf.mxu0
    %v3169 = vadd.f32 %v781, %v3168
    %v3170 = vpop.f32.mrf.mxu0
    %v3171 = vadd.f32 %v785, %v3170
    %3172 = vmatprep.mubr.bf16.mxu0 %v431
    %3173 = vmatmul.mubr.bf16.gmra.mxu0 %v430
    %v3174 = vpop.f32.mrf.mxu0
    %v3175 = vadd.f32 %v781, %v3174
    %v3176 = vpop.f32.mrf.mxu0
    %v3177 = vadd.f32 %v785, %v3176
    %v3178 = vpop.f32.mrf.mxu0
    %v3179 = vadd.f32 %v781, %v3178
    %v3180 = vpop.f32.mrf.mxu0
    %v3181 = vadd.f32 %v785, %v3180
    %3182 = vmatprep.mubr.bf16.mxu0 %v436
    %3183 = vmatmul.mubr.bf16.gmra.mxu0 %v435
    %v3184 = vpop.f32.mrf.mxu0
    %v3185 = vadd.f32 %v781, %v3184
    %v3186 = vpop.f32.mrf.mxu0
    %v3187 = vadd.f32 %v785, %v3186
    %v3188 = vpop.f32.mrf.mxu0
    %v3189 = vadd.f32 %v781, %v3188
    %v3190 = vpop.f32.mrf.mxu0
    %v3191 = vadd.f32 %v785, %v3190
    %3192 = vdwg.mxu0
    %3193 = vmatprep.subr.bf16.mxu0 %v1951
    %3194 = vmatpush1.bf16.msra.mxu0 %v1950
    %3195 = vmatprep.subr.bf16.mxu0 %v1943
    %3196 = vmatpush1.bf16.msra.mxu0 %v1942
    %3197 = vmatprep.subr.bf16.mxu0 %v1935
    %3198 = vmatpush1.bf16.msra.mxu0 %v1934
    %3199 = vmatprep.subr.bf16.mxu0 %v1927
    %3200 = vmatpush1.bf16.msra.mxu0 %v1926
    %3201 = vmatprep.subr.bf16.mxu0 %v1919
    %3202 = vmatpush1.bf16.msra.mxu0 %v1918
    %3203 = vmatprep.subr.bf16.mxu0 %v1911
    %3204 = vmatpush1.bf16.msra.mxu0 %v1910
    %3205 = vmatprep.subr.bf16.mxu0 %v1903
    %3206 = vmatpush1.bf16.msra.mxu0 %v1902
    %3207 = vmatprep.subr.bf16.mxu0 %v1895
    %3208 = vmatpush1.bf16.msra.mxu0 %v1894
    %3209 = vmatprep.subr.bf16.mxu0 %v2015
    %3210 = vmatpush2.bf16.msra.mxu0 %v2014
    %3211 = vmatprep.subr.bf16.mxu0 %v2007
    %3212 = vmatpush2.bf16.msra.mxu0 %v2006
    %3213 = vmatprep.subr.bf16.mxu0 %v1999
    %3214 = vmatpush2.bf16.msra.mxu0 %v1998
    %3215 = vmatprep.subr.bf16.mxu0 %v1991
    %3216 = vmatpush2.bf16.msra.mxu0 %v1990
    %3217 = vmatprep.subr.bf16.mxu0 %v1983
    %3218 = vmatpush2.bf16.msra.mxu0 %v1982
    %3219 = vmatprep.subr.bf16.mxu0 %v1975
    %3220 = vmatpush2.bf16.msra.mxu0 %v1974
    %3221 = vmatprep.subr.bf16.mxu0 %v1967
    %3222 = vmatpush2.bf16.msra.mxu0 %v1966
    %3223 = vmatprep.subr.bf16.mxu0 %v1959
    %3224 = vmatpush2.bf16.msra.mxu0 %v1958
    %3225 = vmatprep.mubr.bf16.mxu0 %v403
    %3226 = vmatmul.mubr.bf16.gmra.mxu0 %v402
    %v3227 = vpop.f32.mrf.mxu0
    %v3228 = vadd.f32 %v3115, %v3227
    %v3229 = vpop.f32.mrf.mxu0
    %v3230 = vadd.f32 %v3117, %v3229
    %v3231 = vpop.f32.mrf.mxu0
    %v3232 = vadd.f32 %v3119, %v3231
    %v3233 = vpop.f32.mrf.mxu0
    %v3234 = vadd.f32 %v3121, %v3233
    %3235 = vmatprep.mubr.bf16.mxu0 %v408
    %3236 = vmatmul.mubr.bf16.gmra.mxu0 %v407
    %v3237 = vpop.f32.mrf.mxu0
    %v3238 = vadd.f32 %v3125, %v3237
    %v3239 = vpop.f32.mrf.mxu0
    %v3240 = vadd.f32 %v3127, %v3239
    %v3241 = vpop.f32.mrf.mxu0
    %v3242 = vadd.f32 %v3129, %v3241
    %v3243 = vpop.f32.mrf.mxu0
    %v3244 = vadd.f32 %v3131, %v3243
    %3245 = vmatprep.mubr.bf16.mxu0 %v413
    %3246 = vmatmul.mubr.bf16.gmra.mxu0 %v412
    %v3247 = vpop.f32.mrf.mxu0
    %v3248 = vadd.f32 %v3135, %v3247
    %v3249 = vpop.f32.mrf.mxu0
    %v3250 = vadd.f32 %v3137, %v3249
    %v3251 = vpop.f32.mrf.mxu0
    %v3252 = vadd.f32 %v3139, %v3251
    %v3253 = vpop.f32.mrf.mxu0
    %v3254 = vadd.f32 %v3141, %v3253
    %3255 = vmatprep.mubr.bf16.mxu0 %v418
    %3256 = vmatmul.mubr.bf16.gmra.mxu0 %v417
    %v3257 = vpop.f32.mrf.mxu0
    %v3258 = vadd.f32 %v3145, %v3257
    %v3259 = vpop.f32.mrf.mxu0
    %v3260 = vadd.f32 %v3147, %v3259
    %v3261 = vpop.f32.mrf.mxu0
    %v3262 = vadd.f32 %v3149, %v3261
    %v3263 = vpop.f32.mrf.mxu0
    %v3264 = vadd.f32 %v3151, %v3263
    %3265 = vmatprep.mubr.bf16.mxu0 %v423
    %3266 = vmatmul.mubr.bf16.gmra.mxu0 %v422
    %v3267 = vpop.f32.mrf.mxu0
    %v3268 = vadd.f32 %v3155, %v3267
    %v3269 = vpop.f32.mrf.mxu0
    %v3270 = vadd.f32 %v3157, %v3269
    %v3271 = vpop.f32.mrf.mxu0
    %v3272 = vadd.f32 %v3159, %v3271
    %v3273 = vpop.f32.mrf.mxu0
    %v3274 = vadd.f32 %v3161, %v3273
    %3275 = vmatprep.mubr.bf16.mxu0 %v428
    %3276 = vmatmul.mubr.bf16.gmra.mxu0 %v427
    %v3277 = vpop.f32.mrf.mxu0
    %v3278 = vadd.f32 %v3165, %v3277
    %v3279 = vpop.f32.mrf.mxu0
    %v3280 = vadd.f32 %v3167, %v3279
    %v3281 = vpop.f32.mrf.mxu0
    %v3282 = vadd.f32 %v3169, %v3281
    %v3283 = vpop.f32.mrf.mxu0
    %v3284 = vadd.f32 %v3171, %v3283
    %3285 = vmatprep.mubr.bf16.mxu0 %v433
    %3286 = vmatmul.mubr.bf16.gmra.mxu0 %v432
    %v3287 = vpop.f32.mrf.mxu0
    %v3288 = vadd.f32 %v3175, %v3287
    %v3289 = vpop.f32.mrf.mxu0
    %v3290 = vadd.f32 %v3177, %v3289
    %v3291 = vpop.f32.mrf.mxu0
    %v3292 = vadd.f32 %v3179, %v3291
    %v3293 = vpop.f32.mrf.mxu0
    %v3294 = vadd.f32 %v3181, %v3293
    %3295 = vmatprep.mubr.bf16.mxu0 %v438
    %3296 = vmatmul.mubr.bf16.gmra.mxu0 %v437
    %v3297 = vpop.f32.mrf.mxu0
    %v3298 = vadd.f32 %v3185, %v3297
    %v3299 = vpop.f32.mrf.mxu0
    %v3300 = vadd.f32 %v3187, %v3299
    %v3301 = vpop.f32.mrf.mxu0
    %v3302 = vadd.f32 %v3189, %v3301
    %v3303 = vpop.f32.mrf.mxu0
    %v3304 = vadd.f32 %v3191, %v3303
    %3305 = vdwg.mxu0
    %3306 = vmatprep.subr.bf16.mxu0 %v2079
    %3307 = vmatpush1.bf16.msra.mxu0 %v2078
    %3308 = vmatprep.subr.bf16.mxu0 %v2071
    %3309 = vmatpush1.bf16.msra.mxu0 %v2070
    %3310 = vmatprep.subr.bf16.mxu0 %v2063
    %3311 = vmatpush1.bf16.msra.mxu0 %v2062
    %3312 = vmatprep.subr.bf16.mxu0 %v2055
    %3313 = vmatpush1.bf16.msra.mxu0 %v2054
    %3314 = vmatprep.subr.bf16.mxu0 %v2047
    %3315 = vmatpush1.bf16.msra.mxu0 %v2046
    %3316 = vmatprep.subr.bf16.mxu0 %v2039
    %3317 = vmatpush1.bf16.msra.mxu0 %v2038
    %3318 = vmatprep.subr.bf16.mxu0 %v2031
    %3319 = vmatpush1.bf16.msra.mxu0 %v2030
    %3320 = vmatprep.subr.bf16.mxu0 %v2023
    %3321 = vmatpush1.bf16.msra.mxu0 %v2022
    %3322 = vmatprep.subr.bf16.mxu0 0
    %3323 = vmatpush2.bf16.msra.mxu0 0
    %3324 = vmatprep.subr.bf16.mxu0 0
    %3325 = vmatpush2.bf16.msra.mxu0 0
    %3326 = vmatprep.subr.bf16.mxu0 0
    %3327 = vmatpush2.bf16.msra.mxu0 0
    %3328 = vmatprep.subr.bf16.mxu0 0
    %3329 = vmatpush2.bf16.msra.mxu0 0
    %3330 = vmatprep.subr.bf16.mxu0 0
    %3331 = vmatpush2.bf16.msra.mxu0 0
    %3332 = vmatprep.subr.bf16.mxu0 0
    %3333 = vmatpush2.bf16.msra.mxu0 0
    %3334 = vmatprep.subr.bf16.mxu0 0
    %3335 = vmatpush2.bf16.msra.mxu0 0
    %3336 = vmatprep.subr.bf16.mxu0 0
    %3337 = vmatpush2.bf16.msra.mxu0 0
    %3338 = vmatprep.mubr.bf16.mxu0 0
    %3339 = vmatmul.mubr.bf16.gmra.mxu0 %v404
    %v3340 = vpop.f32.mrf.mxu0
    %v3341 = vadd.f32 %v3228, %v3340
    %v3342 = vpop.f32.mrf.mxu0
    %v3343 = vadd.f32 %v3230, %v3342
    %v3344 = vpop.f32.mrf.mxu0
    %v3345 = vadd.f32 %v3232, %v3344
    %v3346 = vpop.f32.mrf.mxu0
    %v3347 = vadd.f32 %v3234, %v3346
    %3348 = vmatprep.mubr.bf16.mxu0 0
    %3349 = vmatmul.mubr.bf16.gmra.mxu0 %v409
    %v3350 = vpop.f32.mrf.mxu0
    %v3351 = vadd.f32 %v3238, %v3350
    %v3352 = vpop.f32.mrf.mxu0
    %v3353 = vadd.f32 %v3240, %v3352
    %v3354 = vpop.f32.mrf.mxu0
    %v3355 = vadd.f32 %v3242, %v3354
    %v3356 = vpop.f32.mrf.mxu0
    %v3357 = vadd.f32 %v3244, %v3356
    %3358 = vmatprep.mubr.bf16.mxu0 0
    %3359 = vmatmul.mubr.bf16.gmra.mxu0 %v414
    %v3360 = vpop.f32.mrf.mxu0
    %v3361 = vadd.f32 %v3248, %v3360
    %v3362 = vpop.f32.mrf.mxu0
    %v3363 = vadd.f32 %v3250, %v3362
    %v3364 = vpop.f32.mrf.mxu0
    %v3365 = vadd.f32 %v3252, %v3364
    %v3366 = vpop.f32.mrf.mxu0
    %v3367 = vadd.f32 %v3254, %v3366
    %3368 = vmatprep.mubr.bf16.mxu0 0
    %3369 = vmatmul.mubr.bf16.gmra.mxu0 %v419
    %v3370 = vpop.f32.mrf.mxu0
    %v3371 = vadd.f32 %v3258, %v3370
    %v3372 = vpop.f32.mrf.mxu0
    %v3373 = vadd.f32 %v3260, %v3372
    %v3374 = vpop.f32.mrf.mxu0
    %v3375 = vadd.f32 %v3262, %v3374
    %v3376 = vpop.f32.mrf.mxu0
    %v3377 = vadd.f32 %v3264, %v3376
    %3378 = vmatprep.mubr.bf16.mxu0 0
    %3379 = vmatmul.mubr.bf16.gmra.mxu0 %v424
    %v3380 = vpop.f32.mrf.mxu0
    %v3381 = vadd.f32 %v3268, %v3380
    %v3382 = vpop.f32.mrf.mxu0
    %v3383 = vadd.f32 %v3270, %v3382
    %v3384 = vpop.f32.mrf.mxu0
    %v3385 = vadd.f32 %v3272, %v3384
    %v3386 = vpop.f32.mrf.mxu0
    %v3387 = vadd.f32 %v3274, %v3386
    %3388 = vmatprep.mubr.bf16.mxu0 0
    %3389 = vmatmul.mubr.bf16.gmra.mxu0 %v429
    %v3390 = vpop.f32.mrf.mxu0
    %v3391 = vadd.f32 %v3278, %v3390
    %v3392 = vpop.f32.mrf.mxu0
    %v3393 = vadd.f32 %v3280, %v3392
    %v3394 = vpop.f32.mrf.mxu0
    %v3395 = vadd.f32 %v3282, %v3394
    %v3396 = vpop.f32.mrf.mxu0
    %v3397 = vadd.f32 %v3284, %v3396
    %3398 = vmatprep.mubr.bf16.mxu0 0
    %3399 = vmatmul.mubr.bf16.gmra.mxu0 %v434
    %v3400 = vpop.f32.mrf.mxu0
    %v3401 = vadd.f32 %v3288, %v3400
    %v3402 = vpop.f32.mrf.mxu0
    %v3403 = vadd.f32 %v3290, %v3402
    %v3404 = vpop.f32.mrf.mxu0
    %v3405 = vadd.f32 %v3292, %v3404
    %v3406 = vpop.f32.mrf.mxu0
    %v3407 = vadd.f32 %v3294, %v3406
    %3408 = vmatprep.mubr.bf16.mxu0 0
    %3409 = vmatmul.mubr.bf16.gmra.mxu0 %v439
    %v3410 = vpop.f32.mrf.mxu0
    %v3411 = vadd.f32 %v3298, %v3410
    %v3412 = vpop.f32.mrf.mxu0
    %v3413 = vadd.f32 %v3300, %v3412
    %v3414 = vpop.f32.mrf.mxu0
    %v3415 = vadd.f32 %v3302, %v3414
    %v3416 = vpop.f32.mrf.mxu0
    %v3417 = vadd.f32 %v3304, %v3416
    %3418 = vdwg.mxu0
    %3419 = vmatprep.subr.bf16.mxu0 %v1825
    %3420 = vmatpush1.bf16.msra.mxu0 %v1824
    %3421 = vmatprep.subr.bf16.mxu0 %v1817
    %3422 = vmatpush1.bf16.msra.mxu0 %v1816
    %3423 = vmatprep.subr.bf16.mxu0 %v1809
    %3424 = vmatpush1.bf16.msra.mxu0 %v1808
    %3425 = vmatprep.subr.bf16.mxu0 %v1801
    %3426 = vmatpush1.bf16.msra.mxu0 %v1800
    %3427 = vmatprep.subr.bf16.mxu0 %v1793
    %3428 = vmatpush1.bf16.msra.mxu0 %v1792
    %3429 = vmatprep.subr.bf16.mxu0 %v1785
    %3430 = vmatpush1.bf16.msra.mxu0 %v1784
    %3431 = vmatprep.subr.bf16.mxu0 %v1777
    %3432 = vmatpush1.bf16.msra.mxu0 %v1776
    %3433 = vmatprep.subr.bf16.mxu0 %v1769
    %3434 = vmatpush1.bf16.msra.mxu0 %v1768
    %3435 = vmatprep.subr.bf16.mxu0 %v1889
    %3436 = vmatpush2.bf16.msra.mxu0 %v1888
    %3437 = vmatprep.subr.bf16.mxu0 %v1881
    %3438 = vmatpush2.bf16.msra.mxu0 %v1880
    %3439 = vmatprep.subr.bf16.mxu0 %v1873
    %3440 = vmatpush2.bf16.msra.mxu0 %v1872
    %3441 = vmatprep.subr.bf16.mxu0 %v1865
    %3442 = vmatpush2.bf16.msra.mxu0 %v1864
    %3443 = vmatprep.subr.bf16.mxu0 %v1857
    %3444 = vmatpush2.bf16.msra.mxu0 %v1856
    %3445 = vmatprep.subr.bf16.mxu0 %v1849
    %3446 = vmatpush2.bf16.msra.mxu0 %v1848
    %3447 = vmatprep.subr.bf16.mxu0 %v1841
    %3448 = vmatpush2.bf16.msra.mxu0 %v1840
    %3449 = vmatprep.subr.bf16.mxu0 %v1833
    %3450 = vmatpush2.bf16.msra.mxu0 %v1832
    %3451 = vmatprep.mubr.bf16.mxu0 %v401
    %3452 = vmatmul.mubr.bf16.gmra.mxu0 %v400
    %v3453 = vpop.f32.mrf.mxu0
    %v3454 = vadd.f32 %v789, %v3453
    %v3455 = vpop.f32.mrf.mxu0
    %v3456 = vadd.f32 %v793, %v3455
    %v3457 = vpop.f32.mrf.mxu0
    %v3458 = vadd.f32 %v789, %v3457
    %v3459 = vpop.f32.mrf.mxu0
    %v3460 = vadd.f32 %v793, %v3459
    %3461 = vmatprep.mubr.bf16.mxu0 %v406
    %3462 = vmatmul.mubr.bf16.gmra.mxu0 %v405
    %v3463 = vpop.f32.mrf.mxu0
    %v3464 = vadd.f32 %v789, %v3463
    %v3465 = vpop.f32.mrf.mxu0
    %v3466 = vadd.f32 %v793, %v3465
    %v3467 = vpop.f32.mrf.mxu0
    %v3468 = vadd.f32 %v789, %v3467
    %v3469 = vpop.f32.mrf.mxu0
    %v3470 = vadd.f32 %v793, %v3469
    %3471 = vmatprep.mubr.bf16.mxu0 %v411
    %3472 = vmatmul.mubr.bf16.gmra.mxu0 %v410
    %v3473 = vpop.f32.mrf.mxu0
    %v3474 = vadd.f32 %v789, %v3473
    %v3475 = vpop.f32.mrf.mxu0
    %v3476 = vadd.f32 %v793, %v3475
    %v3477 = vpop.f32.mrf.mxu0
    %v3478 = vadd.f32 %v789, %v3477
    %v3479 = vpop.f32.mrf.mxu0
    %v3480 = vadd.f32 %v793, %v3479
    %3481 = vmatprep.mubr.bf16.mxu0 %v416
    %3482 = vmatmul.mubr.bf16.gmra.mxu0 %v415
    %v3483 = vpop.f32.mrf.mxu0
    %v3484 = vadd.f32 %v789, %v3483
    %v3485 = vpop.f32.mrf.mxu0
    %v3486 = vadd.f32 %v793, %v3485
    %v3487 = vpop.f32.mrf.mxu0
    %v3488 = vadd.f32 %v789, %v3487
    %v3489 = vpop.f32.mrf.mxu0
    %v3490 = vadd.f32 %v793, %v3489
    %3491 = vmatprep.mubr.bf16.mxu0 %v421
    %3492 = vmatmul.mubr.bf16.gmra.mxu0 %v420
    %v3493 = vpop.f32.mrf.mxu0
    %v3494 = vadd.f32 %v789, %v3493
    %v3495 = vpop.f32.mrf.mxu0
    %v3496 = vadd.f32 %v793, %v3495
    %v3497 = vpop.f32.mrf.mxu0
    %v3498 = vadd.f32 %v789, %v3497
    %v3499 = vpop.f32.mrf.mxu0
    %v3500 = vadd.f32 %v793, %v3499
    %3501 = vmatprep.mubr.bf16.mxu0 %v426
    %3502 = vmatmul.mubr.bf16.gmra.mxu0 %v425
    %v3503 = vpop.f32.mrf.mxu0
    %v3504 = vadd.f32 %v789, %v3503
    %v3505 = vpop.f32.mrf.mxu0
    %v3506 = vadd.f32 %v793, %v3505
    %v3507 = vpop.f32.mrf.mxu0
    %v3508 = vadd.f32 %v789, %v3507
    %v3509 = vpop.f32.mrf.mxu0
    %v3510 = vadd.f32 %v793, %v3509
    %3511 = vmatprep.mubr.bf16.mxu0 %v431
    %3512 = vmatmul.mubr.bf16.gmra.mxu0 %v430
    %v3513 = vpop.f32.mrf.mxu0
    %v3514 = vadd.f32 %v789, %v3513
    %v3515 = vpop.f32.mrf.mxu0
    %v3516 = vadd.f32 %v793, %v3515
    %v3517 = vpop.f32.mrf.mxu0
    %v3518 = vadd.f32 %v789, %v3517
    %v3519 = vpop.f32.mrf.mxu0
    %v3520 = vadd.f32 %v793, %v3519
    %3521 = vmatprep.mubr.bf16.mxu0 %v436
    %3522 = vmatmul.mubr.bf16.gmra.mxu0 %v435
    %v3523 = vpop.f32.mrf.mxu0
    %v3524 = vadd.f32 %v789, %v3523
    %v3525 = vpop.f32.mrf.mxu0
    %v3526 = vadd.f32 %v793, %v3525
    %v3527 = vpop.f32.mrf.mxu0
    %v3528 = vadd.f32 %v789, %v3527
    %v3529 = vpop.f32.mrf.mxu0
    %v3530 = vadd.f32 %v793, %v3529
    %3531 = vdwg.mxu0
    %3532 = vmatprep.subr.bf16.mxu0 %v1953
    %3533 = vmatpush1.bf16.msra.mxu0 %v1952
    %3534 = vmatprep.subr.bf16.mxu0 %v1945
    %3535 = vmatpush1.bf16.msra.mxu0 %v1944
    %3536 = vmatprep.subr.bf16.mxu0 %v1937
    %3537 = vmatpush1.bf16.msra.mxu0 %v1936
    %3538 = vmatprep.subr.bf16.mxu0 %v1929
    %3539 = vmatpush1.bf16.msra.mxu0 %v1928
    %3540 = vmatprep.subr.bf16.mxu0 %v1921
    %3541 = vmatpush1.bf16.msra.mxu0 %v1920
    %3542 = vmatprep.subr.bf16.mxu0 %v1913
    %3543 = vmatpush1.bf16.msra.mxu0 %v1912
    %3544 = vmatprep.subr.bf16.mxu0 %v1905
    %3545 = vmatpush1.bf16.msra.mxu0 %v1904
    %3546 = vmatprep.subr.bf16.mxu0 %v1897
    %3547 = vmatpush1.bf16.msra.mxu0 %v1896
    %3548 = vmatprep.subr.bf16.mxu0 %v2017
    %3549 = vmatpush2.bf16.msra.mxu0 %v2016
    %3550 = vmatprep.subr.bf16.mxu0 %v2009
    %3551 = vmatpush2.bf16.msra.mxu0 %v2008
    %3552 = vmatprep.subr.bf16.mxu0 %v2001
    %3553 = vmatpush2.bf16.msra.mxu0 %v2000
    %3554 = vmatprep.subr.bf16.mxu0 %v1993
    %3555 = vmatpush2.bf16.msra.mxu0 %v1992
    %3556 = vmatprep.subr.bf16.mxu0 %v1985
    %3557 = vmatpush2.bf16.msra.mxu0 %v1984
    %3558 = vmatprep.subr.bf16.mxu0 %v1977
    %3559 = vmatpush2.bf16.msra.mxu0 %v1976
    %3560 = vmatprep.subr.bf16.mxu0 %v1969
    %3561 = vmatpush2.bf16.msra.mxu0 %v1968
    %3562 = vmatprep.subr.bf16.mxu0 %v1961
    %3563 = vmatpush2.bf16.msra.mxu0 %v1960
    %3564 = vmatprep.mubr.bf16.mxu0 %v403
    %3565 = vmatmul.mubr.bf16.gmra.mxu0 %v402
    %v3566 = vpop.f32.mrf.mxu0
    %v3567 = vadd.f32 %v3454, %v3566
    %v3568 = vpop.f32.mrf.mxu0
    %v3569 = vadd.f32 %v3456, %v3568
    %v3570 = vpop.f32.mrf.mxu0
    %v3571 = vadd.f32 %v3458, %v3570
    %v3572 = vpop.f32.mrf.mxu0
    %v3573 = vadd.f32 %v3460, %v3572
    %3574 = vmatprep.mubr.bf16.mxu0 %v408
    %3575 = vmatmul.mubr.bf16.gmra.mxu0 %v407
    %v3576 = vpop.f32.mrf.mxu0
    %v3577 = vadd.f32 %v3464, %v3576
    %v3578 = vpop.f32.mrf.mxu0
    %v3579 = vadd.f32 %v3466, %v3578
    %v3580 = vpop.f32.mrf.mxu0
    %v3581 = vadd.f32 %v3468, %v3580
    %v3582 = vpop.f32.mrf.mxu0
    %v3583 = vadd.f32 %v3470, %v3582
    %3584 = vmatprep.mubr.bf16.mxu0 %v413
    %3585 = vmatmul.mubr.bf16.gmra.mxu0 %v412
    %v3586 = vpop.f32.mrf.mxu0
    %v3587 = vadd.f32 %v3474, %v3586
    %v3588 = vpop.f32.mrf.mxu0
    %v3589 = vadd.f32 %v3476, %v3588
    %v3590 = vpop.f32.mrf.mxu0
    %v3591 = vadd.f32 %v3478, %v3590
    %v3592 = vpop.f32.mrf.mxu0
    %v3593 = vadd.f32 %v3480, %v3592
    %3594 = vmatprep.mubr.bf16.mxu0 %v418
    %3595 = vmatmul.mubr.bf16.gmra.mxu0 %v417
    %v3596 = vpop.f32.mrf.mxu0
    %v3597 = vadd.f32 %v3484, %v3596
    %v3598 = vpop.f32.mrf.mxu0
    %v3599 = vadd.f32 %v3486, %v3598
    %v3600 = vpop.f32.mrf.mxu0
    %v3601 = vadd.f32 %v3488, %v3600
    %v3602 = vpop.f32.mrf.mxu0
    %v3603 = vadd.f32 %v3490, %v3602
    %3604 = vmatprep.mubr.bf16.mxu0 %v423
    %3605 = vmatmul.mubr.bf16.gmra.mxu0 %v422
    %v3606 = vpop.f32.mrf.mxu0
    %v3607 = vadd.f32 %v3494, %v3606
    %v3608 = vpop.f32.mrf.mxu0
    %v3609 = vadd.f32 %v3496, %v3608
    %v3610 = vpop.f32.mrf.mxu0
    %v3611 = vadd.f32 %v3498, %v3610
    %v3612 = vpop.f32.mrf.mxu0
    %v3613 = vadd.f32 %v3500, %v3612
    %3614 = vmatprep.mubr.bf16.mxu0 %v428
    %3615 = vmatmul.mubr.bf16.gmra.mxu0 %v427
    %v3616 = vpop.f32.mrf.mxu0
    %v3617 = vadd.f32 %v3504, %v3616
    %v3618 = vpop.f32.mrf.mxu0
    %v3619 = vadd.f32 %v3506, %v3618
    %v3620 = vpop.f32.mrf.mxu0
    %v3621 = vadd.f32 %v3508, %v3620
    %v3622 = vpop.f32.mrf.mxu0
    %v3623 = vadd.f32 %v3510, %v3622
    %3624 = vmatprep.mubr.bf16.mxu0 %v433
    %3625 = vmatmul.mubr.bf16.gmra.mxu0 %v432
    %v3626 = vpop.f32.mrf.mxu0
    %v3627 = vadd.f32 %v3514, %v3626
    %v3628 = vpop.f32.mrf.mxu0
    %v3629 = vadd.f32 %v3516, %v3628
    %v3630 = vpop.f32.mrf.mxu0
    %v3631 = vadd.f32 %v3518, %v3630
    %v3632 = vpop.f32.mrf.mxu0
    %v3633 = vadd.f32 %v3520, %v3632
    %3634 = vmatprep.mubr.bf16.mxu0 %v438
    %3635 = vmatmul.mubr.bf16.gmra.mxu0 %v437
    %v3636 = vpop.f32.mrf.mxu0
    %v3637 = vadd.f32 %v3524, %v3636
    %v3638 = vpop.f32.mrf.mxu0
    %v3639 = vadd.f32 %v3526, %v3638
    %v3640 = vpop.f32.mrf.mxu0
    %v3641 = vadd.f32 %v3528, %v3640
    %v3642 = vpop.f32.mrf.mxu0
    %v3643 = vadd.f32 %v3530, %v3642
    %3644 = vdwg.mxu0
    %3645 = vmatprep.subr.bf16.mxu0 %v2081
    %3646 = vmatpush1.bf16.msra.mxu0 %v2080
    %3647 = vmatprep.subr.bf16.mxu0 %v2073
    %3648 = vmatpush1.bf16.msra.mxu0 %v2072
    %3649 = vmatprep.subr.bf16.mxu0 %v2065
    %3650 = vmatpush1.bf16.msra.mxu0 %v2064
    %3651 = vmatprep.subr.bf16.mxu0 %v2057
    %3652 = vmatpush1.bf16.msra.mxu0 %v2056
    %3653 = vmatprep.subr.bf16.mxu0 %v2049
    %3654 = vmatpush1.bf16.msra.mxu0 %v2048
    %3655 = vmatprep.subr.bf16.mxu0 %v2041
    %3656 = vmatpush1.bf16.msra.mxu0 %v2040
    %3657 = vmatprep.subr.bf16.mxu0 %v2033
    %3658 = vmatpush1.bf16.msra.mxu0 %v2032
    %3659 = vmatprep.subr.bf16.mxu0 %v2025
    %3660 = vmatpush1.bf16.msra.mxu0 %v2024
    %3661 = vmatprep.subr.bf16.mxu0 0
    %3662 = vmatpush2.bf16.msra.mxu0 0
    %3663 = vmatprep.subr.bf16.mxu0 0
    %3664 = vmatpush2.bf16.msra.mxu0 0
    %3665 = vmatprep.subr.bf16.mxu0 0
    %3666 = vmatpush2.bf16.msra.mxu0 0
    %3667 = vmatprep.subr.bf16.mxu0 0
    %3668 = vmatpush2.bf16.msra.mxu0 0
    %3669 = vmatprep.subr.bf16.mxu0 0
    %3670 = vmatpush2.bf16.msra.mxu0 0
    %3671 = vmatprep.subr.bf16.mxu0 0
    %3672 = vmatpush2.bf16.msra.mxu0 0
    %3673 = vmatprep.subr.bf16.mxu0 0
    %3674 = vmatpush2.bf16.msra.mxu0 0
    %3675 = vmatprep.subr.bf16.mxu0 0
    %3676 = vmatpush2.bf16.msra.mxu0 0
    %3677 = vmatprep.mubr.bf16.mxu0 0
    %3678 = vmatmul.mubr.bf16.gmra.mxu0 %v404
    %v3679 = vpop.f32.mrf.mxu0
    %v3680 = vadd.f32 %v3567, %v3679
    %v3681 = vpop.f32.mrf.mxu0
    %v3682 = vadd.f32 %v3569, %v3681
    %v3683 = vpop.f32.mrf.mxu0
    %v3684 = vadd.f32 %v3571, %v3683
    %v3685 = vpop.f32.mrf.mxu0
    %v3686 = vadd.f32 %v3573, %v3685
    %3687 = vmatprep.mubr.bf16.mxu0 0
    %3688 = vmatmul.mubr.bf16.gmra.mxu0 %v409
    %v3689 = vpop.f32.mrf.mxu0
    %v3690 = vadd.f32 %v3577, %v3689
    %v3691 = vpop.f32.mrf.mxu0
    %v3692 = vadd.f32 %v3579, %v3691
    %v3693 = vpop.f32.mrf.mxu0
    %v3694 = vadd.f32 %v3581, %v3693
    %v3695 = vpop.f32.mrf.mxu0
    %v3696 = vadd.f32 %v3583, %v3695
    %3697 = vmatprep.mubr.bf16.mxu0 0
    %3698 = vmatmul.mubr.bf16.gmra.mxu0 %v414
    %v3699 = vpop.f32.mrf.mxu0
    %v3700 = vadd.f32 %v3587, %v3699
    %v3701 = vpop.f32.mrf.mxu0
    %v3702 = vadd.f32 %v3589, %v3701
    %v3703 = vpop.f32.mrf.mxu0
    %v3704 = vadd.f32 %v3591, %v3703
    %v3705 = vpop.f32.mrf.mxu0
    %v3706 = vadd.f32 %v3593, %v3705
    %3707 = vmatprep.mubr.bf16.mxu0 0
    %3708 = vmatmul.mubr.bf16.gmra.mxu0 %v419
    %v3709 = vpop.f32.mrf.mxu0
    %v3710 = vadd.f32 %v3597, %v3709
    %v3711 = vpop.f32.mrf.mxu0
    %v3712 = vadd.f32 %v3599, %v3711
    %v3713 = vpop.f32.mrf.mxu0
    %v3714 = vadd.f32 %v3601, %v3713
    %v3715 = vpop.f32.mrf.mxu0
    %v3716 = vadd.f32 %v3603, %v3715
    %3717 = vmatprep.mubr.bf16.mxu0 0
    %3718 = vmatmul.mubr.bf16.gmra.mxu0 %v424
    %v3719 = vpop.f32.mrf.mxu0
    %v3720 = vadd.f32 %v3607, %v3719
    %v3721 = vpop.f32.mrf.mxu0
    %v3722 = vadd.f32 %v3609, %v3721
    %v3723 = vpop.f32.mrf.mxu0
    %v3724 = vadd.f32 %v3611, %v3723
    %v3725 = vpop.f32.mrf.mxu0
    %v3726 = vadd.f32 %v3613, %v3725
    %3727 = vmatprep.mubr.bf16.mxu0 0
    %3728 = vmatmul.mubr.bf16.gmra.mxu0 %v429
    %v3729 = vpop.f32.mrf.mxu0
    %v3730 = vadd.f32 %v3617, %v3729
    %v3731 = vpop.f32.mrf.mxu0
    %v3732 = vadd.f32 %v3619, %v3731
    %v3733 = vpop.f32.mrf.mxu0
    %v3734 = vadd.f32 %v3621, %v3733
    %v3735 = vpop.f32.mrf.mxu0
    %v3736 = vadd.f32 %v3623, %v3735
    %3737 = vmatprep.mubr.bf16.mxu0 0
    %3738 = vmatmul.mubr.bf16.gmra.mxu0 %v434
    %v3739 = vpop.f32.mrf.mxu0
    %v3740 = vadd.f32 %v3627, %v3739
    %v3741 = vpop.f32.mrf.mxu0
    %v3742 = vadd.f32 %v3629, %v3741
    %v3743 = vpop.f32.mrf.mxu0
    %v3744 = vadd.f32 %v3631, %v3743
    %v3745 = vpop.f32.mrf.mxu0
    %v3746 = vadd.f32 %v3633, %v3745
    %3747 = vmatprep.mubr.bf16.mxu0 0
    %3748 = vmatmul.mubr.bf16.gmra.mxu0 %v439
    %v3749 = vpop.f32.mrf.mxu0
    %v3750 = vadd.f32 %v3637, %v3749
    %v3751 = vpop.f32.mrf.mxu0
    %v3752 = vadd.f32 %v3639, %v3751
    %v3753 = vpop.f32.mrf.mxu0
    %v3754 = vadd.f32 %v3641, %v3753
    %v3755 = vpop.f32.mrf.mxu0
    %v3756 = vadd.f32 %v3643, %v3755
    %3757 = vdwg.mxu0
    %v3758 = vmax.f32 %v2663, 0.0
    %v3759 = vmax.f32 %v2665, 0.0
    %v3760 = vmax.f32 %v3002, 0.0
    %v3761 = vmax.f32 %v3004, 0.0
    %v3762 = vmax.f32 %v3341, 0.0
    %v3763 = vmax.f32 %v3343, 0.0
    %v3764 = vmax.f32 %v3680, 0.0
    %v3765 = vmax.f32 %v3682, 0.0
    %v3766 = vmax.f32 %v2667, 0.0
    %v3767 = vmax.f32 %v2669, 0.0
    %v3768 = vmax.f32 %v3006, 0.0
    %v3769 = vmax.f32 %v3008, 0.0
    %v3770 = vmax.f32 %v3345, 0.0
    %v3771 = vmax.f32 %v3347, 0.0
    %v3772 = vmax.f32 %v3684, 0.0
    %v3773 = vmax.f32 %v3686, 0.0
    %v3774 = vmax.f32 %v2673, 0.0
    %v3775 = vmax.f32 %v2675, 0.0
    %v3776 = vmax.f32 %v3012, 0.0
    %v3777 = vmax.f32 %v3014, 0.0
    %v3778 = vmax.f32 %v3351, 0.0
    %v3779 = vmax.f32 %v3353, 0.0
    %v3780 = vmax.f32 %v3690, 0.0
    %v3781 = vmax.f32 %v3692, 0.0
    %v3782 = vmax.f32 %v2677, 0.0
    %v3783 = vmax.f32 %v2679, 0.0
    %v3784 = vmax.f32 %v3016, 0.0
    %v3785 = vmax.f32 %v3018, 0.0
    %v3786 = vmax.f32 %v3355, 0.0
    %v3787 = vmax.f32 %v3357, 0.0
    %v3788 = vmax.f32 %v3694, 0.0
    %v3789 = vmax.f32 %v3696, 0.0
    %v3790 = vmax.f32 %v2683, 0.0
    %v3791 = vmax.f32 %v2685, 0.0
    %v3792 = vmax.f32 %v3022, 0.0
    %v3793 = vmax.f32 %v3024, 0.0
    %v3794 = vmax.f32 %v3361, 0.0
    %v3795 = vmax.f32 %v3363, 0.0
    %v3796 = vmax.f32 %v3700, 0.0
    %v3797 = vmax.f32 %v3702, 0.0
    %v3798 = vmax.f32 %v2687, 0.0
    %v3799 = vmax.f32 %v2689, 0.0
    %v3800 = vmax.f32 %v3026, 0.0
    %v3801 = vmax.f32 %v3028, 0.0
    %v3802 = vmax.f32 %v3365, 0.0
    %v3803 = vmax.f32 %v3367, 0.0
    %v3804 = vmax.f32 %v3704, 0.0
    %v3805 = vmax.f32 %v3706, 0.0
    %v3806 = vmax.f32 %v2693, 0.0
    %v3807 = vmax.f32 %v2695, 0.0
    %v3808 = vmax.f32 %v3032, 0.0
    %v3809 = vmax.f32 %v3034, 0.0
    %v3810 = vmax.f32 %v3371, 0.0
    %v3811 = vmax.f32 %v3373, 0.0
    %v3812 = vmax.f32 %v3710, 0.0
    %v3813 = vmax.f32 %v3712, 0.0
    %v3814 = vmax.f32 %v2697, 0.0
    %v3815 = vmax.f32 %v2699, 0.0
    %v3816 = vmax.f32 %v3036, 0.0
    %v3817 = vmax.f32 %v3038, 0.0
    %v3818 = vmax.f32 %v3375, 0.0
    %v3819 = vmax.f32 %v3377, 0.0
    %v3820 = vmax.f32 %v3714, 0.0
    %v3821 = vmax.f32 %v3716, 0.0
    %v3822 = vmax.f32 %v2703, 0.0
    %v3823 = vmax.f32 %v2705, 0.0
    %v3824 = vmax.f32 %v3042, 0.0
    %v3825 = vmax.f32 %v3044, 0.0
    %v3826 = vmax.f32 %v3381, 0.0
    %v3827 = vmax.f32 %v3383, 0.0
    %v3828 = vmax.f32 %v3720, 0.0
    %v3829 = vmax.f32 %v3722, 0.0
    %v3830 = vmax.f32 %v2707, 0.0
    %v3831 = vmax.f32 %v2709, 0.0
    %v3832 = vmax.f32 %v3046, 0.0
    %v3833 = vmax.f32 %v3048, 0.0
    %v3834 = vmax.f32 %v3385, 0.0
    %v3835 = vmax.f32 %v3387, 0.0
    %v3836 = vmax.f32 %v3724, 0.0
    %v3837 = vmax.f32 %v3726, 0.0
    %v3838 = vmax.f32 %v2713, 0.0
    %v3839 = vmax.f32 %v2715, 0.0
    %v3840 = vmax.f32 %v3052, 0.0
    %v3841 = vmax.f32 %v3054, 0.0
    %v3842 = vmax.f32 %v3391, 0.0
    %v3843 = vmax.f32 %v3393, 0.0
    %v3844 = vmax.f32 %v3730, 0.0
    %v3845 = vmax.f32 %v3732, 0.0
    %v3846 = vmax.f32 %v2717, 0.0
    %v3847 = vmax.f32 %v2719, 0.0
    %v3848 = vmax.f32 %v3056, 0.0
    %v3849 = vmax.f32 %v3058, 0.0
    %v3850 = vmax.f32 %v3395, 0.0
    %v3851 = vmax.f32 %v3397, 0.0
    %v3852 = vmax.f32 %v3734, 0.0
    %v3853 = vmax.f32 %v3736, 0.0
    %v3854 = vmax.f32 %v2723, 0.0
    %v3855 = vmax.f32 %v2725, 0.0
    %v3856 = vmax.f32 %v3062, 0.0
    %v3857 = vmax.f32 %v3064, 0.0
    %v3858 = vmax.f32 %v3401, 0.0
    %v3859 = vmax.f32 %v3403, 0.0
    %v3860 = vmax.f32 %v3740, 0.0
    %v3861 = vmax.f32 %v3742, 0.0
    %v3862 = vmax.f32 %v2727, 0.0
    %v3863 = vmax.f32 %v2729, 0.0
    %v3864 = vmax.f32 %v3066, 0.0
    %v3865 = vmax.f32 %v3068, 0.0
    %v3866 = vmax.f32 %v3405, 0.0
    %v3867 = vmax.f32 %v3407, 0.0
    %v3868 = vmax.f32 %v3744, 0.0
    %v3869 = vmax.f32 %v3746, 0.0
    %v3870 = vmax.f32 %v2733, 0.0
    %v3871 = vmax.f32 %v2735, 0.0
    %v3872 = vmax.f32 %v3072, 0.0
    %v3873 = vmax.f32 %v3074, 0.0
    %v3874 = vmax.f32 %v3411, 0.0
    %v3875 = vmax.f32 %v3413, 0.0
    %v3876 = vmax.f32 %v3750, 0.0
    %v3877 = vmax.f32 %v3752, 0.0
    %v3878 = vmax.f32 %v2737, 0.0
    %v3879 = vmax.f32 %v2739, 0.0
    %v3880 = vmax.f32 %v3076, 0.0
    %v3881 = vmax.f32 %v3078, 0.0
    %v3882 = vmax.f32 %v3415, 0.0
    %v3883 = vmax.f32 %v3417, 0.0
    %v3884 = vmax.f32 %v3754, 0.0
    %v3885 = vmax.f32 %v3756, 0.0
    %v3886 = vpack.c.bf16 %v3766, %v3758
    %v3887 = vpack.c.bf16 %v3767, %v3759
    %v3888 = vpack.c.bf16 %v3768, %v3760
    %v3889 = vpack.c.bf16 %v3769, %v3761
    %v3890 = vpack.c.bf16 %v3770, %v3762
    %v3891 = vpack.c.bf16 %v3771, %v3763
    %v3892 = vpack.c.bf16 %v3772, %v3764
    %v3893 = vpack.c.bf16 %v3773, %v3765
    %v3894 = vpack.c.bf16 %v3782, %v3774
    %v3895 = vpack.c.bf16 %v3783, %v3775
    %v3896 = vpack.c.bf16 %v3784, %v3776
    %v3897 = vpack.c.bf16 %v3785, %v3777
    %v3898 = vpack.c.bf16 %v3786, %v3778
    %v3899 = vpack.c.bf16 %v3787, %v3779
    %v3900 = vpack.c.bf16 %v3788, %v3780
    %v3901 = vpack.c.bf16 %v3789, %v3781
    %v3902 = vpack.c.bf16 %v3798, %v3790
    %v3903 = vpack.c.bf16 %v3799, %v3791
    %v3904 = vpack.c.bf16 %v3800, %v3792
    %v3905 = vpack.c.bf16 %v3801, %v3793
    %v3906 = vpack.c.bf16 %v3802, %v3794
    %v3907 = vpack.c.bf16 %v3803, %v3795
    %v3908 = vpack.c.bf16 %v3804, %v3796
    %v3909 = vpack.c.bf16 %v3805, %v3797
    %v3910 = vpack.c.bf16 %v3814, %v3806
    %v3911 = vpack.c.bf16 %v3815, %v3807
    %v3912 = vpack.c.bf16 %v3816, %v3808
    %v3913 = vpack.c.bf16 %v3817, %v3809
    %v3914 = vpack.c.bf16 %v3818, %v3810
    %v3915 = vpack.c.bf16 %v3819, %v3811
    %v3916 = vpack.c.bf16 %v3820, %v3812
    %v3917 = vpack.c.bf16 %v3821, %v3813
    %v3918 = vpack.c.bf16 %v3830, %v3822
    %v3919 = vpack.c.bf16 %v3831, %v3823
    %v3920 = vpack.c.bf16 %v3832, %v3824
    %v3921 = vpack.c.bf16 %v3833, %v3825
    %v3922 = vpack.c.bf16 %v3834, %v3826
    %v3923 = vpack.c.bf16 %v3835, %v3827
    %v3924 = vpack.c.bf16 %v3836, %v3828
    %v3925 = vpack.c.bf16 %v3837, %v3829
    %v3926 = vpack.c.bf16 %v3846, %v3838
    %v3927 = vpack.c.bf16 %v3847, %v3839
    %v3928 = vpack.c.bf16 %v3848, %v3840
    %v3929 = vpack.c.bf16 %v3849, %v3841
    %v3930 = vpack.c.bf16 %v3850, %v3842
    %v3931 = vpack.c.bf16 %v3851, %v3843
    %v3932 = vpack.c.bf16 %v3852, %v3844
    %v3933 = vpack.c.bf16 %v3853, %v3845
    %v3934 = vpack.c.bf16 %v3862, %v3854
    %v3935 = vpack.c.bf16 %v3863, %v3855
    %v3936 = vpack.c.bf16 %v3864, %v3856
    %v3937 = vpack.c.bf16 %v3865, %v3857
    %v3938 = vpack.c.bf16 %v3866, %v3858
    %v3939 = vpack.c.bf16 %v3867, %v3859
    %v3940 = vpack.c.bf16 %v3868, %v3860
    %v3941 = vpack.c.bf16 %v3869, %v3861
    %v3942 = vpack.c.bf16 %v3878, %v3870
    %v3943 = vpack.c.bf16 %v3879, %v3871
    %v3944 = vpack.c.bf16 %v3880, %v3872
    %v3945 = vpack.c.bf16 %v3881, %v3873
    %v3946 = vpack.c.bf16 %v3882, %v3874
    %v3947 = vpack.c.bf16 %v3883, %v3875
    %v3948 = vpack.c.bf16 %v3884, %v3876
    %v3949 = vpack.c.bf16 %v3885, %v3877
    %v3950 = vld [vmem:[#allocation6] sm:$0xff]
    %v3951 = vld [vmem:[#allocation6 + $0x8] sm:$0xff]
    %v3952 = vld [vmem:[#allocation6 + $0x10] sm:$0xff]
    %v3953 = vld [vmem:[#allocation6 + $0x18] sm:$0xff]
    %v3954 = vld [vmem:[#allocation6 + $0x20] sm:$0xff]
    %v3955 = vld [vmem:[#allocation6 + $0x28] sm:$0xff]
    %v3956 = vld [vmem:[#allocation6 + $0x30] sm:$0xff]
    %v3957 = vld [vmem:[#allocation6 + $0x38] sm:$0xff]
    %v3958 = vld [vmem:[#allocation6 + $0x40] sm:$0xff]
    %v3959 = vld [vmem:[#allocation6 + $0x48] sm:$0xff]
    %v3960 = vld [vmem:[#allocation6 + $0x50] sm:$0xff]
    %v3961 = vld [vmem:[#allocation6 + $0x58] sm:$0xff]
    %v3962 = vld [vmem:[#allocation6 + $0x60] sm:$0xff]
    %v3963 = vld [vmem:[#allocation6 + $0x68] sm:$0xff]
    %v3964 = vld [vmem:[#allocation6 + $0x70] sm:$0xff]
    %v3965 = vld [vmem:[#allocation6 + $0x78] sm:$0xff]
    %v3966 = vld [vmem:[#allocation6 + $0x80] sm:$0xff]
    %v3967 = vld [vmem:[#allocation6 + $0x88] sm:$0xff]
    %v3968 = vld [vmem:[#allocation6 + $0x90] sm:$0xff]
    %v3969 = vld [vmem:[#allocation6 + $0x98] sm:$0xff]
    %v3970 = vld [vmem:[#allocation6 + $0xa0] sm:$0xff]
    %v3971 = vld [vmem:[#allocation6 + $0xa8] sm:$0xff]
    %v3972 = vld [vmem:[#allocation6 + $0xb0] sm:$0xff]
    %v3973 = vld [vmem:[#allocation6 + $0xb8] sm:$0xff]
    %v3974 = vld [vmem:[#allocation6 + $0xc0] sm:$0xff]
    %v3975 = vld [vmem:[#allocation6 + $0xc8] sm:$0xff]
    %v3976 = vld [vmem:[#allocation6 + $0xd0] sm:$0xff]
    %v3977 = vld [vmem:[#allocation6 + $0xd8] sm:$0xff]
    %v3978 = vld [vmem:[#allocation6 + $0xe0] sm:$0xff]
    %v3979 = vld [vmem:[#allocation6 + $0xe8] sm:$0xff]
    %v3980 = vld [vmem:[#allocation6 + $0xf0] sm:$0xff]
    %v3981 = vld [vmem:[#allocation6 + $0xf8] sm:$0xff]
    %v3982 = vld [vmem:[#allocation6 + $0x100] sm:$0xff]
    %v3983 = vld [vmem:[#allocation6 + $0x108] sm:$0xff]
    %v3984 = vld [vmem:[#allocation6 + $0x110] sm:$0xff]
    %v3985 = vld [vmem:[#allocation6 + $0x118] sm:$0xff]
    %v3986 = vld [vmem:[#allocation6 + $0x120] sm:$0xff]
    %v3987 = vld [vmem:[#allocation6 + $0x128] sm:$0xff]
    %v3988 = vld [vmem:[#allocation6 + $0x130] sm:$0xff]
    %v3989 = vld [vmem:[#allocation6 + $0x138] sm:$0xff]
    %v3990 = vld [vmem:[#allocation6 + $0x140] sm:$0xff]
    %v3991 = vld [vmem:[#allocation6 + $0x148] sm:$0xff]
    %v3992 = vld [vmem:[#allocation6 + $0x150] sm:$0xff]
    %v3993 = vld [vmem:[#allocation6 + $0x158] sm:$0xff]
    %v3994 = vld [vmem:[#allocation6 + $0x160] sm:$0xff]
    %v3995 = vld [vmem:[#allocation6 + $0x168] sm:$0xff]
    %v3996 = vld [vmem:[#allocation6 + $0x170] sm:$0xff]
    %v3997 = vld [vmem:[#allocation6 + $0x178] sm:$0xff]
    %v3998 = vld [vmem:[#allocation6 + $0x180] sm:$0xff]
    %v3999 = vld [vmem:[#allocation6 + $0x188] sm:$0xff]
    %v4000 = vld [vmem:[#allocation6 + $0x190] sm:$0xff]
    %v4001 = vld [vmem:[#allocation6 + $0x198] sm:$0xff]
    %v4002 = vld [vmem:[#allocation6 + $0x1a0] sm:$0xff]
    %v4003 = vld [vmem:[#allocation6 + $0x1a8] sm:$0xff]
    %v4004 = vld [vmem:[#allocation6 + $0x1b0] sm:$0xff]
    %v4005 = vld [vmem:[#allocation6 + $0x1b8] sm:$0xff]
    %v4006 = vld [vmem:[#allocation6 + $0x1c0] sm:$0xff]
    %v4007 = vld [vmem:[#allocation6 + $0x1c8] sm:$0xff]
    %v4008 = vld [vmem:[#allocation6 + $0x1d0] sm:$0xff]
    %v4009 = vld [vmem:[#allocation6 + $0x1d8] sm:$0xff]
    %v4010 = vld [vmem:[#allocation6 + $0x1e0] sm:$0xff]
    %v4011 = vld [vmem:[#allocation6 + $0x1e8] sm:$0xff]
    %v4012 = vld [vmem:[#allocation6 + $0x1f0] sm:$0xff]
    %v4013 = vld [vmem:[#allocation6 + $0x1f8] sm:$0xff]
    %v4014 = vld [vmem:[#allocation6 + $0x200] sm:$0xff]
    %v4015 = vld [vmem:[#allocation6 + $0x208] sm:$0xff]
    %v4016 = vld [vmem:[#allocation6 + $0x210] sm:$0xff]
    %v4017 = vld [vmem:[#allocation6 + $0x218] sm:$0xff]
    %v4018 = vld [vmem:[#allocation6 + $0x220] sm:$0xff]
    %v4019 = vld [vmem:[#allocation6 + $0x228] sm:$0xff]
    %v4020 = vld [vmem:[#allocation6 + $0x230] sm:$0xff]
    %v4021 = vld [vmem:[#allocation6 + $0x238] sm:$0xff]
    %v4022 = vld [vmem:[#allocation6 + $0x240] sm:$0xff]
    %v4023 = vld [vmem:[#allocation6 + $0x248] sm:$0xff]
    %v4024 = vld [vmem:[#allocation6 + $0x250] sm:$0xff]
    %v4025 = vld [vmem:[#allocation6 + $0x258] sm:$0xff]
    %v4026 = vld [vmem:[#allocation6 + $0x260] sm:$0xff]
    %v4027 = vld [vmem:[#allocation6 + $0x268] sm:$0xff]
    %v4028 = vld [vmem:[#allocation6 + $0x270] sm:$0xff]
    %v4029 = vld [vmem:[#allocation6 + $0x278] sm:$0xff]
    %v4030 = vld [vmem:[#allocation6 + $0x280] sm:$0xff]
    %v4031 = vld [vmem:[#allocation6 + $0x288] sm:$0xff]
    %v4032 = vld [vmem:[#allocation6 + $0x290] sm:$0xff]
    %v4033 = vld [vmem:[#allocation6 + $0x298] sm:$0xff]
    %v4034 = vld [vmem:[#allocation6 + $0x2a0] sm:$0xff]
    %v4035 = vld [vmem:[#allocation6 + $0x2a8] sm:$0xff]
    %v4036 = vld [vmem:[#allocation6 + $0x2b0] sm:$0xff]
    %v4037 = vld [vmem:[#allocation6 + $0x2b8] sm:$0xff]
    %v4038 = vld [vmem:[#allocation6 + $0x2c0] sm:$0xff]
    %v4039 = vld [vmem:[#allocation6 + $0x2c8] sm:$0xff]
    %v4040 = vld [vmem:[#allocation6 + $0x2d0] sm:$0xff]
    %v4041 = vld [vmem:[#allocation6 + $0x2d8] sm:$0xff]
    %v4042 = vld [vmem:[#allocation6 + $0x2e0] sm:$0xff]
    %v4043 = vld [vmem:[#allocation6 + $0x2e8] sm:$0xff]
    %v4044 = vld [vmem:[#allocation6 + $0x2f0] sm:$0xff]
    %v4045 = vld [vmem:[#allocation6 + $0x2f8] sm:$0xff]
    %v4046 = vld [vmem:[#allocation6 + $0x300] sm:$0xff]
    %v4047 = vld [vmem:[#allocation6 + $0x308] sm:$0xff]
    %v4048 = vld [vmem:[#allocation6 + $0x310] sm:$0xff]
    %v4049 = vld [vmem:[#allocation6 + $0x318] sm:$0xff]
    %v4050 = vld [vmem:[#allocation6 + $0x320] sm:$0xff]
    %v4051 = vld [vmem:[#allocation6 + $0x328] sm:$0xff]
    %v4052 = vld [vmem:[#allocation6 + $0x330] sm:$0xff]
    %v4053 = vld [vmem:[#allocation6 + $0x338] sm:$0xff]
    %v4054 = vld [vmem:[#allocation6 + $0x340] sm:$0xff]
    %v4055 = vld [vmem:[#allocation6 + $0x348] sm:$0xff]
    %v4056 = vld [vmem:[#allocation6 + $0x350] sm:$0xff]
    %v4057 = vld [vmem:[#allocation6 + $0x358] sm:$0xff]
    %v4058 = vld [vmem:[#allocation6 + $0x360] sm:$0xff]
    %v4059 = vld [vmem:[#allocation6 + $0x368] sm:$0xff]
    %v4060 = vld [vmem:[#allocation6 + $0x370] sm:$0xff]
    %v4061 = vld [vmem:[#allocation6 + $0x378] sm:$0xff]
    %v4062 = vld [vmem:[#allocation6 + $0x380] sm:$0xff]
    %v4063 = vld [vmem:[#allocation6 + $0x388] sm:$0xff]
    %v4064 = vld [vmem:[#allocation6 + $0x390] sm:$0xff]
    %v4065 = vld [vmem:[#allocation6 + $0x398] sm:$0xff]
    %v4066 = vld [vmem:[#allocation6 + $0x3a0] sm:$0xff]
    %v4067 = vld [vmem:[#allocation6 + $0x3a8] sm:$0xff]
    %v4068 = vld [vmem:[#allocation6 + $0x3b0] sm:$0xff]
    %v4069 = vld [vmem:[#allocation6 + $0x3b8] sm:$0xff]
    %v4070 = vld [vmem:[#allocation6 + $0x3c0] sm:$0xff]
    %v4071 = vld [vmem:[#allocation6 + $0x3c8] sm:$0xff]
    %v4072 = vld [vmem:[#allocation6 + $0x3d0] sm:$0xff]
    %v4073 = vld [vmem:[#allocation6 + $0x3d8] sm:$0xff]
    %v4074 = vld [vmem:[#allocation6 + $0x3e0] sm:$0xff]
    %v4075 = vld [vmem:[#allocation6 + $0x3e8] sm:$0xff]
    %v4076 = vld [vmem:[#allocation6 + $0x3f0] sm:$0xff]
    %v4077 = vld [vmem:[#allocation6 + $0x3f8] sm:$0xff]
    %v4078 = vld [vmem:[#allocation6 + $0x400] sm:$0xff]
    %v4079 = vld [vmem:[#allocation6 + $0x408] sm:$0xff]
    %v4080 = vld [vmem:[#allocation6 + $0x410] sm:$0xff]
    %v4081 = vld [vmem:[#allocation6 + $0x418] sm:$0xff]
    %v4082 = vld [vmem:[#allocation6 + $0x420] sm:$0xff]
    %v4083 = vld [vmem:[#allocation6 + $0x428] sm:$0xff]
    %v4084 = vld [vmem:[#allocation6 + $0x430] sm:$0xff]
    %v4085 = vld [vmem:[#allocation6 + $0x438] sm:$0xff]
    %v4086 = vld [vmem:[#allocation6 + $0x440] sm:$0xff]
    %v4087 = vld [vmem:[#allocation6 + $0x448] sm:$0xff]
    %v4088 = vld [vmem:[#allocation6 + $0x450] sm:$0xff]
    %v4089 = vld [vmem:[#allocation6 + $0x458] sm:$0xff]
    %v4090 = vld [vmem:[#allocation6 + $0x460] sm:$0xff]
    %v4091 = vld [vmem:[#allocation6 + $0x468] sm:$0xff]
    %v4092 = vld [vmem:[#allocation6 + $0x470] sm:$0xff]
    %v4093 = vld [vmem:[#allocation6 + $0x478] sm:$0xff]
    %v4094 = vld [vmem:[#allocation6 + $0x480] sm:$0xff]
    %v4095 = vld [vmem:[#allocation6 + $0x488] sm:$0xff]
    %v4096 = vld [vmem:[#allocation6 + $0x490] sm:$0xff]
    %v4097 = vld [vmem:[#allocation6 + $0x498] sm:$0xff]
    %v4098 = vld [vmem:[#allocation6 + $0x4a0] sm:$0xff]
    %v4099 = vld [vmem:[#allocation6 + $0x4a8] sm:$0xff]
    %v4100 = vld [vmem:[#allocation6 + $0x4b0] sm:$0xff]
    %v4101 = vld [vmem:[#allocation6 + $0x4b8] sm:$0xff]
    %v4102 = vld [vmem:[#allocation6 + $0x4c0] sm:$0xff]
    %v4103 = vld [vmem:[#allocation6 + $0x4c8] sm:$0xff]
    %v4104 = vld [vmem:[#allocation6 + $0x4d0] sm:$0xff]
    %v4105 = vld [vmem:[#allocation6 + $0x4d8] sm:$0xff]
    %v4106 = vld [vmem:[#allocation6 + $0x4e0] sm:$0xff]
    %v4107 = vld [vmem:[#allocation6 + $0x4e8] sm:$0xff]
    %v4108 = vld [vmem:[#allocation6 + $0x4f0] sm:$0xff]
    %v4109 = vld [vmem:[#allocation6 + $0x4f8] sm:$0xff]
    %v4110 = vld [vmem:[#allocation6 + $0x500] sm:$0xff]
    %v4111 = vld [vmem:[#allocation6 + $0x508] sm:$0xff]
    %v4112 = vld [vmem:[#allocation6 + $0x510] sm:$0xff]
    %v4113 = vld [vmem:[#allocation6 + $0x518] sm:$0xff]
    %v4114 = vld [vmem:[#allocation6 + $0x520] sm:$0xff]
    %v4115 = vld [vmem:[#allocation6 + $0x528] sm:$0xff]
    %v4116 = vld [vmem:[#allocation6 + $0x530] sm:$0xff]
    %v4117 = vld [vmem:[#allocation6 + $0x538] sm:$0xff]
    %v4118 = vld [vmem:[#allocation6 + $0x540] sm:$0xff]
    %v4119 = vld [vmem:[#allocation6 + $0x548] sm:$0xff]
    %v4120 = vld [vmem:[#allocation6 + $0x550] sm:$0xff]
    %v4121 = vld [vmem:[#allocation6 + $0x558] sm:$0xff]
    %v4122 = vld [vmem:[#allocation6 + $0x560] sm:$0xff]
    %v4123 = vld [vmem:[#allocation6 + $0x568] sm:$0xff]
    %v4124 = vld [vmem:[#allocation6 + $0x570] sm:$0xff]
    %v4125 = vld [vmem:[#allocation6 + $0x578] sm:$0xff]
    %v4126 = vld [vmem:[#allocation6 + $0x580] sm:$0xff]
    %v4127 = vld [vmem:[#allocation6 + $0x588] sm:$0xff]
    %v4128 = vld [vmem:[#allocation6 + $0x590] sm:$0xff]
    %v4129 = vld [vmem:[#allocation6 + $0x598] sm:$0xff]
    %v4130 = vld [vmem:[#allocation6 + $0x5a0] sm:$0xff]
    %v4131 = vld [vmem:[#allocation6 + $0x5a8] sm:$0xff]
    %v4132 = vld [vmem:[#allocation6 + $0x5b0] sm:$0xff]
    %v4133 = vld [vmem:[#allocation6 + $0x5b8] sm:$0xff]
    %v4134 = vld [vmem:[#allocation6 + $0x5c0] sm:$0xff]
    %v4135 = vld [vmem:[#allocation6 + $0x5c8] sm:$0xff]
    %v4136 = vld [vmem:[#allocation6 + $0x5d0] sm:$0xff]
    %v4137 = vld [vmem:[#allocation6 + $0x5d8] sm:$0xff]
    %v4138 = vld [vmem:[#allocation6 + $0x5e0] sm:$0xff]
    %v4139 = vld [vmem:[#allocation6 + $0x5e8] sm:$0xff]
    %v4140 = vld [vmem:[#allocation6 + $0x5f0] sm:$0xff]
    %v4141 = vld [vmem:[#allocation6 + $0x5f8] sm:$0xff]
    %v4142 = vld [vmem:[#allocation6 + $0x600] sm:$0xff]
    %v4143 = vld [vmem:[#allocation6 + $0x608] sm:$0xff]
    %v4144 = vld [vmem:[#allocation6 + $0x610] sm:$0xff]
    %v4145 = vld [vmem:[#allocation6 + $0x618] sm:$0xff]
    %v4146 = vld [vmem:[#allocation6 + $0x620] sm:$0xff]
    %v4147 = vld [vmem:[#allocation6 + $0x628] sm:$0xff]
    %v4148 = vld [vmem:[#allocation6 + $0x630] sm:$0xff]
    %v4149 = vld [vmem:[#allocation6 + $0x638] sm:$0xff]
    %v4150 = vld [vmem:[#allocation6 + $0x640] sm:$0xff]
    %v4151 = vld [vmem:[#allocation6 + $0x648] sm:$0xff]
    %v4152 = vld [vmem:[#allocation6 + $0x650] sm:$0xff]
    %v4153 = vld [vmem:[#allocation6 + $0x658] sm:$0xff]
    %v4154 = vld [vmem:[#allocation6 + $0x660] sm:$0xff]
    %v4155 = vld [vmem:[#allocation6 + $0x668] sm:$0xff]
    %v4156 = vld [vmem:[#allocation6 + $0x670] sm:$0xff]
    %v4157 = vld [vmem:[#allocation6 + $0x678] sm:$0xff]
    %v4158 = vld [vmem:[#allocation6 + $0x680] sm:$0xff]
    %v4159 = vld [vmem:[#allocation6 + $0x688] sm:$0xff]
    %v4160 = vld [vmem:[#allocation6 + $0x690] sm:$0xff]
    %v4161 = vld [vmem:[#allocation6 + $0x698] sm:$0xff]
    %v4162 = vld [vmem:[#allocation6 + $0x6a0] sm:$0xff]
    %v4163 = vld [vmem:[#allocation6 + $0x6a8] sm:$0xff]
    %v4164 = vld [vmem:[#allocation6 + $0x6b0] sm:$0xff]
    %v4165 = vld [vmem:[#allocation6 + $0x6b8] sm:$0xff]
    %v4166 = vld [vmem:[#allocation6 + $0x6c0] sm:$0xff]
    %v4167 = vld [vmem:[#allocation6 + $0x6c8] sm:$0xff]
    %v4168 = vld [vmem:[#allocation6 + $0x6d0] sm:$0xff]
    %v4169 = vld [vmem:[#allocation6 + $0x6d8] sm:$0xff]
    %v4170 = vld [vmem:[#allocation6 + $0x6e0] sm:$0xff]
    %v4171 = vld [vmem:[#allocation6 + $0x6e8] sm:$0xff]
    %v4172 = vld [vmem:[#allocation6 + $0x6f0] sm:$0xff]
    %v4173 = vld [vmem:[#allocation6 + $0x6f8] sm:$0xff]
    %v4174 = vld [vmem:[#allocation6 + $0x700] sm:$0xff]
    %v4175 = vld [vmem:[#allocation6 + $0x708] sm:$0xff]
    %v4176 = vld [vmem:[#allocation6 + $0x710] sm:$0xff]
    %v4177 = vld [vmem:[#allocation6 + $0x718] sm:$0xff]
    %v4178 = vld [vmem:[#allocation6 + $0x720] sm:$0xff]
    %v4179 = vld [vmem:[#allocation6 + $0x728] sm:$0xff]
    %v4180 = vld [vmem:[#allocation6 + $0x730] sm:$0xff]
    %v4181 = vld [vmem:[#allocation6 + $0x738] sm:$0xff]
    %v4182 = vld [vmem:[#allocation6 + $0x740] sm:$0xff]
    %v4183 = vld [vmem:[#allocation6 + $0x748] sm:$0xff]
    %v4184 = vld [vmem:[#allocation6 + $0x750] sm:$0xff]
    %v4185 = vld [vmem:[#allocation6 + $0x758] sm:$0xff]
    %v4186 = vld [vmem:[#allocation6 + $0x760] sm:$0xff]
    %v4187 = vld [vmem:[#allocation6 + $0x768] sm:$0xff]
    %v4188 = vld [vmem:[#allocation6 + $0x770] sm:$0xff]
    %v4189 = vld [vmem:[#allocation6 + $0x778] sm:$0xff]
    %v4190 = vld [vmem:[#allocation6 + $0x780] sm:$0xff]
    %v4191 = vld [vmem:[#allocation6 + $0x788] sm:$0xff]
    %v4192 = vld [vmem:[#allocation6 + $0x790] sm:$0xff]
    %v4193 = vld [vmem:[#allocation6 + $0x798] sm:$0xff]
    %v4194 = vld [vmem:[#allocation6 + $0x7a0] sm:$0xff]
    %v4195 = vld [vmem:[#allocation6 + $0x7a8] sm:$0xff]
    %v4196 = vld [vmem:[#allocation6 + $0x7b0] sm:$0xff]
    %v4197 = vld [vmem:[#allocation6 + $0x7b8] sm:$0xff]
    %v4198 = vld [vmem:[#allocation6 + $0x7c0] sm:$0xff]
    %v4199 = vld [vmem:[#allocation6 + $0x7c8] sm:$0xff]
    %v4200 = vld [vmem:[#allocation6 + $0x7d0] sm:$0xff]
    %v4201 = vld [vmem:[#allocation6 + $0x7d8] sm:$0xff]
    %v4202 = vld [vmem:[#allocation6 + $0x7e0] sm:$0xff]
    %v4203 = vld [vmem:[#allocation6 + $0x7e8] sm:$0xff]
    %v4204 = vld [vmem:[#allocation6 + $0x7f0] sm:$0xff]
    %v4205 = vld [vmem:[#allocation6 + $0x7f8] sm:$0xff]
    %v4206 = vld [vmem:[#allocation6 + $0x800] sm:$0xff]
    %v4207 = vld [vmem:[#allocation6 + $0x808] sm:$0xff]
    %v4208 = vld [vmem:[#allocation6 + $0x810] sm:$0xff]
    %v4209 = vld [vmem:[#allocation6 + $0x818] sm:$0xff]
    %v4210 = vld [vmem:[#allocation6 + $0x820] sm:$0xff]
    %v4211 = vld [vmem:[#allocation6 + $0x828] sm:$0xff]
    %v4212 = vld [vmem:[#allocation6 + $0x830] sm:$0xff]
    %v4213 = vld [vmem:[#allocation6 + $0x838] sm:$0xff]
    %v4214 = vld [vmem:[#allocation6 + $0x840] sm:$0xff]
    %v4215 = vld [vmem:[#allocation6 + $0x848] sm:$0xff]
    %v4216 = vld [vmem:[#allocation6 + $0x850] sm:$0xff]
    %v4217 = vld [vmem:[#allocation6 + $0x858] sm:$0xff]
    %v4218 = vld [vmem:[#allocation6 + $0x860] sm:$0xff]
    %v4219 = vld [vmem:[#allocation6 + $0x868] sm:$0xff]
    %v4220 = vld [vmem:[#allocation6 + $0x870] sm:$0xff]
    %v4221 = vld [vmem:[#allocation6 + $0x878] sm:$0xff]
    %v4222 = vld [vmem:[#allocation6 + $0x880] sm:$0xff]
    %v4223 = vld [vmem:[#allocation6 + $0x888] sm:$0xff]
    %v4224 = vld [vmem:[#allocation6 + $0x890] sm:$0xff]
    %v4225 = vld [vmem:[#allocation6 + $0x898] sm:$0xff]
    %v4226 = vld [vmem:[#allocation6 + $0x8a0] sm:$0xff]
    %v4227 = vld [vmem:[#allocation6 + $0x8a8] sm:$0xff]
    %v4228 = vld [vmem:[#allocation6 + $0x8b0] sm:$0xff]
    %v4229 = vld [vmem:[#allocation6 + $0x8b8] sm:$0xff]
    %v4230 = vld [vmem:[#allocation6 + $0x8c0] sm:$0xff]
    %v4231 = vld [vmem:[#allocation6 + $0x8c8] sm:$0xff]
    %v4232 = vld [vmem:[#allocation6 + $0x8d0] sm:$0xff]
    %v4233 = vld [vmem:[#allocation6 + $0x8d8] sm:$0xff]
    %v4234 = vld [vmem:[#allocation6 + $0x8e0] sm:$0xff]
    %v4235 = vld [vmem:[#allocation6 + $0x8e8] sm:$0xff]
    %v4236 = vld [vmem:[#allocation6 + $0x8f0] sm:$0xff]
    %v4237 = vld [vmem:[#allocation6 + $0x8f8] sm:$0xff]
    %v4238 = vld [vmem:[#allocation6 + $0x900] sm:$0xff]
    %v4239 = vld [vmem:[#allocation6 + $0x908] sm:$0xff]
    %v4240 = vld [vmem:[#allocation6 + $0x910] sm:$0xff]
    %v4241 = vld [vmem:[#allocation6 + $0x918] sm:$0xff]
    %v4242 = vld [vmem:[#allocation6 + $0x920] sm:$0xff]
    %v4243 = vld [vmem:[#allocation6 + $0x928] sm:$0xff]
    %v4244 = vld [vmem:[#allocation6 + $0x930] sm:$0xff]
    %v4245 = vld [vmem:[#allocation6 + $0x938] sm:$0xff]
    %v4246 = vld [vmem:[#allocation6 + $0x940] sm:$0xff]
    %v4247 = vld [vmem:[#allocation6 + $0x948] sm:$0xff]
    %v4248 = vld [vmem:[#allocation6 + $0x950] sm:$0xff]
    %v4249 = vld [vmem:[#allocation6 + $0x958] sm:$0xff]
    %v4250 = vld [vmem:[#allocation6 + $0x960] sm:$0xff]
    %v4251 = vld [vmem:[#allocation6 + $0x968] sm:$0xff]
    %v4252 = vld [vmem:[#allocation6 + $0x970] sm:$0xff]
    %v4253 = vld [vmem:[#allocation6 + $0x978] sm:$0xff]
    %v4254 = vld [vmem:[#allocation6 + $0x980] sm:$0xff]
    %v4255 = vld [vmem:[#allocation6 + $0x988] sm:$0xff]
    %v4256 = vld [vmem:[#allocation6 + $0x990] sm:$0xff]
    %v4257 = vld [vmem:[#allocation6 + $0x998] sm:$0xff]
    %v4258 = vld [vmem:[#allocation6 + $0x9a0] sm:$0xff]
    %v4259 = vld [vmem:[#allocation6 + $0x9a8] sm:$0xff]
    %v4260 = vld [vmem:[#allocation6 + $0x9b0] sm:$0xff]
    %v4261 = vld [vmem:[#allocation6 + $0x9b8] sm:$0xff]
    %v4262 = vld [vmem:[#allocation6 + $0x9c0] sm:$0xff]
    %v4263 = vld [vmem:[#allocation6 + $0x9c8] sm:$0xff]
    %v4264 = vld [vmem:[#allocation6 + $0x9d0] sm:$0xff]
    %v4265 = vld [vmem:[#allocation6 + $0x9d8] sm:$0xff]
    %v4266 = vld [vmem:[#allocation6 + $0x9e0] sm:$0xff]
    %v4267 = vld [vmem:[#allocation6 + $0x9e8] sm:$0xff]
    %v4268 = vld [vmem:[#allocation6 + $0x9f0] sm:$0xff]
    %v4269 = vld [vmem:[#allocation6 + $0x9f8] sm:$0xff]
    %v4270 = vld [vmem:[#allocation6 + $0xa00] sm:$0xff]
    %v4271 = vld [vmem:[#allocation6 + $0xa08] sm:$0xff]
    %v4272 = vld [vmem:[#allocation6 + $0xa10] sm:$0xff]
    %v4273 = vld [vmem:[#allocation6 + $0xa18] sm:$0xff]
    %v4274 = vld [vmem:[#allocation6 + $0xa20] sm:$0xff]
    %v4275 = vld [vmem:[#allocation6 + $0xa28] sm:$0xff]
    %v4276 = vld [vmem:[#allocation6 + $0xa30] sm:$0xff]
    %v4277 = vld [vmem:[#allocation6 + $0xa38] sm:$0xff]
    %v4278 = vld [vmem:[#allocation6 + $0xa40] sm:$0xff]
    %v4279 = vld [vmem:[#allocation6 + $0xa48] sm:$0xff]
    %v4280 = vld [vmem:[#allocation6 + $0xa50] sm:$0xff]
    %v4281 = vld [vmem:[#allocation6 + $0xa58] sm:$0xff]
    %v4282 = vld [vmem:[#allocation6 + $0xa60] sm:$0xff]
    %v4283 = vld [vmem:[#allocation6 + $0xa68] sm:$0xff]
    %v4284 = vld [vmem:[#allocation6 + $0xa70] sm:$0xff]
    %v4285 = vld [vmem:[#allocation6 + $0xa78] sm:$0xff]
    %v4286 = vld [vmem:[#allocation6 + $0xa80] sm:$0xff]
    %v4287 = vld [vmem:[#allocation6 + $0xa88] sm:$0xff]
    %v4288 = vld [vmem:[#allocation6 + $0xa90] sm:$0xff]
    %v4289 = vld [vmem:[#allocation6 + $0xa98] sm:$0xff]
    %v4290 = vld [vmem:[#allocation6 + $0xaa0] sm:$0xff]
    %v4291 = vld [vmem:[#allocation6 + $0xaa8] sm:$0xff]
    %v4292 = vld [vmem:[#allocation6 + $0xab0] sm:$0xff]
    %v4293 = vld [vmem:[#allocation6 + $0xab8] sm:$0xff]
    %v4294 = vld [vmem:[#allocation6 + $0xac0] sm:$0xff]
    %v4295 = vld [vmem:[#allocation6 + $0xac8] sm:$0xff]
    %v4296 = vld [vmem:[#allocation6 + $0xad0] sm:$0xff]
    %v4297 = vld [vmem:[#allocation6 + $0xad8] sm:$0xff]
    %v4298 = vld [vmem:[#allocation6 + $0xae0] sm:$0xff]
    %v4299 = vld [vmem:[#allocation6 + $0xae8] sm:$0xff]
    %v4300 = vld [vmem:[#allocation6 + $0xaf0] sm:$0xff]
    %v4301 = vld [vmem:[#allocation6 + $0xaf8] sm:$0xff]
    %v4302 = vld [vmem:[#allocation6 + $0xb00] sm:$0xff]
    %v4303 = vld [vmem:[#allocation6 + $0xb08] sm:$0xff]
    %v4304 = vld [vmem:[#allocation6 + $0xb10] sm:$0xff]
    %v4305 = vld [vmem:[#allocation6 + $0xb18] sm:$0xff]
    %v4306 = vld [vmem:[#allocation6 + $0xb20] sm:$0xff]
    %v4307 = vld [vmem:[#allocation6 + $0xb28] sm:$0xff]
    %v4308 = vld [vmem:[#allocation6 + $0xb30] sm:$0xff]
    %v4309 = vld [vmem:[#allocation6 + $0xb38] sm:$0xff]
    %v4310 = vld [vmem:[#allocation6 + $0xb40] sm:$0xff]
    %v4311 = vld [vmem:[#allocation6 + $0xb48] sm:$0xff]
    %v4312 = vld [vmem:[#allocation6 + $0xb50] sm:$0xff]
    %v4313 = vld [vmem:[#allocation6 + $0xb58] sm:$0xff]
    %v4314 = vld [vmem:[#allocation6 + $0xb60] sm:$0xff]
    %v4315 = vld [vmem:[#allocation6 + $0xb68] sm:$0xff]
    %v4316 = vld [vmem:[#allocation6 + $0xb70] sm:$0xff]
    %v4317 = vld [vmem:[#allocation6 + $0xb78] sm:$0xff]
    %v4318 = vld [vmem:[#allocation6 + $0xb80] sm:$0xff]
    %v4319 = vld [vmem:[#allocation6 + $0xb88] sm:$0xff]
    %v4320 = vld [vmem:[#allocation6 + $0xb90] sm:$0xff]
    %v4321 = vld [vmem:[#allocation6 + $0xb98] sm:$0xff]
    %v4322 = vld [vmem:[#allocation6 + $0xba0] sm:$0xff]
    %v4323 = vld [vmem:[#allocation6 + $0xba8] sm:$0xff]
    %v4324 = vld [vmem:[#allocation6 + $0xbb0] sm:$0xff]
    %v4325 = vld [vmem:[#allocation6 + $0xbb8] sm:$0xff]
    %v4326 = vld [vmem:[#allocation6 + $0xbc0] sm:$0xff]
    %v4327 = vld [vmem:[#allocation6 + $0xbc8] sm:$0xff]
    %v4328 = vld [vmem:[#allocation6 + $0xbd0] sm:$0xff]
    %v4329 = vld [vmem:[#allocation6 + $0xbd8] sm:$0xff]
    %v4330 = vld [vmem:[#allocation6 + $0xbe0] sm:$0xff]
    %v4331 = vld [vmem:[#allocation6 + $0xbe8] sm:$0xff]
    %v4332 = vld [vmem:[#allocation6 + $0xbf0] sm:$0xff]
    %v4333 = vld [vmem:[#allocation6 + $0xbf8] sm:$0xff]
    %v4334 = vld [vmem:[#allocation6 + $0xc00] sm:$0xff]
    %v4335 = vld [vmem:[#allocation6 + $0xc08] sm:$0xff]
    %v4336 = vld [vmem:[#allocation6 + $0xc10] sm:$0xff]
    %v4337 = vld [vmem:[#allocation6 + $0xc18] sm:$0xff]
    %v4338 = vld [vmem:[#allocation6 + $0xc20] sm:$0xff]
    %v4339 = vld [vmem:[#allocation6 + $0xc28] sm:$0xff]
    %v4340 = vld [vmem:[#allocation6 + $0xc30] sm:$0xff]
    %v4341 = vld [vmem:[#allocation6 + $0xc38] sm:$0xff]
    %v4342 = vld [vmem:[#allocation6 + $0xc40] sm:$0xff]
    %v4343 = vld [vmem:[#allocation6 + $0xc48] sm:$0xff]
    %v4344 = vld [vmem:[#allocation6 + $0xc50] sm:$0xff]
    %v4345 = vld [vmem:[#allocation6 + $0xc58] sm:$0xff]
    %v4346 = vld [vmem:[#allocation6 + $0xc60] sm:$0xff]
    %v4347 = vld [vmem:[#allocation6 + $0xc68] sm:$0xff]
    %v4348 = vld [vmem:[#allocation6 + $0xc70] sm:$0xff]
    %v4349 = vld [vmem:[#allocation6 + $0xc78] sm:$0xff]
    %v4350 = vld [vmem:[#allocation6 + $0xc80] sm:$0xff]
    %v4351 = vld [vmem:[#allocation6 + $0xc88] sm:$0xff]
    %v4352 = vld [vmem:[#allocation6 + $0xc90] sm:$0xff]
    %v4353 = vld [vmem:[#allocation6 + $0xc98] sm:$0xff]
    %v4354 = vld [vmem:[#allocation6 + $0xca0] sm:$0xff]
    %v4355 = vld [vmem:[#allocation6 + $0xca8] sm:$0xff]
    %v4356 = vld [vmem:[#allocation6 + $0xcb0] sm:$0xff]
    %v4357 = vld [vmem:[#allocation6 + $0xcb8] sm:$0xff]
    %v4358 = vld [vmem:[#allocation6 + $0xcc0] sm:$0xff]
    %v4359 = vld [vmem:[#allocation6 + $0xcc8] sm:$0xff]
    %v4360 = vld [vmem:[#allocation6 + $0xcd0] sm:$0xff]
    %v4361 = vld [vmem:[#allocation6 + $0xcd8] sm:$0xff]
    %v4362 = vld [vmem:[#allocation6 + $0xce0] sm:$0xff]
    %v4363 = vld [vmem:[#allocation6 + $0xce8] sm:$0xff]
    %v4364 = vld [vmem:[#allocation6 + $0xcf0] sm:$0xff]
    %v4365 = vld [vmem:[#allocation6 + $0xcf8] sm:$0xff]
    %v4366 = vld [vmem:[#allocation6 + $0xd00] sm:$0xff]
    %v4367 = vld [vmem:[#allocation6 + $0xd08] sm:$0xff]
    %v4368 = vld [vmem:[#allocation6 + $0xd10] sm:$0xff]
    %v4369 = vld [vmem:[#allocation6 + $0xd18] sm:$0xff]
    %v4370 = vld [vmem:[#allocation6 + $0xd20] sm:$0xff]
    %v4371 = vld [vmem:[#allocation6 + $0xd28] sm:$0xff]
    %v4372 = vld [vmem:[#allocation6 + $0xd30] sm:$0xff]
    %v4373 = vld [vmem:[#allocation6 + $0xd38] sm:$0xff]
    %v4374 = vld [vmem:[#allocation6 + $0xd40] sm:$0xff]
    %v4375 = vld [vmem:[#allocation6 + $0xd48] sm:$0xff]
    %v4376 = vld [vmem:[#allocation6 + $0xd50] sm:$0xff]
    %v4377 = vld [vmem:[#allocation6 + $0xd58] sm:$0xff]
    %v4378 = vld [vmem:[#allocation6 + $0xd60] sm:$0xff]
    %v4379 = vld [vmem:[#allocation6 + $0xd68] sm:$0xff]
    %v4380 = vld [vmem:[#allocation6 + $0xd70] sm:$0xff]
    %v4381 = vld [vmem:[#allocation6 + $0xd78] sm:$0xff]
    %v4382 = vld [vmem:[#allocation6 + $0xd80] sm:$0xff]
    %v4383 = vld [vmem:[#allocation6 + $0xd88] sm:$0xff]
    %v4384 = vld [vmem:[#allocation6 + $0xd90] sm:$0xff]
    %v4385 = vld [vmem:[#allocation6 + $0xd98] sm:$0xff]
    %v4386 = vld [vmem:[#allocation6 + $0xda0] sm:$0xff]
    %v4387 = vld [vmem:[#allocation6 + $0xda8] sm:$0xff]
    %v4388 = vld [vmem:[#allocation6 + $0xdb0] sm:$0xff]
    %v4389 = vld [vmem:[#allocation6 + $0xdb8] sm:$0xff]
    %v4390 = vld [vmem:[#allocation6 + $0xdc0] sm:$0xff]
    %v4391 = vld [vmem:[#allocation6 + $0xdc8] sm:$0xff]
    %v4392 = vld [vmem:[#allocation6 + $0xdd0] sm:$0xff]
    %v4393 = vld [vmem:[#allocation6 + $0xdd8] sm:$0xff]
    %v4394 = vld [vmem:[#allocation6 + $0xde0] sm:$0xff]
    %v4395 = vld [vmem:[#allocation6 + $0xde8] sm:$0xff]
    %v4396 = vld [vmem:[#allocation6 + $0xdf0] sm:$0xff]
    %v4397 = vld [vmem:[#allocation6 + $0xdf8] sm:$0xff]
    %v4398 = vld [vmem:[#allocation6 + $0xe00] sm:$0xff]
    %v4399 = vld [vmem:[#allocation6 + $0xe08] sm:$0xff]
    %v4400 = vld [vmem:[#allocation6 + $0xe10] sm:$0xff]
    %v4401 = vld [vmem:[#allocation6 + $0xe18] sm:$0xff]
    %v4402 = vld [vmem:[#allocation6 + $0xe20] sm:$0xff]
    %v4403 = vld [vmem:[#allocation6 + $0xe28] sm:$0xff]
    %v4404 = vld [vmem:[#allocation6 + $0xe30] sm:$0xff]
    %v4405 = vld [vmem:[#allocation6 + $0xe38] sm:$0xff]
    %v4406 = vld [vmem:[#allocation6 + $0xe40] sm:$0xff]
    %v4407 = vld [vmem:[#allocation6 + $0xe48] sm:$0xff]
    %v4408 = vld [vmem:[#allocation6 + $0xe50] sm:$0xff]
    %v4409 = vld [vmem:[#allocation6 + $0xe58] sm:$0xff]
    %v4410 = vld [vmem:[#allocation6 + $0xe60] sm:$0xff]
    %v4411 = vld [vmem:[#allocation6 + $0xe68] sm:$0xff]
    %v4412 = vld [vmem:[#allocation6 + $0xe70] sm:$0xff]
    %v4413 = vld [vmem:[#allocation6 + $0xe78] sm:$0xff]
    %v4414 = vld [vmem:[#allocation6 + $0xe80] sm:$0xff]
    %v4415 = vld [vmem:[#allocation6 + $0xe88] sm:$0xff]
    %v4416 = vld [vmem:[#allocation6 + $0xe90] sm:$0xff]
    %v4417 = vld [vmem:[#allocation6 + $0xe98] sm:$0xff]
    %v4418 = vld [vmem:[#allocation6 + $0xea0] sm:$0xff]
    %v4419 = vld [vmem:[#allocation6 + $0xea8] sm:$0xff]
    %v4420 = vld [vmem:[#allocation6 + $0xeb0] sm:$0xff]
    %v4421 = vld [vmem:[#allocation6 + $0xeb8] sm:$0xff]
    %v4422 = vld [vmem:[#allocation6 + $0xec0] sm:$0xff]
    %v4423 = vld [vmem:[#allocation6 + $0xec8] sm:$0xff]
    %v4424 = vld [vmem:[#allocation6 + $0xed0] sm:$0xff]
    %v4425 = vld [vmem:[#allocation6 + $0xed8] sm:$0xff]
    %v4426 = vld [vmem:[#allocation6 + $0xee0] sm:$0xff]
    %v4427 = vld [vmem:[#allocation6 + $0xee8] sm:$0xff]
    %v4428 = vld [vmem:[#allocation6 + $0xef0] sm:$0xff]
    %v4429 = vld [vmem:[#allocation6 + $0xef8] sm:$0xff]
    %v4430 = vld [vmem:[#allocation6 + $0xf00] sm:$0xff]
    %v4431 = vld [vmem:[#allocation6 + $0xf08] sm:$0xff]
    %v4432 = vld [vmem:[#allocation6 + $0xf10] sm:$0xff]
    %v4433 = vld [vmem:[#allocation6 + $0xf18] sm:$0xff]
    %v4434 = vld [vmem:[#allocation6 + $0xf20] sm:$0xff]
    %v4435 = vld [vmem:[#allocation6 + $0xf28] sm:$0xff]
    %v4436 = vld [vmem:[#allocation6 + $0xf30] sm:$0xff]
    %v4437 = vld [vmem:[#allocation6 + $0xf38] sm:$0xff]
    %v4438 = vld [vmem:[#allocation6 + $0xf40] sm:$0xff]
    %v4439 = vld [vmem:[#allocation6 + $0xf48] sm:$0xff]
    %v4440 = vld [vmem:[#allocation6 + $0xf50] sm:$0xff]
    %v4441 = vld [vmem:[#allocation6 + $0xf58] sm:$0xff]
    %v4442 = vld [vmem:[#allocation6 + $0xf60] sm:$0xff]
    %v4443 = vld [vmem:[#allocation6 + $0xf68] sm:$0xff]
    %v4444 = vld [vmem:[#allocation6 + $0xf70] sm:$0xff]
    %v4445 = vld [vmem:[#allocation6 + $0xf78] sm:$0xff]
    %v4446 = vld [vmem:[#allocation6 + $0xf80] sm:$0xff]
    %v4447 = vld [vmem:[#allocation6 + $0xf88] sm:$0xff]
    %v4448 = vld [vmem:[#allocation6 + $0xf90] sm:$0xff]
    %v4449 = vld [vmem:[#allocation6 + $0xf98] sm:$0xff]
    %v4450 = vld [vmem:[#allocation6 + $0xfa0] sm:$0xff]
    %v4451 = vld [vmem:[#allocation6 + $0xfa8] sm:$0xff]
    %v4452 = vld [vmem:[#allocation6 + $0xfb0] sm:$0xff]
    %v4453 = vld [vmem:[#allocation6 + $0xfb8] sm:$0xff]
    %v4454 = vld [vmem:[#allocation6 + $0xfc0] sm:$0xff]
    %v4455 = vld [vmem:[#allocation6 + $0xfc8] sm:$0xff]
    %v4456 = vld [vmem:[#allocation6 + $0xfd0] sm:$0xff]
    %v4457 = vld [vmem:[#allocation6 + $0xfd8] sm:$0xff]
    %v4458 = vld [vmem:[#allocation6 + $0xfe0] sm:$0xff]
    %v4459 = vld [vmem:[#allocation6 + $0xfe8] sm:$0xff]
    %v4460 = vld [vmem:[#allocation6 + $0xff0] sm:$0xff]
    %v4461 = vld [vmem:[#allocation6 + $0xff8] sm:$0xff]
    %v4462 = vld [vmem:[#allocation7] sm:$0xff]
    %v4464 = vlaneseq
    %v4465 = vshrl.u32 %v4464, 7
    %v4466 = vsub.s32 0, %v4465
    %v4467 = vrot.slane %v4462, %v4466
    %v4468 = vlaneseq
    %v4469 = vshrl.u32 %v4468, 7
    %v4470 = vsub.s32 1, %v4469
    %v4471 = vrot.slane %v4462, %v4470
    %v4472 = vlaneseq
    %v4473 = vshrl.u32 %v4472, 7
    %v4474 = vsub.s32 2, %v4473
    %v4475 = vrot.slane %v4462, %v4474
    %v4476 = vlaneseq
    %v4477 = vshrl.u32 %v4476, 7
    %v4478 = vsub.s32 3, %v4477
    %v4479 = vrot.slane %v4462, %v4478
    %v4480 = vlaneseq
    %v4481 = vshrl.u32 %v4480, 7
    %v4482 = vsub.s32 4, %v4481
    %v4483 = vrot.slane %v4462, %v4482
    %v4484 = vlaneseq
    %v4485 = vshrl.u32 %v4484, 7
    %v4486 = vsub.s32 5, %v4485
    %v4487 = vrot.slane %v4462, %v4486
    %v4488 = vlaneseq
    %v4489 = vshrl.u32 %v4488, 7
    %v4490 = vsub.s32 6, %v4489
    %v4491 = vrot.slane %v4462, %v4490
    %v4492 = vlaneseq
    %v4493 = vshrl.u32 %v4492, 7
    %v4494 = vsub.s32 7, %v4493
    %v4495 = vrot.slane %v4462, %v4494
    %v5016 = vunpack.c.l.b16 %v3950
    %v5017 = vunpack.c.h.b16 %v3950
    %v5018 = vunpack.c.l.b16 %v3951
    %v5019 = vunpack.c.h.b16 %v3951
    %v5020 = vunpack.c.l.b16 %v3952
    %v5021 = vunpack.c.h.b16 %v3952
    %v5022 = vunpack.c.l.b16 %v3953
    %v5023 = vunpack.c.h.b16 %v3953
    %v5024 = vunpack.c.l.b16 %v3954
    %v5025 = vunpack.c.h.b16 %v3954
    %v5026 = vunpack.c.l.b16 %v3955
    %v5027 = vunpack.c.h.b16 %v3955
    %v5028 = vunpack.c.l.b16 %v3956
    %v5029 = vunpack.c.h.b16 %v3956
    %v5030 = vunpack.c.l.b16 %v3957
    %v5031 = vunpack.c.h.b16 %v3957
    %v5032 = vunpack.c.l.b16 %v3958
    %v5033 = vunpack.c.h.b16 %v3958
    %v5034 = vunpack.c.l.b16 %v3959
    %v5035 = vunpack.c.h.b16 %v3959
    %v5036 = vunpack.c.l.b16 %v3960
    %v5037 = vunpack.c.h.b16 %v3960
    %v5038 = vunpack.c.l.b16 %v3961
    %v5039 = vunpack.c.h.b16 %v3961
    %v5040 = vunpack.c.l.b16 %v3962
    %v5041 = vunpack.c.h.b16 %v3962
    %v5042 = vunpack.c.l.b16 %v3963
    %v5043 = vunpack.c.h.b16 %v3963
    %v5044 = vunpack.c.l.b16 %v3964
    %v5045 = vunpack.c.h.b16 %v3964
    %v5046 = vunpack.c.l.b16 %v3965
    %v5047 = vunpack.c.h.b16 %v3965
    %v5048 = vunpack.c.l.b16 %v3966
    %v5049 = vunpack.c.h.b16 %v3966
    %v5050 = vunpack.c.l.b16 %v3967
    %v5051 = vunpack.c.h.b16 %v3967
    %v5052 = vunpack.c.l.b16 %v3968
    %v5053 = vunpack.c.h.b16 %v3968
    %v5054 = vunpack.c.l.b16 %v3969
    %v5055 = vunpack.c.h.b16 %v3969
    %v5056 = vunpack.c.l.b16 %v3970
    %v5057 = vunpack.c.h.b16 %v3970
    %v5058 = vunpack.c.l.b16 %v3971
    %v5059 = vunpack.c.h.b16 %v3971
    %v5060 = vunpack.c.l.b16 %v3972
    %v5061 = vunpack.c.h.b16 %v3972
    %v5062 = vunpack.c.l.b16 %v3973
    %v5063 = vunpack.c.h.b16 %v3973
    %v5064 = vunpack.c.l.b16 %v3974
    %v5065 = vunpack.c.h.b16 %v3974
    %v5066 = vunpack.c.l.b16 %v3975
    %v5067 = vunpack.c.h.b16 %v3975
    %v5068 = vunpack.c.l.b16 %v3976
    %v5069 = vunpack.c.h.b16 %v3976
    %v5070 = vunpack.c.l.b16 %v3977
    %v5071 = vunpack.c.h.b16 %v3977
    %v5072 = vunpack.c.l.b16 %v3978
    %v5073 = vunpack.c.h.b16 %v3978
    %v5074 = vunpack.c.l.b16 %v3979
    %v5075 = vunpack.c.h.b16 %v3979
    %v5076 = vunpack.c.l.b16 %v3980
    %v5077 = vunpack.c.h.b16 %v3980
    %v5078 = vunpack.c.l.b16 %v3981
    %v5079 = vunpack.c.h.b16 %v3981
    %v5080 = vunpack.c.l.b16 %v3982
    %v5081 = vunpack.c.h.b16 %v3982
    %v5082 = vunpack.c.l.b16 %v3983
    %v5083 = vunpack.c.h.b16 %v3983
    %v5084 = vunpack.c.l.b16 %v3984
    %v5085 = vunpack.c.h.b16 %v3984
    %v5086 = vunpack.c.l.b16 %v3985
    %v5087 = vunpack.c.h.b16 %v3985
    %v5088 = vunpack.c.l.b16 %v3986
    %v5089 = vunpack.c.h.b16 %v3986
    %v5090 = vunpack.c.l.b16 %v3987
    %v5091 = vunpack.c.h.b16 %v3987
    %v5092 = vunpack.c.l.b16 %v3988
    %v5093 = vunpack.c.h.b16 %v3988
    %v5094 = vunpack.c.l.b16 %v3989
    %v5095 = vunpack.c.h.b16 %v3989
    %v5096 = vunpack.c.l.b16 %v3990
    %v5097 = vunpack.c.h.b16 %v3990
    %v5098 = vunpack.c.l.b16 %v3991
    %v5099 = vunpack.c.h.b16 %v3991
    %v5100 = vunpack.c.l.b16 %v3992
    %v5101 = vunpack.c.h.b16 %v3992
    %v5102 = vunpack.c.l.b16 %v3993
    %v5103 = vunpack.c.h.b16 %v3993
    %v5104 = vunpack.c.l.b16 %v3994
    %v5105 = vunpack.c.h.b16 %v3994
    %v5106 = vunpack.c.l.b16 %v3995
    %v5107 = vunpack.c.h.b16 %v3995
    %v5108 = vunpack.c.l.b16 %v3996
    %v5109 = vunpack.c.h.b16 %v3996
    %v5110 = vunpack.c.l.b16 %v3997
    %v5111 = vunpack.c.h.b16 %v3997
    %v5112 = vunpack.c.l.b16 %v3998
    %v5113 = vunpack.c.h.b16 %v3998
    %v5114 = vunpack.c.l.b16 %v3999
    %v5115 = vunpack.c.h.b16 %v3999
    %v5116 = vunpack.c.l.b16 %v4000
    %v5117 = vunpack.c.h.b16 %v4000
    %v5118 = vunpack.c.l.b16 %v4001
    %v5119 = vunpack.c.h.b16 %v4001
    %v5120 = vunpack.c.l.b16 %v4002
    %v5121 = vunpack.c.h.b16 %v4002
    %v5122 = vunpack.c.l.b16 %v4003
    %v5123 = vunpack.c.h.b16 %v4003
    %v5124 = vunpack.c.l.b16 %v4004
    %v5125 = vunpack.c.h.b16 %v4004
    %v5126 = vunpack.c.l.b16 %v4005
    %v5127 = vunpack.c.h.b16 %v4005
    %v5128 = vunpack.c.l.b16 %v4006
    %v5129 = vunpack.c.h.b16 %v4006
    %v5130 = vunpack.c.l.b16 %v4007
    %v5131 = vunpack.c.h.b16 %v4007
    %v5132 = vunpack.c.l.b16 %v4008
    %v5133 = vunpack.c.h.b16 %v4008
    %v5134 = vunpack.c.l.b16 %v4009
    %v5135 = vunpack.c.h.b16 %v4009
    %v5136 = vunpack.c.l.b16 %v4010
    %v5137 = vunpack.c.h.b16 %v4010
    %v5138 = vunpack.c.l.b16 %v4011
    %v5139 = vunpack.c.h.b16 %v4011
    %v5140 = vunpack.c.l.b16 %v4012
    %v5141 = vunpack.c.h.b16 %v4012
    %v5142 = vunpack.c.l.b16 %v4013
    %v5143 = vunpack.c.h.b16 %v4013
    %v5144 = vunpack.c.l.b16 %v4014
    %v5145 = vunpack.c.h.b16 %v4014
    %v5146 = vunpack.c.l.b16 %v4015
    %v5147 = vunpack.c.h.b16 %v4015
    %v5148 = vunpack.c.l.b16 %v4016
    %v5149 = vunpack.c.h.b16 %v4016
    %v5150 = vunpack.c.l.b16 %v4017
    %v5151 = vunpack.c.h.b16 %v4017
    %v5152 = vunpack.c.l.b16 %v4018
    %v5153 = vunpack.c.h.b16 %v4018
    %v5154 = vunpack.c.l.b16 %v4019
    %v5155 = vunpack.c.h.b16 %v4019
    %v5156 = vunpack.c.l.b16 %v4020
    %v5157 = vunpack.c.h.b16 %v4020
    %v5158 = vunpack.c.l.b16 %v4021
    %v5159 = vunpack.c.h.b16 %v4021
    %v5160 = vunpack.c.l.b16 %v4022
    %v5161 = vunpack.c.h.b16 %v4022
    %v5162 = vunpack.c.l.b16 %v4023
    %v5163 = vunpack.c.h.b16 %v4023
    %v5164 = vunpack.c.l.b16 %v4024
    %v5165 = vunpack.c.h.b16 %v4024
    %v5166 = vunpack.c.l.b16 %v4025
    %v5167 = vunpack.c.h.b16 %v4025
    %v5168 = vunpack.c.l.b16 %v4026
    %v5169 = vunpack.c.h.b16 %v4026
    %v5170 = vunpack.c.l.b16 %v4027
    %v5171 = vunpack.c.h.b16 %v4027
    %v5172 = vunpack.c.l.b16 %v4028
    %v5173 = vunpack.c.h.b16 %v4028
    %v5174 = vunpack.c.l.b16 %v4029
    %v5175 = vunpack.c.h.b16 %v4029
    %v5176 = vunpack.c.l.b16 %v4030
    %v5177 = vunpack.c.h.b16 %v4030
    %v5178 = vunpack.c.l.b16 %v4031
    %v5179 = vunpack.c.h.b16 %v4031
    %v5180 = vunpack.c.l.b16 %v4032
    %v5181 = vunpack.c.h.b16 %v4032
    %v5182 = vunpack.c.l.b16 %v4033
    %v5183 = vunpack.c.h.b16 %v4033
    %v5184 = vunpack.c.l.b16 %v4034
    %v5185 = vunpack.c.h.b16 %v4034
    %v5186 = vunpack.c.l.b16 %v4035
    %v5187 = vunpack.c.h.b16 %v4035
    %v5188 = vunpack.c.l.b16 %v4036
    %v5189 = vunpack.c.h.b16 %v4036
    %v5190 = vunpack.c.l.b16 %v4037
    %v5191 = vunpack.c.h.b16 %v4037
    %v5192 = vunpack.c.l.b16 %v4038
    %v5193 = vunpack.c.h.b16 %v4038
    %v5194 = vunpack.c.l.b16 %v4039
    %v5195 = vunpack.c.h.b16 %v4039
    %v5196 = vunpack.c.l.b16 %v4040
    %v5197 = vunpack.c.h.b16 %v4040
    %v5198 = vunpack.c.l.b16 %v4041
    %v5199 = vunpack.c.h.b16 %v4041
    %v5200 = vunpack.c.l.b16 %v4042
    %v5201 = vunpack.c.h.b16 %v4042
    %v5202 = vunpack.c.l.b16 %v4043
    %v5203 = vunpack.c.h.b16 %v4043
    %v5204 = vunpack.c.l.b16 %v4044
    %v5205 = vunpack.c.h.b16 %v4044
    %v5206 = vunpack.c.l.b16 %v4045
    %v5207 = vunpack.c.h.b16 %v4045
    %v5208 = vunpack.c.l.b16 %v4046
    %v5209 = vunpack.c.h.b16 %v4046
    %v5210 = vunpack.c.l.b16 %v4047
    %v5211 = vunpack.c.h.b16 %v4047
    %v5212 = vunpack.c.l.b16 %v4048
    %v5213 = vunpack.c.h.b16 %v4048
    %v5214 = vunpack.c.l.b16 %v4049
    %v5215 = vunpack.c.h.b16 %v4049
    %v5216 = vunpack.c.l.b16 %v4050
    %v5217 = vunpack.c.h.b16 %v4050
    %v5218 = vunpack.c.l.b16 %v4051
    %v5219 = vunpack.c.h.b16 %v4051
    %v5220 = vunpack.c.l.b16 %v4052
    %v5221 = vunpack.c.h.b16 %v4052
    %v5222 = vunpack.c.l.b16 %v4053
    %v5223 = vunpack.c.h.b16 %v4053
    %v5224 = vunpack.c.l.b16 %v4054
    %v5225 = vunpack.c.h.b16 %v4054
    %v5226 = vunpack.c.l.b16 %v4055
    %v5227 = vunpack.c.h.b16 %v4055
    %v5228 = vunpack.c.l.b16 %v4056
    %v5229 = vunpack.c.h.b16 %v4056
    %v5230 = vunpack.c.l.b16 %v4057
    %v5231 = vunpack.c.h.b16 %v4057
    %v5232 = vunpack.c.l.b16 %v4058
    %v5233 = vunpack.c.h.b16 %v4058
    %v5234 = vunpack.c.l.b16 %v4059
    %v5235 = vunpack.c.h.b16 %v4059
    %v5236 = vunpack.c.l.b16 %v4060
    %v5237 = vunpack.c.h.b16 %v4060
    %v5238 = vunpack.c.l.b16 %v4061
    %v5239 = vunpack.c.h.b16 %v4061
    %v5240 = vunpack.c.l.b16 %v4062
    %v5241 = vunpack.c.h.b16 %v4062
    %v5242 = vunpack.c.l.b16 %v4063
    %v5243 = vunpack.c.h.b16 %v4063
    %v5244 = vunpack.c.l.b16 %v4064
    %v5245 = vunpack.c.h.b16 %v4064
    %v5246 = vunpack.c.l.b16 %v4065
    %v5247 = vunpack.c.h.b16 %v4065
    %v5248 = vunpack.c.l.b16 %v4066
    %v5249 = vunpack.c.h.b16 %v4066
    %v5250 = vunpack.c.l.b16 %v4067
    %v5251 = vunpack.c.h.b16 %v4067
    %v5252 = vunpack.c.l.b16 %v4068
    %v5253 = vunpack.c.h.b16 %v4068
    %v5254 = vunpack.c.l.b16 %v4069
    %v5255 = vunpack.c.h.b16 %v4069
    %v5256 = vunpack.c.l.b16 %v4070
    %v5257 = vunpack.c.h.b16 %v4070
    %v5258 = vunpack.c.l.b16 %v4071
    %v5259 = vunpack.c.h.b16 %v4071
    %v5260 = vunpack.c.l.b16 %v4072
    %v5261 = vunpack.c.h.b16 %v4072
    %v5262 = vunpack.c.l.b16 %v4073
    %v5263 = vunpack.c.h.b16 %v4073
    %v5264 = vunpack.c.l.b16 %v4074
    %v5265 = vunpack.c.h.b16 %v4074
    %v5266 = vunpack.c.l.b16 %v4075
    %v5267 = vunpack.c.h.b16 %v4075
    %v5268 = vunpack.c.l.b16 %v4076
    %v5269 = vunpack.c.h.b16 %v4076
    %v5270 = vunpack.c.l.b16 %v4077
    %v5271 = vunpack.c.h.b16 %v4077
    %v5272 = vunpack.c.l.b16 %v4078
    %v5273 = vunpack.c.h.b16 %v4078
    %v5274 = vunpack.c.l.b16 %v4079
    %v5275 = vunpack.c.h.b16 %v4079
    %v5276 = vunpack.c.l.b16 %v4080
    %v5277 = vunpack.c.h.b16 %v4080
    %v5278 = vunpack.c.l.b16 %v4081
    %v5279 = vunpack.c.h.b16 %v4081
    %v5280 = vunpack.c.l.b16 %v4082
    %v5281 = vunpack.c.h.b16 %v4082
    %v5282 = vunpack.c.l.b16 %v4083
    %v5283 = vunpack.c.h.b16 %v4083
    %v5284 = vunpack.c.l.b16 %v4084
    %v5285 = vunpack.c.h.b16 %v4084
    %v5286 = vunpack.c.l.b16 %v4085
    %v5287 = vunpack.c.h.b16 %v4085
    %v5288 = vunpack.c.l.b16 %v4086
    %v5289 = vunpack.c.h.b16 %v4086
    %v5290 = vunpack.c.l.b16 %v4087
    %v5291 = vunpack.c.h.b16 %v4087
    %v5292 = vunpack.c.l.b16 %v4088
    %v5293 = vunpack.c.h.b16 %v4088
    %v5294 = vunpack.c.l.b16 %v4089
    %v5295 = vunpack.c.h.b16 %v4089
    %v5296 = vunpack.c.l.b16 %v4090
    %v5297 = vunpack.c.h.b16 %v4090
    %v5298 = vunpack.c.l.b16 %v4091
    %v5299 = vunpack.c.h.b16 %v4091
    %v5300 = vunpack.c.l.b16 %v4092
    %v5301 = vunpack.c.h.b16 %v4092
    %v5302 = vunpack.c.l.b16 %v4093
    %v5303 = vunpack.c.h.b16 %v4093
    %v5304 = vunpack.c.l.b16 %v4094
    %v5305 = vunpack.c.h.b16 %v4094
    %v5306 = vunpack.c.l.b16 %v4095
    %v5307 = vunpack.c.h.b16 %v4095
    %v5308 = vunpack.c.l.b16 %v4096
    %v5309 = vunpack.c.h.b16 %v4096
    %v5310 = vunpack.c.l.b16 %v4097
    %v5311 = vunpack.c.h.b16 %v4097
    %v5312 = vunpack.c.l.b16 %v4098
    %v5313 = vunpack.c.h.b16 %v4098
    %v5314 = vunpack.c.l.b16 %v4099
    %v5315 = vunpack.c.h.b16 %v4099
    %v5316 = vunpack.c.l.b16 %v4100
    %v5317 = vunpack.c.h.b16 %v4100
    %v5318 = vunpack.c.l.b16 %v4101
    %v5319 = vunpack.c.h.b16 %v4101
    %v5320 = vunpack.c.l.b16 %v4102
    %v5321 = vunpack.c.h.b16 %v4102
    %v5322 = vunpack.c.l.b16 %v4103
    %v5323 = vunpack.c.h.b16 %v4103
    %v5324 = vunpack.c.l.b16 %v4104
    %v5325 = vunpack.c.h.b16 %v4104
    %v5326 = vunpack.c.l.b16 %v4105
    %v5327 = vunpack.c.h.b16 %v4105
    %v5328 = vunpack.c.l.b16 %v4106
    %v5329 = vunpack.c.h.b16 %v4106
    %v5330 = vunpack.c.l.b16 %v4107
    %v5331 = vunpack.c.h.b16 %v4107
    %v5332 = vunpack.c.l.b16 %v4108
    %v5333 = vunpack.c.h.b16 %v4108
    %v5334 = vunpack.c.l.b16 %v4109
    %v5335 = vunpack.c.h.b16 %v4109
    %v5336 = vunpack.c.l.b16 %v4110
    %v5337 = vunpack.c.h.b16 %v4110
    %v5338 = vunpack.c.l.b16 %v4111
    %v5339 = vunpack.c.h.b16 %v4111
    %v5340 = vunpack.c.l.b16 %v4112
    %v5341 = vunpack.c.h.b16 %v4112
    %v5342 = vunpack.c.l.b16 %v4113
    %v5343 = vunpack.c.h.b16 %v4113
    %v5344 = vunpack.c.l.b16 %v4114
    %v5345 = vunpack.c.h.b16 %v4114
    %v5346 = vunpack.c.l.b16 %v4115
    %v5347 = vunpack.c.h.b16 %v4115
    %v5348 = vunpack.c.l.b16 %v4116
    %v5349 = vunpack.c.h.b16 %v4116
    %v5350 = vunpack.c.l.b16 %v4117
    %v5351 = vunpack.c.h.b16 %v4117
    %v5352 = vunpack.c.l.b16 %v4118
    %v5353 = vunpack.c.h.b16 %v4118
    %v5354 = vunpack.c.l.b16 %v4119
    %v5355 = vunpack.c.h.b16 %v4119
    %v5356 = vunpack.c.l.b16 %v4120
    %v5357 = vunpack.c.h.b16 %v4120
    %v5358 = vunpack.c.l.b16 %v4121
    %v5359 = vunpack.c.h.b16 %v4121
    %v5360 = vunpack.c.l.b16 %v4122
    %v5361 = vunpack.c.h.b16 %v4122
    %v5362 = vunpack.c.l.b16 %v4123
    %v5363 = vunpack.c.h.b16 %v4123
    %v5364 = vunpack.c.l.b16 %v4124
    %v5365 = vunpack.c.h.b16 %v4124
    %v5366 = vunpack.c.l.b16 %v4125
    %v5367 = vunpack.c.h.b16 %v4125
    %v5368 = vunpack.c.l.b16 %v4126
    %v5369 = vunpack.c.h.b16 %v4126
    %v5370 = vunpack.c.l.b16 %v4127
    %v5371 = vunpack.c.h.b16 %v4127
    %v5372 = vunpack.c.l.b16 %v4128
    %v5373 = vunpack.c.h.b16 %v4128
    %v5374 = vunpack.c.l.b16 %v4129
    %v5375 = vunpack.c.h.b16 %v4129
    %v5376 = vunpack.c.l.b16 %v4130
    %v5377 = vunpack.c.h.b16 %v4130
    %v5378 = vunpack.c.l.b16 %v4131
    %v5379 = vunpack.c.h.b16 %v4131
    %v5380 = vunpack.c.l.b16 %v4132
    %v5381 = vunpack.c.h.b16 %v4132
    %v5382 = vunpack.c.l.b16 %v4133
    %v5383 = vunpack.c.h.b16 %v4133
    %v5384 = vunpack.c.l.b16 %v4134
    %v5385 = vunpack.c.h.b16 %v4134
    %v5386 = vunpack.c.l.b16 %v4135
    %v5387 = vunpack.c.h.b16 %v4135
    %v5388 = vunpack.c.l.b16 %v4136
    %v5389 = vunpack.c.h.b16 %v4136
    %v5390 = vunpack.c.l.b16 %v4137
    %v5391 = vunpack.c.h.b16 %v4137
    %v5392 = vunpack.c.l.b16 %v4138
    %v5393 = vunpack.c.h.b16 %v4138
    %v5394 = vunpack.c.l.b16 %v4139
    %v5395 = vunpack.c.h.b16 %v4139
    %v5396 = vunpack.c.l.b16 %v4140
    %v5397 = vunpack.c.h.b16 %v4140
    %v5398 = vunpack.c.l.b16 %v4141
    %v5399 = vunpack.c.h.b16 %v4141
    %v5400 = vunpack.c.l.b16 %v4142
    %v5401 = vunpack.c.h.b16 %v4142
    %v5402 = vunpack.c.l.b16 %v4143
    %v5403 = vunpack.c.h.b16 %v4143
    %v5404 = vunpack.c.l.b16 %v4144
    %v5405 = vunpack.c.h.b16 %v4144
    %v5406 = vunpack.c.l.b16 %v4145
    %v5407 = vunpack.c.h.b16 %v4145
    %v5408 = vunpack.c.l.b16 %v4146
    %v5409 = vunpack.c.h.b16 %v4146
    %v5410 = vunpack.c.l.b16 %v4147
    %v5411 = vunpack.c.h.b16 %v4147
    %v5412 = vunpack.c.l.b16 %v4148
    %v5413 = vunpack.c.h.b16 %v4148
    %v5414 = vunpack.c.l.b16 %v4149
    %v5415 = vunpack.c.h.b16 %v4149
    %v5416 = vunpack.c.l.b16 %v4150
    %v5417 = vunpack.c.h.b16 %v4150
    %v5418 = vunpack.c.l.b16 %v4151
    %v5419 = vunpack.c.h.b16 %v4151
    %v5420 = vunpack.c.l.b16 %v4152
    %v5421 = vunpack.c.h.b16 %v4152
    %v5422 = vunpack.c.l.b16 %v4153
    %v5423 = vunpack.c.h.b16 %v4153
    %v5424 = vunpack.c.l.b16 %v4154
    %v5425 = vunpack.c.h.b16 %v4154
    %v5426 = vunpack.c.l.b16 %v4155
    %v5427 = vunpack.c.h.b16 %v4155
    %v5428 = vunpack.c.l.b16 %v4156
    %v5429 = vunpack.c.h.b16 %v4156
    %v5430 = vunpack.c.l.b16 %v4157
    %v5431 = vunpack.c.h.b16 %v4157
    %v5432 = vunpack.c.l.b16 %v4158
    %v5433 = vunpack.c.h.b16 %v4158
    %v5434 = vunpack.c.l.b16 %v4159
    %v5435 = vunpack.c.h.b16 %v4159
    %v5436 = vunpack.c.l.b16 %v4160
    %v5437 = vunpack.c.h.b16 %v4160
    %v5438 = vunpack.c.l.b16 %v4161
    %v5439 = vunpack.c.h.b16 %v4161
    %v5440 = vunpack.c.l.b16 %v4162
    %v5441 = vunpack.c.h.b16 %v4162
    %v5442 = vunpack.c.l.b16 %v4163
    %v5443 = vunpack.c.h.b16 %v4163
    %v5444 = vunpack.c.l.b16 %v4164
    %v5445 = vunpack.c.h.b16 %v4164
    %v5446 = vunpack.c.l.b16 %v4165
    %v5447 = vunpack.c.h.b16 %v4165
    %v5448 = vunpack.c.l.b16 %v4166
    %v5449 = vunpack.c.h.b16 %v4166
    %v5450 = vunpack.c.l.b16 %v4167
    %v5451 = vunpack.c.h.b16 %v4167
    %v5452 = vunpack.c.l.b16 %v4168
    %v5453 = vunpack.c.h.b16 %v4168
    %v5454 = vunpack.c.l.b16 %v4169
    %v5455 = vunpack.c.h.b16 %v4169
    %v5456 = vunpack.c.l.b16 %v4170
    %v5457 = vunpack.c.h.b16 %v4170
    %v5458 = vunpack.c.l.b16 %v4171
    %v5459 = vunpack.c.h.b16 %v4171
    %v5460 = vunpack.c.l.b16 %v4172
    %v5461 = vunpack.c.h.b16 %v4172
    %v5462 = vunpack.c.l.b16 %v4173
    %v5463 = vunpack.c.h.b16 %v4173
    %v5464 = vunpack.c.l.b16 %v4174
    %v5465 = vunpack.c.h.b16 %v4174
    %v5466 = vunpack.c.l.b16 %v4175
    %v5467 = vunpack.c.h.b16 %v4175
    %v5468 = vunpack.c.l.b16 %v4176
    %v5469 = vunpack.c.h.b16 %v4176
    %v5470 = vunpack.c.l.b16 %v4177
    %v5471 = vunpack.c.h.b16 %v4177
    %v5472 = vunpack.c.l.b16 %v4178
    %v5473 = vunpack.c.h.b16 %v4178
    %v5474 = vunpack.c.l.b16 %v4179
    %v5475 = vunpack.c.h.b16 %v4179
    %v5476 = vunpack.c.l.b16 %v4180
    %v5477 = vunpack.c.h.b16 %v4180
    %v5478 = vunpack.c.l.b16 %v4181
    %v5479 = vunpack.c.h.b16 %v4181
    %v5480 = vunpack.c.l.b16 %v4182
    %v5481 = vunpack.c.h.b16 %v4182
    %v5482 = vunpack.c.l.b16 %v4183
    %v5483 = vunpack.c.h.b16 %v4183
    %v5484 = vunpack.c.l.b16 %v4184
    %v5485 = vunpack.c.h.b16 %v4184
    %v5486 = vunpack.c.l.b16 %v4185
    %v5487 = vunpack.c.h.b16 %v4185
    %v5488 = vunpack.c.l.b16 %v4186
    %v5489 = vunpack.c.h.b16 %v4186
    %v5490 = vunpack.c.l.b16 %v4187
    %v5491 = vunpack.c.h.b16 %v4187
    %v5492 = vunpack.c.l.b16 %v4188
    %v5493 = vunpack.c.h.b16 %v4188
    %v5494 = vunpack.c.l.b16 %v4189
    %v5495 = vunpack.c.h.b16 %v4189
    %v5496 = vunpack.c.l.b16 %v4190
    %v5497 = vunpack.c.h.b16 %v4190
    %v5498 = vunpack.c.l.b16 %v4191
    %v5499 = vunpack.c.h.b16 %v4191
    %v5500 = vunpack.c.l.b16 %v4192
    %v5501 = vunpack.c.h.b16 %v4192
    %v5502 = vunpack.c.l.b16 %v4193
    %v5503 = vunpack.c.h.b16 %v4193
    %v5504 = vunpack.c.l.b16 %v4194
    %v5505 = vunpack.c.h.b16 %v4194
    %v5506 = vunpack.c.l.b16 %v4195
    %v5507 = vunpack.c.h.b16 %v4195
    %v5508 = vunpack.c.l.b16 %v4196
    %v5509 = vunpack.c.h.b16 %v4196
    %v5510 = vunpack.c.l.b16 %v4197
    %v5511 = vunpack.c.h.b16 %v4197
    %v5512 = vunpack.c.l.b16 %v4198
    %v5513 = vunpack.c.h.b16 %v4198
    %v5514 = vunpack.c.l.b16 %v4199
    %v5515 = vunpack.c.h.b16 %v4199
    %v5516 = vunpack.c.l.b16 %v4200
    %v5517 = vunpack.c.h.b16 %v4200
    %v5518 = vunpack.c.l.b16 %v4201
    %v5519 = vunpack.c.h.b16 %v4201
    %v5520 = vunpack.c.l.b16 %v4202
    %v5521 = vunpack.c.h.b16 %v4202
    %v5522 = vunpack.c.l.b16 %v4203
    %v5523 = vunpack.c.h.b16 %v4203
    %v5524 = vunpack.c.l.b16 %v4204
    %v5525 = vunpack.c.h.b16 %v4204
    %v5526 = vunpack.c.l.b16 %v4205
    %v5527 = vunpack.c.h.b16 %v4205
    %v5528 = vunpack.c.l.b16 %v4206
    %v5529 = vunpack.c.h.b16 %v4206
    %v5530 = vunpack.c.l.b16 %v4207
    %v5531 = vunpack.c.h.b16 %v4207
    %v5532 = vunpack.c.l.b16 %v4208
    %v5533 = vunpack.c.h.b16 %v4208
    %v5534 = vunpack.c.l.b16 %v4209
    %v5535 = vunpack.c.h.b16 %v4209
    %v5536 = vunpack.c.l.b16 %v4210
    %v5537 = vunpack.c.h.b16 %v4210
    %v5538 = vunpack.c.l.b16 %v4211
    %v5539 = vunpack.c.h.b16 %v4211
    %v5540 = vunpack.c.l.b16 %v4212
    %v5541 = vunpack.c.h.b16 %v4212
    %v5542 = vunpack.c.l.b16 %v4213
    %v5543 = vunpack.c.h.b16 %v4213
    %v5544 = vunpack.c.l.b16 %v4214
    %v5545 = vunpack.c.h.b16 %v4214
    %v5546 = vunpack.c.l.b16 %v4215
    %v5547 = vunpack.c.h.b16 %v4215
    %v5548 = vunpack.c.l.b16 %v4216
    %v5549 = vunpack.c.h.b16 %v4216
    %v5550 = vunpack.c.l.b16 %v4217
    %v5551 = vunpack.c.h.b16 %v4217
    %v5552 = vunpack.c.l.b16 %v4218
    %v5553 = vunpack.c.h.b16 %v4218
    %v5554 = vunpack.c.l.b16 %v4219
    %v5555 = vunpack.c.h.b16 %v4219
    %v5556 = vunpack.c.l.b16 %v4220
    %v5557 = vunpack.c.h.b16 %v4220
    %v5558 = vunpack.c.l.b16 %v4221
    %v5559 = vunpack.c.h.b16 %v4221
    %v5560 = vunpack.c.l.b16 %v4222
    %v5561 = vunpack.c.h.b16 %v4222
    %v5562 = vunpack.c.l.b16 %v4223
    %v5563 = vunpack.c.h.b16 %v4223
    %v5564 = vunpack.c.l.b16 %v4224
    %v5565 = vunpack.c.h.b16 %v4224
    %v5566 = vunpack.c.l.b16 %v4225
    %v5567 = vunpack.c.h.b16 %v4225
    %v5568 = vunpack.c.l.b16 %v4226
    %v5569 = vunpack.c.h.b16 %v4226
    %v5570 = vunpack.c.l.b16 %v4227
    %v5571 = vunpack.c.h.b16 %v4227
    %v5572 = vunpack.c.l.b16 %v4228
    %v5573 = vunpack.c.h.b16 %v4228
    %v5574 = vunpack.c.l.b16 %v4229
    %v5575 = vunpack.c.h.b16 %v4229
    %v5576 = vunpack.c.l.b16 %v4230
    %v5577 = vunpack.c.h.b16 %v4230
    %v5578 = vunpack.c.l.b16 %v4231
    %v5579 = vunpack.c.h.b16 %v4231
    %v5580 = vunpack.c.l.b16 %v4232
    %v5581 = vunpack.c.h.b16 %v4232
    %v5582 = vunpack.c.l.b16 %v4233
    %v5583 = vunpack.c.h.b16 %v4233
    %v5584 = vunpack.c.l.b16 %v4234
    %v5585 = vunpack.c.h.b16 %v4234
    %v5586 = vunpack.c.l.b16 %v4235
    %v5587 = vunpack.c.h.b16 %v4235
    %v5588 = vunpack.c.l.b16 %v4236
    %v5589 = vunpack.c.h.b16 %v4236
    %v5590 = vunpack.c.l.b16 %v4237
    %v5591 = vunpack.c.h.b16 %v4237
    %v5592 = vunpack.c.l.b16 %v4238
    %v5593 = vunpack.c.h.b16 %v4238
    %v5594 = vunpack.c.l.b16 %v4239
    %v5595 = vunpack.c.h.b16 %v4239
    %v5596 = vunpack.c.l.b16 %v4240
    %v5597 = vunpack.c.h.b16 %v4240
    %v5598 = vunpack.c.l.b16 %v4241
    %v5599 = vunpack.c.h.b16 %v4241
    %v5600 = vunpack.c.l.b16 %v4242
    %v5601 = vunpack.c.h.b16 %v4242
    %v5602 = vunpack.c.l.b16 %v4243
    %v5603 = vunpack.c.h.b16 %v4243
    %v5604 = vunpack.c.l.b16 %v4244
    %v5605 = vunpack.c.h.b16 %v4244
    %v5606 = vunpack.c.l.b16 %v4245
    %v5607 = vunpack.c.h.b16 %v4245
    %v5608 = vunpack.c.l.b16 %v4246
    %v5609 = vunpack.c.h.b16 %v4246
    %v5610 = vunpack.c.l.b16 %v4247
    %v5611 = vunpack.c.h.b16 %v4247
    %v5612 = vunpack.c.l.b16 %v4248
    %v5613 = vunpack.c.h.b16 %v4248
    %v5614 = vunpack.c.l.b16 %v4249
    %v5615 = vunpack.c.h.b16 %v4249
    %v5616 = vunpack.c.l.b16 %v4250
    %v5617 = vunpack.c.h.b16 %v4250
    %v5618 = vunpack.c.l.b16 %v4251
    %v5619 = vunpack.c.h.b16 %v4251
    %v5620 = vunpack.c.l.b16 %v4252
    %v5621 = vunpack.c.h.b16 %v4252
    %v5622 = vunpack.c.l.b16 %v4253
    %v5623 = vunpack.c.h.b16 %v4253
    %v5624 = vunpack.c.l.b16 %v4254
    %v5625 = vunpack.c.h.b16 %v4254
    %v5626 = vunpack.c.l.b16 %v4255
    %v5627 = vunpack.c.h.b16 %v4255
    %v5628 = vunpack.c.l.b16 %v4256
    %v5629 = vunpack.c.h.b16 %v4256
    %v5630 = vunpack.c.l.b16 %v4257
    %v5631 = vunpack.c.h.b16 %v4257
    %v5632 = vunpack.c.l.b16 %v4258
    %v5633 = vunpack.c.h.b16 %v4258
    %v5634 = vunpack.c.l.b16 %v4259
    %v5635 = vunpack.c.h.b16 %v4259
    %v5636 = vunpack.c.l.b16 %v4260
    %v5637 = vunpack.c.h.b16 %v4260
    %v5638 = vunpack.c.l.b16 %v4261
    %v5639 = vunpack.c.h.b16 %v4261
    %v5640 = vunpack.c.l.b16 %v4262
    %v5641 = vunpack.c.h.b16 %v4262
    %v5642 = vunpack.c.l.b16 %v4263
    %v5643 = vunpack.c.h.b16 %v4263
    %v5644 = vunpack.c.l.b16 %v4264
    %v5645 = vunpack.c.h.b16 %v4264
    %v5646 = vunpack.c.l.b16 %v4265
    %v5647 = vunpack.c.h.b16 %v4265
    %v5648 = vunpack.c.l.b16 %v4266
    %v5649 = vunpack.c.h.b16 %v4266
    %v5650 = vunpack.c.l.b16 %v4267
    %v5651 = vunpack.c.h.b16 %v4267
    %v5652 = vunpack.c.l.b16 %v4268
    %v5653 = vunpack.c.h.b16 %v4268
    %v5654 = vunpack.c.l.b16 %v4269
    %v5655 = vunpack.c.h.b16 %v4269
    %v5656 = vunpack.c.l.b16 %v4270
    %v5657 = vunpack.c.h.b16 %v4270
    %v5658 = vunpack.c.l.b16 %v4271
    %v5659 = vunpack.c.h.b16 %v4271
    %v5660 = vunpack.c.l.b16 %v4272
    %v5661 = vunpack.c.h.b16 %v4272
    %v5662 = vunpack.c.l.b16 %v4273
    %v5663 = vunpack.c.h.b16 %v4273
    %v5664 = vunpack.c.l.b16 %v4274
    %v5665 = vunpack.c.h.b16 %v4274
    %v5666 = vunpack.c.l.b16 %v4275
    %v5667 = vunpack.c.h.b16 %v4275
    %v5668 = vunpack.c.l.b16 %v4276
    %v5669 = vunpack.c.h.b16 %v4276
    %v5670 = vunpack.c.l.b16 %v4277
    %v5671 = vunpack.c.h.b16 %v4277
    %v5672 = vunpack.c.l.b16 %v4278
    %v5673 = vunpack.c.h.b16 %v4278
    %v5674 = vunpack.c.l.b16 %v4279
    %v5675 = vunpack.c.h.b16 %v4279
    %v5676 = vunpack.c.l.b16 %v4280
    %v5677 = vunpack.c.h.b16 %v4280
    %v5678 = vunpack.c.l.b16 %v4281
    %v5679 = vunpack.c.h.b16 %v4281
    %v5680 = vunpack.c.l.b16 %v4282
    %v5681 = vunpack.c.h.b16 %v4282
    %v5682 = vunpack.c.l.b16 %v4283
    %v5683 = vunpack.c.h.b16 %v4283
    %v5684 = vunpack.c.l.b16 %v4284
    %v5685 = vunpack.c.h.b16 %v4284
    %v5686 = vunpack.c.l.b16 %v4285
    %v5687 = vunpack.c.h.b16 %v4285
    %v5688 = vunpack.c.l.b16 %v4286
    %v5689 = vunpack.c.h.b16 %v4286
    %v5690 = vunpack.c.l.b16 %v4287
    %v5691 = vunpack.c.h.b16 %v4287
    %v5692 = vunpack.c.l.b16 %v4288
    %v5693 = vunpack.c.h.b16 %v4288
    %v5694 = vunpack.c.l.b16 %v4289
    %v5695 = vunpack.c.h.b16 %v4289
    %v5696 = vunpack.c.l.b16 %v4290
    %v5697 = vunpack.c.h.b16 %v4290
    %v5698 = vunpack.c.l.b16 %v4291
    %v5699 = vunpack.c.h.b16 %v4291
    %v5700 = vunpack.c.l.b16 %v4292
    %v5701 = vunpack.c.h.b16 %v4292
    %v5702 = vunpack.c.l.b16 %v4293
    %v5703 = vunpack.c.h.b16 %v4293
    %v5704 = vunpack.c.l.b16 %v4294
    %v5705 = vunpack.c.h.b16 %v4294
    %v5706 = vunpack.c.l.b16 %v4295
    %v5707 = vunpack.c.h.b16 %v4295
    %v5708 = vunpack.c.l.b16 %v4296
    %v5709 = vunpack.c.h.b16 %v4296
    %v5710 = vunpack.c.l.b16 %v4297
    %v5711 = vunpack.c.h.b16 %v4297
    %v5712 = vunpack.c.l.b16 %v4298
    %v5713 = vunpack.c.h.b16 %v4298
    %v5714 = vunpack.c.l.b16 %v4299
    %v5715 = vunpack.c.h.b16 %v4299
    %v5716 = vunpack.c.l.b16 %v4300
    %v5717 = vunpack.c.h.b16 %v4300
    %v5718 = vunpack.c.l.b16 %v4301
    %v5719 = vunpack.c.h.b16 %v4301
    %v5720 = vunpack.c.l.b16 %v4302
    %v5721 = vunpack.c.h.b16 %v4302
    %v5722 = vunpack.c.l.b16 %v4303
    %v5723 = vunpack.c.h.b16 %v4303
    %v5724 = vunpack.c.l.b16 %v4304
    %v5725 = vunpack.c.h.b16 %v4304
    %v5726 = vunpack.c.l.b16 %v4305
    %v5727 = vunpack.c.h.b16 %v4305
    %v5728 = vunpack.c.l.b16 %v4306
    %v5729 = vunpack.c.h.b16 %v4306
    %v5730 = vunpack.c.l.b16 %v4307
    %v5731 = vunpack.c.h.b16 %v4307
    %v5732 = vunpack.c.l.b16 %v4308
    %v5733 = vunpack.c.h.b16 %v4308
    %v5734 = vunpack.c.l.b16 %v4309
    %v5735 = vunpack.c.h.b16 %v4309
    %v5736 = vunpack.c.l.b16 %v4310
    %v5737 = vunpack.c.h.b16 %v4310
    %v5738 = vunpack.c.l.b16 %v4311
    %v5739 = vunpack.c.h.b16 %v4311
    %v5740 = vunpack.c.l.b16 %v4312
    %v5741 = vunpack.c.h.b16 %v4312
    %v5742 = vunpack.c.l.b16 %v4313
    %v5743 = vunpack.c.h.b16 %v4313
    %v5744 = vunpack.c.l.b16 %v4314
    %v5745 = vunpack.c.h.b16 %v4314
    %v5746 = vunpack.c.l.b16 %v4315
    %v5747 = vunpack.c.h.b16 %v4315
    %v5748 = vunpack.c.l.b16 %v4316
    %v5749 = vunpack.c.h.b16 %v4316
    %v5750 = vunpack.c.l.b16 %v4317
    %v5751 = vunpack.c.h.b16 %v4317
    %v5752 = vunpack.c.l.b16 %v4318
    %v5753 = vunpack.c.h.b16 %v4318
    %v5754 = vunpack.c.l.b16 %v4319
    %v5755 = vunpack.c.h.b16 %v4319
    %v5756 = vunpack.c.l.b16 %v4320
    %v5757 = vunpack.c.h.b16 %v4320
    %v5758 = vunpack.c.l.b16 %v4321
    %v5759 = vunpack.c.h.b16 %v4321
    %v5760 = vunpack.c.l.b16 %v4322
    %v5761 = vunpack.c.h.b16 %v4322
    %v5762 = vunpack.c.l.b16 %v4323
    %v5763 = vunpack.c.h.b16 %v4323
    %v5764 = vunpack.c.l.b16 %v4324
    %v5765 = vunpack.c.h.b16 %v4324
    %v5766 = vunpack.c.l.b16 %v4325
    %v5767 = vunpack.c.h.b16 %v4325
    %v5768 = vunpack.c.l.b16 %v4326
    %v5769 = vunpack.c.h.b16 %v4326
    %v5770 = vunpack.c.l.b16 %v4327
    %v5771 = vunpack.c.h.b16 %v4327
    %v5772 = vunpack.c.l.b16 %v4328
    %v5773 = vunpack.c.h.b16 %v4328
    %v5774 = vunpack.c.l.b16 %v4329
    %v5775 = vunpack.c.h.b16 %v4329
    %v5776 = vunpack.c.l.b16 %v4330
    %v5777 = vunpack.c.h.b16 %v4330
    %v5778 = vunpack.c.l.b16 %v4331
    %v5779 = vunpack.c.h.b16 %v4331
    %v5780 = vunpack.c.l.b16 %v4332
    %v5781 = vunpack.c.h.b16 %v4332
    %v5782 = vunpack.c.l.b16 %v4333
    %v5783 = vunpack.c.h.b16 %v4333
    %v5784 = vunpack.c.l.b16 %v4334
    %v5785 = vunpack.c.h.b16 %v4334
    %v5786 = vunpack.c.l.b16 %v4335
    %v5787 = vunpack.c.h.b16 %v4335
    %v5788 = vunpack.c.l.b16 %v4336
    %v5789 = vunpack.c.h.b16 %v4336
    %v5790 = vunpack.c.l.b16 %v4337
    %v5791 = vunpack.c.h.b16 %v4337
    %v5792 = vunpack.c.l.b16 %v4338
    %v5793 = vunpack.c.h.b16 %v4338
    %v5794 = vunpack.c.l.b16 %v4339
    %v5795 = vunpack.c.h.b16 %v4339
    %v5796 = vunpack.c.l.b16 %v4340
    %v5797 = vunpack.c.h.b16 %v4340
    %v5798 = vunpack.c.l.b16 %v4341
    %v5799 = vunpack.c.h.b16 %v4341
    %v5800 = vunpack.c.l.b16 %v4342
    %v5801 = vunpack.c.h.b16 %v4342
    %v5802 = vunpack.c.l.b16 %v4343
    %v5803 = vunpack.c.h.b16 %v4343
    %v5804 = vunpack.c.l.b16 %v4344
    %v5805 = vunpack.c.h.b16 %v4344
    %v5806 = vunpack.c.l.b16 %v4345
    %v5807 = vunpack.c.h.b16 %v4345
    %v5808 = vunpack.c.l.b16 %v4346
    %v5809 = vunpack.c.h.b16 %v4346
    %v5810 = vunpack.c.l.b16 %v4347
    %v5811 = vunpack.c.h.b16 %v4347
    %v5812 = vunpack.c.l.b16 %v4348
    %v5813 = vunpack.c.h.b16 %v4348
    %v5814 = vunpack.c.l.b16 %v4349
    %v5815 = vunpack.c.h.b16 %v4349
    %v5816 = vunpack.c.l.b16 %v4350
    %v5817 = vunpack.c.h.b16 %v4350
    %v5818 = vunpack.c.l.b16 %v4351
    %v5819 = vunpack.c.h.b16 %v4351
    %v5820 = vunpack.c.l.b16 %v4352
    %v5821 = vunpack.c.h.b16 %v4352
    %v5822 = vunpack.c.l.b16 %v4353
    %v5823 = vunpack.c.h.b16 %v4353
    %v5824 = vunpack.c.l.b16 %v4354
    %v5825 = vunpack.c.h.b16 %v4354
    %v5826 = vunpack.c.l.b16 %v4355
    %v5827 = vunpack.c.h.b16 %v4355
    %v5828 = vunpack.c.l.b16 %v4356
    %v5829 = vunpack.c.h.b16 %v4356
    %v5830 = vunpack.c.l.b16 %v4357
    %v5831 = vunpack.c.h.b16 %v4357
    %v5832 = vunpack.c.l.b16 %v4358
    %v5833 = vunpack.c.h.b16 %v4358
    %v5834 = vunpack.c.l.b16 %v4359
    %v5835 = vunpack.c.h.b16 %v4359
    %v5836 = vunpack.c.l.b16 %v4360
    %v5837 = vunpack.c.h.b16 %v4360
    %v5838 = vunpack.c.l.b16 %v4361
    %v5839 = vunpack.c.h.b16 %v4361
    %v5840 = vunpack.c.l.b16 %v4362
    %v5841 = vunpack.c.h.b16 %v4362
    %v5842 = vunpack.c.l.b16 %v4363
    %v5843 = vunpack.c.h.b16 %v4363
    %v5844 = vunpack.c.l.b16 %v4364
    %v5845 = vunpack.c.h.b16 %v4364
    %v5846 = vunpack.c.l.b16 %v4365
    %v5847 = vunpack.c.h.b16 %v4365
    %v5848 = vunpack.c.l.b16 %v4366
    %v5849 = vunpack.c.h.b16 %v4366
    %v5850 = vunpack.c.l.b16 %v4367
    %v5851 = vunpack.c.h.b16 %v4367
    %v5852 = vunpack.c.l.b16 %v4368
    %v5853 = vunpack.c.h.b16 %v4368
    %v5854 = vunpack.c.l.b16 %v4369
    %v5855 = vunpack.c.h.b16 %v4369
    %v5856 = vunpack.c.l.b16 %v4370
    %v5857 = vunpack.c.h.b16 %v4370
    %v5858 = vunpack.c.l.b16 %v4371
    %v5859 = vunpack.c.h.b16 %v4371
    %v5860 = vunpack.c.l.b16 %v4372
    %v5861 = vunpack.c.h.b16 %v4372
    %v5862 = vunpack.c.l.b16 %v4373
    %v5863 = vunpack.c.h.b16 %v4373
    %v5864 = vunpack.c.l.b16 %v4374
    %v5865 = vunpack.c.h.b16 %v4374
    %v5866 = vunpack.c.l.b16 %v4375
    %v5867 = vunpack.c.h.b16 %v4375
    %v5868 = vunpack.c.l.b16 %v4376
    %v5869 = vunpack.c.h.b16 %v4376
    %v5870 = vunpack.c.l.b16 %v4377
    %v5871 = vunpack.c.h.b16 %v4377
    %v5872 = vunpack.c.l.b16 %v4378
    %v5873 = vunpack.c.h.b16 %v4378
    %v5874 = vunpack.c.l.b16 %v4379
    %v5875 = vunpack.c.h.b16 %v4379
    %v5876 = vunpack.c.l.b16 %v4380
    %v5877 = vunpack.c.h.b16 %v4380
    %v5878 = vunpack.c.l.b16 %v4381
    %v5879 = vunpack.c.h.b16 %v4381
    %v5880 = vunpack.c.l.b16 %v4382
    %v5881 = vunpack.c.h.b16 %v4382
    %v5882 = vunpack.c.l.b16 %v4383
    %v5883 = vunpack.c.h.b16 %v4383
    %v5884 = vunpack.c.l.b16 %v4384
    %v5885 = vunpack.c.h.b16 %v4384
    %v5886 = vunpack.c.l.b16 %v4385
    %v5887 = vunpack.c.h.b16 %v4385
    %v5888 = vunpack.c.l.b16 %v4386
    %v5889 = vunpack.c.h.b16 %v4386
    %v5890 = vunpack.c.l.b16 %v4387
    %v5891 = vunpack.c.h.b16 %v4387
    %v5892 = vunpack.c.l.b16 %v4388
    %v5893 = vunpack.c.h.b16 %v4388
    %v5894 = vunpack.c.l.b16 %v4389
    %v5895 = vunpack.c.h.b16 %v4389
    %v5896 = vunpack.c.l.b16 %v4390
    %v5897 = vunpack.c.h.b16 %v4390
    %v5898 = vunpack.c.l.b16 %v4391
    %v5899 = vunpack.c.h.b16 %v4391
    %v5900 = vunpack.c.l.b16 %v4392
    %v5901 = vunpack.c.h.b16 %v4392
    %v5902 = vunpack.c.l.b16 %v4393
    %v5903 = vunpack.c.h.b16 %v4393
    %v5904 = vunpack.c.l.b16 %v4394
    %v5905 = vunpack.c.h.b16 %v4394
    %v5906 = vunpack.c.l.b16 %v4395
    %v5907 = vunpack.c.h.b16 %v4395
    %v5908 = vunpack.c.l.b16 %v4396
    %v5909 = vunpack.c.h.b16 %v4396
    %v5910 = vunpack.c.l.b16 %v4397
    %v5911 = vunpack.c.h.b16 %v4397
    %v5912 = vunpack.c.l.b16 %v4398
    %v5913 = vunpack.c.h.b16 %v4398
    %v5914 = vunpack.c.l.b16 %v4399
    %v5915 = vunpack.c.h.b16 %v4399
    %v5916 = vunpack.c.l.b16 %v4400
    %v5917 = vunpack.c.h.b16 %v4400
    %v5918 = vunpack.c.l.b16 %v4401
    %v5919 = vunpack.c.h.b16 %v4401
    %v5920 = vunpack.c.l.b16 %v4402
    %v5921 = vunpack.c.h.b16 %v4402
    %v5922 = vunpack.c.l.b16 %v4403
    %v5923 = vunpack.c.h.b16 %v4403
    %v5924 = vunpack.c.l.b16 %v4404
    %v5925 = vunpack.c.h.b16 %v4404
    %v5926 = vunpack.c.l.b16 %v4405
    %v5927 = vunpack.c.h.b16 %v4405
    %v5928 = vunpack.c.l.b16 %v4406
    %v5929 = vunpack.c.h.b16 %v4406
    %v5930 = vunpack.c.l.b16 %v4407
    %v5931 = vunpack.c.h.b16 %v4407
    %v5932 = vunpack.c.l.b16 %v4408
    %v5933 = vunpack.c.h.b16 %v4408
    %v5934 = vunpack.c.l.b16 %v4409
    %v5935 = vunpack.c.h.b16 %v4409
    %v5936 = vunpack.c.l.b16 %v4410
    %v5937 = vunpack.c.h.b16 %v4410
    %v5938 = vunpack.c.l.b16 %v4411
    %v5939 = vunpack.c.h.b16 %v4411
    %v5940 = vunpack.c.l.b16 %v4412
    %v5941 = vunpack.c.h.b16 %v4412
    %v5942 = vunpack.c.l.b16 %v4413
    %v5943 = vunpack.c.h.b16 %v4413
    %v5944 = vunpack.c.l.b16 %v4414
    %v5945 = vunpack.c.h.b16 %v4414
    %v5946 = vunpack.c.l.b16 %v4415
    %v5947 = vunpack.c.h.b16 %v4415
    %v5948 = vunpack.c.l.b16 %v4416
    %v5949 = vunpack.c.h.b16 %v4416
    %v5950 = vunpack.c.l.b16 %v4417
    %v5951 = vunpack.c.h.b16 %v4417
    %v5952 = vunpack.c.l.b16 %v4418
    %v5953 = vunpack.c.h.b16 %v4418
    %v5954 = vunpack.c.l.b16 %v4419
    %v5955 = vunpack.c.h.b16 %v4419
    %v5956 = vunpack.c.l.b16 %v4420
    %v5957 = vunpack.c.h.b16 %v4420
    %v5958 = vunpack.c.l.b16 %v4421
    %v5959 = vunpack.c.h.b16 %v4421
    %v5960 = vunpack.c.l.b16 %v4422
    %v5961 = vunpack.c.h.b16 %v4422
    %v5962 = vunpack.c.l.b16 %v4423
    %v5963 = vunpack.c.h.b16 %v4423
    %v5964 = vunpack.c.l.b16 %v4424
    %v5965 = vunpack.c.h.b16 %v4424
    %v5966 = vunpack.c.l.b16 %v4425
    %v5967 = vunpack.c.h.b16 %v4425
    %v5968 = vunpack.c.l.b16 %v4426
    %v5969 = vunpack.c.h.b16 %v4426
    %v5970 = vunpack.c.l.b16 %v4427
    %v5971 = vunpack.c.h.b16 %v4427
    %v5972 = vunpack.c.l.b16 %v4428
    %v5973 = vunpack.c.h.b16 %v4428
    %v5974 = vunpack.c.l.b16 %v4429
    %v5975 = vunpack.c.h.b16 %v4429
    %v5976 = vunpack.c.l.b16 %v4430
    %v5977 = vunpack.c.h.b16 %v4430
    %v5978 = vunpack.c.l.b16 %v4431
    %v5979 = vunpack.c.h.b16 %v4431
    %v5980 = vunpack.c.l.b16 %v4432
    %v5981 = vunpack.c.h.b16 %v4432
    %v5982 = vunpack.c.l.b16 %v4433
    %v5983 = vunpack.c.h.b16 %v4433
    %v5984 = vunpack.c.l.b16 %v4434
    %v5985 = vunpack.c.h.b16 %v4434
    %v5986 = vunpack.c.l.b16 %v4435
    %v5987 = vunpack.c.h.b16 %v4435
    %v5988 = vunpack.c.l.b16 %v4436
    %v5989 = vunpack.c.h.b16 %v4436
    %v5990 = vunpack.c.l.b16 %v4437
    %v5991 = vunpack.c.h.b16 %v4437
    %v5992 = vunpack.c.l.b16 %v4438
    %v5993 = vunpack.c.h.b16 %v4438
    %v5994 = vunpack.c.l.b16 %v4439
    %v5995 = vunpack.c.h.b16 %v4439
    %v5996 = vunpack.c.l.b16 %v4440
    %v5997 = vunpack.c.h.b16 %v4440
    %v5998 = vunpack.c.l.b16 %v4441
    %v5999 = vunpack.c.h.b16 %v4441
    %v6000 = vunpack.c.l.b16 %v4442
    %v6001 = vunpack.c.h.b16 %v4442
    %v6002 = vunpack.c.l.b16 %v4443
    %v6003 = vunpack.c.h.b16 %v4443
    %v6004 = vunpack.c.l.b16 %v4444
    %v6005 = vunpack.c.h.b16 %v4444
    %v6006 = vunpack.c.l.b16 %v4445
    %v6007 = vunpack.c.h.b16 %v4445
    %v6008 = vunpack.c.l.b16 %v4446
    %v6009 = vunpack.c.h.b16 %v4446
    %v6010 = vunpack.c.l.b16 %v4447
    %v6011 = vunpack.c.h.b16 %v4447
    %v6012 = vunpack.c.l.b16 %v4448
    %v6013 = vunpack.c.h.b16 %v4448
    %v6014 = vunpack.c.l.b16 %v4449
    %v6015 = vunpack.c.h.b16 %v4449
    %v6016 = vunpack.c.l.b16 %v4450
    %v6017 = vunpack.c.h.b16 %v4450
    %v6018 = vunpack.c.l.b16 %v4451
    %v6019 = vunpack.c.h.b16 %v4451
    %v6020 = vunpack.c.l.b16 %v4452
    %v6021 = vunpack.c.h.b16 %v4452
    %v6022 = vunpack.c.l.b16 %v4453
    %v6023 = vunpack.c.h.b16 %v4453
    %v6024 = vunpack.c.l.b16 %v4454
    %v6025 = vunpack.c.h.b16 %v4454
    %v6026 = vunpack.c.l.b16 %v4455
    %v6027 = vunpack.c.h.b16 %v4455
    %v6028 = vunpack.c.l.b16 %v4456
    %v6029 = vunpack.c.h.b16 %v4456
    %v6030 = vunpack.c.l.b16 %v4457
    %v6031 = vunpack.c.h.b16 %v4457
    %v6032 = vunpack.c.l.b16 %v4458
    %v6033 = vunpack.c.h.b16 %v4458
    %v6034 = vunpack.c.l.b16 %v4459
    %v6035 = vunpack.c.h.b16 %v4459
    %v6036 = vunpack.c.l.b16 %v4460
    %v6037 = vunpack.c.h.b16 %v4460
    %v6038 = vunpack.c.l.b16 %v4461
    %v6039 = vunpack.c.h.b16 %v4461
    %v6040 = vpack.c.b16 %v5024, %v5016
    %v6041 = vpack.c.b16 %v5025, %v5017
    %v6042 = vpack.c.b16 %v5026, %v5018
    %v6043 = vpack.c.b16 %v5027, %v5019
    %v6044 = vpack.c.b16 %v5028, %v5020
    %v6045 = vpack.c.b16 %v5029, %v5021
    %v6046 = vpack.c.b16 %v5030, %v5022
    %v6047 = vpack.c.b16 %v5031, %v5023
    %v6048 = vpack.c.b16 %v5040, %v5032
    %v6049 = vpack.c.b16 %v5041, %v5033
    %v6050 = vpack.c.b16 %v5042, %v5034
    %v6051 = vpack.c.b16 %v5043, %v5035
    %v6052 = vpack.c.b16 %v5044, %v5036
    %v6053 = vpack.c.b16 %v5045, %v5037
    %v6054 = vpack.c.b16 %v5046, %v5038
    %v6055 = vpack.c.b16 %v5047, %v5039
    %v6056 = vpack.c.b16 %v5056, %v5048
    %v6057 = vpack.c.b16 %v5057, %v5049
    %v6058 = vpack.c.b16 %v5058, %v5050
    %v6059 = vpack.c.b16 %v5059, %v5051
    %v6060 = vpack.c.b16 %v5060, %v5052
    %v6061 = vpack.c.b16 %v5061, %v5053
    %v6062 = vpack.c.b16 %v5062, %v5054
    %v6063 = vpack.c.b16 %v5063, %v5055
    %v6064 = vpack.c.b16 %v5072, %v5064
    %v6065 = vpack.c.b16 %v5073, %v5065
    %v6066 = vpack.c.b16 %v5074, %v5066
    %v6067 = vpack.c.b16 %v5075, %v5067
    %v6068 = vpack.c.b16 %v5076, %v5068
    %v6069 = vpack.c.b16 %v5077, %v5069
    %v6070 = vpack.c.b16 %v5078, %v5070
    %v6071 = vpack.c.b16 %v5079, %v5071
    %v6072 = vpack.c.b16 %v5088, %v5080
    %v6073 = vpack.c.b16 %v5089, %v5081
    %v6074 = vpack.c.b16 %v5090, %v5082
    %v6075 = vpack.c.b16 %v5091, %v5083
    %v6076 = vpack.c.b16 %v5092, %v5084
    %v6077 = vpack.c.b16 %v5093, %v5085
    %v6078 = vpack.c.b16 %v5094, %v5086
    %v6079 = vpack.c.b16 %v5095, %v5087
    %v6080 = vpack.c.b16 %v5104, %v5096
    %v6081 = vpack.c.b16 %v5105, %v5097
    %v6082 = vpack.c.b16 %v5106, %v5098
    %v6083 = vpack.c.b16 %v5107, %v5099
    %v6084 = vpack.c.b16 %v5108, %v5100
    %v6085 = vpack.c.b16 %v5109, %v5101
    %v6086 = vpack.c.b16 %v5110, %v5102
    %v6087 = vpack.c.b16 %v5111, %v5103
    %v6088 = vpack.c.b16 %v5120, %v5112
    %v6089 = vpack.c.b16 %v5121, %v5113
    %v6090 = vpack.c.b16 %v5122, %v5114
    %v6091 = vpack.c.b16 %v5123, %v5115
    %v6092 = vpack.c.b16 %v5124, %v5116
    %v6093 = vpack.c.b16 %v5125, %v5117
    %v6094 = vpack.c.b16 %v5126, %v5118
    %v6095 = vpack.c.b16 %v5127, %v5119
    %v6096 = vpack.c.b16 %v5136, %v5128
    %v6097 = vpack.c.b16 %v5137, %v5129
    %v6098 = vpack.c.b16 %v5138, %v5130
    %v6099 = vpack.c.b16 %v5139, %v5131
    %v6100 = vpack.c.b16 %v5140, %v5132
    %v6101 = vpack.c.b16 %v5141, %v5133
    %v6102 = vpack.c.b16 %v5142, %v5134
    %v6103 = vpack.c.b16 %v5143, %v5135
    %v6104 = vpack.c.b16 %v5152, %v5144
    %v6105 = vpack.c.b16 %v5153, %v5145
    %v6106 = vpack.c.b16 %v5154, %v5146
    %v6107 = vpack.c.b16 %v5155, %v5147
    %v6108 = vpack.c.b16 %v5156, %v5148
    %v6109 = vpack.c.b16 %v5157, %v5149
    %v6110 = vpack.c.b16 %v5158, %v5150
    %v6111 = vpack.c.b16 %v5159, %v5151
    %v6112 = vpack.c.b16 %v5168, %v5160
    %v6113 = vpack.c.b16 %v5169, %v5161
    %v6114 = vpack.c.b16 %v5170, %v5162
    %v6115 = vpack.c.b16 %v5171, %v5163
    %v6116 = vpack.c.b16 %v5172, %v5164
    %v6117 = vpack.c.b16 %v5173, %v5165
    %v6118 = vpack.c.b16 %v5174, %v5166
    %v6119 = vpack.c.b16 %v5175, %v5167
    %v6120 = vpack.c.b16 %v5184, %v5176
    %v6121 = vpack.c.b16 %v5185, %v5177
    %v6122 = vpack.c.b16 %v5186, %v5178
    %v6123 = vpack.c.b16 %v5187, %v5179
    %v6124 = vpack.c.b16 %v5188, %v5180
    %v6125 = vpack.c.b16 %v5189, %v5181
    %v6126 = vpack.c.b16 %v5190, %v5182
    %v6127 = vpack.c.b16 %v5191, %v5183
    %v6128 = vpack.c.b16 %v5200, %v5192
    %v6129 = vpack.c.b16 %v5201, %v5193
    %v6130 = vpack.c.b16 %v5202, %v5194
    %v6131 = vpack.c.b16 %v5203, %v5195
    %v6132 = vpack.c.b16 %v5204, %v5196
    %v6133 = vpack.c.b16 %v5205, %v5197
    %v6134 = vpack.c.b16 %v5206, %v5198
    %v6135 = vpack.c.b16 %v5207, %v5199
    %v6136 = vpack.c.b16 %v5216, %v5208
    %v6137 = vpack.c.b16 %v5217, %v5209
    %v6138 = vpack.c.b16 %v5218, %v5210
    %v6139 = vpack.c.b16 %v5219, %v5211
    %v6140 = vpack.c.b16 %v5220, %v5212
    %v6141 = vpack.c.b16 %v5221, %v5213
    %v6142 = vpack.c.b16 %v5222, %v5214
    %v6143 = vpack.c.b16 %v5223, %v5215
    %v6144 = vpack.c.b16 %v5232, %v5224
    %v6145 = vpack.c.b16 %v5233, %v5225
    %v6146 = vpack.c.b16 %v5234, %v5226
    %v6147 = vpack.c.b16 %v5235, %v5227
    %v6148 = vpack.c.b16 %v5236, %v5228
    %v6149 = vpack.c.b16 %v5237, %v5229
    %v6150 = vpack.c.b16 %v5238, %v5230
    %v6151 = vpack.c.b16 %v5239, %v5231
    %v6152 = vpack.c.b16 %v5248, %v5240
    %v6153 = vpack.c.b16 %v5249, %v5241
    %v6154 = vpack.c.b16 %v5250, %v5242
    %v6155 = vpack.c.b16 %v5251, %v5243
    %v6156 = vpack.c.b16 %v5252, %v5244
    %v6157 = vpack.c.b16 %v5253, %v5245
    %v6158 = vpack.c.b16 %v5254, %v5246
    %v6159 = vpack.c.b16 %v5255, %v5247
    %v6160 = vpack.c.b16 %v5264, %v5256
    %v6161 = vpack.c.b16 %v5265, %v5257
    %v6162 = vpack.c.b16 %v5266, %v5258
    %v6163 = vpack.c.b16 %v5267, %v5259
    %v6164 = vpack.c.b16 %v5268, %v5260
    %v6165 = vpack.c.b16 %v5269, %v5261
    %v6166 = vpack.c.b16 %v5270, %v5262
    %v6167 = vpack.c.b16 %v5271, %v5263
    %v6168 = vpack.c.b16 %v5280, %v5272
    %v6169 = vpack.c.b16 %v5281, %v5273
    %v6170 = vpack.c.b16 %v5282, %v5274
    %v6171 = vpack.c.b16 %v5283, %v5275
    %v6172 = vpack.c.b16 %v5284, %v5276
    %v6173 = vpack.c.b16 %v5285, %v5277
    %v6174 = vpack.c.b16 %v5286, %v5278
    %v6175 = vpack.c.b16 %v5287, %v5279
    %v6176 = vpack.c.b16 %v5296, %v5288
    %v6177 = vpack.c.b16 %v5297, %v5289
    %v6178 = vpack.c.b16 %v5298, %v5290
    %v6179 = vpack.c.b16 %v5299, %v5291
    %v6180 = vpack.c.b16 %v5300, %v5292
    %v6181 = vpack.c.b16 %v5301, %v5293
    %v6182 = vpack.c.b16 %v5302, %v5294
    %v6183 = vpack.c.b16 %v5303, %v5295
    %v6184 = vpack.c.b16 %v5312, %v5304
    %v6185 = vpack.c.b16 %v5313, %v5305
    %v6186 = vpack.c.b16 %v5314, %v5306
    %v6187 = vpack.c.b16 %v5315, %v5307
    %v6188 = vpack.c.b16 %v5316, %v5308
    %v6189 = vpack.c.b16 %v5317, %v5309
    %v6190 = vpack.c.b16 %v5318, %v5310
    %v6191 = vpack.c.b16 %v5319, %v5311
    %v6192 = vpack.c.b16 %v5328, %v5320
    %v6193 = vpack.c.b16 %v5329, %v5321
    %v6194 = vpack.c.b16 %v5330, %v5322
    %v6195 = vpack.c.b16 %v5331, %v5323
    %v6196 = vpack.c.b16 %v5332, %v5324
    %v6197 = vpack.c.b16 %v5333, %v5325
    %v6198 = vpack.c.b16 %v5334, %v5326
    %v6199 = vpack.c.b16 %v5335, %v5327
    %v6200 = vpack.c.b16 %v5344, %v5336
    %v6201 = vpack.c.b16 %v5345, %v5337
    %v6202 = vpack.c.b16 %v5346, %v5338
    %v6203 = vpack.c.b16 %v5347, %v5339
    %v6204 = vpack.c.b16 %v5348, %v5340
    %v6205 = vpack.c.b16 %v5349, %v5341
    %v6206 = vpack.c.b16 %v5350, %v5342
    %v6207 = vpack.c.b16 %v5351, %v5343
    %v6208 = vpack.c.b16 %v5360, %v5352
    %v6209 = vpack.c.b16 %v5361, %v5353
    %v6210 = vpack.c.b16 %v5362, %v5354
    %v6211 = vpack.c.b16 %v5363, %v5355
    %v6212 = vpack.c.b16 %v5364, %v5356
    %v6213 = vpack.c.b16 %v5365, %v5357
    %v6214 = vpack.c.b16 %v5366, %v5358
    %v6215 = vpack.c.b16 %v5367, %v5359
    %v6216 = vpack.c.b16 %v5376, %v5368
    %v6217 = vpack.c.b16 %v5377, %v5369
    %v6218 = vpack.c.b16 %v5378, %v5370
    %v6219 = vpack.c.b16 %v5379, %v5371
    %v6220 = vpack.c.b16 %v5380, %v5372
    %v6221 = vpack.c.b16 %v5381, %v5373
    %v6222 = vpack.c.b16 %v5382, %v5374
    %v6223 = vpack.c.b16 %v5383, %v5375
    %v6224 = vpack.c.b16 %v5392, %v5384
    %v6225 = vpack.c.b16 %v5393, %v5385
    %v6226 = vpack.c.b16 %v5394, %v5386
    %v6227 = vpack.c.b16 %v5395, %v5387
    %v6228 = vpack.c.b16 %v5396, %v5388
    %v6229 = vpack.c.b16 %v5397, %v5389
    %v6230 = vpack.c.b16 %v5398, %v5390
    %v6231 = vpack.c.b16 %v5399, %v5391
    %v6232 = vpack.c.b16 %v5408, %v5400
    %v6233 = vpack.c.b16 %v5409, %v5401
    %v6234 = vpack.c.b16 %v5410, %v5402
    %v6235 = vpack.c.b16 %v5411, %v5403
    %v6236 = vpack.c.b16 %v5412, %v5404
    %v6237 = vpack.c.b16 %v5413, %v5405
    %v6238 = vpack.c.b16 %v5414, %v5406
    %v6239 = vpack.c.b16 %v5415, %v5407
    %v6240 = vpack.c.b16 %v5424, %v5416
    %v6241 = vpack.c.b16 %v5425, %v5417
    %v6242 = vpack.c.b16 %v5426, %v5418
    %v6243 = vpack.c.b16 %v5427, %v5419
    %v6244 = vpack.c.b16 %v5428, %v5420
    %v6245 = vpack.c.b16 %v5429, %v5421
    %v6246 = vpack.c.b16 %v5430, %v5422
    %v6247 = vpack.c.b16 %v5431, %v5423
    %v6248 = vpack.c.b16 %v5440, %v5432
    %v6249 = vpack.c.b16 %v5441, %v5433
    %v6250 = vpack.c.b16 %v5442, %v5434
    %v6251 = vpack.c.b16 %v5443, %v5435
    %v6252 = vpack.c.b16 %v5444, %v5436
    %v6253 = vpack.c.b16 %v5445, %v5437
    %v6254 = vpack.c.b16 %v5446, %v5438
    %v6255 = vpack.c.b16 %v5447, %v5439
    %v6256 = vpack.c.b16 %v5456, %v5448
    %v6257 = vpack.c.b16 %v5457, %v5449
    %v6258 = vpack.c.b16 %v5458, %v5450
    %v6259 = vpack.c.b16 %v5459, %v5451
    %v6260 = vpack.c.b16 %v5460, %v5452
    %v6261 = vpack.c.b16 %v5461, %v5453
    %v6262 = vpack.c.b16 %v5462, %v5454
    %v6263 = vpack.c.b16 %v5463, %v5455
    %v6264 = vpack.c.b16 %v5472, %v5464
    %v6265 = vpack.c.b16 %v5473, %v5465
    %v6266 = vpack.c.b16 %v5474, %v5466
    %v6267 = vpack.c.b16 %v5475, %v5467
    %v6268 = vpack.c.b16 %v5476, %v5468
    %v6269 = vpack.c.b16 %v5477, %v5469
    %v6270 = vpack.c.b16 %v5478, %v5470
    %v6271 = vpack.c.b16 %v5479, %v5471
    %v6272 = vpack.c.b16 %v5488, %v5480
    %v6273 = vpack.c.b16 %v5489, %v5481
    %v6274 = vpack.c.b16 %v5490, %v5482
    %v6275 = vpack.c.b16 %v5491, %v5483
    %v6276 = vpack.c.b16 %v5492, %v5484
    %v6277 = vpack.c.b16 %v5493, %v5485
    %v6278 = vpack.c.b16 %v5494, %v5486
    %v6279 = vpack.c.b16 %v5495, %v5487
    %v6280 = vpack.c.b16 %v5504, %v5496
    %v6281 = vpack.c.b16 %v5505, %v5497
    %v6282 = vpack.c.b16 %v5506, %v5498
    %v6283 = vpack.c.b16 %v5507, %v5499
    %v6284 = vpack.c.b16 %v5508, %v5500
    %v6285 = vpack.c.b16 %v5509, %v5501
    %v6286 = vpack.c.b16 %v5510, %v5502
    %v6287 = vpack.c.b16 %v5511, %v5503
    %v6288 = vpack.c.b16 %v5520, %v5512
    %v6289 = vpack.c.b16 %v5521, %v5513
    %v6290 = vpack.c.b16 %v5522, %v5514
    %v6291 = vpack.c.b16 %v5523, %v5515
    %v6292 = vpack.c.b16 %v5524, %v5516
    %v6293 = vpack.c.b16 %v5525, %v5517
    %v6294 = vpack.c.b16 %v5526, %v5518
    %v6295 = vpack.c.b16 %v5527, %v5519
    %v6296 = vpack.c.b16 %v5536, %v5528
    %v6297 = vpack.c.b16 %v5537, %v5529
    %v6298 = vpack.c.b16 %v5538, %v5530
    %v6299 = vpack.c.b16 %v5539, %v5531
    %v6300 = vpack.c.b16 %v5540, %v5532
    %v6301 = vpack.c.b16 %v5541, %v5533
    %v6302 = vpack.c.b16 %v5542, %v5534
    %v6303 = vpack.c.b16 %v5543, %v5535
    %v6304 = vpack.c.b16 %v5552, %v5544
    %v6305 = vpack.c.b16 %v5553, %v5545
    %v6306 = vpack.c.b16 %v5554, %v5546
    %v6307 = vpack.c.b16 %v5555, %v5547
    %v6308 = vpack.c.b16 %v5556, %v5548
    %v6309 = vpack.c.b16 %v5557, %v5549
    %v6310 = vpack.c.b16 %v5558, %v5550
    %v6311 = vpack.c.b16 %v5559, %v5551
    %v6312 = vpack.c.b16 %v5568, %v5560
    %v6313 = vpack.c.b16 %v5569, %v5561
    %v6314 = vpack.c.b16 %v5570, %v5562
    %v6315 = vpack.c.b16 %v5571, %v5563
    %v6316 = vpack.c.b16 %v5572, %v5564
    %v6317 = vpack.c.b16 %v5573, %v5565
    %v6318 = vpack.c.b16 %v5574, %v5566
    %v6319 = vpack.c.b16 %v5575, %v5567
    %v6320 = vpack.c.b16 %v5584, %v5576
    %v6321 = vpack.c.b16 %v5585, %v5577
    %v6322 = vpack.c.b16 %v5586, %v5578
    %v6323 = vpack.c.b16 %v5587, %v5579
    %v6324 = vpack.c.b16 %v5588, %v5580
    %v6325 = vpack.c.b16 %v5589, %v5581
    %v6326 = vpack.c.b16 %v5590, %v5582
    %v6327 = vpack.c.b16 %v5591, %v5583
    %v6328 = vpack.c.b16 %v5600, %v5592
    %v6329 = vpack.c.b16 %v5601, %v5593
    %v6330 = vpack.c.b16 %v5602, %v5594
    %v6331 = vpack.c.b16 %v5603, %v5595
    %v6332 = vpack.c.b16 %v5604, %v5596
    %v6333 = vpack.c.b16 %v5605, %v5597
    %v6334 = vpack.c.b16 %v5606, %v5598
    %v6335 = vpack.c.b16 %v5607, %v5599
    %v6336 = vpack.c.b16 %v5616, %v5608
    %v6337 = vpack.c.b16 %v5617, %v5609
    %v6338 = vpack.c.b16 %v5618, %v5610
    %v6339 = vpack.c.b16 %v5619, %v5611
    %v6340 = vpack.c.b16 %v5620, %v5612
    %v6341 = vpack.c.b16 %v5621, %v5613
    %v6342 = vpack.c.b16 %v5622, %v5614
    %v6343 = vpack.c.b16 %v5623, %v5615
    %v6344 = vpack.c.b16 %v5632, %v5624
    %v6345 = vpack.c.b16 %v5633, %v5625
    %v6346 = vpack.c.b16 %v5634, %v5626
    %v6347 = vpack.c.b16 %v5635, %v5627
    %v6348 = vpack.c.b16 %v5636, %v5628
    %v6349 = vpack.c.b16 %v5637, %v5629
    %v6350 = vpack.c.b16 %v5638, %v5630
    %v6351 = vpack.c.b16 %v5639, %v5631
    %v6352 = vpack.c.b16 %v5648, %v5640
    %v6353 = vpack.c.b16 %v5649, %v5641
    %v6354 = vpack.c.b16 %v5650, %v5642
    %v6355 = vpack.c.b16 %v5651, %v5643
    %v6356 = vpack.c.b16 %v5652, %v5644
    %v6357 = vpack.c.b16 %v5653, %v5645
    %v6358 = vpack.c.b16 %v5654, %v5646
    %v6359 = vpack.c.b16 %v5655, %v5647
    %v6360 = vpack.c.b16 %v5664, %v5656
    %v6361 = vpack.c.b16 %v5665, %v5657
    %v6362 = vpack.c.b16 %v5666, %v5658
    %v6363 = vpack.c.b16 %v5667, %v5659
    %v6364 = vpack.c.b16 %v5668, %v5660
    %v6365 = vpack.c.b16 %v5669, %v5661
    %v6366 = vpack.c.b16 %v5670, %v5662
    %v6367 = vpack.c.b16 %v5671, %v5663
    %v6368 = vpack.c.b16 %v5680, %v5672
    %v6369 = vpack.c.b16 %v5681, %v5673
    %v6370 = vpack.c.b16 %v5682, %v5674
    %v6371 = vpack.c.b16 %v5683, %v5675
    %v6372 = vpack.c.b16 %v5684, %v5676
    %v6373 = vpack.c.b16 %v5685, %v5677
    %v6374 = vpack.c.b16 %v5686, %v5678
    %v6375 = vpack.c.b16 %v5687, %v5679
    %v6376 = vpack.c.b16 %v5696, %v5688
    %v6377 = vpack.c.b16 %v5697, %v5689
    %v6378 = vpack.c.b16 %v5698, %v5690
    %v6379 = vpack.c.b16 %v5699, %v5691
    %v6380 = vpack.c.b16 %v5700, %v5692
    %v6381 = vpack.c.b16 %v5701, %v5693
    %v6382 = vpack.c.b16 %v5702, %v5694
    %v6383 = vpack.c.b16 %v5703, %v5695
    %v6384 = vpack.c.b16 %v5712, %v5704
    %v6385 = vpack.c.b16 %v5713, %v5705
    %v6386 = vpack.c.b16 %v5714, %v5706
    %v6387 = vpack.c.b16 %v5715, %v5707
    %v6388 = vpack.c.b16 %v5716, %v5708
    %v6389 = vpack.c.b16 %v5717, %v5709
    %v6390 = vpack.c.b16 %v5718, %v5710
    %v6391 = vpack.c.b16 %v5719, %v5711
    %v6392 = vpack.c.b16 %v5728, %v5720
    %v6393 = vpack.c.b16 %v5729, %v5721
    %v6394 = vpack.c.b16 %v5730, %v5722
    %v6395 = vpack.c.b16 %v5731, %v5723
    %v6396 = vpack.c.b16 %v5732, %v5724
    %v6397 = vpack.c.b16 %v5733, %v5725
    %v6398 = vpack.c.b16 %v5734, %v5726
    %v6399 = vpack.c.b16 %v5735, %v5727
    %v6400 = vpack.c.b16 %v5744, %v5736
    %v6401 = vpack.c.b16 %v5745, %v5737
    %v6402 = vpack.c.b16 %v5746, %v5738
    %v6403 = vpack.c.b16 %v5747, %v5739
    %v6404 = vpack.c.b16 %v5748, %v5740
    %v6405 = vpack.c.b16 %v5749, %v5741
    %v6406 = vpack.c.b16 %v5750, %v5742
    %v6407 = vpack.c.b16 %v5751, %v5743
    %v6408 = vpack.c.b16 %v5760, %v5752
    %v6409 = vpack.c.b16 %v5761, %v5753
    %v6410 = vpack.c.b16 %v5762, %v5754
    %v6411 = vpack.c.b16 %v5763, %v5755
    %v6412 = vpack.c.b16 %v5764, %v5756
    %v6413 = vpack.c.b16 %v5765, %v5757
    %v6414 = vpack.c.b16 %v5766, %v5758
    %v6415 = vpack.c.b16 %v5767, %v5759
    %v6416 = vpack.c.b16 %v5776, %v5768
    %v6417 = vpack.c.b16 %v5777, %v5769
    %v6418 = vpack.c.b16 %v5778, %v5770
    %v6419 = vpack.c.b16 %v5779, %v5771
    %v6420 = vpack.c.b16 %v5780, %v5772
    %v6421 = vpack.c.b16 %v5781, %v5773
    %v6422 = vpack.c.b16 %v5782, %v5774
    %v6423 = vpack.c.b16 %v5783, %v5775
    %v6424 = vpack.c.b16 %v5792, %v5784
    %v6425 = vpack.c.b16 %v5793, %v5785
    %v6426 = vpack.c.b16 %v5794, %v5786
    %v6427 = vpack.c.b16 %v5795, %v5787
    %v6428 = vpack.c.b16 %v5796, %v5788
    %v6429 = vpack.c.b16 %v5797, %v5789
    %v6430 = vpack.c.b16 %v5798, %v5790
    %v6431 = vpack.c.b16 %v5799, %v5791
    %v6432 = vpack.c.b16 %v5808, %v5800
    %v6433 = vpack.c.b16 %v5809, %v5801
    %v6434 = vpack.c.b16 %v5810, %v5802
    %v6435 = vpack.c.b16 %v5811, %v5803
    %v6436 = vpack.c.b16 %v5812, %v5804
    %v6437 = vpack.c.b16 %v5813, %v5805
    %v6438 = vpack.c.b16 %v5814, %v5806
    %v6439 = vpack.c.b16 %v5815, %v5807
    %v6440 = vpack.c.b16 %v5824, %v5816
    %v6441 = vpack.c.b16 %v5825, %v5817
    %v6442 = vpack.c.b16 %v5826, %v5818
    %v6443 = vpack.c.b16 %v5827, %v5819
    %v6444 = vpack.c.b16 %v5828, %v5820
    %v6445 = vpack.c.b16 %v5829, %v5821
    %v6446 = vpack.c.b16 %v5830, %v5822
    %v6447 = vpack.c.b16 %v5831, %v5823
    %v6448 = vpack.c.b16 %v5840, %v5832
    %v6449 = vpack.c.b16 %v5841, %v5833
    %v6450 = vpack.c.b16 %v5842, %v5834
    %v6451 = vpack.c.b16 %v5843, %v5835
    %v6452 = vpack.c.b16 %v5844, %v5836
    %v6453 = vpack.c.b16 %v5845, %v5837
    %v6454 = vpack.c.b16 %v5846, %v5838
    %v6455 = vpack.c.b16 %v5847, %v5839
    %v6456 = vpack.c.b16 %v5856, %v5848
    %v6457 = vpack.c.b16 %v5857, %v5849
    %v6458 = vpack.c.b16 %v5858, %v5850
    %v6459 = vpack.c.b16 %v5859, %v5851
    %v6460 = vpack.c.b16 %v5860, %v5852
    %v6461 = vpack.c.b16 %v5861, %v5853
    %v6462 = vpack.c.b16 %v5862, %v5854
    %v6463 = vpack.c.b16 %v5863, %v5855
    %v6464 = vpack.c.b16 %v5872, %v5864
    %v6465 = vpack.c.b16 %v5873, %v5865
    %v6466 = vpack.c.b16 %v5874, %v5866
    %v6467 = vpack.c.b16 %v5875, %v5867
    %v6468 = vpack.c.b16 %v5876, %v5868
    %v6469 = vpack.c.b16 %v5877, %v5869
    %v6470 = vpack.c.b16 %v5878, %v5870
    %v6471 = vpack.c.b16 %v5879, %v5871
    %v6472 = vpack.c.b16 %v5888, %v5880
    %v6473 = vpack.c.b16 %v5889, %v5881
    %v6474 = vpack.c.b16 %v5890, %v5882
    %v6475 = vpack.c.b16 %v5891, %v5883
    %v6476 = vpack.c.b16 %v5892, %v5884
    %v6477 = vpack.c.b16 %v5893, %v5885
    %v6478 = vpack.c.b16 %v5894, %v5886
    %v6479 = vpack.c.b16 %v5895, %v5887
    %v6480 = vpack.c.b16 %v5904, %v5896
    %v6481 = vpack.c.b16 %v5905, %v5897
    %v6482 = vpack.c.b16 %v5906, %v5898
    %v6483 = vpack.c.b16 %v5907, %v5899
    %v6484 = vpack.c.b16 %v5908, %v5900
    %v6485 = vpack.c.b16 %v5909, %v5901
    %v6486 = vpack.c.b16 %v5910, %v5902
    %v6487 = vpack.c.b16 %v5911, %v5903
    %v6488 = vpack.c.b16 %v5920, %v5912
    %v6489 = vpack.c.b16 %v5921, %v5913
    %v6490 = vpack.c.b16 %v5922, %v5914
    %v6491 = vpack.c.b16 %v5923, %v5915
    %v6492 = vpack.c.b16 %v5924, %v5916
    %v6493 = vpack.c.b16 %v5925, %v5917
    %v6494 = vpack.c.b16 %v5926, %v5918
    %v6495 = vpack.c.b16 %v5927, %v5919
    %v6496 = vpack.c.b16 %v5936, %v5928
    %v6497 = vpack.c.b16 %v5937, %v5929
    %v6498 = vpack.c.b16 %v5938, %v5930
    %v6499 = vpack.c.b16 %v5939, %v5931
    %v6500 = vpack.c.b16 %v5940, %v5932
    %v6501 = vpack.c.b16 %v5941, %v5933
    %v6502 = vpack.c.b16 %v5942, %v5934
    %v6503 = vpack.c.b16 %v5943, %v5935
    %v6504 = vpack.c.b16 %v5952, %v5944
    %v6505 = vpack.c.b16 %v5953, %v5945
    %v6506 = vpack.c.b16 %v5954, %v5946
    %v6507 = vpack.c.b16 %v5955, %v5947
    %v6508 = vpack.c.b16 %v5956, %v5948
    %v6509 = vpack.c.b16 %v5957, %v5949
    %v6510 = vpack.c.b16 %v5958, %v5950
    %v6511 = vpack.c.b16 %v5959, %v5951
    %v6512 = vpack.c.b16 %v5968, %v5960
    %v6513 = vpack.c.b16 %v5969, %v5961
    %v6514 = vpack.c.b16 %v5970, %v5962
    %v6515 = vpack.c.b16 %v5971, %v5963
    %v6516 = vpack.c.b16 %v5972, %v5964
    %v6517 = vpack.c.b16 %v5973, %v5965
    %v6518 = vpack.c.b16 %v5974, %v5966
    %v6519 = vpack.c.b16 %v5975, %v5967
    %v6520 = vpack.c.b16 %v5984, %v5976
    %v6521 = vpack.c.b16 %v5985, %v5977
    %v6522 = vpack.c.b16 %v5986, %v5978
    %v6523 = vpack.c.b16 %v5987, %v5979
    %v6524 = vpack.c.b16 %v5988, %v5980
    %v6525 = vpack.c.b16 %v5989, %v5981
    %v6526 = vpack.c.b16 %v5990, %v5982
    %v6527 = vpack.c.b16 %v5991, %v5983
    %v6528 = vpack.c.b16 %v6000, %v5992
    %v6529 = vpack.c.b16 %v6001, %v5993
    %v6530 = vpack.c.b16 %v6002, %v5994
    %v6531 = vpack.c.b16 %v6003, %v5995
    %v6532 = vpack.c.b16 %v6004, %v5996
    %v6533 = vpack.c.b16 %v6005, %v5997
    %v6534 = vpack.c.b16 %v6006, %v5998
    %v6535 = vpack.c.b16 %v6007, %v5999
    %v6536 = vpack.c.b16 %v6016, %v6008
    %v6537 = vpack.c.b16 %v6017, %v6009
    %v6538 = vpack.c.b16 %v6018, %v6010
    %v6539 = vpack.c.b16 %v6019, %v6011
    %v6540 = vpack.c.b16 %v6020, %v6012
    %v6541 = vpack.c.b16 %v6021, %v6013
    %v6542 = vpack.c.b16 %v6022, %v6014
    %v6543 = vpack.c.b16 %v6023, %v6015
    %v6544 = vpack.c.b16 %v6032, %v6024
    %v6545 = vpack.c.b16 %v6033, %v6025
    %v6546 = vpack.c.b16 %v6034, %v6026
    %v6547 = vpack.c.b16 %v6035, %v6027
    %v6548 = vpack.c.b16 %v6036, %v6028
    %v6549 = vpack.c.b16 %v6037, %v6029
    %v6550 = vpack.c.b16 %v6038, %v6030
    %v6551 = vpack.c.b16 %v6039, %v6031
    %7064 = vmatprep.subr.bf16.mxu0 %v6097
    %7065 = vmatpush1.bf16.msra.mxu0 %v6096
    %7066 = vmatprep.subr.bf16.mxu0 %v6089
    %7067 = vmatpush1.bf16.msra.mxu0 %v6088
    %7068 = vmatprep.subr.bf16.mxu0 %v6081
    %7069 = vmatpush1.bf16.msra.mxu0 %v6080
    %7070 = vmatprep.subr.bf16.mxu0 %v6073
    %7071 = vmatpush1.bf16.msra.mxu0 %v6072
    %7072 = vmatprep.subr.bf16.mxu0 %v6065
    %7073 = vmatpush1.bf16.msra.mxu0 %v6064
    %7074 = vmatprep.subr.bf16.mxu0 %v6057
    %7075 = vmatpush1.bf16.msra.mxu0 %v6056
    %7076 = vmatprep.subr.bf16.mxu0 %v6049
    %7077 = vmatpush1.bf16.msra.mxu0 %v6048
    %7078 = vmatprep.subr.bf16.mxu0 %v6041
    %7079 = vmatpush1.bf16.msra.mxu0 %v6040
    %7080 = vmatprep.subr.bf16.mxu0 %v6161
    %7081 = vmatpush2.bf16.msra.mxu0 %v6160
    %7082 = vmatprep.subr.bf16.mxu0 %v6153
    %7083 = vmatpush2.bf16.msra.mxu0 %v6152
    %7084 = vmatprep.subr.bf16.mxu0 %v6145
    %7085 = vmatpush2.bf16.msra.mxu0 %v6144
    %7086 = vmatprep.subr.bf16.mxu0 %v6137
    %7087 = vmatpush2.bf16.msra.mxu0 %v6136
    %7088 = vmatprep.subr.bf16.mxu0 %v6129
    %7089 = vmatpush2.bf16.msra.mxu0 %v6128
    %7090 = vmatprep.subr.bf16.mxu0 %v6121
    %7091 = vmatpush2.bf16.msra.mxu0 %v6120
    %7092 = vmatprep.subr.bf16.mxu0 %v6113
    %7093 = vmatpush2.bf16.msra.mxu0 %v6112
    %7094 = vmatprep.subr.bf16.mxu0 %v6105
    %7095 = vmatpush2.bf16.msra.mxu0 %v6104
    %7096 = vmatprep.mubr.bf16.mxu0 %v3887
    %7097 = vmatmul.mubr.bf16.gmra.mxu0 %v3886
    %v7098 = vpop.f32.mrf.mxu0
    %v7099 = vadd.f32 %v4467, %v7098
    %v7100 = vpop.f32.mrf.mxu0
    %v7101 = vadd.f32 %v4471, %v7100
    %v7102 = vpop.f32.mrf.mxu0
    %v7103 = vadd.f32 %v4467, %v7102
    %v7104 = vpop.f32.mrf.mxu0
    %v7105 = vadd.f32 %v4471, %v7104
    %7106 = vmatprep.mubr.bf16.mxu0 %v3895
    %7107 = vmatmul.mubr.bf16.gmra.mxu0 %v3894
    %v7108 = vpop.f32.mrf.mxu0
    %v7109 = vadd.f32 %v4467, %v7108
    %v7110 = vpop.f32.mrf.mxu0
    %v7111 = vadd.f32 %v4471, %v7110
    %v7112 = vpop.f32.mrf.mxu0
    %v7113 = vadd.f32 %v4467, %v7112
    %v7114 = vpop.f32.mrf.mxu0
    %v7115 = vadd.f32 %v4471, %v7114
    %7116 = vmatprep.mubr.bf16.mxu0 %v3903
    %7117 = vmatmul.mubr.bf16.gmra.mxu0 %v3902
    %v7118 = vpop.f32.mrf.mxu0
    %v7119 = vadd.f32 %v4467, %v7118
    %v7120 = vpop.f32.mrf.mxu0
    %v7121 = vadd.f32 %v4471, %v7120
    %v7122 = vpop.f32.mrf.mxu0
    %v7123 = vadd.f32 %v4467, %v7122
    %v7124 = vpop.f32.mrf.mxu0
    %v7125 = vadd.f32 %v4471, %v7124
    %7126 = vmatprep.mubr.bf16.mxu0 %v3911
    %7127 = vmatmul.mubr.bf16.gmra.mxu0 %v3910
    %v7128 = vpop.f32.mrf.mxu0
    %v7129 = vadd.f32 %v4467, %v7128
    %v7130 = vpop.f32.mrf.mxu0
    %v7131 = vadd.f32 %v4471, %v7130
    %v7132 = vpop.f32.mrf.mxu0
    %v7133 = vadd.f32 %v4467, %v7132
    %v7134 = vpop.f32.mrf.mxu0
    %v7135 = vadd.f32 %v4471, %v7134
    %7136 = vmatprep.mubr.bf16.mxu0 %v3919
    %7137 = vmatmul.mubr.bf16.gmra.mxu0 %v3918
    %v7138 = vpop.f32.mrf.mxu0
    %v7139 = vadd.f32 %v4467, %v7138
    %v7140 = vpop.f32.mrf.mxu0
    %v7141 = vadd.f32 %v4471, %v7140
    %v7142 = vpop.f32.mrf.mxu0
    %v7143 = vadd.f32 %v4467, %v7142
    %v7144 = vpop.f32.mrf.mxu0
    %v7145 = vadd.f32 %v4471, %v7144
    %7146 = vmatprep.mubr.bf16.mxu0 %v3927
    %7147 = vmatmul.mubr.bf16.gmra.mxu0 %v3926
    %v7148 = vpop.f32.mrf.mxu0
    %v7149 = vadd.f32 %v4467, %v7148
    %v7150 = vpop.f32.mrf.mxu0
    %v7151 = vadd.f32 %v4471, %v7150
    %v7152 = vpop.f32.mrf.mxu0
    %v7153 = vadd.f32 %v4467, %v7152
    %v7154 = vpop.f32.mrf.mxu0
    %v7155 = vadd.f32 %v4471, %v7154
    %7156 = vmatprep.mubr.bf16.mxu0 %v3935
    %7157 = vmatmul.mubr.bf16.gmra.mxu0 %v3934
    %v7158 = vpop.f32.mrf.mxu0
    %v7159 = vadd.f32 %v4467, %v7158
    %v7160 = vpop.f32.mrf.mxu0
    %v7161 = vadd.f32 %v4471, %v7160
    %v7162 = vpop.f32.mrf.mxu0
    %v7163 = vadd.f32 %v4467, %v7162
    %v7164 = vpop.f32.mrf.mxu0
    %v7165 = vadd.f32 %v4471, %v7164
    %7166 = vmatprep.mubr.bf16.mxu0 %v3943
    %7167 = vmatmul.mubr.bf16.gmra.mxu0 %v3942
    %v7168 = vpop.f32.mrf.mxu0
    %v7169 = vadd.f32 %v4467, %v7168
    %v7170 = vpop.f32.mrf.mxu0
    %v7171 = vadd.f32 %v4471, %v7170
    %v7172 = vpop.f32.mrf.mxu0
    %v7173 = vadd.f32 %v4467, %v7172
    %v7174 = vpop.f32.mrf.mxu0
    %v7175 = vadd.f32 %v4471, %v7174
    %7176 = vdwg.mxu0
    %7177 = vmatprep.subr.bf16.mxu0 %v6225
    %7178 = vmatpush1.bf16.msra.mxu0 %v6224
    %7179 = vmatprep.subr.bf16.mxu0 %v6217
    %7180 = vmatpush1.bf16.msra.mxu0 %v6216
    %7181 = vmatprep.subr.bf16.mxu0 %v6209
    %7182 = vmatpush1.bf16.msra.mxu0 %v6208
    %7183 = vmatprep.subr.bf16.mxu0 %v6201
    %7184 = vmatpush1.bf16.msra.mxu0 %v6200
    %7185 = vmatprep.subr.bf16.mxu0 %v6193
    %7186 = vmatpush1.bf16.msra.mxu0 %v6192
    %7187 = vmatprep.subr.bf16.mxu0 %v6185
    %7188 = vmatpush1.bf16.msra.mxu0 %v6184
    %7189 = vmatprep.subr.bf16.mxu0 %v6177
    %7190 = vmatpush1.bf16.msra.mxu0 %v6176
    %7191 = vmatprep.subr.bf16.mxu0 %v6169
    %7192 = vmatpush1.bf16.msra.mxu0 %v6168
    %7193 = vmatprep.subr.bf16.mxu0 %v6289
    %7194 = vmatpush2.bf16.msra.mxu0 %v6288
    %7195 = vmatprep.subr.bf16.mxu0 %v6281
    %7196 = vmatpush2.bf16.msra.mxu0 %v6280
    %7197 = vmatprep.subr.bf16.mxu0 %v6273
    %7198 = vmatpush2.bf16.msra.mxu0 %v6272
    %7199 = vmatprep.subr.bf16.mxu0 %v6265
    %7200 = vmatpush2.bf16.msra.mxu0 %v6264
    %7201 = vmatprep.subr.bf16.mxu0 %v6257
    %7202 = vmatpush2.bf16.msra.mxu0 %v6256
    %7203 = vmatprep.subr.bf16.mxu0 %v6249
    %7204 = vmatpush2.bf16.msra.mxu0 %v6248
    %7205 = vmatprep.subr.bf16.mxu0 %v6241
    %7206 = vmatpush2.bf16.msra.mxu0 %v6240
    %7207 = vmatprep.subr.bf16.mxu0 %v6233
    %7208 = vmatpush2.bf16.msra.mxu0 %v6232
    %7209 = vmatprep.mubr.bf16.mxu0 %v3889
    %7210 = vmatmul.mubr.bf16.gmra.mxu0 %v3888
    %v7211 = vpop.f32.mrf.mxu0
    %v7212 = vadd.f32 %v7099, %v7211
    %v7213 = vpop.f32.mrf.mxu0
    %v7214 = vadd.f32 %v7101, %v7213
    %v7215 = vpop.f32.mrf.mxu0
    %v7216 = vadd.f32 %v7103, %v7215
    %v7217 = vpop.f32.mrf.mxu0
    %v7218 = vadd.f32 %v7105, %v7217
    %7219 = vmatprep.mubr.bf16.mxu0 %v3897
    %7220 = vmatmul.mubr.bf16.gmra.mxu0 %v3896
    %v7221 = vpop.f32.mrf.mxu0
    %v7222 = vadd.f32 %v7109, %v7221
    %v7223 = vpop.f32.mrf.mxu0
    %v7224 = vadd.f32 %v7111, %v7223
    %v7225 = vpop.f32.mrf.mxu0
    %v7226 = vadd.f32 %v7113, %v7225
    %v7227 = vpop.f32.mrf.mxu0
    %v7228 = vadd.f32 %v7115, %v7227
    %7229 = vmatprep.mubr.bf16.mxu0 %v3905
    %7230 = vmatmul.mubr.bf16.gmra.mxu0 %v3904
    %v7231 = vpop.f32.mrf.mxu0
    %v7232 = vadd.f32 %v7119, %v7231
    %v7233 = vpop.f32.mrf.mxu0
    %v7234 = vadd.f32 %v7121, %v7233
    %v7235 = vpop.f32.mrf.mxu0
    %v7236 = vadd.f32 %v7123, %v7235
    %v7237 = vpop.f32.mrf.mxu0
    %v7238 = vadd.f32 %v7125, %v7237
    %7239 = vmatprep.mubr.bf16.mxu0 %v3913
    %7240 = vmatmul.mubr.bf16.gmra.mxu0 %v3912
    %v7241 = vpop.f32.mrf.mxu0
    %v7242 = vadd.f32 %v7129, %v7241
    %v7243 = vpop.f32.mrf.mxu0
    %v7244 = vadd.f32 %v7131, %v7243
    %v7245 = vpop.f32.mrf.mxu0
    %v7246 = vadd.f32 %v7133, %v7245
    %v7247 = vpop.f32.mrf.mxu0
    %v7248 = vadd.f32 %v7135, %v7247
    %7249 = vmatprep.mubr.bf16.mxu0 %v3921
    %7250 = vmatmul.mubr.bf16.gmra.mxu0 %v3920
    %v7251 = vpop.f32.mrf.mxu0
    %v7252 = vadd.f32 %v7139, %v7251
    %v7253 = vpop.f32.mrf.mxu0
    %v7254 = vadd.f32 %v7141, %v7253
    %v7255 = vpop.f32.mrf.mxu0
    %v7256 = vadd.f32 %v7143, %v7255
    %v7257 = vpop.f32.mrf.mxu0
    %v7258 = vadd.f32 %v7145, %v7257
    %7259 = vmatprep.mubr.bf16.mxu0 %v3929
    %7260 = vmatmul.mubr.bf16.gmra.mxu0 %v3928
    %v7261 = vpop.f32.mrf.mxu0
    %v7262 = vadd.f32 %v7149, %v7261
    %v7263 = vpop.f32.mrf.mxu0
    %v7264 = vadd.f32 %v7151, %v7263
    %v7265 = vpop.f32.mrf.mxu0
    %v7266 = vadd.f32 %v7153, %v7265
    %v7267 = vpop.f32.mrf.mxu0
    %v7268 = vadd.f32 %v7155, %v7267
    %7269 = vmatprep.mubr.bf16.mxu0 %v3937
    %7270 = vmatmul.mubr.bf16.gmra.mxu0 %v3936
    %v7271 = vpop.f32.mrf.mxu0
    %v7272 = vadd.f32 %v7159, %v7271
    %v7273 = vpop.f32.mrf.mxu0
    %v7274 = vadd.f32 %v7161, %v7273
    %v7275 = vpop.f32.mrf.mxu0
    %v7276 = vadd.f32 %v7163, %v7275
    %v7277 = vpop.f32.mrf.mxu0
    %v7278 = vadd.f32 %v7165, %v7277
    %7279 = vmatprep.mubr.bf16.mxu0 %v3945
    %7280 = vmatmul.mubr.bf16.gmra.mxu0 %v3944
    %v7281 = vpop.f32.mrf.mxu0
    %v7282 = vadd.f32 %v7169, %v7281
    %v7283 = vpop.f32.mrf.mxu0
    %v7284 = vadd.f32 %v7171, %v7283
    %v7285 = vpop.f32.mrf.mxu0
    %v7286 = vadd.f32 %v7173, %v7285
    %v7287 = vpop.f32.mrf.mxu0
    %v7288 = vadd.f32 %v7175, %v7287
    %7289 = vdwg.mxu0
    %7290 = vmatprep.subr.bf16.mxu0 %v6353
    %7291 = vmatpush1.bf16.msra.mxu0 %v6352
    %7292 = vmatprep.subr.bf16.mxu0 %v6345
    %7293 = vmatpush1.bf16.msra.mxu0 %v6344
    %7294 = vmatprep.subr.bf16.mxu0 %v6337
    %7295 = vmatpush1.bf16.msra.mxu0 %v6336
    %7296 = vmatprep.subr.bf16.mxu0 %v6329
    %7297 = vmatpush1.bf16.msra.mxu0 %v6328
    %7298 = vmatprep.subr.bf16.mxu0 %v6321
    %7299 = vmatpush1.bf16.msra.mxu0 %v6320
    %7300 = vmatprep.subr.bf16.mxu0 %v6313
    %7301 = vmatpush1.bf16.msra.mxu0 %v6312
    %7302 = vmatprep.subr.bf16.mxu0 %v6305
    %7303 = vmatpush1.bf16.msra.mxu0 %v6304
    %7304 = vmatprep.subr.bf16.mxu0 %v6297
    %7305 = vmatpush1.bf16.msra.mxu0 %v6296
    %7306 = vmatprep.subr.bf16.mxu0 %v6417
    %7307 = vmatpush2.bf16.msra.mxu0 %v6416
    %7308 = vmatprep.subr.bf16.mxu0 %v6409
    %7309 = vmatpush2.bf16.msra.mxu0 %v6408
    %7310 = vmatprep.subr.bf16.mxu0 %v6401
    %7311 = vmatpush2.bf16.msra.mxu0 %v6400
    %7312 = vmatprep.subr.bf16.mxu0 %v6393
    %7313 = vmatpush2.bf16.msra.mxu0 %v6392
    %7314 = vmatprep.subr.bf16.mxu0 %v6385
    %7315 = vmatpush2.bf16.msra.mxu0 %v6384
    %7316 = vmatprep.subr.bf16.mxu0 %v6377
    %7317 = vmatpush2.bf16.msra.mxu0 %v6376
    %7318 = vmatprep.subr.bf16.mxu0 %v6369
    %7319 = vmatpush2.bf16.msra.mxu0 %v6368
    %7320 = vmatprep.subr.bf16.mxu0 %v6361
    %7321 = vmatpush2.bf16.msra.mxu0 %v6360
    %7322 = vmatprep.mubr.bf16.mxu0 %v3891
    %7323 = vmatmul.mubr.bf16.gmra.mxu0 %v3890
    %v7324 = vpop.f32.mrf.mxu0
    %v7325 = vadd.f32 %v7212, %v7324
    %v7326 = vpop.f32.mrf.mxu0
    %v7327 = vadd.f32 %v7214, %v7326
    %v7328 = vpop.f32.mrf.mxu0
    %v7329 = vadd.f32 %v7216, %v7328
    %v7330 = vpop.f32.mrf.mxu0
    %v7331 = vadd.f32 %v7218, %v7330
    %7332 = vmatprep.mubr.bf16.mxu0 %v3899
    %7333 = vmatmul.mubr.bf16.gmra.mxu0 %v3898
    %v7334 = vpop.f32.mrf.mxu0
    %v7335 = vadd.f32 %v7222, %v7334
    %v7336 = vpop.f32.mrf.mxu0
    %v7337 = vadd.f32 %v7224, %v7336
    %v7338 = vpop.f32.mrf.mxu0
    %v7339 = vadd.f32 %v7226, %v7338
    %v7340 = vpop.f32.mrf.mxu0
    %v7341 = vadd.f32 %v7228, %v7340
    %7342 = vmatprep.mubr.bf16.mxu0 %v3907
    %7343 = vmatmul.mubr.bf16.gmra.mxu0 %v3906
    %v7344 = vpop.f32.mrf.mxu0
    %v7345 = vadd.f32 %v7232, %v7344
    %v7346 = vpop.f32.mrf.mxu0
    %v7347 = vadd.f32 %v7234, %v7346
    %v7348 = vpop.f32.mrf.mxu0
    %v7349 = vadd.f32 %v7236, %v7348
    %v7350 = vpop.f32.mrf.mxu0
    %v7351 = vadd.f32 %v7238, %v7350
    %7352 = vmatprep.mubr.bf16.mxu0 %v3915
    %7353 = vmatmul.mubr.bf16.gmra.mxu0 %v3914
    %v7354 = vpop.f32.mrf.mxu0
    %v7355 = vadd.f32 %v7242, %v7354
    %v7356 = vpop.f32.mrf.mxu0
    %v7357 = vadd.f32 %v7244, %v7356
    %v7358 = vpop.f32.mrf.mxu0
    %v7359 = vadd.f32 %v7246, %v7358
    %v7360 = vpop.f32.mrf.mxu0
    %v7361 = vadd.f32 %v7248, %v7360
    %7362 = vmatprep.mubr.bf16.mxu0 %v3923
    %7363 = vmatmul.mubr.bf16.gmra.mxu0 %v3922
    %v7364 = vpop.f32.mrf.mxu0
    %v7365 = vadd.f32 %v7252, %v7364
    %v7366 = vpop.f32.mrf.mxu0
    %v7367 = vadd.f32 %v7254, %v7366
    %v7368 = vpop.f32.mrf.mxu0
    %v7369 = vadd.f32 %v7256, %v7368
    %v7370 = vpop.f32.mrf.mxu0
    %v7371 = vadd.f32 %v7258, %v7370
    %7372 = vmatprep.mubr.bf16.mxu0 %v3931
    %7373 = vmatmul.mubr.bf16.gmra.mxu0 %v3930
    %v7374 = vpop.f32.mrf.mxu0
    %v7375 = vadd.f32 %v7262, %v7374
    %v7376 = vpop.f32.mrf.mxu0
    %v7377 = vadd.f32 %v7264, %v7376
    %v7378 = vpop.f32.mrf.mxu0
    %v7379 = vadd.f32 %v7266, %v7378
    %v7380 = vpop.f32.mrf.mxu0
    %v7381 = vadd.f32 %v7268, %v7380
    %7382 = vmatprep.mubr.bf16.mxu0 %v3939
    %7383 = vmatmul.mubr.bf16.gmra.mxu0 %v3938
    %v7384 = vpop.f32.mrf.mxu0
    %v7385 = vadd.f32 %v7272, %v7384
    %v7386 = vpop.f32.mrf.mxu0
    %v7387 = vadd.f32 %v7274, %v7386
    %v7388 = vpop.f32.mrf.mxu0
    %v7389 = vadd.f32 %v7276, %v7388
    %v7390 = vpop.f32.mrf.mxu0
    %v7391 = vadd.f32 %v7278, %v7390
    %7392 = vmatprep.mubr.bf16.mxu0 %v3947
    %7393 = vmatmul.mubr.bf16.gmra.mxu0 %v3946
    %v7394 = vpop.f32.mrf.mxu0
    %v7395 = vadd.f32 %v7282, %v7394
    %v7396 = vpop.f32.mrf.mxu0
    %v7397 = vadd.f32 %v7284, %v7396
    %v7398 = vpop.f32.mrf.mxu0
    %v7399 = vadd.f32 %v7286, %v7398
    %v7400 = vpop.f32.mrf.mxu0
    %v7401 = vadd.f32 %v7288, %v7400
    %7402 = vdwg.mxu0
    %7403 = vmatprep.subr.bf16.mxu0 %v6481
    %7404 = vmatpush1.bf16.msra.mxu0 %v6480
    %7405 = vmatprep.subr.bf16.mxu0 %v6473
    %7406 = vmatpush1.bf16.msra.mxu0 %v6472
    %7407 = vmatprep.subr.bf16.mxu0 %v6465
    %7408 = vmatpush1.bf16.msra.mxu0 %v6464
    %7409 = vmatprep.subr.bf16.mxu0 %v6457
    %7410 = vmatpush1.bf16.msra.mxu0 %v6456
    %7411 = vmatprep.subr.bf16.mxu0 %v6449
    %7412 = vmatpush1.bf16.msra.mxu0 %v6448
    %7413 = vmatprep.subr.bf16.mxu0 %v6441
    %7414 = vmatpush1.bf16.msra.mxu0 %v6440
    %7415 = vmatprep.subr.bf16.mxu0 %v6433
    %7416 = vmatpush1.bf16.msra.mxu0 %v6432
    %7417 = vmatprep.subr.bf16.mxu0 %v6425
    %7418 = vmatpush1.bf16.msra.mxu0 %v6424
    %7419 = vmatprep.subr.bf16.mxu0 %v6545
    %7420 = vmatpush2.bf16.msra.mxu0 %v6544
    %7421 = vmatprep.subr.bf16.mxu0 %v6537
    %7422 = vmatpush2.bf16.msra.mxu0 %v6536
    %7423 = vmatprep.subr.bf16.mxu0 %v6529
    %7424 = vmatpush2.bf16.msra.mxu0 %v6528
    %7425 = vmatprep.subr.bf16.mxu0 %v6521
    %7426 = vmatpush2.bf16.msra.mxu0 %v6520
    %7427 = vmatprep.subr.bf16.mxu0 %v6513
    %7428 = vmatpush2.bf16.msra.mxu0 %v6512
    %7429 = vmatprep.subr.bf16.mxu0 %v6505
    %7430 = vmatpush2.bf16.msra.mxu0 %v6504
    %7431 = vmatprep.subr.bf16.mxu0 %v6497
    %7432 = vmatpush2.bf16.msra.mxu0 %v6496
    %7433 = vmatprep.subr.bf16.mxu0 %v6489
    %7434 = vmatpush2.bf16.msra.mxu0 %v6488
    %7435 = vmatprep.mubr.bf16.mxu0 %v3893
    %7436 = vmatmul.mubr.bf16.gmra.mxu0 %v3892
    %v7437 = vpop.f32.mrf.mxu0
    %v7438 = vadd.f32 %v7325, %v7437
    %v7439 = vpop.f32.mrf.mxu0
    %v7440 = vadd.f32 %v7327, %v7439
    %v7441 = vpop.f32.mrf.mxu0
    %v7442 = vadd.f32 %v7329, %v7441
    %v7443 = vpop.f32.mrf.mxu0
    %v7444 = vadd.f32 %v7331, %v7443
    %7445 = vmatprep.mubr.bf16.mxu0 %v3901
    %7446 = vmatmul.mubr.bf16.gmra.mxu0 %v3900
    %v7447 = vpop.f32.mrf.mxu0
    %v7448 = vadd.f32 %v7335, %v7447
    %v7449 = vpop.f32.mrf.mxu0
    %v7450 = vadd.f32 %v7337, %v7449
    %v7451 = vpop.f32.mrf.mxu0
    %v7452 = vadd.f32 %v7339, %v7451
    %v7453 = vpop.f32.mrf.mxu0
    %v7454 = vadd.f32 %v7341, %v7453
    %7455 = vmatprep.mubr.bf16.mxu0 %v3909
    %7456 = vmatmul.mubr.bf16.gmra.mxu0 %v3908
    %v7457 = vpop.f32.mrf.mxu0
    %v7458 = vadd.f32 %v7345, %v7457
    %v7459 = vpop.f32.mrf.mxu0
    %v7460 = vadd.f32 %v7347, %v7459
    %v7461 = vpop.f32.mrf.mxu0
    %v7462 = vadd.f32 %v7349, %v7461
    %v7463 = vpop.f32.mrf.mxu0
    %v7464 = vadd.f32 %v7351, %v7463
    %7465 = vmatprep.mubr.bf16.mxu0 %v3917
    %7466 = vmatmul.mubr.bf16.gmra.mxu0 %v3916
    %v7467 = vpop.f32.mrf.mxu0
    %v7468 = vadd.f32 %v7355, %v7467
    %v7469 = vpop.f32.mrf.mxu0
    %v7470 = vadd.f32 %v7357, %v7469
    %v7471 = vpop.f32.mrf.mxu0
    %v7472 = vadd.f32 %v7359, %v7471
    %v7473 = vpop.f32.mrf.mxu0
    %v7474 = vadd.f32 %v7361, %v7473
    %7475 = vmatprep.mubr.bf16.mxu0 %v3925
    %7476 = vmatmul.mubr.bf16.gmra.mxu0 %v3924
    %v7477 = vpop.f32.mrf.mxu0
    %v7478 = vadd.f32 %v7365, %v7477
    %v7479 = vpop.f32.mrf.mxu0
    %v7480 = vadd.f32 %v7367, %v7479
    %v7481 = vpop.f32.mrf.mxu0
    %v7482 = vadd.f32 %v7369, %v7481
    %v7483 = vpop.f32.mrf.mxu0
    %v7484 = vadd.f32 %v7371, %v7483
    %7485 = vmatprep.mubr.bf16.mxu0 %v3933
    %7486 = vmatmul.mubr.bf16.gmra.mxu0 %v3932
    %v7487 = vpop.f32.mrf.mxu0
    %v7488 = vadd.f32 %v7375, %v7487
    %v7489 = vpop.f32.mrf.mxu0
    %v7490 = vadd.f32 %v7377, %v7489
    %v7491 = vpop.f32.mrf.mxu0
    %v7492 = vadd.f32 %v7379, %v7491
    %v7493 = vpop.f32.mrf.mxu0
    %v7494 = vadd.f32 %v7381, %v7493
    %7495 = vmatprep.mubr.bf16.mxu0 %v3941
    %7496 = vmatmul.mubr.bf16.gmra.mxu0 %v3940
    %v7497 = vpop.f32.mrf.mxu0
    %v7498 = vadd.f32 %v7385, %v7497
    %v7499 = vpop.f32.mrf.mxu0
    %v7500 = vadd.f32 %v7387, %v7499
    %v7501 = vpop.f32.mrf.mxu0
    %v7502 = vadd.f32 %v7389, %v7501
    %v7503 = vpop.f32.mrf.mxu0
    %v7504 = vadd.f32 %v7391, %v7503
    %7505 = vmatprep.mubr.bf16.mxu0 %v3949
    %7506 = vmatmul.mubr.bf16.gmra.mxu0 %v3948
    %v7507 = vpop.f32.mrf.mxu0
    %v7508 = vadd.f32 %v7395, %v7507
    %v7509 = vpop.f32.mrf.mxu0
    %v7510 = vadd.f32 %v7397, %v7509
    %v7511 = vpop.f32.mrf.mxu0
    %v7512 = vadd.f32 %v7399, %v7511
    %v7513 = vpop.f32.mrf.mxu0
    %v7514 = vadd.f32 %v7401, %v7513
    %7515 = vdwg.mxu0
    %7516 = vmatprep.subr.bf16.mxu0 %v6099
    %7517 = vmatpush1.bf16.msra.mxu0 %v6098
    %7518 = vmatprep.subr.bf16.mxu0 %v6091
    %7519 = vmatpush1.bf16.msra.mxu0 %v6090
    %7520 = vmatprep.subr.bf16.mxu0 %v6083
    %7521 = vmatpush1.bf16.msra.mxu0 %v6082
    %7522 = vmatprep.subr.bf16.mxu0 %v6075
    %7523 = vmatpush1.bf16.msra.mxu0 %v6074
    %7524 = vmatprep.subr.bf16.mxu0 %v6067
    %7525 = vmatpush1.bf16.msra.mxu0 %v6066
    %7526 = vmatprep.subr.bf16.mxu0 %v6059
    %7527 = vmatpush1.bf16.msra.mxu0 %v6058
    %7528 = vmatprep.subr.bf16.mxu0 %v6051
    %7529 = vmatpush1.bf16.msra.mxu0 %v6050
    %7530 = vmatprep.subr.bf16.mxu0 %v6043
    %7531 = vmatpush1.bf16.msra.mxu0 %v6042
    %7532 = vmatprep.subr.bf16.mxu0 %v6163
    %7533 = vmatpush2.bf16.msra.mxu0 %v6162
    %7534 = vmatprep.subr.bf16.mxu0 %v6155
    %7535 = vmatpush2.bf16.msra.mxu0 %v6154
    %7536 = vmatprep.subr.bf16.mxu0 %v6147
    %7537 = vmatpush2.bf16.msra.mxu0 %v6146
    %7538 = vmatprep.subr.bf16.mxu0 %v6139
    %7539 = vmatpush2.bf16.msra.mxu0 %v6138
    %7540 = vmatprep.subr.bf16.mxu0 %v6131
    %7541 = vmatpush2.bf16.msra.mxu0 %v6130
    %7542 = vmatprep.subr.bf16.mxu0 %v6123
    %7543 = vmatpush2.bf16.msra.mxu0 %v6122
    %7544 = vmatprep.subr.bf16.mxu0 %v6115
    %7545 = vmatpush2.bf16.msra.mxu0 %v6114
    %7546 = vmatprep.subr.bf16.mxu0 %v6107
    %7547 = vmatpush2.bf16.msra.mxu0 %v6106
    %7548 = vmatprep.mubr.bf16.mxu0 %v3887
    %7549 = vmatmul.mubr.bf16.gmra.mxu0 %v3886
    %v7550 = vpop.f32.mrf.mxu0
    %v7551 = vadd.f32 %v4475, %v7550
    %v7552 = vpop.f32.mrf.mxu0
    %v7553 = vadd.f32 %v4479, %v7552
    %v7554 = vpop.f32.mrf.mxu0
    %v7555 = vadd.f32 %v4475, %v7554
    %v7556 = vpop.f32.mrf.mxu0
    %v7557 = vadd.f32 %v4479, %v7556
    %7558 = vmatprep.mubr.bf16.mxu0 %v3895
    %7559 = vmatmul.mubr.bf16.gmra.mxu0 %v3894
    %v7560 = vpop.f32.mrf.mxu0
    %v7561 = vadd.f32 %v4475, %v7560
    %v7562 = vpop.f32.mrf.mxu0
    %v7563 = vadd.f32 %v4479, %v7562
    %v7564 = vpop.f32.mrf.mxu0
    %v7565 = vadd.f32 %v4475, %v7564
    %v7566 = vpop.f32.mrf.mxu0
    %v7567 = vadd.f32 %v4479, %v7566
    %7568 = vmatprep.mubr.bf16.mxu0 %v3903
    %7569 = vmatmul.mubr.bf16.gmra.mxu0 %v3902
    %v7570 = vpop.f32.mrf.mxu0
    %v7571 = vadd.f32 %v4475, %v7570
    %v7572 = vpop.f32.mrf.mxu0
    %v7573 = vadd.f32 %v4479, %v7572
    %v7574 = vpop.f32.mrf.mxu0
    %v7575 = vadd.f32 %v4475, %v7574
    %v7576 = vpop.f32.mrf.mxu0
    %v7577 = vadd.f32 %v4479, %v7576
    %7578 = vmatprep.mubr.bf16.mxu0 %v3911
    %7579 = vmatmul.mubr.bf16.gmra.mxu0 %v3910
    %v7580 = vpop.f32.mrf.mxu0
    %v7581 = vadd.f32 %v4475, %v7580
    %v7582 = vpop.f32.mrf.mxu0
    %v7583 = vadd.f32 %v4479, %v7582
    %v7584 = vpop.f32.mrf.mxu0
    %v7585 = vadd.f32 %v4475, %v7584
    %v7586 = vpop.f32.mrf.mxu0
    %v7587 = vadd.f32 %v4479, %v7586
    %7588 = vmatprep.mubr.bf16.mxu0 %v3919
    %7589 = vmatmul.mubr.bf16.gmra.mxu0 %v3918
    %v7590 = vpop.f32.mrf.mxu0
    %v7591 = vadd.f32 %v4475, %v7590
    %v7592 = vpop.f32.mrf.mxu0
    %v7593 = vadd.f32 %v4479, %v7592
    %v7594 = vpop.f32.mrf.mxu0
    %v7595 = vadd.f32 %v4475, %v7594
    %v7596 = vpop.f32.mrf.mxu0
    %v7597 = vadd.f32 %v4479, %v7596
    %7598 = vmatprep.mubr.bf16.mxu0 %v3927
    %7599 = vmatmul.mubr.bf16.gmra.mxu0 %v3926
    %v7600 = vpop.f32.mrf.mxu0
    %v7601 = vadd.f32 %v4475, %v7600
    %v7602 = vpop.f32.mrf.mxu0
    %v7603 = vadd.f32 %v4479, %v7602
    %v7604 = vpop.f32.mrf.mxu0
    %v7605 = vadd.f32 %v4475, %v7604
    %v7606 = vpop.f32.mrf.mxu0
    %v7607 = vadd.f32 %v4479, %v7606
    %7608 = vmatprep.mubr.bf16.mxu0 %v3935
    %7609 = vmatmul.mubr.bf16.gmra.mxu0 %v3934
    %v7610 = vpop.f32.mrf.mxu0
    %v7611 = vadd.f32 %v4475, %v7610
    %v7612 = vpop.f32.mrf.mxu0
    %v7613 = vadd.f32 %v4479, %v7612
    %v7614 = vpop.f32.mrf.mxu0
    %v7615 = vadd.f32 %v4475, %v7614
    %v7616 = vpop.f32.mrf.mxu0
    %v7617 = vadd.f32 %v4479, %v7616
    %7618 = vmatprep.mubr.bf16.mxu0 %v3943
    %7619 = vmatmul.mubr.bf16.gmra.mxu0 %v3942
    %v7620 = vpop.f32.mrf.mxu0
    %v7621 = vadd.f32 %v4475, %v7620
    %v7622 = vpop.f32.mrf.mxu0
    %v7623 = vadd.f32 %v4479, %v7622
    %v7624 = vpop.f32.mrf.mxu0
    %v7625 = vadd.f32 %v4475, %v7624
    %v7626 = vpop.f32.mrf.mxu0
    %v7627 = vadd.f32 %v4479, %v7626
    %7628 = vdwg.mxu0
    %7629 = vmatprep.subr.bf16.mxu0 %v6227
    %7630 = vmatpush1.bf16.msra.mxu0 %v6226
    %7631 = vmatprep.subr.bf16.mxu0 %v6219
    %7632 = vmatpush1.bf16.msra.mxu0 %v6218
    %7633 = vmatprep.subr.bf16.mxu0 %v6211
    %7634 = vmatpush1.bf16.msra.mxu0 %v6210
    %7635 = vmatprep.subr.bf16.mxu0 %v6203
    %7636 = vmatpush1.bf16.msra.mxu0 %v6202
    %7637 = vmatprep.subr.bf16.mxu0 %v6195
    %7638 = vmatpush1.bf16.msra.mxu0 %v6194
    %7639 = vmatprep.subr.bf16.mxu0 %v6187
    %7640 = vmatpush1.bf16.msra.mxu0 %v6186
    %7641 = vmatprep.subr.bf16.mxu0 %v6179
    %7642 = vmatpush1.bf16.msra.mxu0 %v6178
    %7643 = vmatprep.subr.bf16.mxu0 %v6171
    %7644 = vmatpush1.bf16.msra.mxu0 %v6170
    %7645 = vmatprep.subr.bf16.mxu0 %v6291
    %7646 = vmatpush2.bf16.msra.mxu0 %v6290
    %7647 = vmatprep.subr.bf16.mxu0 %v6283
    %7648 = vmatpush2.bf16.msra.mxu0 %v6282
    %7649 = vmatprep.subr.bf16.mxu0 %v6275
    %7650 = vmatpush2.bf16.msra.mxu0 %v6274
    %7651 = vmatprep.subr.bf16.mxu0 %v6267
    %7652 = vmatpush2.bf16.msra.mxu0 %v6266
    %7653 = vmatprep.subr.bf16.mxu0 %v6259
    %7654 = vmatpush2.bf16.msra.mxu0 %v6258
    %7655 = vmatprep.subr.bf16.mxu0 %v6251
    %7656 = vmatpush2.bf16.msra.mxu0 %v6250
    %7657 = vmatprep.subr.bf16.mxu0 %v6243
    %7658 = vmatpush2.bf16.msra.mxu0 %v6242
    %7659 = vmatprep.subr.bf16.mxu0 %v6235
    %7660 = vmatpush2.bf16.msra.mxu0 %v6234
    %7661 = vmatprep.mubr.bf16.mxu0 %v3889
    %7662 = vmatmul.mubr.bf16.gmra.mxu0 %v3888
    %v7663 = vpop.f32.mrf.mxu0
    %v7664 = vadd.f32 %v7551, %v7663
    %v7665 = vpop.f32.mrf.mxu0
    %v7666 = vadd.f32 %v7553, %v7665
    %v7667 = vpop.f32.mrf.mxu0
    %v7668 = vadd.f32 %v7555, %v7667
    %v7669 = vpop.f32.mrf.mxu0
    %v7670 = vadd.f32 %v7557, %v7669
    %7671 = vmatprep.mubr.bf16.mxu0 %v3897
    %7672 = vmatmul.mubr.bf16.gmra.mxu0 %v3896
    %v7673 = vpop.f32.mrf.mxu0
    %v7674 = vadd.f32 %v7561, %v7673
    %v7675 = vpop.f32.mrf.mxu0
    %v7676 = vadd.f32 %v7563, %v7675
    %v7677 = vpop.f32.mrf.mxu0
    %v7678 = vadd.f32 %v7565, %v7677
    %v7679 = vpop.f32.mrf.mxu0
    %v7680 = vadd.f32 %v7567, %v7679
    %7681 = vmatprep.mubr.bf16.mxu0 %v3905
    %7682 = vmatmul.mubr.bf16.gmra.mxu0 %v3904
    %v7683 = vpop.f32.mrf.mxu0
    %v7684 = vadd.f32 %v7571, %v7683
    %v7685 = vpop.f32.mrf.mxu0
    %v7686 = vadd.f32 %v7573, %v7685
    %v7687 = vpop.f32.mrf.mxu0
    %v7688 = vadd.f32 %v7575, %v7687
    %v7689 = vpop.f32.mrf.mxu0
    %v7690 = vadd.f32 %v7577, %v7689
    %7691 = vmatprep.mubr.bf16.mxu0 %v3913
    %7692 = vmatmul.mubr.bf16.gmra.mxu0 %v3912
    %v7693 = vpop.f32.mrf.mxu0
    %v7694 = vadd.f32 %v7581, %v7693
    %v7695 = vpop.f32.mrf.mxu0
    %v7696 = vadd.f32 %v7583, %v7695
    %v7697 = vpop.f32.mrf.mxu0
    %v7698 = vadd.f32 %v7585, %v7697
    %v7699 = vpop.f32.mrf.mxu0
    %v7700 = vadd.f32 %v7587, %v7699
    %7701 = vmatprep.mubr.bf16.mxu0 %v3921
    %7702 = vmatmul.mubr.bf16.gmra.mxu0 %v3920
    %v7703 = vpop.f32.mrf.mxu0
    %v7704 = vadd.f32 %v7591, %v7703
    %v7705 = vpop.f32.mrf.mxu0
    %v7706 = vadd.f32 %v7593, %v7705
    %v7707 = vpop.f32.mrf.mxu0
    %v7708 = vadd.f32 %v7595, %v7707
    %v7709 = vpop.f32.mrf.mxu0
    %v7710 = vadd.f32 %v7597, %v7709
    %7711 = vmatprep.mubr.bf16.mxu0 %v3929
    %7712 = vmatmul.mubr.bf16.gmra.mxu0 %v3928
    %v7713 = vpop.f32.mrf.mxu0
    %v7714 = vadd.f32 %v7601, %v7713
    %v7715 = vpop.f32.mrf.mxu0
    %v7716 = vadd.f32 %v7603, %v7715
    %v7717 = vpop.f32.mrf.mxu0
    %v7718 = vadd.f32 %v7605, %v7717
    %v7719 = vpop.f32.mrf.mxu0
    %v7720 = vadd.f32 %v7607, %v7719
    %7721 = vmatprep.mubr.bf16.mxu0 %v3937
    %7722 = vmatmul.mubr.bf16.gmra.mxu0 %v3936
    %v7723 = vpop.f32.mrf.mxu0
    %v7724 = vadd.f32 %v7611, %v7723
    %v7725 = vpop.f32.mrf.mxu0
    %v7726 = vadd.f32 %v7613, %v7725
    %v7727 = vpop.f32.mrf.mxu0
    %v7728 = vadd.f32 %v7615, %v7727
    %v7729 = vpop.f32.mrf.mxu0
    %v7730 = vadd.f32 %v7617, %v7729
    %7731 = vmatprep.mubr.bf16.mxu0 %v3945
    %7732 = vmatmul.mubr.bf16.gmra.mxu0 %v3944
    %v7733 = vpop.f32.mrf.mxu0
    %v7734 = vadd.f32 %v7621, %v7733
    %v7735 = vpop.f32.mrf.mxu0
    %v7736 = vadd.f32 %v7623, %v7735
    %v7737 = vpop.f32.mrf.mxu0
    %v7738 = vadd.f32 %v7625, %v7737
    %v7739 = vpop.f32.mrf.mxu0
    %v7740 = vadd.f32 %v7627, %v7739
    %7741 = vdwg.mxu0
    %7742 = vmatprep.subr.bf16.mxu0 %v6355
    %7743 = vmatpush1.bf16.msra.mxu0 %v6354
    %7744 = vmatprep.subr.bf16.mxu0 %v6347
    %7745 = vmatpush1.bf16.msra.mxu0 %v6346
    %7746 = vmatprep.subr.bf16.mxu0 %v6339
    %7747 = vmatpush1.bf16.msra.mxu0 %v6338
    %7748 = vmatprep.subr.bf16.mxu0 %v6331
    %7749 = vmatpush1.bf16.msra.mxu0 %v6330
    %7750 = vmatprep.subr.bf16.mxu0 %v6323
    %7751 = vmatpush1.bf16.msra.mxu0 %v6322
    %7752 = vmatprep.subr.bf16.mxu0 %v6315
    %7753 = vmatpush1.bf16.msra.mxu0 %v6314
    %7754 = vmatprep.subr.bf16.mxu0 %v6307
    %7755 = vmatpush1.bf16.msra.mxu0 %v6306
    %7756 = vmatprep.subr.bf16.mxu0 %v6299
    %7757 = vmatpush1.bf16.msra.mxu0 %v6298
    %7758 = vmatprep.subr.bf16.mxu0 %v6419
    %7759 = vmatpush2.bf16.msra.mxu0 %v6418
    %7760 = vmatprep.subr.bf16.mxu0 %v6411
    %7761 = vmatpush2.bf16.msra.mxu0 %v6410
    %7762 = vmatprep.subr.bf16.mxu0 %v6403
    %7763 = vmatpush2.bf16.msra.mxu0 %v6402
    %7764 = vmatprep.subr.bf16.mxu0 %v6395
    %7765 = vmatpush2.bf16.msra.mxu0 %v6394
    %7766 = vmatprep.subr.bf16.mxu0 %v6387
    %7767 = vmatpush2.bf16.msra.mxu0 %v6386
    %7768 = vmatprep.subr.bf16.mxu0 %v6379
    %7769 = vmatpush2.bf16.msra.mxu0 %v6378
    %7770 = vmatprep.subr.bf16.mxu0 %v6371
    %7771 = vmatpush2.bf16.msra.mxu0 %v6370
    %7772 = vmatprep.subr.bf16.mxu0 %v6363
    %7773 = vmatpush2.bf16.msra.mxu0 %v6362
    %7774 = vmatprep.mubr.bf16.mxu0 %v3891
    %7775 = vmatmul.mubr.bf16.gmra.mxu0 %v3890
    %v7776 = vpop.f32.mrf.mxu0
    %v7777 = vadd.f32 %v7664, %v7776
    %v7778 = vpop.f32.mrf.mxu0
    %v7779 = vadd.f32 %v7666, %v7778
    %v7780 = vpop.f32.mrf.mxu0
    %v7781 = vadd.f32 %v7668, %v7780
    %v7782 = vpop.f32.mrf.mxu0
    %v7783 = vadd.f32 %v7670, %v7782
    %7784 = vmatprep.mubr.bf16.mxu0 %v3899
    %7785 = vmatmul.mubr.bf16.gmra.mxu0 %v3898
    %v7786 = vpop.f32.mrf.mxu0
    %v7787 = vadd.f32 %v7674, %v7786
    %v7788 = vpop.f32.mrf.mxu0
    %v7789 = vadd.f32 %v7676, %v7788
    %v7790 = vpop.f32.mrf.mxu0
    %v7791 = vadd.f32 %v7678, %v7790
    %v7792 = vpop.f32.mrf.mxu0
    %v7793 = vadd.f32 %v7680, %v7792
    %7794 = vmatprep.mubr.bf16.mxu0 %v3907
    %7795 = vmatmul.mubr.bf16.gmra.mxu0 %v3906
    %v7796 = vpop.f32.mrf.mxu0
    %v7797 = vadd.f32 %v7684, %v7796
    %v7798 = vpop.f32.mrf.mxu0
    %v7799 = vadd.f32 %v7686, %v7798
    %v7800 = vpop.f32.mrf.mxu0
    %v7801 = vadd.f32 %v7688, %v7800
    %v7802 = vpop.f32.mrf.mxu0
    %v7803 = vadd.f32 %v7690, %v7802
    %7804 = vmatprep.mubr.bf16.mxu0 %v3915
    %7805 = vmatmul.mubr.bf16.gmra.mxu0 %v3914
    %v7806 = vpop.f32.mrf.mxu0
    %v7807 = vadd.f32 %v7694, %v7806
    %v7808 = vpop.f32.mrf.mxu0
    %v7809 = vadd.f32 %v7696, %v7808
    %v7810 = vpop.f32.mrf.mxu0
    %v7811 = vadd.f32 %v7698, %v7810
    %v7812 = vpop.f32.mrf.mxu0
    %v7813 = vadd.f32 %v7700, %v7812
    %7814 = vmatprep.mubr.bf16.mxu0 %v3923
    %7815 = vmatmul.mubr.bf16.gmra.mxu0 %v3922
    %v7816 = vpop.f32.mrf.mxu0
    %v7817 = vadd.f32 %v7704, %v7816
    %v7818 = vpop.f32.mrf.mxu0
    %v7819 = vadd.f32 %v7706, %v7818
    %v7820 = vpop.f32.mrf.mxu0
    %v7821 = vadd.f32 %v7708, %v7820
    %v7822 = vpop.f32.mrf.mxu0
    %v7823 = vadd.f32 %v7710, %v7822
    %7824 = vmatprep.mubr.bf16.mxu0 %v3931
    %7825 = vmatmul.mubr.bf16.gmra.mxu0 %v3930
    %v7826 = vpop.f32.mrf.mxu0
    %v7827 = vadd.f32 %v7714, %v7826
    %v7828 = vpop.f32.mrf.mxu0
    %v7829 = vadd.f32 %v7716, %v7828
    %v7830 = vpop.f32.mrf.mxu0
    %v7831 = vadd.f32 %v7718, %v7830
    %v7832 = vpop.f32.mrf.mxu0
    %v7833 = vadd.f32 %v7720, %v7832
    %7834 = vmatprep.mubr.bf16.mxu0 %v3939
    %7835 = vmatmul.mubr.bf16.gmra.mxu0 %v3938
    %v7836 = vpop.f32.mrf.mxu0
    %v7837 = vadd.f32 %v7724, %v7836
    %v7838 = vpop.f32.mrf.mxu0
    %v7839 = vadd.f32 %v7726, %v7838
    %v7840 = vpop.f32.mrf.mxu0
    %v7841 = vadd.f32 %v7728, %v7840
    %v7842 = vpop.f32.mrf.mxu0
    %v7843 = vadd.f32 %v7730, %v7842
    %7844 = vmatprep.mubr.bf16.mxu0 %v3947
    %7845 = vmatmul.mubr.bf16.gmra.mxu0 %v3946
    %v7846 = vpop.f32.mrf.mxu0
    %v7847 = vadd.f32 %v7734, %v7846
    %v7848 = vpop.f32.mrf.mxu0
    %v7849 = vadd.f32 %v7736, %v7848
    %v7850 = vpop.f32.mrf.mxu0
    %v7851 = vadd.f32 %v7738, %v7850
    %v7852 = vpop.f32.mrf.mxu0
    %v7853 = vadd.f32 %v7740, %v7852
    %7854 = vdwg.mxu0
    %7855 = vmatprep.subr.bf16.mxu0 %v6483
    %7856 = vmatpush1.bf16.msra.mxu0 %v6482
    %7857 = vmatprep.subr.bf16.mxu0 %v6475
    %7858 = vmatpush1.bf16.msra.mxu0 %v6474
    %7859 = vmatprep.subr.bf16.mxu0 %v6467
    %7860 = vmatpush1.bf16.msra.mxu0 %v6466
    %7861 = vmatprep.subr.bf16.mxu0 %v6459
    %7862 = vmatpush1.bf16.msra.mxu0 %v6458
    %7863 = vmatprep.subr.bf16.mxu0 %v6451
    %7864 = vmatpush1.bf16.msra.mxu0 %v6450
    %7865 = vmatprep.subr.bf16.mxu0 %v6443
    %7866 = vmatpush1.bf16.msra.mxu0 %v6442
    %7867 = vmatprep.subr.bf16.mxu0 %v6435
    %7868 = vmatpush1.bf16.msra.mxu0 %v6434
    %7869 = vmatprep.subr.bf16.mxu0 %v6427
    %7870 = vmatpush1.bf16.msra.mxu0 %v6426
    %7871 = vmatprep.subr.bf16.mxu0 %v6547
    %7872 = vmatpush2.bf16.msra.mxu0 %v6546
    %7873 = vmatprep.subr.bf16.mxu0 %v6539
    %7874 = vmatpush2.bf16.msra.mxu0 %v6538
    %7875 = vmatprep.subr.bf16.mxu0 %v6531
    %7876 = vmatpush2.bf16.msra.mxu0 %v6530
    %7877 = vmatprep.subr.bf16.mxu0 %v6523
    %7878 = vmatpush2.bf16.msra.mxu0 %v6522
    %7879 = vmatprep.subr.bf16.mxu0 %v6515
    %7880 = vmatpush2.bf16.msra.mxu0 %v6514
    %7881 = vmatprep.subr.bf16.mxu0 %v6507
    %7882 = vmatpush2.bf16.msra.mxu0 %v6506
    %7883 = vmatprep.subr.bf16.mxu0 %v6499
    %7884 = vmatpush2.bf16.msra.mxu0 %v6498
    %7885 = vmatprep.subr.bf16.mxu0 %v6491
    %7886 = vmatpush2.bf16.msra.mxu0 %v6490
    %7887 = vmatprep.mubr.bf16.mxu0 %v3893
    %7888 = vmatmul.mubr.bf16.gmra.mxu0 %v3892
    %v7889 = vpop.f32.mrf.mxu0
    %v7890 = vadd.f32 %v7777, %v7889
    %v7891 = vpop.f32.mrf.mxu0
    %v7892 = vadd.f32 %v7779, %v7891
    %v7893 = vpop.f32.mrf.mxu0
    %v7894 = vadd.f32 %v7781, %v7893
    %v7895 = vpop.f32.mrf.mxu0
    %v7896 = vadd.f32 %v7783, %v7895
    %7897 = vmatprep.mubr.bf16.mxu0 %v3901
    %7898 = vmatmul.mubr.bf16.gmra.mxu0 %v3900
    %v7899 = vpop.f32.mrf.mxu0
    %v7900 = vadd.f32 %v7787, %v7899
    %v7901 = vpop.f32.mrf.mxu0
    %v7902 = vadd.f32 %v7789, %v7901
    %v7903 = vpop.f32.mrf.mxu0
    %v7904 = vadd.f32 %v7791, %v7903
    %v7905 = vpop.f32.mrf.mxu0
    %v7906 = vadd.f32 %v7793, %v7905
    %7907 = vmatprep.mubr.bf16.mxu0 %v3909
    %7908 = vmatmul.mubr.bf16.gmra.mxu0 %v3908
    %v7909 = vpop.f32.mrf.mxu0
    %v7910 = vadd.f32 %v7797, %v7909
    %v7911 = vpop.f32.mrf.mxu0
    %v7912 = vadd.f32 %v7799, %v7911
    %v7913 = vpop.f32.mrf.mxu0
    %v7914 = vadd.f32 %v7801, %v7913
    %v7915 = vpop.f32.mrf.mxu0
    %v7916 = vadd.f32 %v7803, %v7915
    %7917 = vmatprep.mubr.bf16.mxu0 %v3917
    %7918 = vmatmul.mubr.bf16.gmra.mxu0 %v3916
    %v7919 = vpop.f32.mrf.mxu0
    %v7920 = vadd.f32 %v7807, %v7919
    %v7921 = vpop.f32.mrf.mxu0
    %v7922 = vadd.f32 %v7809, %v7921
    %v7923 = vpop.f32.mrf.mxu0
    %v7924 = vadd.f32 %v7811, %v7923
    %v7925 = vpop.f32.mrf.mxu0
    %v7926 = vadd.f32 %v7813, %v7925
    %7927 = vmatprep.mubr.bf16.mxu0 %v3925
    %7928 = vmatmul.mubr.bf16.gmra.mxu0 %v3924
    %v7929 = vpop.f32.mrf.mxu0
    %v7930 = vadd.f32 %v7817, %v7929
    %v7931 = vpop.f32.mrf.mxu0
    %v7932 = vadd.f32 %v7819, %v7931
    %v7933 = vpop.f32.mrf.mxu0
    %v7934 = vadd.f32 %v7821, %v7933
    %v7935 = vpop.f32.mrf.mxu0
    %v7936 = vadd.f32 %v7823, %v7935
    %7937 = vmatprep.mubr.bf16.mxu0 %v3933
    %7938 = vmatmul.mubr.bf16.gmra.mxu0 %v3932
    %v7939 = vpop.f32.mrf.mxu0
    %v7940 = vadd.f32 %v7827, %v7939
    %v7941 = vpop.f32.mrf.mxu0
    %v7942 = vadd.f32 %v7829, %v7941
    %v7943 = vpop.f32.mrf.mxu0
    %v7944 = vadd.f32 %v7831, %v7943
    %v7945 = vpop.f32.mrf.mxu0
    %v7946 = vadd.f32 %v7833, %v7945
    %7947 = vmatprep.mubr.bf16.mxu0 %v3941
    %7948 = vmatmul.mubr.bf16.gmra.mxu0 %v3940
    %v7949 = vpop.f32.mrf.mxu0
    %v7950 = vadd.f32 %v7837, %v7949
    %v7951 = vpop.f32.mrf.mxu0
    %v7952 = vadd.f32 %v7839, %v7951
    %v7953 = vpop.f32.mrf.mxu0
    %v7954 = vadd.f32 %v7841, %v7953
    %v7955 = vpop.f32.mrf.mxu0
    %v7956 = vadd.f32 %v7843, %v7955
    %7957 = vmatprep.mubr.bf16.mxu0 %v3949
    %7958 = vmatmul.mubr.bf16.gmra.mxu0 %v3948
    %v7959 = vpop.f32.mrf.mxu0
    %v7960 = vadd.f32 %v7847, %v7959
    %v7961 = vpop.f32.mrf.mxu0
    %v7962 = vadd.f32 %v7849, %v7961
    %v7963 = vpop.f32.mrf.mxu0
    %v7964 = vadd.f32 %v7851, %v7963
    %v7965 = vpop.f32.mrf.mxu0
    %v7966 = vadd.f32 %v7853, %v7965
    %7967 = vdwg.mxu0
    %7968 = vmatprep.subr.bf16.mxu0 %v6101
    %7969 = vmatpush1.bf16.msra.mxu0 %v6100
    %7970 = vmatprep.subr.bf16.mxu0 %v6093
    %7971 = vmatpush1.bf16.msra.mxu0 %v6092
    %7972 = vmatprep.subr.bf16.mxu0 %v6085
    %7973 = vmatpush1.bf16.msra.mxu0 %v6084
    %7974 = vmatprep.subr.bf16.mxu0 %v6077
    %7975 = vmatpush1.bf16.msra.mxu0 %v6076
    %7976 = vmatprep.subr.bf16.mxu0 %v6069
    %7977 = vmatpush1.bf16.msra.mxu0 %v6068
    %7978 = vmatprep.subr.bf16.mxu0 %v6061
    %7979 = vmatpush1.bf16.msra.mxu0 %v6060
    %7980 = vmatprep.subr.bf16.mxu0 %v6053
    %7981 = vmatpush1.bf16.msra.mxu0 %v6052
    %7982 = vmatprep.subr.bf16.mxu0 %v6045
    %7983 = vmatpush1.bf16.msra.mxu0 %v6044
    %7984 = vmatprep.subr.bf16.mxu0 %v6165
    %7985 = vmatpush2.bf16.msra.mxu0 %v6164
    %7986 = vmatprep.subr.bf16.mxu0 %v6157
    %7987 = vmatpush2.bf16.msra.mxu0 %v6156
    %7988 = vmatprep.subr.bf16.mxu0 %v6149
    %7989 = vmatpush2.bf16.msra.mxu0 %v6148
    %7990 = vmatprep.subr.bf16.mxu0 %v6141
    %7991 = vmatpush2.bf16.msra.mxu0 %v6140
    %7992 = vmatprep.subr.bf16.mxu0 %v6133
    %7993 = vmatpush2.bf16.msra.mxu0 %v6132
    %7994 = vmatprep.subr.bf16.mxu0 %v6125
    %7995 = vmatpush2.bf16.msra.mxu0 %v6124
    %7996 = vmatprep.subr.bf16.mxu0 %v6117
    %7997 = vmatpush2.bf16.msra.mxu0 %v6116
    %7998 = vmatprep.subr.bf16.mxu0 %v6109
    %7999 = vmatpush2.bf16.msra.mxu0 %v6108
    %8000 = vmatprep.mubr.bf16.mxu0 %v3887
    %8001 = vmatmul.mubr.bf16.gmra.mxu0 %v3886
    %v8002 = vpop.f32.mrf.mxu0
    %v8003 = vadd.f32 %v4483, %v8002
    %v8004 = vpop.f32.mrf.mxu0
    %v8005 = vadd.f32 %v4487, %v8004
    %v8006 = vpop.f32.mrf.mxu0
    %v8007 = vadd.f32 %v4483, %v8006
    %v8008 = vpop.f32.mrf.mxu0
    %v8009 = vadd.f32 %v4487, %v8008
    %8010 = vmatprep.mubr.bf16.mxu0 %v3895
    %8011 = vmatmul.mubr.bf16.gmra.mxu0 %v3894
    %v8012 = vpop.f32.mrf.mxu0
    %v8013 = vadd.f32 %v4483, %v8012
    %v8014 = vpop.f32.mrf.mxu0
    %v8015 = vadd.f32 %v4487, %v8014
    %v8016 = vpop.f32.mrf.mxu0
    %v8017 = vadd.f32 %v4483, %v8016
    %v8018 = vpop.f32.mrf.mxu0
    %v8019 = vadd.f32 %v4487, %v8018
    %8020 = vmatprep.mubr.bf16.mxu0 %v3903
    %8021 = vmatmul.mubr.bf16.gmra.mxu0 %v3902
    %v8022 = vpop.f32.mrf.mxu0
    %v8023 = vadd.f32 %v4483, %v8022
    %v8024 = vpop.f32.mrf.mxu0
    %v8025 = vadd.f32 %v4487, %v8024
    %v8026 = vpop.f32.mrf.mxu0
    %v8027 = vadd.f32 %v4483, %v8026
    %v8028 = vpop.f32.mrf.mxu0
    %v8029 = vadd.f32 %v4487, %v8028
    %8030 = vmatprep.mubr.bf16.mxu0 %v3911
    %8031 = vmatmul.mubr.bf16.gmra.mxu0 %v3910
    %v8032 = vpop.f32.mrf.mxu0
    %v8033 = vadd.f32 %v4483, %v8032
    %v8034 = vpop.f32.mrf.mxu0
    %v8035 = vadd.f32 %v4487, %v8034
    %v8036 = vpop.f32.mrf.mxu0
    %v8037 = vadd.f32 %v4483, %v8036
    %v8038 = vpop.f32.mrf.mxu0
    %v8039 = vadd.f32 %v4487, %v8038
    %8040 = vmatprep.mubr.bf16.mxu0 %v3919
    %8041 = vmatmul.mubr.bf16.gmra.mxu0 %v3918
    %v8042 = vpop.f32.mrf.mxu0
    %v8043 = vadd.f32 %v4483, %v8042
    %v8044 = vpop.f32.mrf.mxu0
    %v8045 = vadd.f32 %v4487, %v8044
    %v8046 = vpop.f32.mrf.mxu0
    %v8047 = vadd.f32 %v4483, %v8046
    %v8048 = vpop.f32.mrf.mxu0
    %v8049 = vadd.f32 %v4487, %v8048
    %8050 = vmatprep.mubr.bf16.mxu0 %v3927
    %8051 = vmatmul.mubr.bf16.gmra.mxu0 %v3926
    %v8052 = vpop.f32.mrf.mxu0
    %v8053 = vadd.f32 %v4483, %v8052
    %v8054 = vpop.f32.mrf.mxu0
    %v8055 = vadd.f32 %v4487, %v8054
    %v8056 = vpop.f32.mrf.mxu0
    %v8057 = vadd.f32 %v4483, %v8056
    %v8058 = vpop.f32.mrf.mxu0
    %v8059 = vadd.f32 %v4487, %v8058
    %8060 = vmatprep.mubr.bf16.mxu0 %v3935
    %8061 = vmatmul.mubr.bf16.gmra.mxu0 %v3934
    %v8062 = vpop.f32.mrf.mxu0
    %v8063 = vadd.f32 %v4483, %v8062
    %v8064 = vpop.f32.mrf.mxu0
    %v8065 = vadd.f32 %v4487, %v8064
    %v8066 = vpop.f32.mrf.mxu0
    %v8067 = vadd.f32 %v4483, %v8066
    %v8068 = vpop.f32.mrf.mxu0
    %v8069 = vadd.f32 %v4487, %v8068
    %8070 = vmatprep.mubr.bf16.mxu0 %v3943
    %8071 = vmatmul.mubr.bf16.gmra.mxu0 %v3942
    %v8072 = vpop.f32.mrf.mxu0
    %v8073 = vadd.f32 %v4483, %v8072
    %v8074 = vpop.f32.mrf.mxu0
    %v8075 = vadd.f32 %v4487, %v8074
    %v8076 = vpop.f32.mrf.mxu0
    %v8077 = vadd.f32 %v4483, %v8076
    %v8078 = vpop.f32.mrf.mxu0
    %v8079 = vadd.f32 %v4487, %v8078
    %8080 = vdwg.mxu0
    %8081 = vmatprep.subr.bf16.mxu0 %v6229
    %8082 = vmatpush1.bf16.msra.mxu0 %v6228
    %8083 = vmatprep.subr.bf16.mxu0 %v6221
    %8084 = vmatpush1.bf16.msra.mxu0 %v6220
    %8085 = vmatprep.subr.bf16.mxu0 %v6213
    %8086 = vmatpush1.bf16.msra.mxu0 %v6212
    %8087 = vmatprep.subr.bf16.mxu0 %v6205
    %8088 = vmatpush1.bf16.msra.mxu0 %v6204
    %8089 = vmatprep.subr.bf16.mxu0 %v6197
    %8090 = vmatpush1.bf16.msra.mxu0 %v6196
    %8091 = vmatprep.subr.bf16.mxu0 %v6189
    %8092 = vmatpush1.bf16.msra.mxu0 %v6188
    %8093 = vmatprep.subr.bf16.mxu0 %v6181
    %8094 = vmatpush1.bf16.msra.mxu0 %v6180
    %8095 = vmatprep.subr.bf16.mxu0 %v6173
    %8096 = vmatpush1.bf16.msra.mxu0 %v6172
    %8097 = vmatprep.subr.bf16.mxu0 %v6293
    %8098 = vmatpush2.bf16.msra.mxu0 %v6292
    %8099 = vmatprep.subr.bf16.mxu0 %v6285
    %8100 = vmatpush2.bf16.msra.mxu0 %v6284
    %8101 = vmatprep.subr.bf16.mxu0 %v6277
    %8102 = vmatpush2.bf16.msra.mxu0 %v6276
    %8103 = vmatprep.subr.bf16.mxu0 %v6269
    %8104 = vmatpush2.bf16.msra.mxu0 %v6268
    %8105 = vmatprep.subr.bf16.mxu0 %v6261
    %8106 = vmatpush2.bf16.msra.mxu0 %v6260
    %8107 = vmatprep.subr.bf16.mxu0 %v6253
    %8108 = vmatpush2.bf16.msra.mxu0 %v6252
    %8109 = vmatprep.subr.bf16.mxu0 %v6245
    %8110 = vmatpush2.bf16.msra.mxu0 %v6244
    %8111 = vmatprep.subr.bf16.mxu0 %v6237
    %8112 = vmatpush2.bf16.msra.mxu0 %v6236
    %8113 = vmatprep.mubr.bf16.mxu0 %v3889
    %8114 = vmatmul.mubr.bf16.gmra.mxu0 %v3888
    %v8115 = vpop.f32.mrf.mxu0
    %v8116 = vadd.f32 %v8003, %v8115
    %v8117 = vpop.f32.mrf.mxu0
    %v8118 = vadd.f32 %v8005, %v8117
    %v8119 = vpop.f32.mrf.mxu0
    %v8120 = vadd.f32 %v8007, %v8119
    %v8121 = vpop.f32.mrf.mxu0
    %v8122 = vadd.f32 %v8009, %v8121
    %8123 = vmatprep.mubr.bf16.mxu0 %v3897
    %8124 = vmatmul.mubr.bf16.gmra.mxu0 %v3896
    %v8125 = vpop.f32.mrf.mxu0
    %v8126 = vadd.f32 %v8013, %v8125
    %v8127 = vpop.f32.mrf.mxu0
    %v8128 = vadd.f32 %v8015, %v8127
    %v8129 = vpop.f32.mrf.mxu0
    %v8130 = vadd.f32 %v8017, %v8129
    %v8131 = vpop.f32.mrf.mxu0
    %v8132 = vadd.f32 %v8019, %v8131
    %8133 = vmatprep.mubr.bf16.mxu0 %v3905
    %8134 = vmatmul.mubr.bf16.gmra.mxu0 %v3904
    %v8135 = vpop.f32.mrf.mxu0
    %v8136 = vadd.f32 %v8023, %v8135
    %v8137 = vpop.f32.mrf.mxu0
    %v8138 = vadd.f32 %v8025, %v8137
    %v8139 = vpop.f32.mrf.mxu0
    %v8140 = vadd.f32 %v8027, %v8139
    %v8141 = vpop.f32.mrf.mxu0
    %v8142 = vadd.f32 %v8029, %v8141
    %8143 = vmatprep.mubr.bf16.mxu0 %v3913
    %8144 = vmatmul.mubr.bf16.gmra.mxu0 %v3912
    %v8145 = vpop.f32.mrf.mxu0
    %v8146 = vadd.f32 %v8033, %v8145
    %v8147 = vpop.f32.mrf.mxu0
    %v8148 = vadd.f32 %v8035, %v8147
    %v8149 = vpop.f32.mrf.mxu0
    %v8150 = vadd.f32 %v8037, %v8149
    %v8151 = vpop.f32.mrf.mxu0
    %v8152 = vadd.f32 %v8039, %v8151
    %8153 = vmatprep.mubr.bf16.mxu0 %v3921
    %8154 = vmatmul.mubr.bf16.gmra.mxu0 %v3920
    %v8155 = vpop.f32.mrf.mxu0
    %v8156 = vadd.f32 %v8043, %v8155
    %v8157 = vpop.f32.mrf.mxu0
    %v8158 = vadd.f32 %v8045, %v8157
    %v8159 = vpop.f32.mrf.mxu0
    %v8160 = vadd.f32 %v8047, %v8159
    %v8161 = vpop.f32.mrf.mxu0
    %v8162 = vadd.f32 %v8049, %v8161
    %8163 = vmatprep.mubr.bf16.mxu0 %v3929
    %8164 = vmatmul.mubr.bf16.gmra.mxu0 %v3928
    %v8165 = vpop.f32.mrf.mxu0
    %v8166 = vadd.f32 %v8053, %v8165
    %v8167 = vpop.f32.mrf.mxu0
    %v8168 = vadd.f32 %v8055, %v8167
    %v8169 = vpop.f32.mrf.mxu0
    %v8170 = vadd.f32 %v8057, %v8169
    %v8171 = vpop.f32.mrf.mxu0
    %v8172 = vadd.f32 %v8059, %v8171
    %8173 = vmatprep.mubr.bf16.mxu0 %v3937
    %8174 = vmatmul.mubr.bf16.gmra.mxu0 %v3936
    %v8175 = vpop.f32.mrf.mxu0
    %v8176 = vadd.f32 %v8063, %v8175
    %v8177 = vpop.f32.mrf.mxu0
    %v8178 = vadd.f32 %v8065, %v8177
    %v8179 = vpop.f32.mrf.mxu0
    %v8180 = vadd.f32 %v8067, %v8179
    %v8181 = vpop.f32.mrf.mxu0
    %v8182 = vadd.f32 %v8069, %v8181
    %8183 = vmatprep.mubr.bf16.mxu0 %v3945
    %8184 = vmatmul.mubr.bf16.gmra.mxu0 %v3944
    %v8185 = vpop.f32.mrf.mxu0
    %v8186 = vadd.f32 %v8073, %v8185
    %v8187 = vpop.f32.mrf.mxu0
    %v8188 = vadd.f32 %v8075, %v8187
    %v8189 = vpop.f32.mrf.mxu0
    %v8190 = vadd.f32 %v8077, %v8189
    %v8191 = vpop.f32.mrf.mxu0
    %v8192 = vadd.f32 %v8079, %v8191
    %8193 = vdwg.mxu0
    %8194 = vmatprep.subr.bf16.mxu0 %v6357
    %8195 = vmatpush1.bf16.msra.mxu0 %v6356
    %8196 = vmatprep.subr.bf16.mxu0 %v6349
    %8197 = vmatpush1.bf16.msra.mxu0 %v6348
    %8198 = vmatprep.subr.bf16.mxu0 %v6341
    %8199 = vmatpush1.bf16.msra.mxu0 %v6340
    %8200 = vmatprep.subr.bf16.mxu0 %v6333
    %8201 = vmatpush1.bf16.msra.mxu0 %v6332
    %8202 = vmatprep.subr.bf16.mxu0 %v6325
    %8203 = vmatpush1.bf16.msra.mxu0 %v6324
    %8204 = vmatprep.subr.bf16.mxu0 %v6317
    %8205 = vmatpush1.bf16.msra.mxu0 %v6316
    %8206 = vmatprep.subr.bf16.mxu0 %v6309
    %8207 = vmatpush1.bf16.msra.mxu0 %v6308
    %8208 = vmatprep.subr.bf16.mxu0 %v6301
    %8209 = vmatpush1.bf16.msra.mxu0 %v6300
    %8210 = vmatprep.subr.bf16.mxu0 %v6421
    %8211 = vmatpush2.bf16.msra.mxu0 %v6420
    %8212 = vmatprep.subr.bf16.mxu0 %v6413
    %8213 = vmatpush2.bf16.msra.mxu0 %v6412
    %8214 = vmatprep.subr.bf16.mxu0 %v6405
    %8215 = vmatpush2.bf16.msra.mxu0 %v6404
    %8216 = vmatprep.subr.bf16.mxu0 %v6397
    %8217 = vmatpush2.bf16.msra.mxu0 %v6396
    %8218 = vmatprep.subr.bf16.mxu0 %v6389
    %8219 = vmatpush2.bf16.msra.mxu0 %v6388
    %8220 = vmatprep.subr.bf16.mxu0 %v6381
    %8221 = vmatpush2.bf16.msra.mxu0 %v6380
    %8222 = vmatprep.subr.bf16.mxu0 %v6373
    %8223 = vmatpush2.bf16.msra.mxu0 %v6372
    %8224 = vmatprep.subr.bf16.mxu0 %v6365
    %8225 = vmatpush2.bf16.msra.mxu0 %v6364
    %8226 = vmatprep.mubr.bf16.mxu0 %v3891
    %8227 = vmatmul.mubr.bf16.gmra.mxu0 %v3890
    %v8228 = vpop.f32.mrf.mxu0
    %v8229 = vadd.f32 %v8116, %v8228
    %v8230 = vpop.f32.mrf.mxu0
    %v8231 = vadd.f32 %v8118, %v8230
    %v8232 = vpop.f32.mrf.mxu0
    %v8233 = vadd.f32 %v8120, %v8232
    %v8234 = vpop.f32.mrf.mxu0
    %v8235 = vadd.f32 %v8122, %v8234
    %8236 = vmatprep.mubr.bf16.mxu0 %v3899
    %8237 = vmatmul.mubr.bf16.gmra.mxu0 %v3898
    %v8238 = vpop.f32.mrf.mxu0
    %v8239 = vadd.f32 %v8126, %v8238
    %v8240 = vpop.f32.mrf.mxu0
    %v8241 = vadd.f32 %v8128, %v8240
    %v8242 = vpop.f32.mrf.mxu0
    %v8243 = vadd.f32 %v8130, %v8242
    %v8244 = vpop.f32.mrf.mxu0
    %v8245 = vadd.f32 %v8132, %v8244
    %8246 = vmatprep.mubr.bf16.mxu0 %v3907
    %8247 = vmatmul.mubr.bf16.gmra.mxu0 %v3906
    %v8248 = vpop.f32.mrf.mxu0
    %v8249 = vadd.f32 %v8136, %v8248
    %v8250 = vpop.f32.mrf.mxu0
    %v8251 = vadd.f32 %v8138, %v8250
    %v8252 = vpop.f32.mrf.mxu0
    %v8253 = vadd.f32 %v8140, %v8252
    %v8254 = vpop.f32.mrf.mxu0
    %v8255 = vadd.f32 %v8142, %v8254
    %8256 = vmatprep.mubr.bf16.mxu0 %v3915
    %8257 = vmatmul.mubr.bf16.gmra.mxu0 %v3914
    %v8258 = vpop.f32.mrf.mxu0
    %v8259 = vadd.f32 %v8146, %v8258
    %v8260 = vpop.f32.mrf.mxu0
    %v8261 = vadd.f32 %v8148, %v8260
    %v8262 = vpop.f32.mrf.mxu0
    %v8263 = vadd.f32 %v8150, %v8262
    %v8264 = vpop.f32.mrf.mxu0
    %v8265 = vadd.f32 %v8152, %v8264
    %8266 = vmatprep.mubr.bf16.mxu0 %v3923
    %8267 = vmatmul.mubr.bf16.gmra.mxu0 %v3922
    %v8268 = vpop.f32.mrf.mxu0
    %v8269 = vadd.f32 %v8156, %v8268
    %v8270 = vpop.f32.mrf.mxu0
    %v8271 = vadd.f32 %v8158, %v8270
    %v8272 = vpop.f32.mrf.mxu0
    %v8273 = vadd.f32 %v8160, %v8272
    %v8274 = vpop.f32.mrf.mxu0
    %v8275 = vadd.f32 %v8162, %v8274
    %8276 = vmatprep.mubr.bf16.mxu0 %v3931
    %8277 = vmatmul.mubr.bf16.gmra.mxu0 %v3930
    %v8278 = vpop.f32.mrf.mxu0
    %v8279 = vadd.f32 %v8166, %v8278
    %v8280 = vpop.f32.mrf.mxu0
    %v8281 = vadd.f32 %v8168, %v8280
    %v8282 = vpop.f32.mrf.mxu0
    %v8283 = vadd.f32 %v8170, %v8282
    %v8284 = vpop.f32.mrf.mxu0
    %v8285 = vadd.f32 %v8172, %v8284
    %8286 = vmatprep.mubr.bf16.mxu0 %v3939
    %8287 = vmatmul.mubr.bf16.gmra.mxu0 %v3938
    %v8288 = vpop.f32.mrf.mxu0
    %v8289 = vadd.f32 %v8176, %v8288
    %v8290 = vpop.f32.mrf.mxu0
    %v8291 = vadd.f32 %v8178, %v8290
    %v8292 = vpop.f32.mrf.mxu0
    %v8293 = vadd.f32 %v8180, %v8292
    %v8294 = vpop.f32.mrf.mxu0
    %v8295 = vadd.f32 %v8182, %v8294
    %8296 = vmatprep.mubr.bf16.mxu0 %v3947
    %8297 = vmatmul.mubr.bf16.gmra.mxu0 %v3946
    %v8298 = vpop.f32.mrf.mxu0
    %v8299 = vadd.f32 %v8186, %v8298
    %v8300 = vpop.f32.mrf.mxu0
    %v8301 = vadd.f32 %v8188, %v8300
    %v8302 = vpop.f32.mrf.mxu0
    %v8303 = vadd.f32 %v8190, %v8302
    %v8304 = vpop.f32.mrf.mxu0
    %v8305 = vadd.f32 %v8192, %v8304
    %8306 = vdwg.mxu0
    %8307 = vmatprep.subr.bf16.mxu0 %v6485
    %8308 = vmatpush1.bf16.msra.mxu0 %v6484
    %8309 = vmatprep.subr.bf16.mxu0 %v6477
    %8310 = vmatpush1.bf16.msra.mxu0 %v6476
    %8311 = vmatprep.subr.bf16.mxu0 %v6469
    %8312 = vmatpush1.bf16.msra.mxu0 %v6468
    %8313 = vmatprep.subr.bf16.mxu0 %v6461
    %8314 = vmatpush1.bf16.msra.mxu0 %v6460
    %8315 = vmatprep.subr.bf16.mxu0 %v6453
    %8316 = vmatpush1.bf16.msra.mxu0 %v6452
    %8317 = vmatprep.subr.bf16.mxu0 %v6445
    %8318 = vmatpush1.bf16.msra.mxu0 %v6444
    %8319 = vmatprep.subr.bf16.mxu0 %v6437
    %8320 = vmatpush1.bf16.msra.mxu0 %v6436
    %8321 = vmatprep.subr.bf16.mxu0 %v6429
    %8322 = vmatpush1.bf16.msra.mxu0 %v6428
    %8323 = vmatprep.subr.bf16.mxu0 %v6549
    %8324 = vmatpush2.bf16.msra.mxu0 %v6548
    %8325 = vmatprep.subr.bf16.mxu0 %v6541
    %8326 = vmatpush2.bf16.msra.mxu0 %v6540
    %8327 = vmatprep.subr.bf16.mxu0 %v6533
    %8328 = vmatpush2.bf16.msra.mxu0 %v6532
    %8329 = vmatprep.subr.bf16.mxu0 %v6525
    %8330 = vmatpush2.bf16.msra.mxu0 %v6524
    %8331 = vmatprep.subr.bf16.mxu0 %v6517
    %8332 = vmatpush2.bf16.msra.mxu0 %v6516
    %8333 = vmatprep.subr.bf16.mxu0 %v6509
    %8334 = vmatpush2.bf16.msra.mxu0 %v6508
    %8335 = vmatprep.subr.bf16.mxu0 %v6501
    %8336 = vmatpush2.bf16.msra.mxu0 %v6500
    %8337 = vmatprep.subr.bf16.mxu0 %v6493
    %8338 = vmatpush2.bf16.msra.mxu0 %v6492
    %8339 = vmatprep.mubr.bf16.mxu0 %v3893
    %8340 = vmatmul.mubr.bf16.gmra.mxu0 %v3892
    %v8341 = vpop.f32.mrf.mxu0
    %v8342 = vadd.f32 %v8229, %v8341
    %v8343 = vpop.f32.mrf.mxu0
    %v8344 = vadd.f32 %v8231, %v8343
    %v8345 = vpop.f32.mrf.mxu0
    %v8346 = vadd.f32 %v8233, %v8345
    %v8347 = vpop.f32.mrf.mxu0
    %v8348 = vadd.f32 %v8235, %v8347
    %8349 = vmatprep.mubr.bf16.mxu0 %v3901
    %8350 = vmatmul.mubr.bf16.gmra.mxu0 %v3900
    %v8351 = vpop.f32.mrf.mxu0
    %v8352 = vadd.f32 %v8239, %v8351
    %v8353 = vpop.f32.mrf.mxu0
    %v8354 = vadd.f32 %v8241, %v8353
    %v8355 = vpop.f32.mrf.mxu0
    %v8356 = vadd.f32 %v8243, %v8355
    %v8357 = vpop.f32.mrf.mxu0
    %v8358 = vadd.f32 %v8245, %v8357
    %8359 = vmatprep.mubr.bf16.mxu0 %v3909
    %8360 = vmatmul.mubr.bf16.gmra.mxu0 %v3908
    %v8361 = vpop.f32.mrf.mxu0
    %v8362 = vadd.f32 %v8249, %v8361
    %v8363 = vpop.f32.mrf.mxu0
    %v8364 = vadd.f32 %v8251, %v8363
    %v8365 = vpop.f32.mrf.mxu0
    %v8366 = vadd.f32 %v8253, %v8365
    %v8367 = vpop.f32.mrf.mxu0
    %v8368 = vadd.f32 %v8255, %v8367
    %8369 = vmatprep.mubr.bf16.mxu0 %v3917
    %8370 = vmatmul.mubr.bf16.gmra.mxu0 %v3916
    %v8371 = vpop.f32.mrf.mxu0
    %v8372 = vadd.f32 %v8259, %v8371
    %v8373 = vpop.f32.mrf.mxu0
    %v8374 = vadd.f32 %v8261, %v8373
    %v8375 = vpop.f32.mrf.mxu0
    %v8376 = vadd.f32 %v8263, %v8375
    %v8377 = vpop.f32.mrf.mxu0
    %v8378 = vadd.f32 %v8265, %v8377
    %8379 = vmatprep.mubr.bf16.mxu0 %v3925
    %8380 = vmatmul.mubr.bf16.gmra.mxu0 %v3924
    %v8381 = vpop.f32.mrf.mxu0
    %v8382 = vadd.f32 %v8269, %v8381
    %v8383 = vpop.f32.mrf.mxu0
    %v8384 = vadd.f32 %v8271, %v8383
    %v8385 = vpop.f32.mrf.mxu0
    %v8386 = vadd.f32 %v8273, %v8385
    %v8387 = vpop.f32.mrf.mxu0
    %v8388 = vadd.f32 %v8275, %v8387
    %8389 = vmatprep.mubr.bf16.mxu0 %v3933
    %8390 = vmatmul.mubr.bf16.gmra.mxu0 %v3932
    %v8391 = vpop.f32.mrf.mxu0
    %v8392 = vadd.f32 %v8279, %v8391
    %v8393 = vpop.f32.mrf.mxu0
    %v8394 = vadd.f32 %v8281, %v8393
    %v8395 = vpop.f32.mrf.mxu0
    %v8396 = vadd.f32 %v8283, %v8395
    %v8397 = vpop.f32.mrf.mxu0
    %v8398 = vadd.f32 %v8285, %v8397
    %8399 = vmatprep.mubr.bf16.mxu0 %v3941
    %8400 = vmatmul.mubr.bf16.gmra.mxu0 %v3940
    %v8401 = vpop.f32.mrf.mxu0
    %v8402 = vadd.f32 %v8289, %v8401
    %v8403 = vpop.f32.mrf.mxu0
    %v8404 = vadd.f32 %v8291, %v8403
    %v8405 = vpop.f32.mrf.mxu0
    %v8406 = vadd.f32 %v8293, %v8405
    %v8407 = vpop.f32.mrf.mxu0
    %v8408 = vadd.f32 %v8295, %v8407
    %8409 = vmatprep.mubr.bf16.mxu0 %v3949
    %8410 = vmatmul.mubr.bf16.gmra.mxu0 %v3948
    %v8411 = vpop.f32.mrf.mxu0
    %v8412 = vadd.f32 %v8299, %v8411
    %v8413 = vpop.f32.mrf.mxu0
    %v8414 = vadd.f32 %v8301, %v8413
    %v8415 = vpop.f32.mrf.mxu0
    %v8416 = vadd.f32 %v8303, %v8415
    %v8417 = vpop.f32.mrf.mxu0
    %v8418 = vadd.f32 %v8305, %v8417
    %8419 = vdwg.mxu0
    %8420 = vmatprep.subr.bf16.mxu0 %v6103
    %8421 = vmatpush1.bf16.msra.mxu0 %v6102
    %8422 = vmatprep.subr.bf16.mxu0 %v6095
    %8423 = vmatpush1.bf16.msra.mxu0 %v6094
    %8424 = vmatprep.subr.bf16.mxu0 %v6087
    %8425 = vmatpush1.bf16.msra.mxu0 %v6086
    %8426 = vmatprep.subr.bf16.mxu0 %v6079
    %8427 = vmatpush1.bf16.msra.mxu0 %v6078
    %8428 = vmatprep.subr.bf16.mxu0 %v6071
    %8429 = vmatpush1.bf16.msra.mxu0 %v6070
    %8430 = vmatprep.subr.bf16.mxu0 %v6063
    %8431 = vmatpush1.bf16.msra.mxu0 %v6062
    %8432 = vmatprep.subr.bf16.mxu0 %v6055
    %8433 = vmatpush1.bf16.msra.mxu0 %v6054
    %8434 = vmatprep.subr.bf16.mxu0 %v6047
    %8435 = vmatpush1.bf16.msra.mxu0 %v6046
    %8436 = vmatprep.subr.bf16.mxu0 %v6167
    %8437 = vmatpush2.bf16.msra.mxu0 %v6166
    %8438 = vmatprep.subr.bf16.mxu0 %v6159
    %8439 = vmatpush2.bf16.msra.mxu0 %v6158
    %8440 = vmatprep.subr.bf16.mxu0 %v6151
    %8441 = vmatpush2.bf16.msra.mxu0 %v6150
    %8442 = vmatprep.subr.bf16.mxu0 %v6143
    %8443 = vmatpush2.bf16.msra.mxu0 %v6142
    %8444 = vmatprep.subr.bf16.mxu0 %v6135
    %8445 = vmatpush2.bf16.msra.mxu0 %v6134
    %8446 = vmatprep.subr.bf16.mxu0 %v6127
    %8447 = vmatpush2.bf16.msra.mxu0 %v6126
    %8448 = vmatprep.subr.bf16.mxu0 %v6119
    %8449 = vmatpush2.bf16.msra.mxu0 %v6118
    %8450 = vmatprep.subr.bf16.mxu0 %v6111
    %8451 = vmatpush2.bf16.msra.mxu0 %v6110
    %8452 = vmatprep.mubr.bf16.mxu0 %v3887
    %8453 = vmatmul.mubr.bf16.gmra.mxu0 %v3886
    %v8454 = vpop.f32.mrf.mxu0
    %v8455 = vadd.f32 %v4491, %v8454
    %v8456 = vpop.f32.mrf.mxu0
    %v8457 = vadd.f32 %v4495, %v8456
    %v8458 = vpop.f32.mrf.mxu0
    %v8459 = vadd.f32 %v4491, %v8458
    %v8460 = vpop.f32.mrf.mxu0
    %v8461 = vadd.f32 %v4495, %v8460
    %8462 = vmatprep.mubr.bf16.mxu0 %v3895
    %8463 = vmatmul.mubr.bf16.gmra.mxu0 %v3894
    %v8464 = vpop.f32.mrf.mxu0
    %v8465 = vadd.f32 %v4491, %v8464
    %v8466 = vpop.f32.mrf.mxu0
    %v8467 = vadd.f32 %v4495, %v8466
    %v8468 = vpop.f32.mrf.mxu0
    %v8469 = vadd.f32 %v4491, %v8468
    %v8470 = vpop.f32.mrf.mxu0
    %v8471 = vadd.f32 %v4495, %v8470
    %8472 = vmatprep.mubr.bf16.mxu0 %v3903
    %8473 = vmatmul.mubr.bf16.gmra.mxu0 %v3902
    %v8474 = vpop.f32.mrf.mxu0
    %v8475 = vadd.f32 %v4491, %v8474
    %v8476 = vpop.f32.mrf.mxu0
    %v8477 = vadd.f32 %v4495, %v8476
    %v8478 = vpop.f32.mrf.mxu0
    %v8479 = vadd.f32 %v4491, %v8478
    %v8480 = vpop.f32.mrf.mxu0
    %v8481 = vadd.f32 %v4495, %v8480
    %8482 = vmatprep.mubr.bf16.mxu0 %v3911
    %8483 = vmatmul.mubr.bf16.gmra.mxu0 %v3910
    %v8484 = vpop.f32.mrf.mxu0
    %v8485 = vadd.f32 %v4491, %v8484
    %v8486 = vpop.f32.mrf.mxu0
    %v8487 = vadd.f32 %v4495, %v8486
    %v8488 = vpop.f32.mrf.mxu0
    %v8489 = vadd.f32 %v4491, %v8488
    %v8490 = vpop.f32.mrf.mxu0
    %v8491 = vadd.f32 %v4495, %v8490
    %8492 = vmatprep.mubr.bf16.mxu0 %v3919
    %8493 = vmatmul.mubr.bf16.gmra.mxu0 %v3918
    %v8494 = vpop.f32.mrf.mxu0
    %v8495 = vadd.f32 %v4491, %v8494
    %v8496 = vpop.f32.mrf.mxu0
    %v8497 = vadd.f32 %v4495, %v8496
    %v8498 = vpop.f32.mrf.mxu0
    %v8499 = vadd.f32 %v4491, %v8498
    %v8500 = vpop.f32.mrf.mxu0
    %v8501 = vadd.f32 %v4495, %v8500
    %8502 = vmatprep.mubr.bf16.mxu0 %v3927
    %8503 = vmatmul.mubr.bf16.gmra.mxu0 %v3926
    %v8504 = vpop.f32.mrf.mxu0
    %v8505 = vadd.f32 %v4491, %v8504
    %v8506 = vpop.f32.mrf.mxu0
    %v8507 = vadd.f32 %v4495, %v8506
    %v8508 = vpop.f32.mrf.mxu0
    %v8509 = vadd.f32 %v4491, %v8508
    %v8510 = vpop.f32.mrf.mxu0
    %v8511 = vadd.f32 %v4495, %v8510
    %8512 = vmatprep.mubr.bf16.mxu0 %v3935
    %8513 = vmatmul.mubr.bf16.gmra.mxu0 %v3934
    %v8514 = vpop.f32.mrf.mxu0
    %v8515 = vadd.f32 %v4491, %v8514
    %v8516 = vpop.f32.mrf.mxu0
    %v8517 = vadd.f32 %v4495, %v8516
    %v8518 = vpop.f32.mrf.mxu0
    %v8519 = vadd.f32 %v4491, %v8518
    %v8520 = vpop.f32.mrf.mxu0
    %v8521 = vadd.f32 %v4495, %v8520
    %8522 = vmatprep.mubr.bf16.mxu0 %v3943
    %8523 = vmatmul.mubr.bf16.gmra.mxu0 %v3942
    %v8524 = vpop.f32.mrf.mxu0
    %v8525 = vadd.f32 %v4491, %v8524
    %v8526 = vpop.f32.mrf.mxu0
    %v8527 = vadd.f32 %v4495, %v8526
    %v8528 = vpop.f32.mrf.mxu0
    %v8529 = vadd.f32 %v4491, %v8528
    %v8530 = vpop.f32.mrf.mxu0
    %v8531 = vadd.f32 %v4495, %v8530
    %8532 = vdwg.mxu0
    %8533 = vmatprep.subr.bf16.mxu0 %v6231
    %8534 = vmatpush1.bf16.msra.mxu0 %v6230
    %8535 = vmatprep.subr.bf16.mxu0 %v6223
    %8536 = vmatpush1.bf16.msra.mxu0 %v6222
    %8537 = vmatprep.subr.bf16.mxu0 %v6215
    %8538 = vmatpush1.bf16.msra.mxu0 %v6214
    %8539 = vmatprep.subr.bf16.mxu0 %v6207
    %8540 = vmatpush1.bf16.msra.mxu0 %v6206
    %8541 = vmatprep.subr.bf16.mxu0 %v6199
    %8542 = vmatpush1.bf16.msra.mxu0 %v6198
    %8543 = vmatprep.subr.bf16.mxu0 %v6191
    %8544 = vmatpush1.bf16.msra.mxu0 %v6190
    %8545 = vmatprep.subr.bf16.mxu0 %v6183
    %8546 = vmatpush1.bf16.msra.mxu0 %v6182
    %8547 = vmatprep.subr.bf16.mxu0 %v6175
    %8548 = vmatpush1.bf16.msra.mxu0 %v6174
    %8549 = vmatprep.subr.bf16.mxu0 %v6295
    %8550 = vmatpush2.bf16.msra.mxu0 %v6294
    %8551 = vmatprep.subr.bf16.mxu0 %v6287
    %8552 = vmatpush2.bf16.msra.mxu0 %v6286
    %8553 = vmatprep.subr.bf16.mxu0 %v6279
    %8554 = vmatpush2.bf16.msra.mxu0 %v6278
    %8555 = vmatprep.subr.bf16.mxu0 %v6271
    %8556 = vmatpush2.bf16.msra.mxu0 %v6270
    %8557 = vmatprep.subr.bf16.mxu0 %v6263
    %8558 = vmatpush2.bf16.msra.mxu0 %v6262
    %8559 = vmatprep.subr.bf16.mxu0 %v6255
    %8560 = vmatpush2.bf16.msra.mxu0 %v6254
    %8561 = vmatprep.subr.bf16.mxu0 %v6247
    %8562 = vmatpush2.bf16.msra.mxu0 %v6246
    %8563 = vmatprep.subr.bf16.mxu0 %v6239
    %8564 = vmatpush2.bf16.msra.mxu0 %v6238
    %8565 = vmatprep.mubr.bf16.mxu0 %v3889
    %8566 = vmatmul.mubr.bf16.gmra.mxu0 %v3888
    %v8567 = vpop.f32.mrf.mxu0
    %v8568 = vadd.f32 %v8455, %v8567
    %v8569 = vpop.f32.mrf.mxu0
    %v8570 = vadd.f32 %v8457, %v8569
    %v8571 = vpop.f32.mrf.mxu0
    %v8572 = vadd.f32 %v8459, %v8571
    %v8573 = vpop.f32.mrf.mxu0
    %v8574 = vadd.f32 %v8461, %v8573
    %8575 = vmatprep.mubr.bf16.mxu0 %v3897
    %8576 = vmatmul.mubr.bf16.gmra.mxu0 %v3896
    %v8577 = vpop.f32.mrf.mxu0
    %v8578 = vadd.f32 %v8465, %v8577
    %v8579 = vpop.f32.mrf.mxu0
    %v8580 = vadd.f32 %v8467, %v8579
    %v8581 = vpop.f32.mrf.mxu0
    %v8582 = vadd.f32 %v8469, %v8581
    %v8583 = vpop.f32.mrf.mxu0
    %v8584 = vadd.f32 %v8471, %v8583
    %8585 = vmatprep.mubr.bf16.mxu0 %v3905
    %8586 = vmatmul.mubr.bf16.gmra.mxu0 %v3904
    %v8587 = vpop.f32.mrf.mxu0
    %v8588 = vadd.f32 %v8475, %v8587
    %v8589 = vpop.f32.mrf.mxu0
    %v8590 = vadd.f32 %v8477, %v8589
    %v8591 = vpop.f32.mrf.mxu0
    %v8592 = vadd.f32 %v8479, %v8591
    %v8593 = vpop.f32.mrf.mxu0
    %v8594 = vadd.f32 %v8481, %v8593
    %8595 = vmatprep.mubr.bf16.mxu0 %v3913
    %8596 = vmatmul.mubr.bf16.gmra.mxu0 %v3912
    %v8597 = vpop.f32.mrf.mxu0
    %v8598 = vadd.f32 %v8485, %v8597
    %v8599 = vpop.f32.mrf.mxu0
    %v8600 = vadd.f32 %v8487, %v8599
    %v8601 = vpop.f32.mrf.mxu0
    %v8602 = vadd.f32 %v8489, %v8601
    %v8603 = vpop.f32.mrf.mxu0
    %v8604 = vadd.f32 %v8491, %v8603
    %8605 = vmatprep.mubr.bf16.mxu0 %v3921
    %8606 = vmatmul.mubr.bf16.gmra.mxu0 %v3920
    %v8607 = vpop.f32.mrf.mxu0
    %v8608 = vadd.f32 %v8495, %v8607
    %v8609 = vpop.f32.mrf.mxu0
    %v8610 = vadd.f32 %v8497, %v8609
    %v8611 = vpop.f32.mrf.mxu0
    %v8612 = vadd.f32 %v8499, %v8611
    %v8613 = vpop.f32.mrf.mxu0
    %v8614 = vadd.f32 %v8501, %v8613
    %8615 = vmatprep.mubr.bf16.mxu0 %v3929
    %8616 = vmatmul.mubr.bf16.gmra.mxu0 %v3928
    %v8617 = vpop.f32.mrf.mxu0
    %v8618 = vadd.f32 %v8505, %v8617
    %v8619 = vpop.f32.mrf.mxu0
    %v8620 = vadd.f32 %v8507, %v8619
    %v8621 = vpop.f32.mrf.mxu0
    %v8622 = vadd.f32 %v8509, %v8621
    %v8623 = vpop.f32.mrf.mxu0
    %v8624 = vadd.f32 %v8511, %v8623
    %8625 = vmatprep.mubr.bf16.mxu0 %v3937
    %8626 = vmatmul.mubr.bf16.gmra.mxu0 %v3936
    %v8627 = vpop.f32.mrf.mxu0
    %v8628 = vadd.f32 %v8515, %v8627
    %v8629 = vpop.f32.mrf.mxu0
    %v8630 = vadd.f32 %v8517, %v8629
    %v8631 = vpop.f32.mrf.mxu0
    %v8632 = vadd.f32 %v8519, %v8631
    %v8633 = vpop.f32.mrf.mxu0
    %v8634 = vadd.f32 %v8521, %v8633
    %8635 = vmatprep.mubr.bf16.mxu0 %v3945
    %8636 = vmatmul.mubr.bf16.gmra.mxu0 %v3944
    %v8637 = vpop.f32.mrf.mxu0
    %v8638 = vadd.f32 %v8525, %v8637
    %v8639 = vpop.f32.mrf.mxu0
    %v8640 = vadd.f32 %v8527, %v8639
    %v8641 = vpop.f32.mrf.mxu0
    %v8642 = vadd.f32 %v8529, %v8641
    %v8643 = vpop.f32.mrf.mxu0
    %v8644 = vadd.f32 %v8531, %v8643
    %8645 = vdwg.mxu0
    %8646 = vmatprep.subr.bf16.mxu0 %v6359
    %8647 = vmatpush1.bf16.msra.mxu0 %v6358
    %8648 = vmatprep.subr.bf16.mxu0 %v6351
    %8649 = vmatpush1.bf16.msra.mxu0 %v6350
    %8650 = vmatprep.subr.bf16.mxu0 %v6343
    %8651 = vmatpush1.bf16.msra.mxu0 %v6342
    %8652 = vmatprep.subr.bf16.mxu0 %v6335
    %8653 = vmatpush1.bf16.msra.mxu0 %v6334
    %8654 = vmatprep.subr.bf16.mxu0 %v6327
    %8655 = vmatpush1.bf16.msra.mxu0 %v6326
    %8656 = vmatprep.subr.bf16.mxu0 %v6319
    %8657 = vmatpush1.bf16.msra.mxu0 %v6318
    %8658 = vmatprep.subr.bf16.mxu0 %v6311
    %8659 = vmatpush1.bf16.msra.mxu0 %v6310
    %8660 = vmatprep.subr.bf16.mxu0 %v6303
    %8661 = vmatpush1.bf16.msra.mxu0 %v6302
    %8662 = vmatprep.subr.bf16.mxu0 %v6423
    %8663 = vmatpush2.bf16.msra.mxu0 %v6422
    %8664 = vmatprep.subr.bf16.mxu0 %v6415
    %8665 = vmatpush2.bf16.msra.mxu0 %v6414
    %8666 = vmatprep.subr.bf16.mxu0 %v6407
    %8667 = vmatpush2.bf16.msra.mxu0 %v6406
    %8668 = vmatprep.subr.bf16.mxu0 %v6399
    %8669 = vmatpush2.bf16.msra.mxu0 %v6398
    %8670 = vmatprep.subr.bf16.mxu0 %v6391
    %8671 = vmatpush2.bf16.msra.mxu0 %v6390
    %8672 = vmatprep.subr.bf16.mxu0 %v6383
    %8673 = vmatpush2.bf16.msra.mxu0 %v6382
    %8674 = vmatprep.subr.bf16.mxu0 %v6375
    %8675 = vmatpush2.bf16.msra.mxu0 %v6374
    %8676 = vmatprep.subr.bf16.mxu0 %v6367
    %8677 = vmatpush2.bf16.msra.mxu0 %v6366
    %8678 = vmatprep.mubr.bf16.mxu0 %v3891
    %8679 = vmatmul.mubr.bf16.gmra.mxu0 %v3890
    %v8680 = vpop.f32.mrf.mxu0
    %v8681 = vadd.f32 %v8568, %v8680
    %v8682 = vpop.f32.mrf.mxu0
    %v8683 = vadd.f32 %v8570, %v8682
    %v8684 = vpop.f32.mrf.mxu0
    %v8685 = vadd.f32 %v8572, %v8684
    %v8686 = vpop.f32.mrf.mxu0
    %v8687 = vadd.f32 %v8574, %v8686
    %8688 = vmatprep.mubr.bf16.mxu0 %v3899
    %8689 = vmatmul.mubr.bf16.gmra.mxu0 %v3898
    %v8690 = vpop.f32.mrf.mxu0
    %v8691 = vadd.f32 %v8578, %v8690
    %v8692 = vpop.f32.mrf.mxu0
    %v8693 = vadd.f32 %v8580, %v8692
    %v8694 = vpop.f32.mrf.mxu0
    %v8695 = vadd.f32 %v8582, %v8694
    %v8696 = vpop.f32.mrf.mxu0
    %v8697 = vadd.f32 %v8584, %v8696
    %8698 = vmatprep.mubr.bf16.mxu0 %v3907
    %8699 = vmatmul.mubr.bf16.gmra.mxu0 %v3906
    %v8700 = vpop.f32.mrf.mxu0
    %v8701 = vadd.f32 %v8588, %v8700
    %v8702 = vpop.f32.mrf.mxu0
    %v8703 = vadd.f32 %v8590, %v8702
    %v8704 = vpop.f32.mrf.mxu0
    %v8705 = vadd.f32 %v8592, %v8704
    %v8706 = vpop.f32.mrf.mxu0
    %v8707 = vadd.f32 %v8594, %v8706
    %8708 = vmatprep.mubr.bf16.mxu0 %v3915
    %8709 = vmatmul.mubr.bf16.gmra.mxu0 %v3914
    %v8710 = vpop.f32.mrf.mxu0
    %v8711 = vadd.f32 %v8598, %v8710
    %v8712 = vpop.f32.mrf.mxu0
    %v8713 = vadd.f32 %v8600, %v8712
    %v8714 = vpop.f32.mrf.mxu0
    %v8715 = vadd.f32 %v8602, %v8714
    %v8716 = vpop.f32.mrf.mxu0
    %v8717 = vadd.f32 %v8604, %v8716
    %8718 = vmatprep.mubr.bf16.mxu0 %v3923
    %8719 = vmatmul.mubr.bf16.gmra.mxu0 %v3922
    %v8720 = vpop.f32.mrf.mxu0
    %v8721 = vadd.f32 %v8608, %v8720
    %v8722 = vpop.f32.mrf.mxu0
    %v8723 = vadd.f32 %v8610, %v8722
    %v8724 = vpop.f32.mrf.mxu0
    %v8725 = vadd.f32 %v8612, %v8724
    %v8726 = vpop.f32.mrf.mxu0
    %v8727 = vadd.f32 %v8614, %v8726
    %8728 = vmatprep.mubr.bf16.mxu0 %v3931
    %8729 = vmatmul.mubr.bf16.gmra.mxu0 %v3930
    %v8730 = vpop.f32.mrf.mxu0
    %v8731 = vadd.f32 %v8618, %v8730
    %v8732 = vpop.f32.mrf.mxu0
    %v8733 = vadd.f32 %v8620, %v8732
    %v8734 = vpop.f32.mrf.mxu0
    %v8735 = vadd.f32 %v8622, %v8734
    %v8736 = vpop.f32.mrf.mxu0
    %v8737 = vadd.f32 %v8624, %v8736
    %8738 = vmatprep.mubr.bf16.mxu0 %v3939
    %8739 = vmatmul.mubr.bf16.gmra.mxu0 %v3938
    %v8740 = vpop.f32.mrf.mxu0
    %v8741 = vadd.f32 %v8628, %v8740
    %v8742 = vpop.f32.mrf.mxu0
    %v8743 = vadd.f32 %v8630, %v8742
    %v8744 = vpop.f32.mrf.mxu0
    %v8745 = vadd.f32 %v8632, %v8744
    %v8746 = vpop.f32.mrf.mxu0
    %v8747 = vadd.f32 %v8634, %v8746
    %8748 = vmatprep.mubr.bf16.mxu0 %v3947
    %8749 = vmatmul.mubr.bf16.gmra.mxu0 %v3946
    %v8750 = vpop.f32.mrf.mxu0
    %v8751 = vadd.f32 %v8638, %v8750
    %v8752 = vpop.f32.mrf.mxu0
    %v8753 = vadd.f32 %v8640, %v8752
    %v8754 = vpop.f32.mrf.mxu0
    %v8755 = vadd.f32 %v8642, %v8754
    %v8756 = vpop.f32.mrf.mxu0
    %v8757 = vadd.f32 %v8644, %v8756
    %8758 = vdwg.mxu0
    %8759 = vmatprep.subr.bf16.mxu0 %v6487
    %8760 = vmatpush1.bf16.msra.mxu0 %v6486
    %8761 = vmatprep.subr.bf16.mxu0 %v6479
    %8762 = vmatpush1.bf16.msra.mxu0 %v6478
    %8763 = vmatprep.subr.bf16.mxu0 %v6471
    %8764 = vmatpush1.bf16.msra.mxu0 %v6470
    %8765 = vmatprep.subr.bf16.mxu0 %v6463
    %8766 = vmatpush1.bf16.msra.mxu0 %v6462
    %8767 = vmatprep.subr.bf16.mxu0 %v6455
    %8768 = vmatpush1.bf16.msra.mxu0 %v6454
    %8769 = vmatprep.subr.bf16.mxu0 %v6447
    %8770 = vmatpush1.bf16.msra.mxu0 %v6446
    %8771 = vmatprep.subr.bf16.mxu0 %v6439
    %8772 = vmatpush1.bf16.msra.mxu0 %v6438
    %8773 = vmatprep.subr.bf16.mxu0 %v6431
    %8774 = vmatpush1.bf16.msra.mxu0 %v6430
    %8775 = vmatprep.subr.bf16.mxu0 %v6551
    %8776 = vmatpush2.bf16.msra.mxu0 %v6550
    %8777 = vmatprep.subr.bf16.mxu0 %v6543
    %8778 = vmatpush2.bf16.msra.mxu0 %v6542
    %8779 = vmatprep.subr.bf16.mxu0 %v6535
    %8780 = vmatpush2.bf16.msra.mxu0 %v6534
    %8781 = vmatprep.subr.bf16.mxu0 %v6527
    %8782 = vmatpush2.bf16.msra.mxu0 %v6526
    %8783 = vmatprep.subr.bf16.mxu0 %v6519
    %8784 = vmatpush2.bf16.msra.mxu0 %v6518
    %8785 = vmatprep.subr.bf16.mxu0 %v6511
    %8786 = vmatpush2.bf16.msra.mxu0 %v6510
    %8787 = vmatprep.subr.bf16.mxu0 %v6503
    %8788 = vmatpush2.bf16.msra.mxu0 %v6502
    %8789 = vmatprep.subr.bf16.mxu0 %v6495
    %8790 = vmatpush2.bf16.msra.mxu0 %v6494
    %8791 = vmatprep.mubr.bf16.mxu0 %v3893
    %8792 = vmatmul.mubr.bf16.gmra.mxu0 %v3892
    %v8793 = vpop.f32.mrf.mxu0
    %v8794 = vadd.f32 %v8681, %v8793
    %v8795 = vpop.f32.mrf.mxu0
    %v8796 = vadd.f32 %v8683, %v8795
    %v8797 = vpop.f32.mrf.mxu0
    %v8798 = vadd.f32 %v8685, %v8797
    %v8799 = vpop.f32.mrf.mxu0
    %v8800 = vadd.f32 %v8687, %v8799
    %8801 = vmatprep.mubr.bf16.mxu0 %v3901
    %8802 = vmatmul.mubr.bf16.gmra.mxu0 %v3900
    %v8803 = vpop.f32.mrf.mxu0
    %v8804 = vadd.f32 %v8691, %v8803
    %v8805 = vpop.f32.mrf.mxu0
    %v8806 = vadd.f32 %v8693, %v8805
    %v8807 = vpop.f32.mrf.mxu0
    %v8808 = vadd.f32 %v8695, %v8807
    %v8809 = vpop.f32.mrf.mxu0
    %v8810 = vadd.f32 %v8697, %v8809
    %8811 = vmatprep.mubr.bf16.mxu0 %v3909
    %8812 = vmatmul.mubr.bf16.gmra.mxu0 %v3908
    %v8813 = vpop.f32.mrf.mxu0
    %v8814 = vadd.f32 %v8701, %v8813
    %v8815 = vpop.f32.mrf.mxu0
    %v8816 = vadd.f32 %v8703, %v8815
    %v8817 = vpop.f32.mrf.mxu0
    %v8818 = vadd.f32 %v8705, %v8817
    %v8819 = vpop.f32.mrf.mxu0
    %v8820 = vadd.f32 %v8707, %v8819
    %8821 = vmatprep.mubr.bf16.mxu0 %v3917
    %8822 = vmatmul.mubr.bf16.gmra.mxu0 %v3916
    %v8823 = vpop.f32.mrf.mxu0
    %v8824 = vadd.f32 %v8711, %v8823
    %v8825 = vpop.f32.mrf.mxu0
    %v8826 = vadd.f32 %v8713, %v8825
    %v8827 = vpop.f32.mrf.mxu0
    %v8828 = vadd.f32 %v8715, %v8827
    %v8829 = vpop.f32.mrf.mxu0
    %v8830 = vadd.f32 %v8717, %v8829
    %8831 = vmatprep.mubr.bf16.mxu0 %v3925
    %8832 = vmatmul.mubr.bf16.gmra.mxu0 %v3924
    %v8833 = vpop.f32.mrf.mxu0
    %v8834 = vadd.f32 %v8721, %v8833
    %v8835 = vpop.f32.mrf.mxu0
    %v8836 = vadd.f32 %v8723, %v8835
    %v8837 = vpop.f32.mrf.mxu0
    %v8838 = vadd.f32 %v8725, %v8837
    %v8839 = vpop.f32.mrf.mxu0
    %v8840 = vadd.f32 %v8727, %v8839
    %8841 = vmatprep.mubr.bf16.mxu0 %v3933
    %8842 = vmatmul.mubr.bf16.gmra.mxu0 %v3932
    %v8843 = vpop.f32.mrf.mxu0
    %v8844 = vadd.f32 %v8731, %v8843
    %v8845 = vpop.f32.mrf.mxu0
    %v8846 = vadd.f32 %v8733, %v8845
    %v8847 = vpop.f32.mrf.mxu0
    %v8848 = vadd.f32 %v8735, %v8847
    %v8849 = vpop.f32.mrf.mxu0
    %v8850 = vadd.f32 %v8737, %v8849
    %8851 = vmatprep.mubr.bf16.mxu0 %v3941
    %8852 = vmatmul.mubr.bf16.gmra.mxu0 %v3940
    %v8853 = vpop.f32.mrf.mxu0
    %v8854 = vadd.f32 %v8741, %v8853
    %v8855 = vpop.f32.mrf.mxu0
    %v8856 = vadd.f32 %v8743, %v8855
    %v8857 = vpop.f32.mrf.mxu0
    %v8858 = vadd.f32 %v8745, %v8857
    %v8859 = vpop.f32.mrf.mxu0
    %v8860 = vadd.f32 %v8747, %v8859
    %8861 = vmatprep.mubr.bf16.mxu0 %v3949
    %8862 = vmatmul.mubr.bf16.gmra.mxu0 %v3948
    %v8863 = vpop.f32.mrf.mxu0
    %v8864 = vadd.f32 %v8751, %v8863
    %v8865 = vpop.f32.mrf.mxu0
    %v8866 = vadd.f32 %v8753, %v8865
    %v8867 = vpop.f32.mrf.mxu0
    %v8868 = vadd.f32 %v8755, %v8867
    %v8869 = vpop.f32.mrf.mxu0
    %v8870 = vadd.f32 %v8757, %v8869
    %8871 = vdwg.mxu0
    %v8872 = vmax.f32 %v7438, 0.0
    %v8873 = vmax.f32 %v7440, 0.0
    %v8874 = vmax.f32 %v7890, 0.0
    %v8875 = vmax.f32 %v7892, 0.0
    %v8876 = vmax.f32 %v8342, 0.0
    %v8877 = vmax.f32 %v8344, 0.0
    %v8878 = vmax.f32 %v8794, 0.0
    %v8879 = vmax.f32 %v8796, 0.0
    %v8880 = vmax.f32 %v7442, 0.0
    %v8881 = vmax.f32 %v7444, 0.0
    %v8882 = vmax.f32 %v7894, 0.0
    %v8883 = vmax.f32 %v7896, 0.0
    %v8884 = vmax.f32 %v8346, 0.0
    %v8885 = vmax.f32 %v8348, 0.0
    %v8886 = vmax.f32 %v8798, 0.0
    %v8887 = vmax.f32 %v8800, 0.0
    %v8888 = vmax.f32 %v7448, 0.0
    %v8889 = vmax.f32 %v7450, 0.0
    %v8890 = vmax.f32 %v7900, 0.0
    %v8891 = vmax.f32 %v7902, 0.0
    %v8892 = vmax.f32 %v8352, 0.0
    %v8893 = vmax.f32 %v8354, 0.0
    %v8894 = vmax.f32 %v8804, 0.0
    %v8895 = vmax.f32 %v8806, 0.0
    %v8896 = vmax.f32 %v7452, 0.0
    %v8897 = vmax.f32 %v7454, 0.0
    %v8898 = vmax.f32 %v7904, 0.0
    %v8899 = vmax.f32 %v7906, 0.0
    %v8900 = vmax.f32 %v8356, 0.0
    %v8901 = vmax.f32 %v8358, 0.0
    %v8902 = vmax.f32 %v8808, 0.0
    %v8903 = vmax.f32 %v8810, 0.0
    %v8904 = vmax.f32 %v7458, 0.0
    %v8905 = vmax.f32 %v7460, 0.0
    %v8906 = vmax.f32 %v7910, 0.0
    %v8907 = vmax.f32 %v7912, 0.0
    %v8908 = vmax.f32 %v8362, 0.0
    %v8909 = vmax.f32 %v8364, 0.0
    %v8910 = vmax.f32 %v8814, 0.0
    %v8911 = vmax.f32 %v8816, 0.0
    %v8912 = vmax.f32 %v7462, 0.0
    %v8913 = vmax.f32 %v7464, 0.0
    %v8914 = vmax.f32 %v7914, 0.0
    %v8915 = vmax.f32 %v7916, 0.0
    %v8916 = vmax.f32 %v8366, 0.0
    %v8917 = vmax.f32 %v8368, 0.0
    %v8918 = vmax.f32 %v8818, 0.0
    %v8919 = vmax.f32 %v8820, 0.0
    %v8920 = vmax.f32 %v7468, 0.0
    %v8921 = vmax.f32 %v7470, 0.0
    %v8922 = vmax.f32 %v7920, 0.0
    %v8923 = vmax.f32 %v7922, 0.0
    %v8924 = vmax.f32 %v8372, 0.0
    %v8925 = vmax.f32 %v8374, 0.0
    %v8926 = vmax.f32 %v8824, 0.0
    %v8927 = vmax.f32 %v8826, 0.0
    %v8928 = vmax.f32 %v7472, 0.0
    %v8929 = vmax.f32 %v7474, 0.0
    %v8930 = vmax.f32 %v7924, 0.0
    %v8931 = vmax.f32 %v7926, 0.0
    %v8932 = vmax.f32 %v8376, 0.0
    %v8933 = vmax.f32 %v8378, 0.0
    %v8934 = vmax.f32 %v8828, 0.0
    %v8935 = vmax.f32 %v8830, 0.0
    %v8936 = vmax.f32 %v7478, 0.0
    %v8937 = vmax.f32 %v7480, 0.0
    %v8938 = vmax.f32 %v7930, 0.0
    %v8939 = vmax.f32 %v7932, 0.0
    %v8940 = vmax.f32 %v8382, 0.0
    %v8941 = vmax.f32 %v8384, 0.0
    %v8942 = vmax.f32 %v8834, 0.0
    %v8943 = vmax.f32 %v8836, 0.0
    %v8944 = vmax.f32 %v7482, 0.0
    %v8945 = vmax.f32 %v7484, 0.0
    %v8946 = vmax.f32 %v7934, 0.0
    %v8947 = vmax.f32 %v7936, 0.0
    %v8948 = vmax.f32 %v8386, 0.0
    %v8949 = vmax.f32 %v8388, 0.0
    %v8950 = vmax.f32 %v8838, 0.0
    %v8951 = vmax.f32 %v8840, 0.0
    %v8952 = vmax.f32 %v7488, 0.0
    %v8953 = vmax.f32 %v7490, 0.0
    %v8954 = vmax.f32 %v7940, 0.0
    %v8955 = vmax.f32 %v7942, 0.0
    %v8956 = vmax.f32 %v8392, 0.0
    %v8957 = vmax.f32 %v8394, 0.0
    %v8958 = vmax.f32 %v8844, 0.0
    %v8959 = vmax.f32 %v8846, 0.0
    %v8960 = vmax.f32 %v7492, 0.0
    %v8961 = vmax.f32 %v7494, 0.0
    %v8962 = vmax.f32 %v7944, 0.0
    %v8963 = vmax.f32 %v7946, 0.0
    %v8964 = vmax.f32 %v8396, 0.0
    %v8965 = vmax.f32 %v8398, 0.0
    %v8966 = vmax.f32 %v8848, 0.0
    %v8967 = vmax.f32 %v8850, 0.0
    %v8968 = vmax.f32 %v7498, 0.0
    %v8969 = vmax.f32 %v7500, 0.0
    %v8970 = vmax.f32 %v7950, 0.0
    %v8971 = vmax.f32 %v7952, 0.0
    %v8972 = vmax.f32 %v8402, 0.0
    %v8973 = vmax.f32 %v8404, 0.0
    %v8974 = vmax.f32 %v8854, 0.0
    %v8975 = vmax.f32 %v8856, 0.0
    %v8976 = vmax.f32 %v7502, 0.0
    %v8977 = vmax.f32 %v7504, 0.0
    %v8978 = vmax.f32 %v7954, 0.0
    %v8979 = vmax.f32 %v7956, 0.0
    %v8980 = vmax.f32 %v8406, 0.0
    %v8981 = vmax.f32 %v8408, 0.0
    %v8982 = vmax.f32 %v8858, 0.0
    %v8983 = vmax.f32 %v8860, 0.0
    %v8984 = vmax.f32 %v7508, 0.0
    %v8985 = vmax.f32 %v7510, 0.0
    %v8986 = vmax.f32 %v7960, 0.0
    %v8987 = vmax.f32 %v7962, 0.0
    %v8988 = vmax.f32 %v8412, 0.0
    %v8989 = vmax.f32 %v8414, 0.0
    %v8990 = vmax.f32 %v8864, 0.0
    %v8991 = vmax.f32 %v8866, 0.0
    %v8992 = vmax.f32 %v7512, 0.0
    %v8993 = vmax.f32 %v7514, 0.0
    %v8994 = vmax.f32 %v7964, 0.0
    %v8995 = vmax.f32 %v7966, 0.0
    %v8996 = vmax.f32 %v8416, 0.0
    %v8997 = vmax.f32 %v8418, 0.0
    %v8998 = vmax.f32 %v8868, 0.0
    %v8999 = vmax.f32 %v8870, 0.0
    %v9000 = vpack.c.bf16 %v8880, %v8872
    %v9001 = vpack.c.bf16 %v8881, %v8873
    %v9002 = vpack.c.bf16 %v8882, %v8874
    %v9003 = vpack.c.bf16 %v8883, %v8875
    %v9004 = vpack.c.bf16 %v8884, %v8876
    %v9005 = vpack.c.bf16 %v8885, %v8877
    %v9006 = vpack.c.bf16 %v8886, %v8878
    %v9007 = vpack.c.bf16 %v8887, %v8879
    %v9008 = vpack.c.bf16 %v8896, %v8888
    %v9009 = vpack.c.bf16 %v8897, %v8889
    %v9010 = vpack.c.bf16 %v8898, %v8890
    %v9011 = vpack.c.bf16 %v8899, %v8891
    %v9012 = vpack.c.bf16 %v8900, %v8892
    %v9013 = vpack.c.bf16 %v8901, %v8893
    %v9014 = vpack.c.bf16 %v8902, %v8894
    %v9015 = vpack.c.bf16 %v8903, %v8895
    %v9016 = vpack.c.bf16 %v8912, %v8904
    %v9017 = vpack.c.bf16 %v8913, %v8905
    %v9018 = vpack.c.bf16 %v8914, %v8906
    %v9019 = vpack.c.bf16 %v8915, %v8907
    %v9020 = vpack.c.bf16 %v8916, %v8908
    %v9021 = vpack.c.bf16 %v8917, %v8909
    %v9022 = vpack.c.bf16 %v8918, %v8910
    %v9023 = vpack.c.bf16 %v8919, %v8911
    %v9024 = vpack.c.bf16 %v8928, %v8920
    %v9025 = vpack.c.bf16 %v8929, %v8921
    %v9026 = vpack.c.bf16 %v8930, %v8922
    %v9027 = vpack.c.bf16 %v8931, %v8923
    %v9028 = vpack.c.bf16 %v8932, %v8924
    %v9029 = vpack.c.bf16 %v8933, %v8925
    %v9030 = vpack.c.bf16 %v8934, %v8926
    %v9031 = vpack.c.bf16 %v8935, %v8927
    %v9032 = vpack.c.bf16 %v8944, %v8936
    %v9033 = vpack.c.bf16 %v8945, %v8937
    %v9034 = vpack.c.bf16 %v8946, %v8938
    %v9035 = vpack.c.bf16 %v8947, %v8939
    %v9036 = vpack.c.bf16 %v8948, %v8940
    %v9037 = vpack.c.bf16 %v8949, %v8941
    %v9038 = vpack.c.bf16 %v8950, %v8942
    %v9039 = vpack.c.bf16 %v8951, %v8943
    %v9040 = vpack.c.bf16 %v8960, %v8952
    %v9041 = vpack.c.bf16 %v8961, %v8953
    %v9042 = vpack.c.bf16 %v8962, %v8954
    %v9043 = vpack.c.bf16 %v8963, %v8955
    %v9044 = vpack.c.bf16 %v8964, %v8956
    %v9045 = vpack.c.bf16 %v8965, %v8957
    %v9046 = vpack.c.bf16 %v8966, %v8958
    %v9047 = vpack.c.bf16 %v8967, %v8959
    %v9048 = vpack.c.bf16 %v8976, %v8968
    %v9049 = vpack.c.bf16 %v8977, %v8969
    %v9050 = vpack.c.bf16 %v8978, %v8970
    %v9051 = vpack.c.bf16 %v8979, %v8971
    %v9052 = vpack.c.bf16 %v8980, %v8972
    %v9053 = vpack.c.bf16 %v8981, %v8973
    %v9054 = vpack.c.bf16 %v8982, %v8974
    %v9055 = vpack.c.bf16 %v8983, %v8975
    %v9056 = vpack.c.bf16 %v8992, %v8984
    %v9057 = vpack.c.bf16 %v8993, %v8985
    %v9058 = vpack.c.bf16 %v8994, %v8986
    %v9059 = vpack.c.bf16 %v8995, %v8987
    %v9060 = vpack.c.bf16 %v8996, %v8988
    %v9061 = vpack.c.bf16 %v8997, %v8989
    %v9062 = vpack.c.bf16 %v8998, %v8990
    %v9063 = vpack.c.bf16 %v8999, %v8991
    %v9064 = vld [vmem:[#allocation9] sm:$0xff]
    %v9065 = vld [vmem:[#allocation9 + $0x8] sm:$0xff]
    %v9066 = vld [vmem:[#allocation9 + $0x10] sm:$0xff]
    %v9067 = vld [vmem:[#allocation9 + $0x18] sm:$0xff]
    %v9068 = vld [vmem:[#allocation9 + $0x20] sm:$0xff]
    %v9069 = vld [vmem:[#allocation9 + $0x28] sm:$0xff]
    %v9070 = vld [vmem:[#allocation9 + $0x30] sm:$0xff]
    %v9071 = vld [vmem:[#allocation9 + $0x38] sm:$0xff]
    %v9072 = vld [vmem:[#allocation9 + $0x40] sm:$0xff]
    %v9073 = vld [vmem:[#allocation9 + $0x48] sm:$0xff]
    %v9074 = vld [vmem:[#allocation9 + $0x50] sm:$0xff]
    %v9075 = vld [vmem:[#allocation9 + $0x58] sm:$0xff]
    %v9076 = vld [vmem:[#allocation9 + $0x60] sm:$0xff]
    %v9077 = vld [vmem:[#allocation9 + $0x68] sm:$0xff]
    %v9078 = vld [vmem:[#allocation9 + $0x70] sm:$0xff]
    %v9079 = vld [vmem:[#allocation9 + $0x78] sm:$0xff]
    %v9080 = vld [vmem:[#allocation9 + $0x80] sm:$0xff]
    %v9081 = vld [vmem:[#allocation9 + $0x88] sm:$0xff]
    %v9082 = vld [vmem:[#allocation9 + $0x90] sm:$0xff]
    %v9083 = vld [vmem:[#allocation9 + $0x98] sm:$0xff]
    %v9084 = vld [vmem:[#allocation9 + $0xa0] sm:$0xff]
    %v9085 = vld [vmem:[#allocation9 + $0xa8] sm:$0xff]
    %v9086 = vld [vmem:[#allocation9 + $0xb0] sm:$0xff]
    %v9087 = vld [vmem:[#allocation9 + $0xb8] sm:$0xff]
    %v9088 = vld [vmem:[#allocation9 + $0xc0] sm:$0xff]
    %v9089 = vld [vmem:[#allocation9 + $0xc8] sm:$0xff]
    %v9090 = vld [vmem:[#allocation9 + $0xd0] sm:$0xff]
    %v9091 = vld [vmem:[#allocation9 + $0xd8] sm:$0xff]
    %v9092 = vld [vmem:[#allocation9 + $0xe0] sm:$0xff]
    %v9093 = vld [vmem:[#allocation9 + $0xe8] sm:$0xff]
    %v9094 = vld [vmem:[#allocation9 + $0xf0] sm:$0xff]
    %v9095 = vld [vmem:[#allocation9 + $0xf8] sm:$0xff]
    %v9096 = vld [vmem:[#allocation9 + $0x100] sm:$0xff]
    %v9097 = vld [vmem:[#allocation9 + $0x108] sm:$0xff]
    %v9098 = vld [vmem:[#allocation9 + $0x110] sm:$0xff]
    %v9099 = vld [vmem:[#allocation9 + $0x118] sm:$0xff]
    %v9100 = vld [vmem:[#allocation9 + $0x120] sm:$0xff]
    %v9101 = vld [vmem:[#allocation9 + $0x128] sm:$0xff]
    %v9102 = vld [vmem:[#allocation9 + $0x130] sm:$0xff]
    %v9103 = vld [vmem:[#allocation9 + $0x138] sm:$0xff]
    %v9104 = vld [vmem:[#allocation9 + $0x140] sm:$0xff]
    %v9105 = vld [vmem:[#allocation9 + $0x148] sm:$0xff]
    %v9106 = vld [vmem:[#allocation9 + $0x150] sm:$0xff]
    %v9107 = vld [vmem:[#allocation9 + $0x158] sm:$0xff]
    %v9108 = vld [vmem:[#allocation9 + $0x160] sm:$0xff]
    %v9109 = vld [vmem:[#allocation9 + $0x168] sm:$0xff]
    %v9110 = vld [vmem:[#allocation9 + $0x170] sm:$0xff]
    %v9111 = vld [vmem:[#allocation9 + $0x178] sm:$0xff]
    %v9112 = vld [vmem:[#allocation9 + $0x180] sm:$0xff]
    %v9113 = vld [vmem:[#allocation9 + $0x188] sm:$0xff]
    %v9114 = vld [vmem:[#allocation9 + $0x190] sm:$0xff]
    %v9115 = vld [vmem:[#allocation9 + $0x198] sm:$0xff]
    %v9116 = vld [vmem:[#allocation9 + $0x1a0] sm:$0xff]
    %v9117 = vld [vmem:[#allocation9 + $0x1a8] sm:$0xff]
    %v9118 = vld [vmem:[#allocation9 + $0x1b0] sm:$0xff]
    %v9119 = vld [vmem:[#allocation9 + $0x1b8] sm:$0xff]
    %v9120 = vld [vmem:[#allocation9 + $0x1c0] sm:$0xff]
    %v9121 = vld [vmem:[#allocation9 + $0x1c8] sm:$0xff]
    %v9122 = vld [vmem:[#allocation9 + $0x1d0] sm:$0xff]
    %v9123 = vld [vmem:[#allocation9 + $0x1d8] sm:$0xff]
    %v9124 = vld [vmem:[#allocation9 + $0x1e0] sm:$0xff]
    %v9125 = vld [vmem:[#allocation9 + $0x1e8] sm:$0xff]
    %v9126 = vld [vmem:[#allocation9 + $0x1f0] sm:$0xff]
    %v9127 = vld [vmem:[#allocation9 + $0x1f8] sm:$0xff]
    %v9128 = vld [vmem:[#allocation9 + $0x200] sm:$0xff]
    %v9129 = vld [vmem:[#allocation9 + $0x208] sm:$0xff]
    %v9130 = vld [vmem:[#allocation9 + $0x210] sm:$0xff]
    %v9131 = vld [vmem:[#allocation9 + $0x218] sm:$0xff]
    %v9132 = vld [vmem:[#allocation9 + $0x220] sm:$0xff]
    %v9133 = vld [vmem:[#allocation9 + $0x228] sm:$0xff]
    %v9134 = vld [vmem:[#allocation9 + $0x230] sm:$0xff]
    %v9135 = vld [vmem:[#allocation9 + $0x238] sm:$0xff]
    %v9136 = vld [vmem:[#allocation9 + $0x240] sm:$0xff]
    %v9137 = vld [vmem:[#allocation9 + $0x248] sm:$0xff]
    %v9138 = vld [vmem:[#allocation9 + $0x250] sm:$0xff]
    %v9139 = vld [vmem:[#allocation9 + $0x258] sm:$0xff]
    %v9140 = vld [vmem:[#allocation9 + $0x260] sm:$0xff]
    %v9141 = vld [vmem:[#allocation9 + $0x268] sm:$0xff]
    %v9142 = vld [vmem:[#allocation9 + $0x270] sm:$0xff]
    %v9143 = vld [vmem:[#allocation9 + $0x278] sm:$0xff]
    %v9144 = vld [vmem:[#allocation9 + $0x280] sm:$0xff]
    %v9145 = vld [vmem:[#allocation9 + $0x288] sm:$0xff]
    %v9146 = vld [vmem:[#allocation9 + $0x290] sm:$0xff]
    %v9147 = vld [vmem:[#allocation9 + $0x298] sm:$0xff]
    %v9148 = vld [vmem:[#allocation9 + $0x2a0] sm:$0xff]
    %v9149 = vld [vmem:[#allocation9 + $0x2a8] sm:$0xff]
    %v9150 = vld [vmem:[#allocation9 + $0x2b0] sm:$0xff]
    %v9151 = vld [vmem:[#allocation9 + $0x2b8] sm:$0xff]
    %v9152 = vld [vmem:[#allocation9 + $0x2c0] sm:$0xff]
    %v9153 = vld [vmem:[#allocation9 + $0x2c8] sm:$0xff]
    %v9154 = vld [vmem:[#allocation9 + $0x2d0] sm:$0xff]
    %v9155 = vld [vmem:[#allocation9 + $0x2d8] sm:$0xff]
    %v9156 = vld [vmem:[#allocation9 + $0x2e0] sm:$0xff]
    %v9157 = vld [vmem:[#allocation9 + $0x2e8] sm:$0xff]
    %v9158 = vld [vmem:[#allocation9 + $0x2f0] sm:$0xff]
    %v9159 = vld [vmem:[#allocation9 + $0x2f8] sm:$0xff]
    %v9160 = vld [vmem:[#allocation9 + $0x300] sm:$0xff]
    %v9161 = vld [vmem:[#allocation9 + $0x308] sm:$0xff]
    %v9162 = vld [vmem:[#allocation9 + $0x310] sm:$0xff]
    %v9163 = vld [vmem:[#allocation9 + $0x318] sm:$0xff]
    %v9164 = vld [vmem:[#allocation9 + $0x320] sm:$0xff]
    %v9165 = vld [vmem:[#allocation9 + $0x328] sm:$0xff]
    %v9166 = vld [vmem:[#allocation9 + $0x330] sm:$0xff]
    %v9167 = vld [vmem:[#allocation9 + $0x338] sm:$0xff]
    %v9168 = vld [vmem:[#allocation9 + $0x340] sm:$0xff]
    %v9169 = vld [vmem:[#allocation9 + $0x348] sm:$0xff]
    %v9170 = vld [vmem:[#allocation9 + $0x350] sm:$0xff]
    %v9171 = vld [vmem:[#allocation9 + $0x358] sm:$0xff]
    %v9172 = vld [vmem:[#allocation9 + $0x360] sm:$0xff]
    %v9173 = vld [vmem:[#allocation9 + $0x368] sm:$0xff]
    %v9174 = vld [vmem:[#allocation9 + $0x370] sm:$0xff]
    %v9175 = vld [vmem:[#allocation9 + $0x378] sm:$0xff]
    %v9176 = vld [vmem:[#allocation9 + $0x380] sm:$0xff]
    %v9177 = vld [vmem:[#allocation9 + $0x388] sm:$0xff]
    %v9178 = vld [vmem:[#allocation9 + $0x390] sm:$0xff]
    %v9179 = vld [vmem:[#allocation9 + $0x398] sm:$0xff]
    %v9180 = vld [vmem:[#allocation9 + $0x3a0] sm:$0xff]
    %v9181 = vld [vmem:[#allocation9 + $0x3a8] sm:$0xff]
    %v9182 = vld [vmem:[#allocation9 + $0x3b0] sm:$0xff]
    %v9183 = vld [vmem:[#allocation9 + $0x3b8] sm:$0xff]
    %v9184 = vld [vmem:[#allocation9 + $0x3c0] sm:$0xff]
    %v9185 = vld [vmem:[#allocation9 + $0x3c8] sm:$0xff]
    %v9186 = vld [vmem:[#allocation9 + $0x3d0] sm:$0xff]
    %v9187 = vld [vmem:[#allocation9 + $0x3d8] sm:$0xff]
    %v9188 = vld [vmem:[#allocation9 + $0x3e0] sm:$0xff]
    %v9189 = vld [vmem:[#allocation9 + $0x3e8] sm:$0xff]
    %v9190 = vld [vmem:[#allocation9 + $0x3f0] sm:$0xff]
    %v9191 = vld [vmem:[#allocation9 + $0x3f8] sm:$0xff]
    %v9192 = vld [vmem:[#allocation10] sm:$0x3]
    %v9194 = vlaneseq
    %v9195 = vshrl.u32 %v9194, 7
    %v9196 = vsub.s32 0, %v9195
    %v9197 = vrot.slane %v9192, %v9196
    %v9198 = vlaneseq
    %v9199 = vshrl.u32 %v9198, 7
    %v9200 = vsub.s32 1, %v9199
    %v9201 = vrot.slane %v9192, %v9200
    %v9332 = vunpack.c.l.b16 %v9064
    %v9333 = vunpack.c.h.b16 %v9064
    %v9334 = vunpack.c.l.b16 %v9065
    %v9335 = vunpack.c.h.b16 %v9065
    %v9336 = vunpack.c.l.b16 %v9066
    %v9337 = vunpack.c.h.b16 %v9066
    %v9338 = vunpack.c.l.b16 %v9067
    %v9339 = vunpack.c.h.b16 %v9067
    %v9340 = vunpack.c.l.b16 %v9068
    %v9341 = vunpack.c.h.b16 %v9068
    %v9342 = vunpack.c.l.b16 %v9069
    %v9343 = vunpack.c.h.b16 %v9069
    %v9344 = vunpack.c.l.b16 %v9070
    %v9345 = vunpack.c.h.b16 %v9070
    %v9346 = vunpack.c.l.b16 %v9071
    %v9347 = vunpack.c.h.b16 %v9071
    %v9348 = vunpack.c.l.b16 %v9072
    %v9349 = vunpack.c.h.b16 %v9072
    %v9350 = vunpack.c.l.b16 %v9073
    %v9351 = vunpack.c.h.b16 %v9073
    %v9352 = vunpack.c.l.b16 %v9074
    %v9353 = vunpack.c.h.b16 %v9074
    %v9354 = vunpack.c.l.b16 %v9075
    %v9355 = vunpack.c.h.b16 %v9075
    %v9356 = vunpack.c.l.b16 %v9076
    %v9357 = vunpack.c.h.b16 %v9076
    %v9358 = vunpack.c.l.b16 %v9077
    %v9359 = vunpack.c.h.b16 %v9077
    %v9360 = vunpack.c.l.b16 %v9078
    %v9361 = vunpack.c.h.b16 %v9078
    %v9362 = vunpack.c.l.b16 %v9079
    %v9363 = vunpack.c.h.b16 %v9079
    %v9364 = vunpack.c.l.b16 %v9080
    %v9365 = vunpack.c.h.b16 %v9080
    %v9366 = vunpack.c.l.b16 %v9081
    %v9367 = vunpack.c.h.b16 %v9081
    %v9368 = vunpack.c.l.b16 %v9082
    %v9369 = vunpack.c.h.b16 %v9082
    %v9370 = vunpack.c.l.b16 %v9083
    %v9371 = vunpack.c.h.b16 %v9083
    %v9372 = vunpack.c.l.b16 %v9084
    %v9373 = vunpack.c.h.b16 %v9084
    %v9374 = vunpack.c.l.b16 %v9085
    %v9375 = vunpack.c.h.b16 %v9085
    %v9376 = vunpack.c.l.b16 %v9086
    %v9377 = vunpack.c.h.b16 %v9086
    %v9378 = vunpack.c.l.b16 %v9087
    %v9379 = vunpack.c.h.b16 %v9087
    %v9380 = vunpack.c.l.b16 %v9088
    %v9381 = vunpack.c.h.b16 %v9088
    %v9382 = vunpack.c.l.b16 %v9089
    %v9383 = vunpack.c.h.b16 %v9089
    %v9384 = vunpack.c.l.b16 %v9090
    %v9385 = vunpack.c.h.b16 %v9090
    %v9386 = vunpack.c.l.b16 %v9091
    %v9387 = vunpack.c.h.b16 %v9091
    %v9388 = vunpack.c.l.b16 %v9092
    %v9389 = vunpack.c.h.b16 %v9092
    %v9390 = vunpack.c.l.b16 %v9093
    %v9391 = vunpack.c.h.b16 %v9093
    %v9392 = vunpack.c.l.b16 %v9094
    %v9393 = vunpack.c.h.b16 %v9094
    %v9394 = vunpack.c.l.b16 %v9095
    %v9395 = vunpack.c.h.b16 %v9095
    %v9396 = vunpack.c.l.b16 %v9096
    %v9397 = vunpack.c.h.b16 %v9096
    %v9398 = vunpack.c.l.b16 %v9097
    %v9399 = vunpack.c.h.b16 %v9097
    %v9400 = vunpack.c.l.b16 %v9098
    %v9401 = vunpack.c.h.b16 %v9098
    %v9402 = vunpack.c.l.b16 %v9099
    %v9403 = vunpack.c.h.b16 %v9099
    %v9404 = vunpack.c.l.b16 %v9100
    %v9405 = vunpack.c.h.b16 %v9100
    %v9406 = vunpack.c.l.b16 %v9101
    %v9407 = vunpack.c.h.b16 %v9101
    %v9408 = vunpack.c.l.b16 %v9102
    %v9409 = vunpack.c.h.b16 %v9102
    %v9410 = vunpack.c.l.b16 %v9103
    %v9411 = vunpack.c.h.b16 %v9103
    %v9412 = vunpack.c.l.b16 %v9104
    %v9413 = vunpack.c.h.b16 %v9104
    %v9414 = vunpack.c.l.b16 %v9105
    %v9415 = vunpack.c.h.b16 %v9105
    %v9416 = vunpack.c.l.b16 %v9106
    %v9417 = vunpack.c.h.b16 %v9106
    %v9418 = vunpack.c.l.b16 %v9107
    %v9419 = vunpack.c.h.b16 %v9107
    %v9420 = vunpack.c.l.b16 %v9108
    %v9421 = vunpack.c.h.b16 %v9108
    %v9422 = vunpack.c.l.b16 %v9109
    %v9423 = vunpack.c.h.b16 %v9109
    %v9424 = vunpack.c.l.b16 %v9110
    %v9425 = vunpack.c.h.b16 %v9110
    %v9426 = vunpack.c.l.b16 %v9111
    %v9427 = vunpack.c.h.b16 %v9111
    %v9428 = vunpack.c.l.b16 %v9112
    %v9429 = vunpack.c.h.b16 %v9112
    %v9430 = vunpack.c.l.b16 %v9113
    %v9431 = vunpack.c.h.b16 %v9113
    %v9432 = vunpack.c.l.b16 %v9114
    %v9433 = vunpack.c.h.b16 %v9114
    %v9434 = vunpack.c.l.b16 %v9115
    %v9435 = vunpack.c.h.b16 %v9115
    %v9436 = vunpack.c.l.b16 %v9116
    %v9437 = vunpack.c.h.b16 %v9116
    %v9438 = vunpack.c.l.b16 %v9117
    %v9439 = vunpack.c.h.b16 %v9117
    %v9440 = vunpack.c.l.b16 %v9118
    %v9441 = vunpack.c.h.b16 %v9118
    %v9442 = vunpack.c.l.b16 %v9119
    %v9443 = vunpack.c.h.b16 %v9119
    %v9444 = vunpack.c.l.b16 %v9120
    %v9445 = vunpack.c.h.b16 %v9120
    %v9446 = vunpack.c.l.b16 %v9121
    %v9447 = vunpack.c.h.b16 %v9121
    %v9448 = vunpack.c.l.b16 %v9122
    %v9449 = vunpack.c.h.b16 %v9122
    %v9450 = vunpack.c.l.b16 %v9123
    %v9451 = vunpack.c.h.b16 %v9123
    %v9452 = vunpack.c.l.b16 %v9124
    %v9453 = vunpack.c.h.b16 %v9124
    %v9454 = vunpack.c.l.b16 %v9125
    %v9455 = vunpack.c.h.b16 %v9125
    %v9456 = vunpack.c.l.b16 %v9126
    %v9457 = vunpack.c.h.b16 %v9126
    %v9458 = vunpack.c.l.b16 %v9127
    %v9459 = vunpack.c.h.b16 %v9127
    %v9460 = vunpack.c.l.b16 %v9128
    %v9461 = vunpack.c.h.b16 %v9128
    %v9462 = vunpack.c.l.b16 %v9129
    %v9463 = vunpack.c.h.b16 %v9129
    %v9464 = vunpack.c.l.b16 %v9130
    %v9465 = vunpack.c.h.b16 %v9130
    %v9466 = vunpack.c.l.b16 %v9131
    %v9467 = vunpack.c.h.b16 %v9131
    %v9468 = vunpack.c.l.b16 %v9132
    %v9469 = vunpack.c.h.b16 %v9132
    %v9470 = vunpack.c.l.b16 %v9133
    %v9471 = vunpack.c.h.b16 %v9133
    %v9472 = vunpack.c.l.b16 %v9134
    %v9473 = vunpack.c.h.b16 %v9134
    %v9474 = vunpack.c.l.b16 %v9135
    %v9475 = vunpack.c.h.b16 %v9135
    %v9476 = vunpack.c.l.b16 %v9136
    %v9477 = vunpack.c.h.b16 %v9136
    %v9478 = vunpack.c.l.b16 %v9137
    %v9479 = vunpack.c.h.b16 %v9137
    %v9480 = vunpack.c.l.b16 %v9138
    %v9481 = vunpack.c.h.b16 %v9138
    %v9482 = vunpack.c.l.b16 %v9139
    %v9483 = vunpack.c.h.b16 %v9139
    %v9484 = vunpack.c.l.b16 %v9140
    %v9485 = vunpack.c.h.b16 %v9140
    %v9486 = vunpack.c.l.b16 %v9141
    %v9487 = vunpack.c.h.b16 %v9141
    %v9488 = vunpack.c.l.b16 %v9142
    %v9489 = vunpack.c.h.b16 %v9142
    %v9490 = vunpack.c.l.b16 %v9143
    %v9491 = vunpack.c.h.b16 %v9143
    %v9492 = vunpack.c.l.b16 %v9144
    %v9493 = vunpack.c.h.b16 %v9144
    %v9494 = vunpack.c.l.b16 %v9145
    %v9495 = vunpack.c.h.b16 %v9145
    %v9496 = vunpack.c.l.b16 %v9146
    %v9497 = vunpack.c.h.b16 %v9146
    %v9498 = vunpack.c.l.b16 %v9147
    %v9499 = vunpack.c.h.b16 %v9147
    %v9500 = vunpack.c.l.b16 %v9148
    %v9501 = vunpack.c.h.b16 %v9148
    %v9502 = vunpack.c.l.b16 %v9149
    %v9503 = vunpack.c.h.b16 %v9149
    %v9504 = vunpack.c.l.b16 %v9150
    %v9505 = vunpack.c.h.b16 %v9150
    %v9506 = vunpack.c.l.b16 %v9151
    %v9507 = vunpack.c.h.b16 %v9151
    %v9508 = vunpack.c.l.b16 %v9152
    %v9509 = vunpack.c.h.b16 %v9152
    %v9510 = vunpack.c.l.b16 %v9153
    %v9511 = vunpack.c.h.b16 %v9153
    %v9512 = vunpack.c.l.b16 %v9154
    %v9513 = vunpack.c.h.b16 %v9154
    %v9514 = vunpack.c.l.b16 %v9155
    %v9515 = vunpack.c.h.b16 %v9155
    %v9516 = vunpack.c.l.b16 %v9156
    %v9517 = vunpack.c.h.b16 %v9156
    %v9518 = vunpack.c.l.b16 %v9157
    %v9519 = vunpack.c.h.b16 %v9157
    %v9520 = vunpack.c.l.b16 %v9158
    %v9521 = vunpack.c.h.b16 %v9158
    %v9522 = vunpack.c.l.b16 %v9159
    %v9523 = vunpack.c.h.b16 %v9159
    %v9524 = vunpack.c.l.b16 %v9160
    %v9525 = vunpack.c.h.b16 %v9160
    %v9526 = vunpack.c.l.b16 %v9161
    %v9527 = vunpack.c.h.b16 %v9161
    %v9528 = vunpack.c.l.b16 %v9162
    %v9529 = vunpack.c.h.b16 %v9162
    %v9530 = vunpack.c.l.b16 %v9163
    %v9531 = vunpack.c.h.b16 %v9163
    %v9532 = vunpack.c.l.b16 %v9164
    %v9533 = vunpack.c.h.b16 %v9164
    %v9534 = vunpack.c.l.b16 %v9165
    %v9535 = vunpack.c.h.b16 %v9165
    %v9536 = vunpack.c.l.b16 %v9166
    %v9537 = vunpack.c.h.b16 %v9166
    %v9538 = vunpack.c.l.b16 %v9167
    %v9539 = vunpack.c.h.b16 %v9167
    %v9540 = vunpack.c.l.b16 %v9168
    %v9541 = vunpack.c.h.b16 %v9168
    %v9542 = vunpack.c.l.b16 %v9169
    %v9543 = vunpack.c.h.b16 %v9169
    %v9544 = vunpack.c.l.b16 %v9170
    %v9545 = vunpack.c.h.b16 %v9170
    %v9546 = vunpack.c.l.b16 %v9171
    %v9547 = vunpack.c.h.b16 %v9171
    %v9548 = vunpack.c.l.b16 %v9172
    %v9549 = vunpack.c.h.b16 %v9172
    %v9550 = vunpack.c.l.b16 %v9173
    %v9551 = vunpack.c.h.b16 %v9173
    %v9552 = vunpack.c.l.b16 %v9174
    %v9553 = vunpack.c.h.b16 %v9174
    %v9554 = vunpack.c.l.b16 %v9175
    %v9555 = vunpack.c.h.b16 %v9175
    %v9556 = vunpack.c.l.b16 %v9176
    %v9557 = vunpack.c.h.b16 %v9176
    %v9558 = vunpack.c.l.b16 %v9177
    %v9559 = vunpack.c.h.b16 %v9177
    %v9560 = vunpack.c.l.b16 %v9178
    %v9561 = vunpack.c.h.b16 %v9178
    %v9562 = vunpack.c.l.b16 %v9179
    %v9563 = vunpack.c.h.b16 %v9179
    %v9564 = vunpack.c.l.b16 %v9180
    %v9565 = vunpack.c.h.b16 %v9180
    %v9566 = vunpack.c.l.b16 %v9181
    %v9567 = vunpack.c.h.b16 %v9181
    %v9568 = vunpack.c.l.b16 %v9182
    %v9569 = vunpack.c.h.b16 %v9182
    %v9570 = vunpack.c.l.b16 %v9183
    %v9571 = vunpack.c.h.b16 %v9183
    %v9572 = vunpack.c.l.b16 %v9184
    %v9573 = vunpack.c.h.b16 %v9184
    %v9574 = vunpack.c.l.b16 %v9185
    %v9575 = vunpack.c.h.b16 %v9185
    %v9576 = vunpack.c.l.b16 %v9186
    %v9577 = vunpack.c.h.b16 %v9186
    %v9578 = vunpack.c.l.b16 %v9187
    %v9579 = vunpack.c.h.b16 %v9187
    %v9580 = vunpack.c.l.b16 %v9188
    %v9581 = vunpack.c.h.b16 %v9188
    %v9582 = vunpack.c.l.b16 %v9189
    %v9583 = vunpack.c.h.b16 %v9189
    %v9584 = vunpack.c.l.b16 %v9190
    %v9585 = vunpack.c.h.b16 %v9190
    %v9586 = vunpack.c.l.b16 %v9191
    %v9587 = vunpack.c.h.b16 %v9191
    %v9588 = vpack.c.b16 %v9334, %v9332
    %v9589 = vpack.c.b16 %v9335, %v9333
    %v9590 = vpack.c.b16 %v9338, %v9336
    %v9591 = vpack.c.b16 %v9339, %v9337
    %v9592 = vpack.c.b16 %v9342, %v9340
    %v9593 = vpack.c.b16 %v9343, %v9341
    %v9594 = vpack.c.b16 %v9346, %v9344
    %v9595 = vpack.c.b16 %v9347, %v9345
    %v9596 = vpack.c.b16 %v9350, %v9348
    %v9597 = vpack.c.b16 %v9351, %v9349
    %v9598 = vpack.c.b16 %v9354, %v9352
    %v9599 = vpack.c.b16 %v9355, %v9353
    %v9600 = vpack.c.b16 %v9358, %v9356
    %v9601 = vpack.c.b16 %v9359, %v9357
    %v9602 = vpack.c.b16 %v9362, %v9360
    %v9603 = vpack.c.b16 %v9363, %v9361
    %v9604 = vpack.c.b16 %v9366, %v9364
    %v9605 = vpack.c.b16 %v9367, %v9365
    %v9606 = vpack.c.b16 %v9370, %v9368
    %v9607 = vpack.c.b16 %v9371, %v9369
    %v9608 = vpack.c.b16 %v9374, %v9372
    %v9609 = vpack.c.b16 %v9375, %v9373
    %v9610 = vpack.c.b16 %v9378, %v9376
    %v9611 = vpack.c.b16 %v9379, %v9377
    %v9612 = vpack.c.b16 %v9382, %v9380
    %v9613 = vpack.c.b16 %v9383, %v9381
    %v9614 = vpack.c.b16 %v9386, %v9384
    %v9615 = vpack.c.b16 %v9387, %v9385
    %v9616 = vpack.c.b16 %v9390, %v9388
    %v9617 = vpack.c.b16 %v9391, %v9389
    %v9618 = vpack.c.b16 %v9394, %v9392
    %v9619 = vpack.c.b16 %v9395, %v9393
    %v9620 = vpack.c.b16 %v9398, %v9396
    %v9621 = vpack.c.b16 %v9399, %v9397
    %v9622 = vpack.c.b16 %v9402, %v9400
    %v9623 = vpack.c.b16 %v9403, %v9401
    %v9624 = vpack.c.b16 %v9406, %v9404
    %v9625 = vpack.c.b16 %v9407, %v9405
    %v9626 = vpack.c.b16 %v9410, %v9408
    %v9627 = vpack.c.b16 %v9411, %v9409
    %v9628 = vpack.c.b16 %v9414, %v9412
    %v9629 = vpack.c.b16 %v9415, %v9413
    %v9630 = vpack.c.b16 %v9418, %v9416
    %v9631 = vpack.c.b16 %v9419, %v9417
    %v9632 = vpack.c.b16 %v9422, %v9420
    %v9633 = vpack.c.b16 %v9423, %v9421
    %v9634 = vpack.c.b16 %v9426, %v9424
    %v9635 = vpack.c.b16 %v9427, %v9425
    %v9636 = vpack.c.b16 %v9430, %v9428
    %v9637 = vpack.c.b16 %v9431, %v9429
    %v9638 = vpack.c.b16 %v9434, %v9432
    %v9639 = vpack.c.b16 %v9435, %v9433
    %v9640 = vpack.c.b16 %v9438, %v9436
    %v9641 = vpack.c.b16 %v9439, %v9437
    %v9642 = vpack.c.b16 %v9442, %v9440
    %v9643 = vpack.c.b16 %v9443, %v9441
    %v9644 = vpack.c.b16 %v9446, %v9444
    %v9645 = vpack.c.b16 %v9447, %v9445
    %v9646 = vpack.c.b16 %v9450, %v9448
    %v9647 = vpack.c.b16 %v9451, %v9449
    %v9648 = vpack.c.b16 %v9454, %v9452
    %v9649 = vpack.c.b16 %v9455, %v9453
    %v9650 = vpack.c.b16 %v9458, %v9456
    %v9651 = vpack.c.b16 %v9459, %v9457
    %v9652 = vpack.c.b16 %v9462, %v9460
    %v9653 = vpack.c.b16 %v9463, %v9461
    %v9654 = vpack.c.b16 %v9466, %v9464
    %v9655 = vpack.c.b16 %v9467, %v9465
    %v9656 = vpack.c.b16 %v9470, %v9468
    %v9657 = vpack.c.b16 %v9471, %v9469
    %v9658 = vpack.c.b16 %v9474, %v9472
    %v9659 = vpack.c.b16 %v9475, %v9473
    %v9660 = vpack.c.b16 %v9478, %v9476
    %v9661 = vpack.c.b16 %v9479, %v9477
    %v9662 = vpack.c.b16 %v9482, %v9480
    %v9663 = vpack.c.b16 %v9483, %v9481
    %v9664 = vpack.c.b16 %v9486, %v9484
    %v9665 = vpack.c.b16 %v9487, %v9485
    %v9666 = vpack.c.b16 %v9490, %v9488
    %v9667 = vpack.c.b16 %v9491, %v9489
    %v9668 = vpack.c.b16 %v9494, %v9492
    %v9669 = vpack.c.b16 %v9495, %v9493
    %v9670 = vpack.c.b16 %v9498, %v9496
    %v9671 = vpack.c.b16 %v9499, %v9497
    %v9672 = vpack.c.b16 %v9502, %v9500
    %v9673 = vpack.c.b16 %v9503, %v9501
    %v9674 = vpack.c.b16 %v9506, %v9504
    %v9675 = vpack.c.b16 %v9507, %v9505
    %v9676 = vpack.c.b16 %v9510, %v9508
    %v9677 = vpack.c.b16 %v9511, %v9509
    %v9678 = vpack.c.b16 %v9514, %v9512
    %v9679 = vpack.c.b16 %v9515, %v9513
    %v9680 = vpack.c.b16 %v9518, %v9516
    %v9681 = vpack.c.b16 %v9519, %v9517
    %v9682 = vpack.c.b16 %v9522, %v9520
    %v9683 = vpack.c.b16 %v9523, %v9521
    %v9684 = vpack.c.b16 %v9526, %v9524
    %v9685 = vpack.c.b16 %v9527, %v9525
    %v9686 = vpack.c.b16 %v9530, %v9528
    %v9687 = vpack.c.b16 %v9531, %v9529
    %v9688 = vpack.c.b16 %v9534, %v9532
    %v9689 = vpack.c.b16 %v9535, %v9533
    %v9690 = vpack.c.b16 %v9538, %v9536
    %v9691 = vpack.c.b16 %v9539, %v9537
    %v9692 = vpack.c.b16 %v9542, %v9540
    %v9693 = vpack.c.b16 %v9543, %v9541
    %v9694 = vpack.c.b16 %v9546, %v9544
    %v9695 = vpack.c.b16 %v9547, %v9545
    %v9696 = vpack.c.b16 %v9550, %v9548
    %v9697 = vpack.c.b16 %v9551, %v9549
    %v9698 = vpack.c.b16 %v9554, %v9552
    %v9699 = vpack.c.b16 %v9555, %v9553
    %v9700 = vpack.c.b16 %v9558, %v9556
    %v9701 = vpack.c.b16 %v9559, %v9557
    %v9702 = vpack.c.b16 %v9562, %v9560
    %v9703 = vpack.c.b16 %v9563, %v9561
    %v9704 = vpack.c.b16 %v9566, %v9564
    %v9705 = vpack.c.b16 %v9567, %v9565
    %v9706 = vpack.c.b16 %v9570, %v9568
    %v9707 = vpack.c.b16 %v9571, %v9569
    %v9708 = vpack.c.b16 %v9574, %v9572
    %v9709 = vpack.c.b16 %v9575, %v9573
    %v9710 = vpack.c.b16 %v9578, %v9576
    %v9711 = vpack.c.b16 %v9579, %v9577
    %v9712 = vpack.c.b16 %v9582, %v9580
    %v9713 = vpack.c.b16 %v9583, %v9581
    %v9714 = vpack.c.b16 %v9586, %v9584
    %v9715 = vpack.c.b16 %v9587, %v9585
    %9844 = vmatprep.subr.bf16.mxu0 %v9603
    %9845 = vmatpush1.bf16.msra.mxu0 %v9602
    %9846 = vmatprep.subr.bf16.mxu0 %v9601
    %9847 = vmatpush1.bf16.msra.mxu0 %v9600
    %9848 = vmatprep.subr.bf16.mxu0 %v9599
    %9849 = vmatpush1.bf16.msra.mxu0 %v9598
    %9850 = vmatprep.subr.bf16.mxu0 %v9597
    %9851 = vmatpush1.bf16.msra.mxu0 %v9596
    %9852 = vmatprep.subr.bf16.mxu0 %v9595
    %9853 = vmatpush1.bf16.msra.mxu0 %v9594
    %9854 = vmatprep.subr.bf16.mxu0 %v9593
    %9855 = vmatpush1.bf16.msra.mxu0 %v9592
    %9856 = vmatprep.subr.bf16.mxu0 %v9591
    %9857 = vmatpush1.bf16.msra.mxu0 %v9590
    %9858 = vmatprep.subr.bf16.mxu0 %v9589
    %9859 = vmatpush1.bf16.msra.mxu0 %v9588
    %9860 = vmatprep.subr.bf16.mxu0 %v9619
    %9861 = vmatpush2.bf16.msra.mxu0 %v9618
    %9862 = vmatprep.subr.bf16.mxu0 %v9617
    %9863 = vmatpush2.bf16.msra.mxu0 %v9616
    %9864 = vmatprep.subr.bf16.mxu0 %v9615
    %9865 = vmatpush2.bf16.msra.mxu0 %v9614
    %9866 = vmatprep.subr.bf16.mxu0 %v9613
    %9867 = vmatpush2.bf16.msra.mxu0 %v9612
    %9868 = vmatprep.subr.bf16.mxu0 %v9611
    %9869 = vmatpush2.bf16.msra.mxu0 %v9610
    %9870 = vmatprep.subr.bf16.mxu0 %v9609
    %9871 = vmatpush2.bf16.msra.mxu0 %v9608
    %9872 = vmatprep.subr.bf16.mxu0 %v9607
    %9873 = vmatpush2.bf16.msra.mxu0 %v9606
    %9874 = vmatprep.subr.bf16.mxu0 %v9605
    %9875 = vmatpush2.bf16.msra.mxu0 %v9604
    %9876 = vmatprep.mubr.bf16.mxu0 %v9001
    %9877 = vmatmul.mubr.bf16.gmra.mxu0 %v9000
    %v9878 = vpop.f32.mrf.mxu0
    %v9879 = vadd.f32 %v9197, %v9878
    %v9880 = vpop.f32.mrf.mxu0
    %v9881 = vadd.f32 %v9201, %v9880
    %v9882 = vpop.f32.mrf.mxu0
    %v9883 = vadd.f32 %v9197, %v9882
    %v9884 = vpop.f32.mrf.mxu0
    %v9885 = vadd.f32 %v9201, %v9884
    %9886 = vmatprep.mubr.bf16.mxu0 %v9009
    %9887 = vmatmul.mubr.bf16.gmra.mxu0 %v9008
    %v9888 = vpop.f32.mrf.mxu0
    %v9889 = vadd.f32 %v9197, %v9888
    %v9890 = vpop.f32.mrf.mxu0
    %v9891 = vadd.f32 %v9201, %v9890
    %v9892 = vpop.f32.mrf.mxu0
    %v9893 = vadd.f32 %v9197, %v9892
    %v9894 = vpop.f32.mrf.mxu0
    %v9895 = vadd.f32 %v9201, %v9894
    %9896 = vmatprep.mubr.bf16.mxu0 %v9017
    %9897 = vmatmul.mubr.bf16.gmra.mxu0 %v9016
    %v9898 = vpop.f32.mrf.mxu0
    %v9899 = vadd.f32 %v9197, %v9898
    %v9900 = vpop.f32.mrf.mxu0
    %v9901 = vadd.f32 %v9201, %v9900
    %v9902 = vpop.f32.mrf.mxu0
    %v9903 = vadd.f32 %v9197, %v9902
    %v9904 = vpop.f32.mrf.mxu0
    %v9905 = vadd.f32 %v9201, %v9904
    %9906 = vmatprep.mubr.bf16.mxu0 %v9025
    %9907 = vmatmul.mubr.bf16.gmra.mxu0 %v9024
    %v9908 = vpop.f32.mrf.mxu0
    %v9909 = vadd.f32 %v9197, %v9908
    %v9910 = vpop.f32.mrf.mxu0
    %v9911 = vadd.f32 %v9201, %v9910
    %v9912 = vpop.f32.mrf.mxu0
    %v9913 = vadd.f32 %v9197, %v9912
    %v9914 = vpop.f32.mrf.mxu0
    %v9915 = vadd.f32 %v9201, %v9914
    %9916 = vmatprep.mubr.bf16.mxu0 %v9033
    %9917 = vmatmul.mubr.bf16.gmra.mxu0 %v9032
    %v9918 = vpop.f32.mrf.mxu0
    %v9919 = vadd.f32 %v9197, %v9918
    %v9920 = vpop.f32.mrf.mxu0
    %v9921 = vadd.f32 %v9201, %v9920
    %v9922 = vpop.f32.mrf.mxu0
    %v9923 = vadd.f32 %v9197, %v9922
    %v9924 = vpop.f32.mrf.mxu0
    %v9925 = vadd.f32 %v9201, %v9924
    %9926 = vmatprep.mubr.bf16.mxu0 %v9041
    %9927 = vmatmul.mubr.bf16.gmra.mxu0 %v9040
    %v9928 = vpop.f32.mrf.mxu0
    %v9929 = vadd.f32 %v9197, %v9928
    %v9930 = vpop.f32.mrf.mxu0
    %v9931 = vadd.f32 %v9201, %v9930
    %v9932 = vpop.f32.mrf.mxu0
    %v9933 = vadd.f32 %v9197, %v9932
    %v9934 = vpop.f32.mrf.mxu0
    %v9935 = vadd.f32 %v9201, %v9934
    %9936 = vmatprep.mubr.bf16.mxu0 %v9049
    %9937 = vmatmul.mubr.bf16.gmra.mxu0 %v9048
    %v9938 = vpop.f32.mrf.mxu0
    %v9939 = vadd.f32 %v9197, %v9938
    %v9940 = vpop.f32.mrf.mxu0
    %v9941 = vadd.f32 %v9201, %v9940
    %v9942 = vpop.f32.mrf.mxu0
    %v9943 = vadd.f32 %v9197, %v9942
    %v9944 = vpop.f32.mrf.mxu0
    %v9945 = vadd.f32 %v9201, %v9944
    %9946 = vmatprep.mubr.bf16.mxu0 %v9057
    %9947 = vmatmul.mubr.bf16.gmra.mxu0 %v9056
    %v9948 = vpop.f32.mrf.mxu0
    %v9949 = vadd.f32 %v9197, %v9948
    %v9950 = vpop.f32.mrf.mxu0
    %v9951 = vadd.f32 %v9201, %v9950
    %v9952 = vpop.f32.mrf.mxu0
    %v9953 = vadd.f32 %v9197, %v9952
    %v9954 = vpop.f32.mrf.mxu0
    %v9955 = vadd.f32 %v9201, %v9954
    %9956 = vdwg.mxu0
    %9957 = vmatprep.subr.bf16.mxu0 %v9635
    %9958 = vmatpush1.bf16.msra.mxu0 %v9634
    %9959 = vmatprep.subr.bf16.mxu0 %v9633
    %9960 = vmatpush1.bf16.msra.mxu0 %v9632
    %9961 = vmatprep.subr.bf16.mxu0 %v9631
    %9962 = vmatpush1.bf16.msra.mxu0 %v9630
    %9963 = vmatprep.subr.bf16.mxu0 %v9629
    %9964 = vmatpush1.bf16.msra.mxu0 %v9628
    %9965 = vmatprep.subr.bf16.mxu0 %v9627
    %9966 = vmatpush1.bf16.msra.mxu0 %v9626
    %9967 = vmatprep.subr.bf16.mxu0 %v9625
    %9968 = vmatpush1.bf16.msra.mxu0 %v9624
    %9969 = vmatprep.subr.bf16.mxu0 %v9623
    %9970 = vmatpush1.bf16.msra.mxu0 %v9622
    %9971 = vmatprep.subr.bf16.mxu0 %v9621
    %9972 = vmatpush1.bf16.msra.mxu0 %v9620
    %9973 = vmatprep.subr.bf16.mxu0 %v9651
    %9974 = vmatpush2.bf16.msra.mxu0 %v9650
    %9975 = vmatprep.subr.bf16.mxu0 %v9649
    %9976 = vmatpush2.bf16.msra.mxu0 %v9648
    %9977 = vmatprep.subr.bf16.mxu0 %v9647
    %9978 = vmatpush2.bf16.msra.mxu0 %v9646
    %9979 = vmatprep.subr.bf16.mxu0 %v9645
    %9980 = vmatpush2.bf16.msra.mxu0 %v9644
    %9981 = vmatprep.subr.bf16.mxu0 %v9643
    %9982 = vmatpush2.bf16.msra.mxu0 %v9642
    %9983 = vmatprep.subr.bf16.mxu0 %v9641
    %9984 = vmatpush2.bf16.msra.mxu0 %v9640
    %9985 = vmatprep.subr.bf16.mxu0 %v9639
    %9986 = vmatpush2.bf16.msra.mxu0 %v9638
    %9987 = vmatprep.subr.bf16.mxu0 %v9637
    %9988 = vmatpush2.bf16.msra.mxu0 %v9636
    %9989 = vmatprep.mubr.bf16.mxu0 %v9003
    %9990 = vmatmul.mubr.bf16.gmra.mxu0 %v9002
    %v9991 = vpop.f32.mrf.mxu0
    %v9992 = vadd.f32 %v9879, %v9991
    %v9993 = vpop.f32.mrf.mxu0
    %v9994 = vadd.f32 %v9881, %v9993
    %v9995 = vpop.f32.mrf.mxu0
    %v9996 = vadd.f32 %v9883, %v9995
    %v9997 = vpop.f32.mrf.mxu0
    %v9998 = vadd.f32 %v9885, %v9997
    %9999 = vmatprep.mubr.bf16.mxu0 %v9011
    %10000 = vmatmul.mubr.bf16.gmra.mxu0 %v9010
    %v10001 = vpop.f32.mrf.mxu0
    %v10002 = vadd.f32 %v9889, %v10001
    %v10003 = vpop.f32.mrf.mxu0
    %v10004 = vadd.f32 %v9891, %v10003
    %v10005 = vpop.f32.mrf.mxu0
    %v10006 = vadd.f32 %v9893, %v10005
    %v10007 = vpop.f32.mrf.mxu0
    %v10008 = vadd.f32 %v9895, %v10007
    %10009 = vmatprep.mubr.bf16.mxu0 %v9019
    %10010 = vmatmul.mubr.bf16.gmra.mxu0 %v9018
    %v10011 = vpop.f32.mrf.mxu0
    %v10012 = vadd.f32 %v9899, %v10011
    %v10013 = vpop.f32.mrf.mxu0
    %v10014 = vadd.f32 %v9901, %v10013
    %v10015 = vpop.f32.mrf.mxu0
    %v10016 = vadd.f32 %v9903, %v10015
    %v10017 = vpop.f32.mrf.mxu0
    %v10018 = vadd.f32 %v9905, %v10017
    %10019 = vmatprep.mubr.bf16.mxu0 %v9027
    %10020 = vmatmul.mubr.bf16.gmra.mxu0 %v9026
    %v10021 = vpop.f32.mrf.mxu0
    %v10022 = vadd.f32 %v9909, %v10021
    %v10023 = vpop.f32.mrf.mxu0
    %v10024 = vadd.f32 %v9911, %v10023
    %v10025 = vpop.f32.mrf.mxu0
    %v10026 = vadd.f32 %v9913, %v10025
    %v10027 = vpop.f32.mrf.mxu0
    %v10028 = vadd.f32 %v9915, %v10027
    %10029 = vmatprep.mubr.bf16.mxu0 %v9035
    %10030 = vmatmul.mubr.bf16.gmra.mxu0 %v9034
    %v10031 = vpop.f32.mrf.mxu0
    %v10032 = vadd.f32 %v9919, %v10031
    %v10033 = vpop.f32.mrf.mxu0
    %v10034 = vadd.f32 %v9921, %v10033
    %v10035 = vpop.f32.mrf.mxu0
    %v10036 = vadd.f32 %v9923, %v10035
    %v10037 = vpop.f32.mrf.mxu0
    %v10038 = vadd.f32 %v9925, %v10037
    %10039 = vmatprep.mubr.bf16.mxu0 %v9043
    %10040 = vmatmul.mubr.bf16.gmra.mxu0 %v9042
    %v10041 = vpop.f32.mrf.mxu0
    %v10042 = vadd.f32 %v9929, %v10041
    %v10043 = vpop.f32.mrf.mxu0
    %v10044 = vadd.f32 %v9931, %v10043
    %v10045 = vpop.f32.mrf.mxu0
    %v10046 = vadd.f32 %v9933, %v10045
    %v10047 = vpop.f32.mrf.mxu0
    %v10048 = vadd.f32 %v9935, %v10047
    %10049 = vmatprep.mubr.bf16.mxu0 %v9051
    %10050 = vmatmul.mubr.bf16.gmra.mxu0 %v9050
    %v10051 = vpop.f32.mrf.mxu0
    %v10052 = vadd.f32 %v9939, %v10051
    %v10053 = vpop.f32.mrf.mxu0
    %v10054 = vadd.f32 %v9941, %v10053
    %v10055 = vpop.f32.mrf.mxu0
    %v10056 = vadd.f32 %v9943, %v10055
    %v10057 = vpop.f32.mrf.mxu0
    %v10058 = vadd.f32 %v9945, %v10057
    %10059 = vmatprep.mubr.bf16.mxu0 %v9059
    %10060 = vmatmul.mubr.bf16.gmra.mxu0 %v9058
    %v10061 = vpop.f32.mrf.mxu0
    %v10062 = vadd.f32 %v9949, %v10061
    %v10063 = vpop.f32.mrf.mxu0
    %v10064 = vadd.f32 %v9951, %v10063
    %v10065 = vpop.f32.mrf.mxu0
    %v10066 = vadd.f32 %v9953, %v10065
    %v10067 = vpop.f32.mrf.mxu0
    %v10068 = vadd.f32 %v9955, %v10067
    %10069 = vdwg.mxu0
    %10070 = vmatprep.subr.bf16.mxu0 %v9667
    %10071 = vmatpush1.bf16.msra.mxu0 %v9666
    %10072 = vmatprep.subr.bf16.mxu0 %v9665
    %10073 = vmatpush1.bf16.msra.mxu0 %v9664
    %10074 = vmatprep.subr.bf16.mxu0 %v9663
    %10075 = vmatpush1.bf16.msra.mxu0 %v9662
    %10076 = vmatprep.subr.bf16.mxu0 %v9661
    %10077 = vmatpush1.bf16.msra.mxu0 %v9660
    %10078 = vmatprep.subr.bf16.mxu0 %v9659
    %10079 = vmatpush1.bf16.msra.mxu0 %v9658
    %10080 = vmatprep.subr.bf16.mxu0 %v9657
    %10081 = vmatpush1.bf16.msra.mxu0 %v9656
    %10082 = vmatprep.subr.bf16.mxu0 %v9655
    %10083 = vmatpush1.bf16.msra.mxu0 %v9654
    %10084 = vmatprep.subr.bf16.mxu0 %v9653
    %10085 = vmatpush1.bf16.msra.mxu0 %v9652
    %10086 = vmatprep.subr.bf16.mxu0 %v9683
    %10087 = vmatpush2.bf16.msra.mxu0 %v9682
    %10088 = vmatprep.subr.bf16.mxu0 %v9681
    %10089 = vmatpush2.bf16.msra.mxu0 %v9680
    %10090 = vmatprep.subr.bf16.mxu0 %v9679
    %10091 = vmatpush2.bf16.msra.mxu0 %v9678
    %10092 = vmatprep.subr.bf16.mxu0 %v9677
    %10093 = vmatpush2.bf16.msra.mxu0 %v9676
    %10094 = vmatprep.subr.bf16.mxu0 %v9675
    %10095 = vmatpush2.bf16.msra.mxu0 %v9674
    %10096 = vmatprep.subr.bf16.mxu0 %v9673
    %10097 = vmatpush2.bf16.msra.mxu0 %v9672
    %10098 = vmatprep.subr.bf16.mxu0 %v9671
    %10099 = vmatpush2.bf16.msra.mxu0 %v9670
    %10100 = vmatprep.subr.bf16.mxu0 %v9669
    %10101 = vmatpush2.bf16.msra.mxu0 %v9668
    %10102 = vmatprep.mubr.bf16.mxu0 %v9005
    %10103 = vmatmul.mubr.bf16.gmra.mxu0 %v9004
    %v10104 = vpop.f32.mrf.mxu0
    %v10105 = vadd.f32 %v9992, %v10104
    %v10106 = vpop.f32.mrf.mxu0
    %v10107 = vadd.f32 %v9994, %v10106
    %v10108 = vpop.f32.mrf.mxu0
    %v10109 = vadd.f32 %v9996, %v10108
    %v10110 = vpop.f32.mrf.mxu0
    %v10111 = vadd.f32 %v9998, %v10110
    %10112 = vmatprep.mubr.bf16.mxu0 %v9013
    %10113 = vmatmul.mubr.bf16.gmra.mxu0 %v9012
    %v10114 = vpop.f32.mrf.mxu0
    %v10115 = vadd.f32 %v10002, %v10114
    %v10116 = vpop.f32.mrf.mxu0
    %v10117 = vadd.f32 %v10004, %v10116
    %v10118 = vpop.f32.mrf.mxu0
    %v10119 = vadd.f32 %v10006, %v10118
    %v10120 = vpop.f32.mrf.mxu0
    %v10121 = vadd.f32 %v10008, %v10120
    %10122 = vmatprep.mubr.bf16.mxu0 %v9021
    %10123 = vmatmul.mubr.bf16.gmra.mxu0 %v9020
    %v10124 = vpop.f32.mrf.mxu0
    %v10125 = vadd.f32 %v10012, %v10124
    %v10126 = vpop.f32.mrf.mxu0
    %v10127 = vadd.f32 %v10014, %v10126
    %v10128 = vpop.f32.mrf.mxu0
    %v10129 = vadd.f32 %v10016, %v10128
    %v10130 = vpop.f32.mrf.mxu0
    %v10131 = vadd.f32 %v10018, %v10130
    %10132 = vmatprep.mubr.bf16.mxu0 %v9029
    %10133 = vmatmul.mubr.bf16.gmra.mxu0 %v9028
    %v10134 = vpop.f32.mrf.mxu0
    %v10135 = vadd.f32 %v10022, %v10134
    %v10136 = vpop.f32.mrf.mxu0
    %v10137 = vadd.f32 %v10024, %v10136
    %v10138 = vpop.f32.mrf.mxu0
    %v10139 = vadd.f32 %v10026, %v10138
    %v10140 = vpop.f32.mrf.mxu0
    %v10141 = vadd.f32 %v10028, %v10140
    %10142 = vmatprep.mubr.bf16.mxu0 %v9037
    %10143 = vmatmul.mubr.bf16.gmra.mxu0 %v9036
    %v10144 = vpop.f32.mrf.mxu0
    %v10145 = vadd.f32 %v10032, %v10144
    %v10146 = vpop.f32.mrf.mxu0
    %v10147 = vadd.f32 %v10034, %v10146
    %v10148 = vpop.f32.mrf.mxu0
    %v10149 = vadd.f32 %v10036, %v10148
    %v10150 = vpop.f32.mrf.mxu0
    %v10151 = vadd.f32 %v10038, %v10150
    %10152 = vmatprep.mubr.bf16.mxu0 %v9045
    %10153 = vmatmul.mubr.bf16.gmra.mxu0 %v9044
    %v10154 = vpop.f32.mrf.mxu0
    %v10155 = vadd.f32 %v10042, %v10154
    %v10156 = vpop.f32.mrf.mxu0
    %v10157 = vadd.f32 %v10044, %v10156
    %v10158 = vpop.f32.mrf.mxu0
    %v10159 = vadd.f32 %v10046, %v10158
    %v10160 = vpop.f32.mrf.mxu0
    %v10161 = vadd.f32 %v10048, %v10160
    %10162 = vmatprep.mubr.bf16.mxu0 %v9053
    %10163 = vmatmul.mubr.bf16.gmra.mxu0 %v9052
    %v10164 = vpop.f32.mrf.mxu0
    %v10165 = vadd.f32 %v10052, %v10164
    %v10166 = vpop.f32.mrf.mxu0
    %v10167 = vadd.f32 %v10054, %v10166
    %v10168 = vpop.f32.mrf.mxu0
    %v10169 = vadd.f32 %v10056, %v10168
    %v10170 = vpop.f32.mrf.mxu0
    %v10171 = vadd.f32 %v10058, %v10170
    %10172 = vmatprep.mubr.bf16.mxu0 %v9061
    %10173 = vmatmul.mubr.bf16.gmra.mxu0 %v9060
    %v10174 = vpop.f32.mrf.mxu0
    %v10175 = vadd.f32 %v10062, %v10174
    %v10176 = vpop.f32.mrf.mxu0
    %v10177 = vadd.f32 %v10064, %v10176
    %v10178 = vpop.f32.mrf.mxu0
    %v10179 = vadd.f32 %v10066, %v10178
    %v10180 = vpop.f32.mrf.mxu0
    %v10181 = vadd.f32 %v10068, %v10180
    %10182 = vdwg.mxu0
    %10183 = vmatprep.subr.bf16.mxu0 %v9699
    %10184 = vmatpush1.bf16.msra.mxu0 %v9698
    %10185 = vmatprep.subr.bf16.mxu0 %v9697
    %10186 = vmatpush1.bf16.msra.mxu0 %v9696
    %10187 = vmatprep.subr.bf16.mxu0 %v9695
    %10188 = vmatpush1.bf16.msra.mxu0 %v9694
    %10189 = vmatprep.subr.bf16.mxu0 %v9693
    %10190 = vmatpush1.bf16.msra.mxu0 %v9692
    %10191 = vmatprep.subr.bf16.mxu0 %v9691
    %10192 = vmatpush1.bf16.msra.mxu0 %v9690
    %10193 = vmatprep.subr.bf16.mxu0 %v9689
    %10194 = vmatpush1.bf16.msra.mxu0 %v9688
    %10195 = vmatprep.subr.bf16.mxu0 %v9687
    %10196 = vmatpush1.bf16.msra.mxu0 %v9686
    %10197 = vmatprep.subr.bf16.mxu0 %v9685
    %10198 = vmatpush1.bf16.msra.mxu0 %v9684
    %10199 = vmatprep.subr.bf16.mxu0 %v9715
    %10200 = vmatpush2.bf16.msra.mxu0 %v9714
    %10201 = vmatprep.subr.bf16.mxu0 %v9713
    %10202 = vmatpush2.bf16.msra.mxu0 %v9712
    %10203 = vmatprep.subr.bf16.mxu0 %v9711
    %10204 = vmatpush2.bf16.msra.mxu0 %v9710
    %10205 = vmatprep.subr.bf16.mxu0 %v9709
    %10206 = vmatpush2.bf16.msra.mxu0 %v9708
    %10207 = vmatprep.subr.bf16.mxu0 %v9707
    %10208 = vmatpush2.bf16.msra.mxu0 %v9706
    %10209 = vmatprep.subr.bf16.mxu0 %v9705
    %10210 = vmatpush2.bf16.msra.mxu0 %v9704
    %10211 = vmatprep.subr.bf16.mxu0 %v9703
    %10212 = vmatpush2.bf16.msra.mxu0 %v9702
    %10213 = vmatprep.subr.bf16.mxu0 %v9701
    %10214 = vmatpush2.bf16.msra.mxu0 %v9700
    %10215 = vmatprep.mubr.bf16.mxu0 %v9007
    %10216 = vmatmul.mubr.bf16.gmra.mxu0 %v9006
    %v10217 = vpop.f32.mrf.mxu0
    %v10218 = vadd.f32 %v10105, %v10217
    %v10219 = vpop.f32.mrf.mxu0
    %v10220 = vadd.f32 %v10107, %v10219
    %v10221 = vpop.f32.mrf.mxu0
    %v10222 = vadd.f32 %v10109, %v10221
    %v10223 = vpop.f32.mrf.mxu0
    %v10224 = vadd.f32 %v10111, %v10223
    %10225 = vmatprep.mubr.bf16.mxu0 %v9015
    %10226 = vmatmul.mubr.bf16.gmra.mxu0 %v9014
    %v10227 = vpop.f32.mrf.mxu0
    %v10228 = vadd.f32 %v10115, %v10227
    %v10229 = vpop.f32.mrf.mxu0
    %v10230 = vadd.f32 %v10117, %v10229
    %v10231 = vpop.f32.mrf.mxu0
    %v10232 = vadd.f32 %v10119, %v10231
    %v10233 = vpop.f32.mrf.mxu0
    %v10234 = vadd.f32 %v10121, %v10233
    %10235 = vmatprep.mubr.bf16.mxu0 %v9023
    %10236 = vmatmul.mubr.bf16.gmra.mxu0 %v9022
    %v10237 = vpop.f32.mrf.mxu0
    %v10238 = vadd.f32 %v10125, %v10237
    %v10239 = vpop.f32.mrf.mxu0
    %v10240 = vadd.f32 %v10127, %v10239
    %v10241 = vpop.f32.mrf.mxu0
    %v10242 = vadd.f32 %v10129, %v10241
    %v10243 = vpop.f32.mrf.mxu0
    %v10244 = vadd.f32 %v10131, %v10243
    %10245 = vmatprep.mubr.bf16.mxu0 %v9031
    %10246 = vmatmul.mubr.bf16.gmra.mxu0 %v9030
    %v10247 = vpop.f32.mrf.mxu0
    %v10248 = vadd.f32 %v10135, %v10247
    %v10249 = vpop.f32.mrf.mxu0
    %v10250 = vadd.f32 %v10137, %v10249
    %v10251 = vpop.f32.mrf.mxu0
    %v10252 = vadd.f32 %v10139, %v10251
    %v10253 = vpop.f32.mrf.mxu0
    %v10254 = vadd.f32 %v10141, %v10253
    %10255 = vmatprep.mubr.bf16.mxu0 %v9039
    %10256 = vmatmul.mubr.bf16.gmra.mxu0 %v9038
    %v10257 = vpop.f32.mrf.mxu0
    %v10258 = vadd.f32 %v10145, %v10257
    %v10259 = vpop.f32.mrf.mxu0
    %v10260 = vadd.f32 %v10147, %v10259
    %v10261 = vpop.f32.mrf.mxu0
    %v10262 = vadd.f32 %v10149, %v10261
    %v10263 = vpop.f32.mrf.mxu0
    %v10264 = vadd.f32 %v10151, %v10263
    %10265 = vmatprep.mubr.bf16.mxu0 %v9047
    %10266 = vmatmul.mubr.bf16.gmra.mxu0 %v9046
    %v10267 = vpop.f32.mrf.mxu0
    %v10268 = vadd.f32 %v10155, %v10267
    %v10269 = vpop.f32.mrf.mxu0
    %v10270 = vadd.f32 %v10157, %v10269
    %v10271 = vpop.f32.mrf.mxu0
    %v10272 = vadd.f32 %v10159, %v10271
    %v10273 = vpop.f32.mrf.mxu0
    %v10274 = vadd.f32 %v10161, %v10273
    %10275 = vmatprep.mubr.bf16.mxu0 %v9055
    %10276 = vmatmul.mubr.bf16.gmra.mxu0 %v9054
    %v10277 = vpop.f32.mrf.mxu0
    %v10278 = vadd.f32 %v10165, %v10277
    %v10279 = vpop.f32.mrf.mxu0
    %v10280 = vadd.f32 %v10167, %v10279
    %v10281 = vpop.f32.mrf.mxu0
    %v10282 = vadd.f32 %v10169, %v10281
    %v10283 = vpop.f32.mrf.mxu0
    %v10284 = vadd.f32 %v10171, %v10283
    %10285 = vmatprep.mubr.bf16.mxu0 %v9063
    %10286 = vmatmul.mubr.bf16.gmra.mxu0 %v9062
    %v10287 = vpop.f32.mrf.mxu0
    %v10288 = vadd.f32 %v10175, %v10287
    %v10289 = vpop.f32.mrf.mxu0
    %v10290 = vadd.f32 %v10177, %v10289
    %v10291 = vpop.f32.mrf.mxu0
    %v10292 = vadd.f32 %v10179, %v10291
    %v10293 = vpop.f32.mrf.mxu0
    %v10294 = vadd.f32 %v10181, %v10293
    %10295 = vdwg.mxu0
    %v10296 = vmax.f32 %v10218, 0.0
    %v10297 = vmax.f32 %v10220, 0.0
    %v10298 = vmax.f32 %v10222, 0.0
    %v10299 = vmax.f32 %v10224, 0.0
    %v10300 = vmax.f32 %v10228, 0.0
    %v10301 = vmax.f32 %v10230, 0.0
    %v10302 = vmax.f32 %v10232, 0.0
    %v10303 = vmax.f32 %v10234, 0.0
    %v10304 = vmax.f32 %v10238, 0.0
    %v10305 = vmax.f32 %v10240, 0.0
    %v10306 = vmax.f32 %v10242, 0.0
    %v10307 = vmax.f32 %v10244, 0.0
    %v10308 = vmax.f32 %v10248, 0.0
    %v10309 = vmax.f32 %v10250, 0.0
    %v10310 = vmax.f32 %v10252, 0.0
    %v10311 = vmax.f32 %v10254, 0.0
    %v10312 = vmax.f32 %v10258, 0.0
    %v10313 = vmax.f32 %v10260, 0.0
    %v10314 = vmax.f32 %v10262, 0.0
    %v10315 = vmax.f32 %v10264, 0.0
    %v10316 = vmax.f32 %v10268, 0.0
    %v10317 = vmax.f32 %v10270, 0.0
    %v10318 = vmax.f32 %v10272, 0.0
    %v10319 = vmax.f32 %v10274, 0.0
    %v10320 = vmax.f32 %v10278, 0.0
    %v10321 = vmax.f32 %v10280, 0.0
    %v10322 = vmax.f32 %v10282, 0.0
    %v10323 = vmax.f32 %v10284, 0.0
    %v10324 = vmax.f32 %v10288, 0.0
    %v10325 = vmax.f32 %v10290, 0.0
    %v10326 = vmax.f32 %v10292, 0.0
    %v10327 = vmax.f32 %v10294, 0.0
    %v10328 = vpack.c.bf16 %v10298, %v10296
    %v10329 = vpack.c.bf16 %v10299, %v10297
    %v10330 = vpack.c.bf16 %v10302, %v10300
    %v10331 = vpack.c.bf16 %v10303, %v10301
    %v10332 = vpack.c.bf16 %v10306, %v10304
    %v10333 = vpack.c.bf16 %v10307, %v10305
    %v10334 = vpack.c.bf16 %v10310, %v10308
    %v10335 = vpack.c.bf16 %v10311, %v10309
    %v10336 = vpack.c.bf16 %v10314, %v10312
    %v10337 = vpack.c.bf16 %v10315, %v10313
    %v10338 = vpack.c.bf16 %v10318, %v10316
    %v10339 = vpack.c.bf16 %v10319, %v10317
    %v10340 = vpack.c.bf16 %v10322, %v10320
    %v10341 = vpack.c.bf16 %v10323, %v10321
    %v10342 = vpack.c.bf16 %v10326, %v10324
    %v10343 = vpack.c.bf16 %v10327, %v10325
    %v10344 = vld [vmem:[#allocation12] sm:$0xff]
    %v10345 = vld [vmem:[#allocation12 + $0x8] sm:$0xff]
    %v10346 = vld [vmem:[#allocation12 + $0x10] sm:$0xff]
    %v10347 = vld [vmem:[#allocation12 + $0x18] sm:$0xff]
    %v10348 = vld [vmem:[#allocation12 + $0x20] sm:$0xff]
    %v10349 = vld [vmem:[#allocation12 + $0x28] sm:$0xff]
    %v10350 = vld [vmem:[#allocation12 + $0x30] sm:$0xff]
    %v10351 = vld [vmem:[#allocation12 + $0x38] sm:$0xff]
    %v10352 = vld [vmem:[#allocation12 + $0x40] sm:$0xff]
    %v10353 = vld [vmem:[#allocation12 + $0x48] sm:$0xff]
    %v10354 = vld [vmem:[#allocation12 + $0x50] sm:$0xff]
    %v10355 = vld [vmem:[#allocation12 + $0x58] sm:$0xff]
    %v10356 = vld [vmem:[#allocation12 + $0x60] sm:$0xff]
    %v10357 = vld [vmem:[#allocation12 + $0x68] sm:$0xff]
    %v10358 = vld [vmem:[#allocation12 + $0x70] sm:$0xff]
    %v10359 = vld [vmem:[#allocation12 + $0x78] sm:$0xff]
    %v10360 = vld [vmem:[#allocation12 + $0x80] sm:$0xff]
    %v10361 = vld [vmem:[#allocation12 + $0x88] sm:$0xff]
    %v10362 = vld [vmem:[#allocation12 + $0x90] sm:$0xff]
    %v10363 = vld [vmem:[#allocation12 + $0x98] sm:$0xff]
    %v10364 = vld [vmem:[#allocation12 + $0xa0] sm:$0xff]
    %v10365 = vld [vmem:[#allocation12 + $0xa8] sm:$0xff]
    %v10366 = vld [vmem:[#allocation12 + $0xb0] sm:$0xff]
    %v10367 = vld [vmem:[#allocation12 + $0xb8] sm:$0xff]
    %v10368 = vld [vmem:[#allocation12 + $0xc0] sm:$0xff]
    %v10369 = vld [vmem:[#allocation12 + $0xc8] sm:$0xff]
    %v10370 = vld [vmem:[#allocation12 + $0xd0] sm:$0xff]
    %v10371 = vld [vmem:[#allocation12 + $0xd8] sm:$0xff]
    %v10372 = vld [vmem:[#allocation12 + $0xe0] sm:$0xff]
    %v10373 = vld [vmem:[#allocation12 + $0xe8] sm:$0xff]
    %v10374 = vld [vmem:[#allocation12 + $0xf0] sm:$0xff]
    %v10375 = vld [vmem:[#allocation12 + $0xf8] sm:$0xff]
    %v10376 = vld [vmem:[#allocation13] sm:$0x3]
    %v10378 = vlaneseq
    %v10379 = vshrl.u32 %v10378, 7
    %v10380 = vsub.s32 0, %v10379
    %v10381 = vrot.slane %v10376, %v10380
    %v10382 = vlaneseq
    %v10383 = vshrl.u32 %v10382, 7
    %v10384 = vsub.s32 1, %v10383
    %v10385 = vrot.slane %v10376, %v10384
    %v10420 = vunpack.c.l.b16 %v10344
    %v10421 = vunpack.c.h.b16 %v10344
    %v10422 = vunpack.c.l.b16 %v10345
    %v10423 = vunpack.c.h.b16 %v10345
    %v10424 = vunpack.c.l.b16 %v10346
    %v10425 = vunpack.c.h.b16 %v10346
    %v10426 = vunpack.c.l.b16 %v10347
    %v10427 = vunpack.c.h.b16 %v10347
    %v10428 = vunpack.c.l.b16 %v10348
    %v10429 = vunpack.c.h.b16 %v10348
    %v10430 = vunpack.c.l.b16 %v10349
    %v10431 = vunpack.c.h.b16 %v10349
    %v10432 = vunpack.c.l.b16 %v10350
    %v10433 = vunpack.c.h.b16 %v10350
    %v10434 = vunpack.c.l.b16 %v10351
    %v10435 = vunpack.c.h.b16 %v10351
    %v10436 = vunpack.c.l.b16 %v10352
    %v10437 = vunpack.c.h.b16 %v10352
    %v10438 = vunpack.c.l.b16 %v10353
    %v10439 = vunpack.c.h.b16 %v10353
    %v10440 = vunpack.c.l.b16 %v10354
    %v10441 = vunpack.c.h.b16 %v10354
    %v10442 = vunpack.c.l.b16 %v10355
    %v10443 = vunpack.c.h.b16 %v10355
    %v10444 = vunpack.c.l.b16 %v10356
    %v10445 = vunpack.c.h.b16 %v10356
    %v10446 = vunpack.c.l.b16 %v10357
    %v10447 = vunpack.c.h.b16 %v10357
    %v10448 = vunpack.c.l.b16 %v10358
    %v10449 = vunpack.c.h.b16 %v10358
    %v10450 = vunpack.c.l.b16 %v10359
    %v10451 = vunpack.c.h.b16 %v10359
    %v10452 = vunpack.c.l.b16 %v10360
    %v10453 = vunpack.c.h.b16 %v10360
    %v10454 = vunpack.c.l.b16 %v10361
    %v10455 = vunpack.c.h.b16 %v10361
    %v10456 = vunpack.c.l.b16 %v10362
    %v10457 = vunpack.c.h.b16 %v10362
    %v10458 = vunpack.c.l.b16 %v10363
    %v10459 = vunpack.c.h.b16 %v10363
    %v10460 = vunpack.c.l.b16 %v10364
    %v10461 = vunpack.c.h.b16 %v10364
    %v10462 = vunpack.c.l.b16 %v10365
    %v10463 = vunpack.c.h.b16 %v10365
    %v10464 = vunpack.c.l.b16 %v10366
    %v10465 = vunpack.c.h.b16 %v10366
    %v10466 = vunpack.c.l.b16 %v10367
    %v10467 = vunpack.c.h.b16 %v10367
    %v10468 = vunpack.c.l.b16 %v10368
    %v10469 = vunpack.c.h.b16 %v10368
    %v10470 = vunpack.c.l.b16 %v10369
    %v10471 = vunpack.c.h.b16 %v10369
    %v10472 = vunpack.c.l.b16 %v10370
    %v10473 = vunpack.c.h.b16 %v10370
    %v10474 = vunpack.c.l.b16 %v10371
    %v10475 = vunpack.c.h.b16 %v10371
    %v10476 = vunpack.c.l.b16 %v10372
    %v10477 = vunpack.c.h.b16 %v10372
    %v10478 = vunpack.c.l.b16 %v10373
    %v10479 = vunpack.c.h.b16 %v10373
    %v10480 = vunpack.c.l.b16 %v10374
    %v10481 = vunpack.c.h.b16 %v10374
    %v10482 = vunpack.c.l.b16 %v10375
    %v10483 = vunpack.c.h.b16 %v10375
    %v10484 = vpack.c.b16 %v10422, %v10420
    %v10485 = vpack.c.b16 %v10423, %v10421
    %v10486 = vpack.c.b16 %v10426, %v10424
    %v10487 = vpack.c.b16 %v10427, %v10425
    %v10488 = vpack.c.b16 %v10430, %v10428
    %v10489 = vpack.c.b16 %v10431, %v10429
    %v10490 = vpack.c.b16 %v10434, %v10432
    %v10491 = vpack.c.b16 %v10435, %v10433
    %v10492 = vpack.c.b16 %v10438, %v10436
    %v10493 = vpack.c.b16 %v10439, %v10437
    %v10494 = vpack.c.b16 %v10442, %v10440
    %v10495 = vpack.c.b16 %v10443, %v10441
    %v10496 = vpack.c.b16 %v10446, %v10444
    %v10497 = vpack.c.b16 %v10447, %v10445
    %v10498 = vpack.c.b16 %v10450, %v10448
    %v10499 = vpack.c.b16 %v10451, %v10449
    %v10500 = vpack.c.b16 %v10454, %v10452
    %v10501 = vpack.c.b16 %v10455, %v10453
    %v10502 = vpack.c.b16 %v10458, %v10456
    %v10503 = vpack.c.b16 %v10459, %v10457
    %v10504 = vpack.c.b16 %v10462, %v10460
    %v10505 = vpack.c.b16 %v10463, %v10461
    %v10506 = vpack.c.b16 %v10466, %v10464
    %v10507 = vpack.c.b16 %v10467, %v10465
    %v10508 = vpack.c.b16 %v10470, %v10468
    %v10509 = vpack.c.b16 %v10471, %v10469
    %v10510 = vpack.c.b16 %v10474, %v10472
    %v10511 = vpack.c.b16 %v10475, %v10473
    %v10512 = vpack.c.b16 %v10478, %v10476
    %v10513 = vpack.c.b16 %v10479, %v10477
    %v10514 = vpack.c.b16 %v10482, %v10480
    %v10515 = vpack.c.b16 %v10483, %v10481
    %10548 = vmatprep.subr.bf16.mxu0 %v10499
    %10549 = vmatpush1.bf16.msra.mxu0 %v10498
    %10550 = vmatprep.subr.bf16.mxu0 %v10497
    %10551 = vmatpush1.bf16.msra.mxu0 %v10496
    %10552 = vmatprep.subr.bf16.mxu0 %v10495
    %10553 = vmatpush1.bf16.msra.mxu0 %v10494
    %10554 = vmatprep.subr.bf16.mxu0 %v10493
    %10555 = vmatpush1.bf16.msra.mxu0 %v10492
    %10556 = vmatprep.subr.bf16.mxu0 %v10491
    %10557 = vmatpush1.bf16.msra.mxu0 %v10490
    %10558 = vmatprep.subr.bf16.mxu0 %v10489
    %10559 = vmatpush1.bf16.msra.mxu0 %v10488
    %10560 = vmatprep.subr.bf16.mxu0 %v10487
    %10561 = vmatpush1.bf16.msra.mxu0 %v10486
    %10562 = vmatprep.subr.bf16.mxu0 %v10485
    %10563 = vmatpush1.bf16.msra.mxu0 %v10484
    %10564 = vmatprep.subr.bf16.mxu0 %v10515
    %10565 = vmatpush2.bf16.msra.mxu0 %v10514
    %10566 = vmatprep.subr.bf16.mxu0 %v10513
    %10567 = vmatpush2.bf16.msra.mxu0 %v10512
    %10568 = vmatprep.subr.bf16.mxu0 %v10511
    %10569 = vmatpush2.bf16.msra.mxu0 %v10510
    %10570 = vmatprep.subr.bf16.mxu0 %v10509
    %10571 = vmatpush2.bf16.msra.mxu0 %v10508
    %10572 = vmatprep.subr.bf16.mxu0 %v10507
    %10573 = vmatpush2.bf16.msra.mxu0 %v10506
    %10574 = vmatprep.subr.bf16.mxu0 %v10505
    %10575 = vmatpush2.bf16.msra.mxu0 %v10504
    %10576 = vmatprep.subr.bf16.mxu0 %v10503
    %10577 = vmatpush2.bf16.msra.mxu0 %v10502
    %10578 = vmatprep.subr.bf16.mxu0 %v10501
    %10579 = vmatpush2.bf16.msra.mxu0 %v10500
    %10580 = vmatprep.mubr.bf16.mxu0 %v10329
    %10581 = vmatmul.mubr.bf16.gmra.mxu0 %v10328
    %v10582 = vpop.f32.mrf.mxu0
    %v10583 = vadd.f32 %v10381, %v10582
    %v10584 = vpop.f32.mrf.mxu0
    %v10585 = vadd.f32 %v10385, %v10584
    %v10586 = vpop.f32.mrf.mxu0
    %v10587 = vadd.f32 %v10381, %v10586
    %v10588 = vpop.f32.mrf.mxu0
    %v10589 = vadd.f32 %v10385, %v10588
    %10590 = vmatprep.mubr.bf16.mxu0 %v10331
    %10591 = vmatmul.mubr.bf16.gmra.mxu0 %v10330
    %v10592 = vpop.f32.mrf.mxu0
    %v10593 = vadd.f32 %v10381, %v10592
    %v10594 = vpop.f32.mrf.mxu0
    %v10595 = vadd.f32 %v10385, %v10594
    %v10596 = vpop.f32.mrf.mxu0
    %v10597 = vadd.f32 %v10381, %v10596
    %v10598 = vpop.f32.mrf.mxu0
    %v10599 = vadd.f32 %v10385, %v10598
    %10600 = vmatprep.mubr.bf16.mxu0 %v10333
    %10601 = vmatmul.mubr.bf16.gmra.mxu0 %v10332
    %v10602 = vpop.f32.mrf.mxu0
    %v10603 = vadd.f32 %v10381, %v10602
    %v10604 = vpop.f32.mrf.mxu0
    %v10605 = vadd.f32 %v10385, %v10604
    %v10606 = vpop.f32.mrf.mxu0
    %v10607 = vadd.f32 %v10381, %v10606
    %v10608 = vpop.f32.mrf.mxu0
    %v10609 = vadd.f32 %v10385, %v10608
    %10610 = vmatprep.mubr.bf16.mxu0 %v10335
    %10611 = vmatmul.mubr.bf16.gmra.mxu0 %v10334
    %v10612 = vpop.f32.mrf.mxu0
    %v10613 = vadd.f32 %v10381, %v10612
    %v10614 = vpop.f32.mrf.mxu0
    %v10615 = vadd.f32 %v10385, %v10614
    %v10616 = vpop.f32.mrf.mxu0
    %v10617 = vadd.f32 %v10381, %v10616
    %v10618 = vpop.f32.mrf.mxu0
    %v10619 = vadd.f32 %v10385, %v10618
    %10620 = vmatprep.mubr.bf16.mxu0 %v10337
    %10621 = vmatmul.mubr.bf16.gmra.mxu0 %v10336
    %v10622 = vpop.f32.mrf.mxu0
    %v10623 = vadd.f32 %v10381, %v10622
    %v10624 = vpop.f32.mrf.mxu0
    %v10625 = vadd.f32 %v10385, %v10624
    %v10626 = vpop.f32.mrf.mxu0
    %v10627 = vadd.f32 %v10381, %v10626
    %v10628 = vpop.f32.mrf.mxu0
    %v10629 = vadd.f32 %v10385, %v10628
    %10630 = vmatprep.mubr.bf16.mxu0 %v10339
    %10631 = vmatmul.mubr.bf16.gmra.mxu0 %v10338
    %v10632 = vpop.f32.mrf.mxu0
    %v10633 = vadd.f32 %v10381, %v10632
    %v10634 = vpop.f32.mrf.mxu0
    %v10635 = vadd.f32 %v10385, %v10634
    %v10636 = vpop.f32.mrf.mxu0
    %v10637 = vadd.f32 %v10381, %v10636
    %v10638 = vpop.f32.mrf.mxu0
    %v10639 = vadd.f32 %v10385, %v10638
    %10640 = vmatprep.mubr.bf16.mxu0 %v10341
    %10641 = vmatmul.mubr.bf16.gmra.mxu0 %v10340
    %v10642 = vpop.f32.mrf.mxu0
    %v10643 = vadd.f32 %v10381, %v10642
    %v10644 = vpop.f32.mrf.mxu0
    %v10645 = vadd.f32 %v10385, %v10644
    %v10646 = vpop.f32.mrf.mxu0
    %v10647 = vadd.f32 %v10381, %v10646
    %v10648 = vpop.f32.mrf.mxu0
    %v10649 = vadd.f32 %v10385, %v10648
    %10650 = vmatprep.mubr.bf16.mxu0 %v10343
    %10651 = vmatmul.mubr.bf16.gmra.mxu0 %v10342
    %v10652 = vpop.f32.mrf.mxu0
    %v10653 = vadd.f32 %v10381, %v10652
    %v10654 = vpop.f32.mrf.mxu0
    %v10655 = vadd.f32 %v10385, %v10654
    %v10656 = vpop.f32.mrf.mxu0
    %v10657 = vadd.f32 %v10381, %v10656
    %v10658 = vpop.f32.mrf.mxu0
    %v10659 = vadd.f32 %v10385, %v10658
    %10660 = vdwg.mxu0
    %v10661 = vmax.f32 %v10583, 0.0
    %v10662 = vmax.f32 %v10585, 0.0
    %v10663 = vmax.f32 %v10587, 0.0
    %v10664 = vmax.f32 %v10589, 0.0
    %v10665 = vmax.f32 %v10593, 0.0
    %v10666 = vmax.f32 %v10595, 0.0
    %v10667 = vmax.f32 %v10597, 0.0
    %v10668 = vmax.f32 %v10599, 0.0
    %v10669 = vmax.f32 %v10603, 0.0
    %v10670 = vmax.f32 %v10605, 0.0
    %v10671 = vmax.f32 %v10607, 0.0
    %v10672 = vmax.f32 %v10609, 0.0
    %v10673 = vmax.f32 %v10613, 0.0
    %v10674 = vmax.f32 %v10615, 0.0
    %v10675 = vmax.f32 %v10617, 0.0
    %v10676 = vmax.f32 %v10619, 0.0
    %v10677 = vmax.f32 %v10623, 0.0
    %v10678 = vmax.f32 %v10625, 0.0
    %v10679 = vmax.f32 %v10627, 0.0
    %v10680 = vmax.f32 %v10629, 0.0
    %v10681 = vmax.f32 %v10633, 0.0
    %v10682 = vmax.f32 %v10635, 0.0
    %v10683 = vmax.f32 %v10637, 0.0
    %v10684 = vmax.f32 %v10639, 0.0
    %v10685 = vmax.f32 %v10643, 0.0
    %v10686 = vmax.f32 %v10645, 0.0
    %v10687 = vmax.f32 %v10647, 0.0
    %v10688 = vmax.f32 %v10649, 0.0
    %v10689 = vmax.f32 %v10653, 0.0
    %v10690 = vmax.f32 %v10655, 0.0
    %v10691 = vmax.f32 %v10657, 0.0
    %v10692 = vmax.f32 %v10659, 0.0
    %v10693 = vpack.c.bf16 %v10663, %v10661
    %v10694 = vpack.c.bf16 %v10664, %v10662
    %v10695 = vpack.c.bf16 %v10667, %v10665
    %v10696 = vpack.c.bf16 %v10668, %v10666
    %v10697 = vpack.c.bf16 %v10671, %v10669
    %v10698 = vpack.c.bf16 %v10672, %v10670
    %v10699 = vpack.c.bf16 %v10675, %v10673
    %v10700 = vpack.c.bf16 %v10676, %v10674
    %v10701 = vpack.c.bf16 %v10679, %v10677
    %v10702 = vpack.c.bf16 %v10680, %v10678
    %v10703 = vpack.c.bf16 %v10683, %v10681
    %v10704 = vpack.c.bf16 %v10684, %v10682
    %v10705 = vpack.c.bf16 %v10687, %v10685
    %v10706 = vpack.c.bf16 %v10688, %v10686
    %v10707 = vpack.c.bf16 %v10691, %v10689
    %v10708 = vpack.c.bf16 %v10692, %v10690
    %v10709 = vld [vmem:[#allocation15] sm:$0xff]
    %v10710 = vld [vmem:[#allocation15 + $0x8] sm:$0xff]
    %v10711 = vld [vmem:[#allocation15 + $0x10] sm:$0xff]
    %v10712 = vld [vmem:[#allocation15 + $0x18] sm:$0xff]
    %v10713 = vld [vmem:[#allocation15 + $0x20] sm:$0xff]
    %v10714 = vld [vmem:[#allocation15 + $0x28] sm:$0xff]
    %v10715 = vld [vmem:[#allocation15 + $0x30] sm:$0xff]
    %v10716 = vld [vmem:[#allocation15 + $0x38] sm:$0xff]
    %v10717 = vld [vmem:[#allocation15 + $0x40] sm:$0xff]
    %v10718 = vld [vmem:[#allocation15 + $0x48] sm:$0xff]
    %v10719 = vld [vmem:[#allocation15 + $0x50] sm:$0xff]
    %v10720 = vld [vmem:[#allocation15 + $0x58] sm:$0xff]
    %v10721 = vld [vmem:[#allocation15 + $0x60] sm:$0xff]
    %v10722 = vld [vmem:[#allocation15 + $0x68] sm:$0xff]
    %v10723 = vld [vmem:[#allocation15 + $0x70] sm:$0xff]
    %v10724 = vld [vmem:[#allocation15 + $0x78] sm:$0xff]
    %v10725 = vld [vmem:[#allocation15 + $0x80] sm:$0xff]
    %v10726 = vld [vmem:[#allocation15 + $0x88] sm:$0xff]
    %v10727 = vld [vmem:[#allocation15 + $0x90] sm:$0xff]
    %v10728 = vld [vmem:[#allocation15 + $0x98] sm:$0xff]
    %v10729 = vld [vmem:[#allocation15 + $0xa0] sm:$0xff]
    %v10730 = vld [vmem:[#allocation15 + $0xa8] sm:$0xff]
    %v10731 = vld [vmem:[#allocation15 + $0xb0] sm:$0xff]
    %v10732 = vld [vmem:[#allocation15 + $0xb8] sm:$0xff]
    %v10733 = vld [vmem:[#allocation15 + $0xc0] sm:$0xff]
    %v10734 = vld [vmem:[#allocation15 + $0xc8] sm:$0xff]
    %v10735 = vld [vmem:[#allocation15 + $0xd0] sm:$0xff]
    %v10736 = vld [vmem:[#allocation15 + $0xd8] sm:$0xff]
    %v10737 = vld [vmem:[#allocation15 + $0xe0] sm:$0xff]
    %v10738 = vld [vmem:[#allocation15 + $0xe8] sm:$0xff]
    %v10739 = vld [vmem:[#allocation15 + $0xf0] sm:$0xff]
    %v10740 = vld [vmem:[#allocation15 + $0xf8] sm:$0xff]
    %v10741 = vld [vmem:[#allocation16] sm:$0x3]
    %v10743 = vlaneseq
    %v10744 = vshrl.u32 %v10743, 7
    %v10745 = vsub.s32 0, %v10744
    %v10746 = vrot.slane %v10741, %v10745
    %v10747 = vlaneseq
    %v10748 = vshrl.u32 %v10747, 7
    %v10749 = vsub.s32 1, %v10748
    %v10750 = vrot.slane %v10741, %v10749
    %v10785 = vunpack.c.l.b16 %v10709
    %v10786 = vunpack.c.h.b16 %v10709
    %v10787 = vunpack.c.l.b16 %v10710
    %v10788 = vunpack.c.h.b16 %v10710
    %v10789 = vunpack.c.l.b16 %v10711
    %v10790 = vunpack.c.h.b16 %v10711
    %v10791 = vunpack.c.l.b16 %v10712
    %v10792 = vunpack.c.h.b16 %v10712
    %v10793 = vunpack.c.l.b16 %v10713
    %v10794 = vunpack.c.h.b16 %v10713
    %v10795 = vunpack.c.l.b16 %v10714
    %v10796 = vunpack.c.h.b16 %v10714
    %v10797 = vunpack.c.l.b16 %v10715
    %v10798 = vunpack.c.h.b16 %v10715
    %v10799 = vunpack.c.l.b16 %v10716
    %v10800 = vunpack.c.h.b16 %v10716
    %v10801 = vunpack.c.l.b16 %v10717
    %v10802 = vunpack.c.h.b16 %v10717
    %v10803 = vunpack.c.l.b16 %v10718
    %v10804 = vunpack.c.h.b16 %v10718
    %v10805 = vunpack.c.l.b16 %v10719
    %v10806 = vunpack.c.h.b16 %v10719
    %v10807 = vunpack.c.l.b16 %v10720
    %v10808 = vunpack.c.h.b16 %v10720
    %v10809 = vunpack.c.l.b16 %v10721
    %v10810 = vunpack.c.h.b16 %v10721
    %v10811 = vunpack.c.l.b16 %v10722
    %v10812 = vunpack.c.h.b16 %v10722
    %v10813 = vunpack.c.l.b16 %v10723
    %v10814 = vunpack.c.h.b16 %v10723
    %v10815 = vunpack.c.l.b16 %v10724
    %v10816 = vunpack.c.h.b16 %v10724
    %v10817 = vunpack.c.l.b16 %v10725
    %v10818 = vunpack.c.h.b16 %v10725
    %v10819 = vunpack.c.l.b16 %v10726
    %v10820 = vunpack.c.h.b16 %v10726
    %v10821 = vunpack.c.l.b16 %v10727
    %v10822 = vunpack.c.h.b16 %v10727
    %v10823 = vunpack.c.l.b16 %v10728
    %v10824 = vunpack.c.h.b16 %v10728
    %v10825 = vunpack.c.l.b16 %v10729
    %v10826 = vunpack.c.h.b16 %v10729
    %v10827 = vunpack.c.l.b16 %v10730
    %v10828 = vunpack.c.h.b16 %v10730
    %v10829 = vunpack.c.l.b16 %v10731
    %v10830 = vunpack.c.h.b16 %v10731
    %v10831 = vunpack.c.l.b16 %v10732
    %v10832 = vunpack.c.h.b16 %v10732
    %v10833 = vunpack.c.l.b16 %v10733
    %v10834 = vunpack.c.h.b16 %v10733
    %v10835 = vunpack.c.l.b16 %v10734
    %v10836 = vunpack.c.h.b16 %v10734
    %v10837 = vunpack.c.l.b16 %v10735
    %v10838 = vunpack.c.h.b16 %v10735
    %v10839 = vunpack.c.l.b16 %v10736
    %v10840 = vunpack.c.h.b16 %v10736
    %v10841 = vunpack.c.l.b16 %v10737
    %v10842 = vunpack.c.h.b16 %v10737
    %v10843 = vunpack.c.l.b16 %v10738
    %v10844 = vunpack.c.h.b16 %v10738
    %v10845 = vunpack.c.l.b16 %v10739
    %v10846 = vunpack.c.h.b16 %v10739
    %v10847 = vunpack.c.l.b16 %v10740
    %v10848 = vunpack.c.h.b16 %v10740
    %v10849 = vpack.c.b16 %v10787, %v10785
    %v10850 = vpack.c.b16 %v10788, %v10786
    %v10851 = vpack.c.b16 %v10791, %v10789
    %v10852 = vpack.c.b16 %v10792, %v10790
    %v10853 = vpack.c.b16 %v10795, %v10793
    %v10854 = vpack.c.b16 %v10796, %v10794
    %v10855 = vpack.c.b16 %v10799, %v10797
    %v10856 = vpack.c.b16 %v10800, %v10798
    %v10857 = vpack.c.b16 %v10803, %v10801
    %v10858 = vpack.c.b16 %v10804, %v10802
    %v10859 = vpack.c.b16 %v10807, %v10805
    %v10860 = vpack.c.b16 %v10808, %v10806
    %v10861 = vpack.c.b16 %v10811, %v10809
    %v10862 = vpack.c.b16 %v10812, %v10810
    %v10863 = vpack.c.b16 %v10815, %v10813
    %v10864 = vpack.c.b16 %v10816, %v10814
    %v10865 = vpack.c.b16 %v10819, %v10817
    %v10866 = vpack.c.b16 %v10820, %v10818
    %v10867 = vpack.c.b16 %v10823, %v10821
    %v10868 = vpack.c.b16 %v10824, %v10822
    %v10869 = vpack.c.b16 %v10827, %v10825
    %v10870 = vpack.c.b16 %v10828, %v10826
    %v10871 = vpack.c.b16 %v10831, %v10829
    %v10872 = vpack.c.b16 %v10832, %v10830
    %v10873 = vpack.c.b16 %v10835, %v10833
    %v10874 = vpack.c.b16 %v10836, %v10834
    %v10875 = vpack.c.b16 %v10839, %v10837
    %v10876 = vpack.c.b16 %v10840, %v10838
    %v10877 = vpack.c.b16 %v10843, %v10841
    %v10878 = vpack.c.b16 %v10844, %v10842
    %v10879 = vpack.c.b16 %v10847, %v10845
    %v10880 = vpack.c.b16 %v10848, %v10846
    %10913 = vmatprep.subr.bf16.mxu0 %v10864
    %10914 = vmatpush1.bf16.msra.mxu0 %v10863
    %10915 = vmatprep.subr.bf16.mxu0 %v10862
    %10916 = vmatpush1.bf16.msra.mxu0 %v10861
    %10917 = vmatprep.subr.bf16.mxu0 %v10860
    %10918 = vmatpush1.bf16.msra.mxu0 %v10859
    %10919 = vmatprep.subr.bf16.mxu0 %v10858
    %10920 = vmatpush1.bf16.msra.mxu0 %v10857
    %10921 = vmatprep.subr.bf16.mxu0 %v10856
    %10922 = vmatpush1.bf16.msra.mxu0 %v10855
    %10923 = vmatprep.subr.bf16.mxu0 %v10854
    %10924 = vmatpush1.bf16.msra.mxu0 %v10853
    %10925 = vmatprep.subr.bf16.mxu0 %v10852
    %10926 = vmatpush1.bf16.msra.mxu0 %v10851
    %10927 = vmatprep.subr.bf16.mxu0 %v10850
    %10928 = vmatpush1.bf16.msra.mxu0 %v10849
    %10929 = vmatprep.subr.bf16.mxu0 %v10880
    %10930 = vmatpush2.bf16.msra.mxu0 %v10879
    %10931 = vmatprep.subr.bf16.mxu0 %v10878
    %10932 = vmatpush2.bf16.msra.mxu0 %v10877
    %10933 = vmatprep.subr.bf16.mxu0 %v10876
    %10934 = vmatpush2.bf16.msra.mxu0 %v10875
    %10935 = vmatprep.subr.bf16.mxu0 %v10874
    %10936 = vmatpush2.bf16.msra.mxu0 %v10873
    %10937 = vmatprep.subr.bf16.mxu0 %v10872
    %10938 = vmatpush2.bf16.msra.mxu0 %v10871
    %10939 = vmatprep.subr.bf16.mxu0 %v10870
    %10940 = vmatpush2.bf16.msra.mxu0 %v10869
    %10941 = vmatprep.subr.bf16.mxu0 %v10868
    %10942 = vmatpush2.bf16.msra.mxu0 %v10867
    %10943 = vmatprep.subr.bf16.mxu0 %v10866
    %10944 = vmatpush2.bf16.msra.mxu0 %v10865
    %10945 = vmatprep.mubr.bf16.mxu0 %v10694
    %10946 = vmatmul.mubr.bf16.gmra.mxu0 %v10693
    %v10947 = vpop.f32.mrf.mxu0
    %v10948 = vadd.f32 %v10746, %v10947
    %v10949 = vpop.f32.mrf.mxu0
    %v10950 = vadd.f32 %v10750, %v10949
    %v10951 = vpop.f32.mrf.mxu0
    %v10952 = vadd.f32 %v10746, %v10951
    %v10953 = vpop.f32.mrf.mxu0
    %v10954 = vadd.f32 %v10750, %v10953
    %10955 = vmatprep.mubr.bf16.mxu0 %v10696
    %10956 = vmatmul.mubr.bf16.gmra.mxu0 %v10695
    %v10957 = vpop.f32.mrf.mxu0
    %v10958 = vadd.f32 %v10746, %v10957
    %v10959 = vpop.f32.mrf.mxu0
    %v10960 = vadd.f32 %v10750, %v10959
    %v10961 = vpop.f32.mrf.mxu0
    %v10962 = vadd.f32 %v10746, %v10961
    %v10963 = vpop.f32.mrf.mxu0
    %v10964 = vadd.f32 %v10750, %v10963
    %10965 = vmatprep.mubr.bf16.mxu0 %v10698
    %10966 = vmatmul.mubr.bf16.gmra.mxu0 %v10697
    %v10967 = vpop.f32.mrf.mxu0
    %v10968 = vadd.f32 %v10746, %v10967
    %v10969 = vpop.f32.mrf.mxu0
    %v10970 = vadd.f32 %v10750, %v10969
    %v10971 = vpop.f32.mrf.mxu0
    %v10972 = vadd.f32 %v10746, %v10971
    %v10973 = vpop.f32.mrf.mxu0
    %v10974 = vadd.f32 %v10750, %v10973
    %10975 = vmatprep.mubr.bf16.mxu0 %v10700
    %10976 = vmatmul.mubr.bf16.gmra.mxu0 %v10699
    %v10977 = vpop.f32.mrf.mxu0
    %v10978 = vadd.f32 %v10746, %v10977
    %v10979 = vpop.f32.mrf.mxu0
    %v10980 = vadd.f32 %v10750, %v10979
    %v10981 = vpop.f32.mrf.mxu0
    %v10982 = vadd.f32 %v10746, %v10981
    %v10983 = vpop.f32.mrf.mxu0
    %v10984 = vadd.f32 %v10750, %v10983
    %10985 = vmatprep.mubr.bf16.mxu0 %v10702
    %10986 = vmatmul.mubr.bf16.gmra.mxu0 %v10701
    %v10987 = vpop.f32.mrf.mxu0
    %v10988 = vadd.f32 %v10746, %v10987
    %v10989 = vpop.f32.mrf.mxu0
    %v10990 = vadd.f32 %v10750, %v10989
    %v10991 = vpop.f32.mrf.mxu0
    %v10992 = vadd.f32 %v10746, %v10991
    %v10993 = vpop.f32.mrf.mxu0
    %v10994 = vadd.f32 %v10750, %v10993
    %10995 = vmatprep.mubr.bf16.mxu0 %v10704
    %10996 = vmatmul.mubr.bf16.gmra.mxu0 %v10703
    %v10997 = vpop.f32.mrf.mxu0
    %v10998 = vadd.f32 %v10746, %v10997
    %v10999 = vpop.f32.mrf.mxu0
    %v11000 = vadd.f32 %v10750, %v10999
    %v11001 = vpop.f32.mrf.mxu0
    %v11002 = vadd.f32 %v10746, %v11001
    %v11003 = vpop.f32.mrf.mxu0
    %v11004 = vadd.f32 %v10750, %v11003
    %11005 = vmatprep.mubr.bf16.mxu0 %v10706
    %11006 = vmatmul.mubr.bf16.gmra.mxu0 %v10705
    %v11007 = vpop.f32.mrf.mxu0
    %v11008 = vadd.f32 %v10746, %v11007
    %v11009 = vpop.f32.mrf.mxu0
    %v11010 = vadd.f32 %v10750, %v11009
    %v11011 = vpop.f32.mrf.mxu0
    %v11012 = vadd.f32 %v10746, %v11011
    %v11013 = vpop.f32.mrf.mxu0
    %v11014 = vadd.f32 %v10750, %v11013
    %11015 = vmatprep.mubr.bf16.mxu0 %v10708
    %11016 = vmatmul.mubr.bf16.gmra.mxu0 %v10707
    %v11017 = vpop.f32.mrf.mxu0
    %v11018 = vadd.f32 %v10746, %v11017
    %v11019 = vpop.f32.mrf.mxu0
    %v11020 = vadd.f32 %v10750, %v11019
    %v11021 = vpop.f32.mrf.mxu0
    %v11022 = vadd.f32 %v10746, %v11021
    %v11023 = vpop.f32.mrf.mxu0
    %v11024 = vadd.f32 %v10750, %v11023
    %11025 = vdwg.mxu0
    %v11026 = vmax.f32 %v10948, 0.0
    %v11027 = vmax.f32 %v10950, 0.0
    %v11028 = vmax.f32 %v10952, 0.0
    %v11029 = vmax.f32 %v10954, 0.0
    %v11030 = vmax.f32 %v10958, 0.0
    %v11031 = vmax.f32 %v10960, 0.0
    %v11032 = vmax.f32 %v10962, 0.0
    %v11033 = vmax.f32 %v10964, 0.0
    %v11034 = vmax.f32 %v10968, 0.0
    %v11035 = vmax.f32 %v10970, 0.0
    %v11036 = vmax.f32 %v10972, 0.0
    %v11037 = vmax.f32 %v10974, 0.0
    %v11038 = vmax.f32 %v10978, 0.0
    %v11039 = vmax.f32 %v10980, 0.0
    %v11040 = vmax.f32 %v10982, 0.0
    %v11041 = vmax.f32 %v10984, 0.0
    %v11042 = vmax.f32 %v10988, 0.0
    %v11043 = vmax.f32 %v10990, 0.0
    %v11044 = vmax.f32 %v10992, 0.0
    %v11045 = vmax.f32 %v10994, 0.0
    %v11046 = vmax.f32 %v10998, 0.0
    %v11047 = vmax.f32 %v11000, 0.0
    %v11048 = vmax.f32 %v11002, 0.0
    %v11049 = vmax.f32 %v11004, 0.0
    %v11050 = vmax.f32 %v11008, 0.0
    %v11051 = vmax.f32 %v11010, 0.0
    %v11052 = vmax.f32 %v11012, 0.0
    %v11053 = vmax.f32 %v11014, 0.0
    %v11054 = vmax.f32 %v11018, 0.0
    %v11055 = vmax.f32 %v11020, 0.0
    %v11056 = vmax.f32 %v11022, 0.0
    %v11057 = vmax.f32 %v11024, 0.0
    %v11058 = vadd.f32 %v11026, %v10296
    %v11059 = vadd.f32 %v11027, %v10297
    %v11060 = vadd.f32 %v11028, %v10298
    %v11061 = vadd.f32 %v11029, %v10299
    %v11062 = vadd.f32 %v11030, %v10300
    %v11063 = vadd.f32 %v11031, %v10301
    %v11064 = vadd.f32 %v11032, %v10302
    %v11065 = vadd.f32 %v11033, %v10303
    %v11066 = vadd.f32 %v11034, %v10304
    %v11067 = vadd.f32 %v11035, %v10305
    %v11068 = vadd.f32 %v11036, %v10306
    %v11069 = vadd.f32 %v11037, %v10307
    %v11070 = vadd.f32 %v11038, %v10308
    %v11071 = vadd.f32 %v11039, %v10309
    %v11072 = vadd.f32 %v11040, %v10310
    %v11073 = vadd.f32 %v11041, %v10311
    %v11074 = vadd.f32 %v11042, %v10312
    %v11075 = vadd.f32 %v11043, %v10313
    %v11076 = vadd.f32 %v11044, %v10314
    %v11077 = vadd.f32 %v11045, %v10315
    %v11078 = vadd.f32 %v11046, %v10316
    %v11079 = vadd.f32 %v11047, %v10317
    %v11080 = vadd.f32 %v11048, %v10318
    %v11081 = vadd.f32 %v11049, %v10319
    %v11082 = vadd.f32 %v11050, %v10320
    %v11083 = vadd.f32 %v11051, %v10321
    %v11084 = vadd.f32 %v11052, %v10322
    %v11085 = vadd.f32 %v11053, %v10323
    %v11086 = vadd.f32 %v11054, %v10324
    %v11087 = vadd.f32 %v11055, %v10325
    %v11088 = vadd.f32 %v11056, %v10326
    %v11089 = vadd.f32 %v11057, %v10327
    %v11090 = vpack.c.bf16 %v11060, %v11058
    %v11091 = vpack.c.bf16 %v11061, %v11059
    %v11092 = vpack.c.bf16 %v11064, %v11062
    %v11093 = vpack.c.bf16 %v11065, %v11063
    %v11094 = vpack.c.bf16 %v11068, %v11066
    %v11095 = vpack.c.bf16 %v11069, %v11067
    %v11096 = vpack.c.bf16 %v11072, %v11070
    %v11097 = vpack.c.bf16 %v11073, %v11071
    %v11098 = vpack.c.bf16 %v11076, %v11074
    %v11099 = vpack.c.bf16 %v11077, %v11075
    %v11100 = vpack.c.bf16 %v11080, %v11078
    %v11101 = vpack.c.bf16 %v11081, %v11079
    %v11102 = vpack.c.bf16 %v11084, %v11082
    %v11103 = vpack.c.bf16 %v11085, %v11083
    %v11104 = vpack.c.bf16 %v11088, %v11086
    %v11105 = vpack.c.bf16 %v11089, %v11087
    %v11106 = vld [vmem:[#allocation18] sm:$0xff]
    %v11107 = vld [vmem:[#allocation18 + $0x8] sm:$0xff]
    %v11108 = vld [vmem:[#allocation18 + $0x10] sm:$0xff]
    %v11109 = vld [vmem:[#allocation18 + $0x18] sm:$0xff]
    %v11110 = vld [vmem:[#allocation18 + $0x20] sm:$0xff]
    %v11111 = vld [vmem:[#allocation18 + $0x28] sm:$0xff]
    %v11112 = vld [vmem:[#allocation18 + $0x30] sm:$0xff]
    %v11113 = vld [vmem:[#allocation18 + $0x38] sm:$0xff]
    %v11114 = vld [vmem:[#allocation18 + $0x40] sm:$0xff]
    %v11115 = vld [vmem:[#allocation18 + $0x48] sm:$0xff]
    %v11116 = vld [vmem:[#allocation18 + $0x50] sm:$0xff]
    %v11117 = vld [vmem:[#allocation18 + $0x58] sm:$0xff]
    %v11118 = vld [vmem:[#allocation18 + $0x60] sm:$0xff]
    %v11119 = vld [vmem:[#allocation18 + $0x68] sm:$0xff]
    %v11120 = vld [vmem:[#allocation18 + $0x70] sm:$0xff]
    %v11121 = vld [vmem:[#allocation18 + $0x78] sm:$0xff]
    %v11122 = vld [vmem:[#allocation18 + $0x80] sm:$0xff]
    %v11123 = vld [vmem:[#allocation18 + $0x88] sm:$0xff]
    %v11124 = vld [vmem:[#allocation18 + $0x90] sm:$0xff]
    %v11125 = vld [vmem:[#allocation18 + $0x98] sm:$0xff]
    %v11126 = vld [vmem:[#allocation18 + $0xa0] sm:$0xff]
    %v11127 = vld [vmem:[#allocation18 + $0xa8] sm:$0xff]
    %v11128 = vld [vmem:[#allocation18 + $0xb0] sm:$0xff]
    %v11129 = vld [vmem:[#allocation18 + $0xb8] sm:$0xff]
    %v11130 = vld [vmem:[#allocation18 + $0xc0] sm:$0xff]
    %v11131 = vld [vmem:[#allocation18 + $0xc8] sm:$0xff]
    %v11132 = vld [vmem:[#allocation18 + $0xd0] sm:$0xff]
    %v11133 = vld [vmem:[#allocation18 + $0xd8] sm:$0xff]
    %v11134 = vld [vmem:[#allocation18 + $0xe0] sm:$0xff]
    %v11135 = vld [vmem:[#allocation18 + $0xe8] sm:$0xff]
    %v11136 = vld [vmem:[#allocation18 + $0xf0] sm:$0xff]
    %v11137 = vld [vmem:[#allocation18 + $0xf8] sm:$0xff]
    %v11138 = vld [vmem:[#allocation19] sm:$0x3]
    %v11140 = vlaneseq
    %v11141 = vshrl.u32 %v11140, 7
    %v11142 = vsub.s32 0, %v11141
    %v11143 = vrot.slane %v11138, %v11142
    %v11144 = vlaneseq
    %v11145 = vshrl.u32 %v11144, 7
    %v11146 = vsub.s32 1, %v11145
    %v11147 = vrot.slane %v11138, %v11146
    %v11182 = vunpack.c.l.b16 %v11106
    %v11183 = vunpack.c.h.b16 %v11106
    %v11184 = vunpack.c.l.b16 %v11107
    %v11185 = vunpack.c.h.b16 %v11107
    %v11186 = vunpack.c.l.b16 %v11108
    %v11187 = vunpack.c.h.b16 %v11108
    %v11188 = vunpack.c.l.b16 %v11109
    %v11189 = vunpack.c.h.b16 %v11109
    %v11190 = vunpack.c.l.b16 %v11110
    %v11191 = vunpack.c.h.b16 %v11110
    %v11192 = vunpack.c.l.b16 %v11111
    %v11193 = vunpack.c.h.b16 %v11111
    %v11194 = vunpack.c.l.b16 %v11112
    %v11195 = vunpack.c.h.b16 %v11112
    %v11196 = vunpack.c.l.b16 %v11113
    %v11197 = vunpack.c.h.b16 %v11113
    %v11198 = vunpack.c.l.b16 %v11114
    %v11199 = vunpack.c.h.b16 %v11114
    %v11200 = vunpack.c.l.b16 %v11115
    %v11201 = vunpack.c.h.b16 %v11115
    %v11202 = vunpack.c.l.b16 %v11116
    %v11203 = vunpack.c.h.b16 %v11116
    %v11204 = vunpack.c.l.b16 %v11117
    %v11205 = vunpack.c.h.b16 %v11117
    %v11206 = vunpack.c.l.b16 %v11118
    %v11207 = vunpack.c.h.b16 %v11118
    %v11208 = vunpack.c.l.b16 %v11119
    %v11209 = vunpack.c.h.b16 %v11119
    %v11210 = vunpack.c.l.b16 %v11120
    %v11211 = vunpack.c.h.b16 %v11120
    %v11212 = vunpack.c.l.b16 %v11121
    %v11213 = vunpack.c.h.b16 %v11121
    %v11214 = vunpack.c.l.b16 %v11122
    %v11215 = vunpack.c.h.b16 %v11122
    %v11216 = vunpack.c.l.b16 %v11123
    %v11217 = vunpack.c.h.b16 %v11123
    %v11218 = vunpack.c.l.b16 %v11124
    %v11219 = vunpack.c.h.b16 %v11124
    %v11220 = vunpack.c.l.b16 %v11125
    %v11221 = vunpack.c.h.b16 %v11125
    %v11222 = vunpack.c.l.b16 %v11126
    %v11223 = vunpack.c.h.b16 %v11126
    %v11224 = vunpack.c.l.b16 %v11127
    %v11225 = vunpack.c.h.b16 %v11127
    %v11226 = vunpack.c.l.b16 %v11128
    %v11227 = vunpack.c.h.b16 %v11128
    %v11228 = vunpack.c.l.b16 %v11129
    %v11229 = vunpack.c.h.b16 %v11129
    %v11230 = vunpack.c.l.b16 %v11130
    %v11231 = vunpack.c.h.b16 %v11130
    %v11232 = vunpack.c.l.b16 %v11131
    %v11233 = vunpack.c.h.b16 %v11131
    %v11234 = vunpack.c.l.b16 %v11132
    %v11235 = vunpack.c.h.b16 %v11132
    %v11236 = vunpack.c.l.b16 %v11133
    %v11237 = vunpack.c.h.b16 %v11133
    %v11238 = vunpack.c.l.b16 %v11134
    %v11239 = vunpack.c.h.b16 %v11134
    %v11240 = vunpack.c.l.b16 %v11135
    %v11241 = vunpack.c.h.b16 %v11135
    %v11242 = vunpack.c.l.b16 %v11136
    %v11243 = vunpack.c.h.b16 %v11136
    %v11244 = vunpack.c.l.b16 %v11137
    %v11245 = vunpack.c.h.b16 %v11137
    %v11246 = vpack.c.b16 %v11184, %v11182
    %v11247 = vpack.c.b16 %v11185, %v11183
    %v11248 = vpack.c.b16 %v11188, %v11186
    %v11249 = vpack.c.b16 %v11189, %v11187
    %v11250 = vpack.c.b16 %v11192, %v11190
    %v11251 = vpack.c.b16 %v11193, %v11191
    %v11252 = vpack.c.b16 %v11196, %v11194
    %v11253 = vpack.c.b16 %v11197, %v11195
    %v11254 = vpack.c.b16 %v11200, %v11198
    %v11255 = vpack.c.b16 %v11201, %v11199
    %v11256 = vpack.c.b16 %v11204, %v11202
    %v11257 = vpack.c.b16 %v11205, %v11203
    %v11258 = vpack.c.b16 %v11208, %v11206
    %v11259 = vpack.c.b16 %v11209, %v11207
    %v11260 = vpack.c.b16 %v11212, %v11210
    %v11261 = vpack.c.b16 %v11213, %v11211
    %v11262 = vpack.c.b16 %v11216, %v11214
    %v11263 = vpack.c.b16 %v11217, %v11215
    %v11264 = vpack.c.b16 %v11220, %v11218
    %v11265 = vpack.c.b16 %v11221, %v11219
    %v11266 = vpack.c.b16 %v11224, %v11222
    %v11267 = vpack.c.b16 %v11225, %v11223
    %v11268 = vpack.c.b16 %v11228, %v11226
    %v11269 = vpack.c.b16 %v11229, %v11227
    %v11270 = vpack.c.b16 %v11232, %v11230
    %v11271 = vpack.c.b16 %v11233, %v11231
    %v11272 = vpack.c.b16 %v11236, %v11234
    %v11273 = vpack.c.b16 %v11237, %v11235
    %v11274 = vpack.c.b16 %v11240, %v11238
    %v11275 = vpack.c.b16 %v11241, %v11239
    %v11276 = vpack.c.b16 %v11244, %v11242
    %v11277 = vpack.c.b16 %v11245, %v11243
    %11310 = vmatprep.subr.bf16.mxu0 %v11261
    %11311 = vmatpush1.bf16.msra.mxu0 %v11260
    %11312 = vmatprep.subr.bf16.mxu0 %v11259
    %11313 = vmatpush1.bf16.msra.mxu0 %v11258
    %11314 = vmatprep.subr.bf16.mxu0 %v11257
    %11315 = vmatpush1.bf16.msra.mxu0 %v11256
    %11316 = vmatprep.subr.bf16.mxu0 %v11255
    %11317 = vmatpush1.bf16.msra.mxu0 %v11254
    %11318 = vmatprep.subr.bf16.mxu0 %v11253
    %11319 = vmatpush1.bf16.msra.mxu0 %v11252
    %11320 = vmatprep.subr.bf16.mxu0 %v11251
    %11321 = vmatpush1.bf16.msra.mxu0 %v11250
    %11322 = vmatprep.subr.bf16.mxu0 %v11249
    %11323 = vmatpush1.bf16.msra.mxu0 %v11248
    %11324 = vmatprep.subr.bf16.mxu0 %v11247
    %11325 = vmatpush1.bf16.msra.mxu0 %v11246
    %11326 = vmatprep.subr.bf16.mxu0 %v11277
    %11327 = vmatpush2.bf16.msra.mxu0 %v11276
    %11328 = vmatprep.subr.bf16.mxu0 %v11275
    %11329 = vmatpush2.bf16.msra.mxu0 %v11274
    %11330 = vmatprep.subr.bf16.mxu0 %v11273
    %11331 = vmatpush2.bf16.msra.mxu0 %v11272
    %11332 = vmatprep.subr.bf16.mxu0 %v11271
    %11333 = vmatpush2.bf16.msra.mxu0 %v11270
    %11334 = vmatprep.subr.bf16.mxu0 %v11269
    %11335 = vmatpush2.bf16.msra.mxu0 %v11268
    %11336 = vmatprep.subr.bf16.mxu0 %v11267
    %11337 = vmatpush2.bf16.msra.mxu0 %v11266
    %11338 = vmatprep.subr.bf16.mxu0 %v11265
    %11339 = vmatpush2.bf16.msra.mxu0 %v11264
    %11340 = vmatprep.subr.bf16.mxu0 %v11263
    %11341 = vmatpush2.bf16.msra.mxu0 %v11262
    %11342 = vmatprep.mubr.bf16.mxu0 %v11091
    %11343 = vmatmul.mubr.bf16.gmra.mxu0 %v11090
    %v11344 = vpop.f32.mrf.mxu0
    %v11345 = vadd.f32 %v11143, %v11344
    %v11346 = vpop.f32.mrf.mxu0
    %v11347 = vadd.f32 %v11147, %v11346
    %v11348 = vpop.f32.mrf.mxu0
    %v11349 = vadd.f32 %v11143, %v11348
    %v11350 = vpop.f32.mrf.mxu0
    %v11351 = vadd.f32 %v11147, %v11350
    %11352 = vmatprep.mubr.bf16.mxu0 %v11093
    %11353 = vmatmul.mubr.bf16.gmra.mxu0 %v11092
    %v11354 = vpop.f32.mrf.mxu0
    %v11355 = vadd.f32 %v11143, %v11354
    %v11356 = vpop.f32.mrf.mxu0
    %v11357 = vadd.f32 %v11147, %v11356
    %v11358 = vpop.f32.mrf.mxu0
    %v11359 = vadd.f32 %v11143, %v11358
    %v11360 = vpop.f32.mrf.mxu0
    %v11361 = vadd.f32 %v11147, %v11360
    %11362 = vmatprep.mubr.bf16.mxu0 %v11095
    %11363 = vmatmul.mubr.bf16.gmra.mxu0 %v11094
    %v11364 = vpop.f32.mrf.mxu0
    %v11365 = vadd.f32 %v11143, %v11364
    %v11366 = vpop.f32.mrf.mxu0
    %v11367 = vadd.f32 %v11147, %v11366
    %v11368 = vpop.f32.mrf.mxu0
    %v11369 = vadd.f32 %v11143, %v11368
    %v11370 = vpop.f32.mrf.mxu0
    %v11371 = vadd.f32 %v11147, %v11370
    %11372 = vmatprep.mubr.bf16.mxu0 %v11097
    %11373 = vmatmul.mubr.bf16.gmra.mxu0 %v11096
    %v11374 = vpop.f32.mrf.mxu0
    %v11375 = vadd.f32 %v11143, %v11374
    %v11376 = vpop.f32.mrf.mxu0
    %v11377 = vadd.f32 %v11147, %v11376
    %v11378 = vpop.f32.mrf.mxu0
    %v11379 = vadd.f32 %v11143, %v11378
    %v11380 = vpop.f32.mrf.mxu0
    %v11381 = vadd.f32 %v11147, %v11380
    %11382 = vmatprep.mubr.bf16.mxu0 %v11099
    %11383 = vmatmul.mubr.bf16.gmra.mxu0 %v11098
    %v11384 = vpop.f32.mrf.mxu0
    %v11385 = vadd.f32 %v11143, %v11384
    %v11386 = vpop.f32.mrf.mxu0
    %v11387 = vadd.f32 %v11147, %v11386
    %v11388 = vpop.f32.mrf.mxu0
    %v11389 = vadd.f32 %v11143, %v11388
    %v11390 = vpop.f32.mrf.mxu0
    %v11391 = vadd.f32 %v11147, %v11390
    %11392 = vmatprep.mubr.bf16.mxu0 %v11101
    %11393 = vmatmul.mubr.bf16.gmra.mxu0 %v11100
    %v11394 = vpop.f32.mrf.mxu0
    %v11395 = vadd.f32 %v11143, %v11394
    %v11396 = vpop.f32.mrf.mxu0
    %v11397 = vadd.f32 %v11147, %v11396
    %v11398 = vpop.f32.mrf.mxu0
    %v11399 = vadd.f32 %v11143, %v11398
    %v11400 = vpop.f32.mrf.mxu0
    %v11401 = vadd.f32 %v11147, %v11400
    %11402 = vmatprep.mubr.bf16.mxu0 %v11103
    %11403 = vmatmul.mubr.bf16.gmra.mxu0 %v11102
    %v11404 = vpop.f32.mrf.mxu0
    %v11405 = vadd.f32 %v11143, %v11404
    %v11406 = vpop.f32.mrf.mxu0
    %v11407 = vadd.f32 %v11147, %v11406
    %v11408 = vpop.f32.mrf.mxu0
    %v11409 = vadd.f32 %v11143, %v11408
    %v11410 = vpop.f32.mrf.mxu0
    %v11411 = vadd.f32 %v11147, %v11410
    %11412 = vmatprep.mubr.bf16.mxu0 %v11105
    %11413 = vmatmul.mubr.bf16.gmra.mxu0 %v11104
    %v11414 = vpop.f32.mrf.mxu0
    %v11415 = vadd.f32 %v11143, %v11414
    %v11416 = vpop.f32.mrf.mxu0
    %v11417 = vadd.f32 %v11147, %v11416
    %v11418 = vpop.f32.mrf.mxu0
    %v11419 = vadd.f32 %v11143, %v11418
    %v11420 = vpop.f32.mrf.mxu0
    %v11421 = vadd.f32 %v11147, %v11420
    %11422 = vdwg.mxu0
    %v11423 = vmax.f32 %v11345, 0.0
    %v11424 = vmax.f32 %v11347, 0.0
    %v11425 = vmax.f32 %v11349, 0.0
    %v11426 = vmax.f32 %v11351, 0.0
    %v11427 = vmax.f32 %v11355, 0.0
    %v11428 = vmax.f32 %v11357, 0.0
    %v11429 = vmax.f32 %v11359, 0.0
    %v11430 = vmax.f32 %v11361, 0.0
    %v11431 = vmax.f32 %v11365, 0.0
    %v11432 = vmax.f32 %v11367, 0.0
    %v11433 = vmax.f32 %v11369, 0.0
    %v11434 = vmax.f32 %v11371, 0.0
    %v11435 = vmax.f32 %v11375, 0.0
    %v11436 = vmax.f32 %v11377, 0.0
    %v11437 = vmax.f32 %v11379, 0.0
    %v11438 = vmax.f32 %v11381, 0.0
    %v11439 = vmax.f32 %v11385, 0.0
    %v11440 = vmax.f32 %v11387, 0.0
    %v11441 = vmax.f32 %v11389, 0.0
    %v11442 = vmax.f32 %v11391, 0.0
    %v11443 = vmax.f32 %v11395, 0.0
    %v11444 = vmax.f32 %v11397, 0.0
    %v11445 = vmax.f32 %v11399, 0.0
    %v11446 = vmax.f32 %v11401, 0.0
    %v11447 = vmax.f32 %v11405, 0.0
    %v11448 = vmax.f32 %v11407, 0.0
    %v11449 = vmax.f32 %v11409, 0.0
    %v11450 = vmax.f32 %v11411, 0.0
    %v11451 = vmax.f32 %v11415, 0.0
    %v11452 = vmax.f32 %v11417, 0.0
    %v11453 = vmax.f32 %v11419, 0.0
    %v11454 = vmax.f32 %v11421, 0.0
    %v11455 = vpack.c.bf16 %v11425, %v11423
    %v11456 = vpack.c.bf16 %v11426, %v11424
    %v11457 = vpack.c.bf16 %v11429, %v11427
    %v11458 = vpack.c.bf16 %v11430, %v11428
    %v11459 = vpack.c.bf16 %v11433, %v11431
    %v11460 = vpack.c.bf16 %v11434, %v11432
    %v11461 = vpack.c.bf16 %v11437, %v11435
    %v11462 = vpack.c.bf16 %v11438, %v11436
    %v11463 = vpack.c.bf16 %v11441, %v11439
    %v11464 = vpack.c.bf16 %v11442, %v11440
    %v11465 = vpack.c.bf16 %v11445, %v11443
    %v11466 = vpack.c.bf16 %v11446, %v11444
    %v11467 = vpack.c.bf16 %v11449, %v11447
    %v11468 = vpack.c.bf16 %v11450, %v11448
    %v11469 = vpack.c.bf16 %v11453, %v11451
    %v11470 = vpack.c.bf16 %v11454, %v11452
    %v11471 = vld [vmem:[#allocation21] sm:$0xff]
    %v11472 = vld [vmem:[#allocation21 + $0x8] sm:$0xff]
    %v11473 = vld [vmem:[#allocation21 + $0x10] sm:$0xff]
    %v11474 = vld [vmem:[#allocation21 + $0x18] sm:$0xff]
    %v11475 = vld [vmem:[#allocation21 + $0x20] sm:$0xff]
    %v11476 = vld [vmem:[#allocation21 + $0x28] sm:$0xff]
    %v11477 = vld [vmem:[#allocation21 + $0x30] sm:$0xff]
    %v11478 = vld [vmem:[#allocation21 + $0x38] sm:$0xff]
    %v11479 = vld [vmem:[#allocation21 + $0x40] sm:$0xff]
    %v11480 = vld [vmem:[#allocation21 + $0x48] sm:$0xff]
    %v11481 = vld [vmem:[#allocation21 + $0x50] sm:$0xff]
    %v11482 = vld [vmem:[#allocation21 + $0x58] sm:$0xff]
    %v11483 = vld [vmem:[#allocation21 + $0x60] sm:$0xff]
    %v11484 = vld [vmem:[#allocation21 + $0x68] sm:$0xff]
    %v11485 = vld [vmem:[#allocation21 + $0x70] sm:$0xff]
    %v11486 = vld [vmem:[#allocation21 + $0x78] sm:$0xff]
    %v11487 = vld [vmem:[#allocation21 + $0x80] sm:$0xff]
    %v11488 = vld [vmem:[#allocation21 + $0x88] sm:$0xff]
    %v11489 = vld [vmem:[#allocation21 + $0x90] sm:$0xff]
    %v11490 = vld [vmem:[#allocation21 + $0x98] sm:$0xff]
    %v11491 = vld [vmem:[#allocation21 + $0xa0] sm:$0xff]
    %v11492 = vld [vmem:[#allocation21 + $0xa8] sm:$0xff]
    %v11493 = vld [vmem:[#allocation21 + $0xb0] sm:$0xff]
    %v11494 = vld [vmem:[#allocation21 + $0xb8] sm:$0xff]
    %v11495 = vld [vmem:[#allocation21 + $0xc0] sm:$0xff]
    %v11496 = vld [vmem:[#allocation21 + $0xc8] sm:$0xff]
    %v11497 = vld [vmem:[#allocation21 + $0xd0] sm:$0xff]
    %v11498 = vld [vmem:[#allocation21 + $0xd8] sm:$0xff]
    %v11499 = vld [vmem:[#allocation21 + $0xe0] sm:$0xff]
    %v11500 = vld [vmem:[#allocation21 + $0xe8] sm:$0xff]
    %v11501 = vld [vmem:[#allocation21 + $0xf0] sm:$0xff]
    %v11502 = vld [vmem:[#allocation21 + $0xf8] sm:$0xff]
    %v11503 = vld [vmem:[#allocation22] sm:$0x3]
    %v11505 = vlaneseq
    %v11506 = vshrl.u32 %v11505, 7
    %v11507 = vsub.s32 0, %v11506
    %v11508 = vrot.slane %v11503, %v11507
    %v11509 = vlaneseq
    %v11510 = vshrl.u32 %v11509, 7
    %v11511 = vsub.s32 1, %v11510
    %v11512 = vrot.slane %v11503, %v11511
    %v11547 = vunpack.c.l.b16 %v11471
    %v11548 = vunpack.c.h.b16 %v11471
    %v11549 = vunpack.c.l.b16 %v11472
    %v11550 = vunpack.c.h.b16 %v11472
    %v11551 = vunpack.c.l.b16 %v11473
    %v11552 = vunpack.c.h.b16 %v11473
    %v11553 = vunpack.c.l.b16 %v11474
    %v11554 = vunpack.c.h.b16 %v11474
    %v11555 = vunpack.c.l.b16 %v11475
    %v11556 = vunpack.c.h.b16 %v11475
    %v11557 = vunpack.c.l.b16 %v11476
    %v11558 = vunpack.c.h.b16 %v11476
    %v11559 = vunpack.c.l.b16 %v11477
    %v11560 = vunpack.c.h.b16 %v11477
    %v11561 = vunpack.c.l.b16 %v11478
    %v11562 = vunpack.c.h.b16 %v11478
    %v11563 = vunpack.c.l.b16 %v11479
    %v11564 = vunpack.c.h.b16 %v11479
    %v11565 = vunpack.c.l.b16 %v11480
    %v11566 = vunpack.c.h.b16 %v11480
    %v11567 = vunpack.c.l.b16 %v11481
    %v11568 = vunpack.c.h.b16 %v11481
    %v11569 = vunpack.c.l.b16 %v11482
    %v11570 = vunpack.c.h.b16 %v11482
    %v11571 = vunpack.c.l.b16 %v11483
    %v11572 = vunpack.c.h.b16 %v11483
    %v11573 = vunpack.c.l.b16 %v11484
    %v11574 = vunpack.c.h.b16 %v11484
    %v11575 = vunpack.c.l.b16 %v11485
    %v11576 = vunpack.c.h.b16 %v11485
    %v11577 = vunpack.c.l.b16 %v11486
    %v11578 = vunpack.c.h.b16 %v11486
    %v11579 = vunpack.c.l.b16 %v11487
    %v11580 = vunpack.c.h.b16 %v11487
    %v11581 = vunpack.c.l.b16 %v11488
    %v11582 = vunpack.c.h.b16 %v11488
    %v11583 = vunpack.c.l.b16 %v11489
    %v11584 = vunpack.c.h.b16 %v11489
    %v11585 = vunpack.c.l.b16 %v11490
    %v11586 = vunpack.c.h.b16 %v11490
    %v11587 = vunpack.c.l.b16 %v11491
    %v11588 = vunpack.c.h.b16 %v11491
    %v11589 = vunpack.c.l.b16 %v11492
    %v11590 = vunpack.c.h.b16 %v11492
    %v11591 = vunpack.c.l.b16 %v11493
    %v11592 = vunpack.c.h.b16 %v11493
    %v11593 = vunpack.c.l.b16 %v11494
    %v11594 = vunpack.c.h.b16 %v11494
    %v11595 = vunpack.c.l.b16 %v11495
    %v11596 = vunpack.c.h.b16 %v11495
    %v11597 = vunpack.c.l.b16 %v11496
    %v11598 = vunpack.c.h.b16 %v11496
    %v11599 = vunpack.c.l.b16 %v11497
    %v11600 = vunpack.c.h.b16 %v11497
    %v11601 = vunpack.c.l.b16 %v11498
    %v11602 = vunpack.c.h.b16 %v11498
    %v11603 = vunpack.c.l.b16 %v11499
    %v11604 = vunpack.c.h.b16 %v11499
    %v11605 = vunpack.c.l.b16 %v11500
    %v11606 = vunpack.c.h.b16 %v11500
    %v11607 = vunpack.c.l.b16 %v11501
    %v11608 = vunpack.c.h.b16 %v11501
    %v11609 = vunpack.c.l.b16 %v11502
    %v11610 = vunpack.c.h.b16 %v11502
    %v11611 = vpack.c.b16 %v11549, %v11547
    %v11612 = vpack.c.b16 %v11550, %v11548
    %v11613 = vpack.c.b16 %v11553, %v11551
    %v11614 = vpack.c.b16 %v11554, %v11552
    %v11615 = vpack.c.b16 %v11557, %v11555
    %v11616 = vpack.c.b16 %v11558, %v11556
    %v11617 = vpack.c.b16 %v11561, %v11559
    %v11618 = vpack.c.b16 %v11562, %v11560
    %v11619 = vpack.c.b16 %v11565, %v11563
    %v11620 = vpack.c.b16 %v11566, %v11564
    %v11621 = vpack.c.b16 %v11569, %v11567
    %v11622 = vpack.c.b16 %v11570, %v11568
    %v11623 = vpack.c.b16 %v11573, %v11571
    %v11624 = vpack.c.b16 %v11574, %v11572
    %v11625 = vpack.c.b16 %v11577, %v11575
    %v11626 = vpack.c.b16 %v11578, %v11576
    %v11627 = vpack.c.b16 %v11581, %v11579
    %v11628 = vpack.c.b16 %v11582, %v11580
    %v11629 = vpack.c.b16 %v11585, %v11583
    %v11630 = vpack.c.b16 %v11586, %v11584
    %v11631 = vpack.c.b16 %v11589, %v11587
    %v11632 = vpack.c.b16 %v11590, %v11588
    %v11633 = vpack.c.b16 %v11593, %v11591
    %v11634 = vpack.c.b16 %v11594, %v11592
    %v11635 = vpack.c.b16 %v11597, %v11595
    %v11636 = vpack.c.b16 %v11598, %v11596
    %v11637 = vpack.c.b16 %v11601, %v11599
    %v11638 = vpack.c.b16 %v11602, %v11600
    %v11639 = vpack.c.b16 %v11605, %v11603
    %v11640 = vpack.c.b16 %v11606, %v11604
    %v11641 = vpack.c.b16 %v11609, %v11607
    %v11642 = vpack.c.b16 %v11610, %v11608
    %11675 = vmatprep.subr.bf16.mxu0 %v11626
    %11676 = vmatpush1.bf16.msra.mxu0 %v11625
    %11677 = vmatprep.subr.bf16.mxu0 %v11624
    %11678 = vmatpush1.bf16.msra.mxu0 %v11623
    %11679 = vmatprep.subr.bf16.mxu0 %v11622
    %11680 = vmatpush1.bf16.msra.mxu0 %v11621
    %11681 = vmatprep.subr.bf16.mxu0 %v11620
    %11682 = vmatpush1.bf16.msra.mxu0 %v11619
    %11683 = vmatprep.subr.bf16.mxu0 %v11618
    %11684 = vmatpush1.bf16.msra.mxu0 %v11617
    %11685 = vmatprep.subr.bf16.mxu0 %v11616
    %11686 = vmatpush1.bf16.msra.mxu0 %v11615
    %11687 = vmatprep.subr.bf16.mxu0 %v11614
    %11688 = vmatpush1.bf16.msra.mxu0 %v11613
    %11689 = vmatprep.subr.bf16.mxu0 %v11612
    %11690 = vmatpush1.bf16.msra.mxu0 %v11611
    %11691 = vmatprep.subr.bf16.mxu0 %v11642
    %11692 = vmatpush2.bf16.msra.mxu0 %v11641
    %11693 = vmatprep.subr.bf16.mxu0 %v11640
    %11694 = vmatpush2.bf16.msra.mxu0 %v11639
    %11695 = vmatprep.subr.bf16.mxu0 %v11638
    %11696 = vmatpush2.bf16.msra.mxu0 %v11637
    %11697 = vmatprep.subr.bf16.mxu0 %v11636
    %11698 = vmatpush2.bf16.msra.mxu0 %v11635
    %11699 = vmatprep.subr.bf16.mxu0 %v11634
    %11700 = vmatpush2.bf16.msra.mxu0 %v11633
    %11701 = vmatprep.subr.bf16.mxu0 %v11632
    %11702 = vmatpush2.bf16.msra.mxu0 %v11631
    %11703 = vmatprep.subr.bf16.mxu0 %v11630
    %11704 = vmatpush2.bf16.msra.mxu0 %v11629
    %11705 = vmatprep.subr.bf16.mxu0 %v11628
    %11706 = vmatpush2.bf16.msra.mxu0 %v11627
    %11707 = vmatprep.mubr.bf16.mxu0 %v11456
    %11708 = vmatmul.mubr.bf16.gmra.mxu0 %v11455
    %v11709 = vpop.f32.mrf.mxu0
    %v11710 = vadd.f32 %v11508, %v11709
    %v11711 = vpop.f32.mrf.mxu0
    %v11712 = vadd.f32 %v11512, %v11711
    %v11713 = vpop.f32.mrf.mxu0
    %v11714 = vadd.f32 %v11508, %v11713
    %v11715 = vpop.f32.mrf.mxu0
    %v11716 = vadd.f32 %v11512, %v11715
    %11717 = vmatprep.mubr.bf16.mxu0 %v11458
    %11718 = vmatmul.mubr.bf16.gmra.mxu0 %v11457
    %v11719 = vpop.f32.mrf.mxu0
    %v11720 = vadd.f32 %v11508, %v11719
    %v11721 = vpop.f32.mrf.mxu0
    %v11722 = vadd.f32 %v11512, %v11721
    %v11723 = vpop.f32.mrf.mxu0
    %v11724 = vadd.f32 %v11508, %v11723
    %v11725 = vpop.f32.mrf.mxu0
    %v11726 = vadd.f32 %v11512, %v11725
    %11727 = vmatprep.mubr.bf16.mxu0 %v11460
    %11728 = vmatmul.mubr.bf16.gmra.mxu0 %v11459
    %v11729 = vpop.f32.mrf.mxu0
    %v11730 = vadd.f32 %v11508, %v11729
    %v11731 = vpop.f32.mrf.mxu0
    %v11732 = vadd.f32 %v11512, %v11731
    %v11733 = vpop.f32.mrf.mxu0
    %v11734 = vadd.f32 %v11508, %v11733
    %v11735 = vpop.f32.mrf.mxu0
    %v11736 = vadd.f32 %v11512, %v11735
    %11737 = vmatprep.mubr.bf16.mxu0 %v11462
    %11738 = vmatmul.mubr.bf16.gmra.mxu0 %v11461
    %v11739 = vpop.f32.mrf.mxu0
    %v11740 = vadd.f32 %v11508, %v11739
    %v11741 = vpop.f32.mrf.mxu0
    %v11742 = vadd.f32 %v11512, %v11741
    %v11743 = vpop.f32.mrf.mxu0
    %v11744 = vadd.f32 %v11508, %v11743
    %v11745 = vpop.f32.mrf.mxu0
    %v11746 = vadd.f32 %v11512, %v11745
    %11747 = vmatprep.mubr.bf16.mxu0 %v11464
    %11748 = vmatmul.mubr.bf16.gmra.mxu0 %v11463
    %v11749 = vpop.f32.mrf.mxu0
    %v11750 = vadd.f32 %v11508, %v11749
    %v11751 = vpop.f32.mrf.mxu0
    %v11752 = vadd.f32 %v11512, %v11751
    %v11753 = vpop.f32.mrf.mxu0
    %v11754 = vadd.f32 %v11508, %v11753
    %v11755 = vpop.f32.mrf.mxu0
    %v11756 = vadd.f32 %v11512, %v11755
    %11757 = vmatprep.mubr.bf16.mxu0 %v11466
    %11758 = vmatmul.mubr.bf16.gmra.mxu0 %v11465
    %v11759 = vpop.f32.mrf.mxu0
    %v11760 = vadd.f32 %v11508, %v11759
    %v11761 = vpop.f32.mrf.mxu0
    %v11762 = vadd.f32 %v11512, %v11761
    %v11763 = vpop.f32.mrf.mxu0
    %v11764 = vadd.f32 %v11508, %v11763
    %v11765 = vpop.f32.mrf.mxu0
    %v11766 = vadd.f32 %v11512, %v11765
    %11767 = vmatprep.mubr.bf16.mxu0 %v11468
    %11768 = vmatmul.mubr.bf16.gmra.mxu0 %v11467
    %v11769 = vpop.f32.mrf.mxu0
    %v11770 = vadd.f32 %v11508, %v11769
    %v11771 = vpop.f32.mrf.mxu0
    %v11772 = vadd.f32 %v11512, %v11771
    %v11773 = vpop.f32.mrf.mxu0
    %v11774 = vadd.f32 %v11508, %v11773
    %v11775 = vpop.f32.mrf.mxu0
    %v11776 = vadd.f32 %v11512, %v11775
    %11777 = vmatprep.mubr.bf16.mxu0 %v11470
    %11778 = vmatmul.mubr.bf16.gmra.mxu0 %v11469
    %v11779 = vpop.f32.mrf.mxu0
    %v11780 = vadd.f32 %v11508, %v11779
    %v11781 = vpop.f32.mrf.mxu0
    %v11782 = vadd.f32 %v11512, %v11781
    %v11783 = vpop.f32.mrf.mxu0
    %v11784 = vadd.f32 %v11508, %v11783
    %v11785 = vpop.f32.mrf.mxu0
    %v11786 = vadd.f32 %v11512, %v11785
    %11787 = vdwg.mxu0
    %v11788 = vmax.f32 %v11710, 0.0
    %v11789 = vmax.f32 %v11712, 0.0
    %v11790 = vmax.f32 %v11714, 0.0
    %v11791 = vmax.f32 %v11716, 0.0
    %v11792 = vmax.f32 %v11720, 0.0
    %v11793 = vmax.f32 %v11722, 0.0
    %v11794 = vmax.f32 %v11724, 0.0
    %v11795 = vmax.f32 %v11726, 0.0
    %v11796 = vmax.f32 %v11730, 0.0
    %v11797 = vmax.f32 %v11732, 0.0
    %v11798 = vmax.f32 %v11734, 0.0
    %v11799 = vmax.f32 %v11736, 0.0
    %v11800 = vmax.f32 %v11740, 0.0
    %v11801 = vmax.f32 %v11742, 0.0
    %v11802 = vmax.f32 %v11744, 0.0
    %v11803 = vmax.f32 %v11746, 0.0
    %v11804 = vmax.f32 %v11750, 0.0
    %v11805 = vmax.f32 %v11752, 0.0
    %v11806 = vmax.f32 %v11754, 0.0
    %v11807 = vmax.f32 %v11756, 0.0
    %v11808 = vmax.f32 %v11760, 0.0
    %v11809 = vmax.f32 %v11762, 0.0
    %v11810 = vmax.f32 %v11764, 0.0
    %v11811 = vmax.f32 %v11766, 0.0
    %v11812 = vmax.f32 %v11770, 0.0
    %v11813 = vmax.f32 %v11772, 0.0
    %v11814 = vmax.f32 %v11774, 0.0
    %v11815 = vmax.f32 %v11776, 0.0
    %v11816 = vmax.f32 %v11780, 0.0
    %v11817 = vmax.f32 %v11782, 0.0
    %v11818 = vmax.f32 %v11784, 0.0
    %v11819 = vmax.f32 %v11786, 0.0
    %v11820 = vadd.f32 %v11788, %v11058
    %v11821 = vadd.f32 %v11789, %v11059
    %v11822 = vadd.f32 %v11790, %v11060
    %v11823 = vadd.f32 %v11791, %v11061
    %v11824 = vadd.f32 %v11792, %v11062
    %v11825 = vadd.f32 %v11793, %v11063
    %v11826 = vadd.f32 %v11794, %v11064
    %v11827 = vadd.f32 %v11795, %v11065
    %v11828 = vadd.f32 %v11796, %v11066
    %v11829 = vadd.f32 %v11797, %v11067
    %v11830 = vadd.f32 %v11798, %v11068
    %v11831 = vadd.f32 %v11799, %v11069
    %v11832 = vadd.f32 %v11800, %v11070
    %v11833 = vadd.f32 %v11801, %v11071
    %v11834 = vadd.f32 %v11802, %v11072
    %v11835 = vadd.f32 %v11803, %v11073
    %v11836 = vadd.f32 %v11804, %v11074
    %v11837 = vadd.f32 %v11805, %v11075
    %v11838 = vadd.f32 %v11806, %v11076
    %v11839 = vadd.f32 %v11807, %v11077
    %v11840 = vadd.f32 %v11808, %v11078
    %v11841 = vadd.f32 %v11809, %v11079
    %v11842 = vadd.f32 %v11810, %v11080
    %v11843 = vadd.f32 %v11811, %v11081
    %v11844 = vadd.f32 %v11812, %v11082
    %v11845 = vadd.f32 %v11813, %v11083
    %v11846 = vadd.f32 %v11814, %v11084
    %v11847 = vadd.f32 %v11815, %v11085
    %v11848 = vadd.f32 %v11816, %v11086
    %v11849 = vadd.f32 %v11817, %v11087
    %v11850 = vadd.f32 %v11818, %v11088
    %v11851 = vadd.f32 %v11819, %v11089
    %v11852 = vpack.c.bf16 %v11822, %v11820
    %v11853 = vpack.c.bf16 %v11823, %v11821
    %v11854 = vpack.c.bf16 %v11826, %v11824
    %v11855 = vpack.c.bf16 %v11827, %v11825
    %v11856 = vpack.c.bf16 %v11830, %v11828
    %v11857 = vpack.c.bf16 %v11831, %v11829
    %v11858 = vpack.c.bf16 %v11834, %v11832
    %v11859 = vpack.c.bf16 %v11835, %v11833
    %v11860 = vpack.c.bf16 %v11838, %v11836
    %v11861 = vpack.c.bf16 %v11839, %v11837
    %v11862 = vpack.c.bf16 %v11842, %v11840
    %v11863 = vpack.c.bf16 %v11843, %v11841
    %v11864 = vpack.c.bf16 %v11846, %v11844
    %v11865 = vpack.c.bf16 %v11847, %v11845
    %v11866 = vpack.c.bf16 %v11850, %v11848
    %v11867 = vpack.c.bf16 %v11851, %v11849
    %v11868 = vld [vmem:[#allocation24] sm:$0xff]
    %v11869 = vld [vmem:[#allocation24 + $0x8] sm:$0xff]
    %v11870 = vld [vmem:[#allocation24 + $0x10] sm:$0xff]
    %v11871 = vld [vmem:[#allocation24 + $0x18] sm:$0xff]
    %v11872 = vld [vmem:[#allocation24 + $0x20] sm:$0xff]
    %v11873 = vld [vmem:[#allocation24 + $0x28] sm:$0xff]
    %v11874 = vld [vmem:[#allocation24 + $0x30] sm:$0xff]
    %v11875 = vld [vmem:[#allocation24 + $0x38] sm:$0xff]
    %v11876 = vld [vmem:[#allocation24 + $0x40] sm:$0xff]
    %v11877 = vld [vmem:[#allocation24 + $0x48] sm:$0xff]
    %v11878 = vld [vmem:[#allocation24 + $0x50] sm:$0xff]
    %v11879 = vld [vmem:[#allocation24 + $0x58] sm:$0xff]
    %v11880 = vld [vmem:[#allocation24 + $0x60] sm:$0xff]
    %v11881 = vld [vmem:[#allocation24 + $0x68] sm:$0xff]
    %v11882 = vld [vmem:[#allocation24 + $0x70] sm:$0xff]
    %v11883 = vld [vmem:[#allocation24 + $0x78] sm:$0xff]
    %v11884 = vld [vmem:[#allocation24 + $0x80] sm:$0xff]
    %v11885 = vld [vmem:[#allocation24 + $0x88] sm:$0xff]
    %v11886 = vld [vmem:[#allocation24 + $0x90] sm:$0xff]
    %v11887 = vld [vmem:[#allocation24 + $0x98] sm:$0xff]
    %v11888 = vld [vmem:[#allocation24 + $0xa0] sm:$0xff]
    %v11889 = vld [vmem:[#allocation24 + $0xa8] sm:$0xff]
    %v11890 = vld [vmem:[#allocation24 + $0xb0] sm:$0xff]
    %v11891 = vld [vmem:[#allocation24 + $0xb8] sm:$0xff]
    %v11892 = vld [vmem:[#allocation24 + $0xc0] sm:$0xff]
    %v11893 = vld [vmem:[#allocation24 + $0xc8] sm:$0xff]
    %v11894 = vld [vmem:[#allocation24 + $0xd0] sm:$0xff]
    %v11895 = vld [vmem:[#allocation24 + $0xd8] sm:$0xff]
    %v11896 = vld [vmem:[#allocation24 + $0xe0] sm:$0xff]
    %v11897 = vld [vmem:[#allocation24 + $0xe8] sm:$0xff]
    %v11898 = vld [vmem:[#allocation24 + $0xf0] sm:$0xff]
    %v11899 = vld [vmem:[#allocation24 + $0xf8] sm:$0xff]
    %v11900 = vld [vmem:[#allocation25] sm:$0x3]
    %v11902 = vlaneseq
    %v11903 = vshrl.u32 %v11902, 7
    %v11904 = vsub.s32 0, %v11903
    %v11905 = vrot.slane %v11900, %v11904
    %v11906 = vlaneseq
    %v11907 = vshrl.u32 %v11906, 7
    %v11908 = vsub.s32 1, %v11907
    %v11909 = vrot.slane %v11900, %v11908
    %v11944 = vunpack.c.l.b16 %v11868
    %v11945 = vunpack.c.h.b16 %v11868
    %v11946 = vunpack.c.l.b16 %v11869
    %v11947 = vunpack.c.h.b16 %v11869
    %v11948 = vunpack.c.l.b16 %v11870
    %v11949 = vunpack.c.h.b16 %v11870
    %v11950 = vunpack.c.l.b16 %v11871
    %v11951 = vunpack.c.h.b16 %v11871
    %v11952 = vunpack.c.l.b16 %v11872
    %v11953 = vunpack.c.h.b16 %v11872
    %v11954 = vunpack.c.l.b16 %v11873
    %v11955 = vunpack.c.h.b16 %v11873
    %v11956 = vunpack.c.l.b16 %v11874
    %v11957 = vunpack.c.h.b16 %v11874
    %v11958 = vunpack.c.l.b16 %v11875
    %v11959 = vunpack.c.h.b16 %v11875
    %v11960 = vunpack.c.l.b16 %v11876
    %v11961 = vunpack.c.h.b16 %v11876
    %v11962 = vunpack.c.l.b16 %v11877
    %v11963 = vunpack.c.h.b16 %v11877
    %v11964 = vunpack.c.l.b16 %v11878
    %v11965 = vunpack.c.h.b16 %v11878
    %v11966 = vunpack.c.l.b16 %v11879
    %v11967 = vunpack.c.h.b16 %v11879
    %v11968 = vunpack.c.l.b16 %v11880
    %v11969 = vunpack.c.h.b16 %v11880
    %v11970 = vunpack.c.l.b16 %v11881
    %v11971 = vunpack.c.h.b16 %v11881
    %v11972 = vunpack.c.l.b16 %v11882
    %v11973 = vunpack.c.h.b16 %v11882
    %v11974 = vunpack.c.l.b16 %v11883
    %v11975 = vunpack.c.h.b16 %v11883
    %v11976 = vunpack.c.l.b16 %v11884
    %v11977 = vunpack.c.h.b16 %v11884
    %v11978 = vunpack.c.l.b16 %v11885
    %v11979 = vunpack.c.h.b16 %v11885
    %v11980 = vunpack.c.l.b16 %v11886
    %v11981 = vunpack.c.h.b16 %v11886
    %v11982 = vunpack.c.l.b16 %v11887
    %v11983 = vunpack.c.h.b16 %v11887
    %v11984 = vunpack.c.l.b16 %v11888
    %v11985 = vunpack.c.h.b16 %v11888
    %v11986 = vunpack.c.l.b16 %v11889
    %v11987 = vunpack.c.h.b16 %v11889
    %v11988 = vunpack.c.l.b16 %v11890
    %v11989 = vunpack.c.h.b16 %v11890
    %v11990 = vunpack.c.l.b16 %v11891
    %v11991 = vunpack.c.h.b16 %v11891
    %v11992 = vunpack.c.l.b16 %v11892
    %v11993 = vunpack.c.h.b16 %v11892
    %v11994 = vunpack.c.l.b16 %v11893
    %v11995 = vunpack.c.h.b16 %v11893
    %v11996 = vunpack.c.l.b16 %v11894
    %v11997 = vunpack.c.h.b16 %v11894
    %v11998 = vunpack.c.l.b16 %v11895
    %v11999 = vunpack.c.h.b16 %v11895
    %v12000 = vunpack.c.l.b16 %v11896
    %v12001 = vunpack.c.h.b16 %v11896
    %v12002 = vunpack.c.l.b16 %v11897
    %v12003 = vunpack.c.h.b16 %v11897
    %v12004 = vunpack.c.l.b16 %v11898
    %v12005 = vunpack.c.h.b16 %v11898
    %v12006 = vunpack.c.l.b16 %v11899
    %v12007 = vunpack.c.h.b16 %v11899
    %v12008 = vpack.c.b16 %v11946, %v11944
    %v12009 = vpack.c.b16 %v11947, %v11945
    %v12010 = vpack.c.b16 %v11950, %v11948
    %v12011 = vpack.c.b16 %v11951, %v11949
    %v12012 = vpack.c.b16 %v11954, %v11952
    %v12013 = vpack.c.b16 %v11955, %v11953
    %v12014 = vpack.c.b16 %v11958, %v11956
    %v12015 = vpack.c.b16 %v11959, %v11957
    %v12016 = vpack.c.b16 %v11962, %v11960
    %v12017 = vpack.c.b16 %v11963, %v11961
    %v12018 = vpack.c.b16 %v11966, %v11964
    %v12019 = vpack.c.b16 %v11967, %v11965
    %v12020 = vpack.c.b16 %v11970, %v11968
    %v12021 = vpack.c.b16 %v11971, %v11969
    %v12022 = vpack.c.b16 %v11974, %v11972
    %v12023 = vpack.c.b16 %v11975, %v11973
    %v12024 = vpack.c.b16 %v11978, %v11976
    %v12025 = vpack.c.b16 %v11979, %v11977
    %v12026 = vpack.c.b16 %v11982, %v11980
    %v12027 = vpack.c.b16 %v11983, %v11981
    %v12028 = vpack.c.b16 %v11986, %v11984
    %v12029 = vpack.c.b16 %v11987, %v11985
    %v12030 = vpack.c.b16 %v11990, %v11988
    %v12031 = vpack.c.b16 %v11991, %v11989
    %v12032 = vpack.c.b16 %v11994, %v11992
    %v12033 = vpack.c.b16 %v11995, %v11993
    %v12034 = vpack.c.b16 %v11998, %v11996
    %v12035 = vpack.c.b16 %v11999, %v11997
    %v12036 = vpack.c.b16 %v12002, %v12000
    %v12037 = vpack.c.b16 %v12003, %v12001
    %v12038 = vpack.c.b16 %v12006, %v12004
    %v12039 = vpack.c.b16 %v12007, %v12005
    %12072 = vmatprep.subr.bf16.mxu0 %v12023
    %12073 = vmatpush1.bf16.msra.mxu0 %v12022
    %12074 = vmatprep.subr.bf16.mxu0 %v12021
    %12075 = vmatpush1.bf16.msra.mxu0 %v12020
    %12076 = vmatprep.subr.bf16.mxu0 %v12019
    %12077 = vmatpush1.bf16.msra.mxu0 %v12018
    %12078 = vmatprep.subr.bf16.mxu0 %v12017
    %12079 = vmatpush1.bf16.msra.mxu0 %v12016
    %12080 = vmatprep.subr.bf16.mxu0 %v12015
    %12081 = vmatpush1.bf16.msra.mxu0 %v12014
    %12082 = vmatprep.subr.bf16.mxu0 %v12013
    %12083 = vmatpush1.bf16.msra.mxu0 %v12012
    %12084 = vmatprep.subr.bf16.mxu0 %v12011
    %12085 = vmatpush1.bf16.msra.mxu0 %v12010
    %12086 = vmatprep.subr.bf16.mxu0 %v12009
    %12087 = vmatpush1.bf16.msra.mxu0 %v12008
    %12088 = vmatprep.subr.bf16.mxu0 %v12039
    %12089 = vmatpush2.bf16.msra.mxu0 %v12038
    %12090 = vmatprep.subr.bf16.mxu0 %v12037
    %12091 = vmatpush2.bf16.msra.mxu0 %v12036
    %12092 = vmatprep.subr.bf16.mxu0 %v12035
    %12093 = vmatpush2.bf16.msra.mxu0 %v12034
    %12094 = vmatprep.subr.bf16.mxu0 %v12033
    %12095 = vmatpush2.bf16.msra.mxu0 %v12032
    %12096 = vmatprep.subr.bf16.mxu0 %v12031
    %12097 = vmatpush2.bf16.msra.mxu0 %v12030
    %12098 = vmatprep.subr.bf16.mxu0 %v12029
    %12099 = vmatpush2.bf16.msra.mxu0 %v12028
    %12100 = vmatprep.subr.bf16.mxu0 %v12027
    %12101 = vmatpush2.bf16.msra.mxu0 %v12026
    %12102 = vmatprep.subr.bf16.mxu0 %v12025
    %12103 = vmatpush2.bf16.msra.mxu0 %v12024
    %12104 = vmatprep.mubr.bf16.mxu0 %v11853
    %12105 = vmatmul.mubr.bf16.gmra.mxu0 %v11852
    %v12106 = vpop.f32.mrf.mxu0
    %v12107 = vadd.f32 %v11905, %v12106
    %v12108 = vpop.f32.mrf.mxu0
    %v12109 = vadd.f32 %v11909, %v12108
    %v12110 = vpop.f32.mrf.mxu0
    %v12111 = vadd.f32 %v11905, %v12110
    %v12112 = vpop.f32.mrf.mxu0
    %v12113 = vadd.f32 %v11909, %v12112
    %12114 = vmatprep.mubr.bf16.mxu0 %v11855
    %12115 = vmatmul.mubr.bf16.gmra.mxu0 %v11854
    %v12116 = vpop.f32.mrf.mxu0
    %v12117 = vadd.f32 %v11905, %v12116
    %v12118 = vpop.f32.mrf.mxu0
    %v12119 = vadd.f32 %v11909, %v12118
    %v12120 = vpop.f32.mrf.mxu0
    %v12121 = vadd.f32 %v11905, %v12120
    %v12122 = vpop.f32.mrf.mxu0
    %v12123 = vadd.f32 %v11909, %v12122
    %12124 = vmatprep.mubr.bf16.mxu0 %v11857
    %12125 = vmatmul.mubr.bf16.gmra.mxu0 %v11856
    %v12126 = vpop.f32.mrf.mxu0
    %v12127 = vadd.f32 %v11905, %v12126
    %v12128 = vpop.f32.mrf.mxu0
    %v12129 = vadd.f32 %v11909, %v12128
    %v12130 = vpop.f32.mrf.mxu0
    %v12131 = vadd.f32 %v11905, %v12130
    %v12132 = vpop.f32.mrf.mxu0
    %v12133 = vadd.f32 %v11909, %v12132
    %12134 = vmatprep.mubr.bf16.mxu0 %v11859
    %12135 = vmatmul.mubr.bf16.gmra.mxu0 %v11858
    %v12136 = vpop.f32.mrf.mxu0
    %v12137 = vadd.f32 %v11905, %v12136
    %v12138 = vpop.f32.mrf.mxu0
    %v12139 = vadd.f32 %v11909, %v12138
    %v12140 = vpop.f32.mrf.mxu0
    %v12141 = vadd.f32 %v11905, %v12140
    %v12142 = vpop.f32.mrf.mxu0
    %v12143 = vadd.f32 %v11909, %v12142
    %12144 = vmatprep.mubr.bf16.mxu0 %v11861
    %12145 = vmatmul.mubr.bf16.gmra.mxu0 %v11860
    %v12146 = vpop.f32.mrf.mxu0
    %v12147 = vadd.f32 %v11905, %v12146
    %v12148 = vpop.f32.mrf.mxu0
    %v12149 = vadd.f32 %v11909, %v12148
    %v12150 = vpop.f32.mrf.mxu0
    %v12151 = vadd.f32 %v11905, %v12150
    %v12152 = vpop.f32.mrf.mxu0
    %v12153 = vadd.f32 %v11909, %v12152
    %12154 = vmatprep.mubr.bf16.mxu0 %v11863
    %12155 = vmatmul.mubr.bf16.gmra.mxu0 %v11862
    %v12156 = vpop.f32.mrf.mxu0
    %v12157 = vadd.f32 %v11905, %v12156
    %v12158 = vpop.f32.mrf.mxu0
    %v12159 = vadd.f32 %v11909, %v12158
    %v12160 = vpop.f32.mrf.mxu0
    %v12161 = vadd.f32 %v11905, %v12160
    %v12162 = vpop.f32.mrf.mxu0
    %v12163 = vadd.f32 %v11909, %v12162
    %12164 = vmatprep.mubr.bf16.mxu0 %v11865
    %12165 = vmatmul.mubr.bf16.gmra.mxu0 %v11864
    %v12166 = vpop.f32.mrf.mxu0
    %v12167 = vadd.f32 %v11905, %v12166
    %v12168 = vpop.f32.mrf.mxu0
    %v12169 = vadd.f32 %v11909, %v12168
    %v12170 = vpop.f32.mrf.mxu0
    %v12171 = vadd.f32 %v11905, %v12170
    %v12172 = vpop.f32.mrf.mxu0
    %v12173 = vadd.f32 %v11909, %v12172
    %12174 = vmatprep.mubr.bf16.mxu0 %v11867
    %12175 = vmatmul.mubr.bf16.gmra.mxu0 %v11866
    %v12176 = vpop.f32.mrf.mxu0
    %v12177 = vadd.f32 %v11905, %v12176
    %v12178 = vpop.f32.mrf.mxu0
    %v12179 = vadd.f32 %v11909, %v12178
    %v12180 = vpop.f32.mrf.mxu0
    %v12181 = vadd.f32 %v11905, %v12180
    %v12182 = vpop.f32.mrf.mxu0
    %v12183 = vadd.f32 %v11909, %v12182
    %12184 = vdwg.mxu0
    %v12185 = vmax.f32 %v12107, 0.0
    %v12186 = vmax.f32 %v12109, 0.0
    %v12187 = vmax.f32 %v12111, 0.0
    %v12188 = vmax.f32 %v12113, 0.0
    %v12189 = vmax.f32 %v12117, 0.0
    %v12190 = vmax.f32 %v12119, 0.0
    %v12191 = vmax.f32 %v12121, 0.0
    %v12192 = vmax.f32 %v12123, 0.0
    %v12193 = vmax.f32 %v12127, 0.0
    %v12194 = vmax.f32 %v12129, 0.0
    %v12195 = vmax.f32 %v12131, 0.0
    %v12196 = vmax.f32 %v12133, 0.0
    %v12197 = vmax.f32 %v12137, 0.0
    %v12198 = vmax.f32 %v12139, 0.0
    %v12199 = vmax.f32 %v12141, 0.0
    %v12200 = vmax.f32 %v12143, 0.0
    %v12201 = vmax.f32 %v12147, 0.0
    %v12202 = vmax.f32 %v12149, 0.0
    %v12203 = vmax.f32 %v12151, 0.0
    %v12204 = vmax.f32 %v12153, 0.0
    %v12205 = vmax.f32 %v12157, 0.0
    %v12206 = vmax.f32 %v12159, 0.0
    %v12207 = vmax.f32 %v12161, 0.0
    %v12208 = vmax.f32 %v12163, 0.0
    %v12209 = vmax.f32 %v12167, 0.0
    %v12210 = vmax.f32 %v12169, 0.0
    %v12211 = vmax.f32 %v12171, 0.0
    %v12212 = vmax.f32 %v12173, 0.0
    %v12213 = vmax.f32 %v12177, 0.0
    %v12214 = vmax.f32 %v12179, 0.0
    %v12215 = vmax.f32 %v12181, 0.0
    %v12216 = vmax.f32 %v12183, 0.0
    %v12217 = vpack.c.bf16 %v12187, %v12185
    %v12218 = vpack.c.bf16 %v12188, %v12186
    %v12219 = vpack.c.bf16 %v12191, %v12189
    %v12220 = vpack.c.bf16 %v12192, %v12190
    %v12221 = vpack.c.bf16 %v12195, %v12193
    %v12222 = vpack.c.bf16 %v12196, %v12194
    %v12223 = vpack.c.bf16 %v12199, %v12197
    %v12224 = vpack.c.bf16 %v12200, %v12198
    %v12225 = vpack.c.bf16 %v12203, %v12201
    %v12226 = vpack.c.bf16 %v12204, %v12202
    %v12227 = vpack.c.bf16 %v12207, %v12205
    %v12228 = vpack.c.bf16 %v12208, %v12206
    %v12229 = vpack.c.bf16 %v12211, %v12209
    %v12230 = vpack.c.bf16 %v12212, %v12210
    %v12231 = vpack.c.bf16 %v12215, %v12213
    %v12232 = vpack.c.bf16 %v12216, %v12214
    %v12233 = vld [vmem:[#allocation27] sm:$0xff]
    %v12234 = vld [vmem:[#allocation27 + $0x8] sm:$0xff]
    %v12235 = vld [vmem:[#allocation27 + $0x10] sm:$0xff]
    %v12236 = vld [vmem:[#allocation27 + $0x18] sm:$0xff]
    %v12237 = vld [vmem:[#allocation27 + $0x20] sm:$0xff]
    %v12238 = vld [vmem:[#allocation27 + $0x28] sm:$0xff]
    %v12239 = vld [vmem:[#allocation27 + $0x30] sm:$0xff]
    %v12240 = vld [vmem:[#allocation27 + $0x38] sm:$0xff]
    %v12241 = vld [vmem:[#allocation27 + $0x40] sm:$0xff]
    %v12242 = vld [vmem:[#allocation27 + $0x48] sm:$0xff]
    %v12243 = vld [vmem:[#allocation27 + $0x50] sm:$0xff]
    %v12244 = vld [vmem:[#allocation27 + $0x58] sm:$0xff]
    %v12245 = vld [vmem:[#allocation27 + $0x60] sm:$0xff]
    %v12246 = vld [vmem:[#allocation27 + $0x68] sm:$0xff]
    %v12247 = vld [vmem:[#allocation27 + $0x70] sm:$0xff]
    %v12248 = vld [vmem:[#allocation27 + $0x78] sm:$0xff]
    %v12249 = vld [vmem:[#allocation27 + $0x80] sm:$0xff]
    %v12250 = vld [vmem:[#allocation27 + $0x88] sm:$0xff]
    %v12251 = vld [vmem:[#allocation27 + $0x90] sm:$0xff]
    %v12252 = vld [vmem:[#allocation27 + $0x98] sm:$0xff]
    %v12253 = vld [vmem:[#allocation27 + $0xa0] sm:$0xff]
    %v12254 = vld [vmem:[#allocation27 + $0xa8] sm:$0xff]
    %v12255 = vld [vmem:[#allocation27 + $0xb0] sm:$0xff]
    %v12256 = vld [vmem:[#allocation27 + $0xb8] sm:$0xff]
    %v12257 = vld [vmem:[#allocation27 + $0xc0] sm:$0xff]
    %v12258 = vld [vmem:[#allocation27 + $0xc8] sm:$0xff]
    %v12259 = vld [vmem:[#allocation27 + $0xd0] sm:$0xff]
    %v12260 = vld [vmem:[#allocation27 + $0xd8] sm:$0xff]
    %v12261 = vld [vmem:[#allocation27 + $0xe0] sm:$0xff]
    %v12262 = vld [vmem:[#allocation27 + $0xe8] sm:$0xff]
    %v12263 = vld [vmem:[#allocation27 + $0xf0] sm:$0xff]
    %v12264 = vld [vmem:[#allocation27 + $0xf8] sm:$0xff]
    %v12265 = vld [vmem:[#allocation28] sm:$0x3]
    %v12267 = vlaneseq
    %v12268 = vshrl.u32 %v12267, 7
    %v12269 = vsub.s32 0, %v12268
    %v12270 = vrot.slane %v12265, %v12269
    %v12271 = vlaneseq
    %v12272 = vshrl.u32 %v12271, 7
    %v12273 = vsub.s32 1, %v12272
    %v12274 = vrot.slane %v12265, %v12273
    %v12309 = vunpack.c.l.b16 %v12233
    %v12310 = vunpack.c.h.b16 %v12233
    %v12311 = vunpack.c.l.b16 %v12234
    %v12312 = vunpack.c.h.b16 %v12234
    %v12313 = vunpack.c.l.b16 %v12235
    %v12314 = vunpack.c.h.b16 %v12235
    %v12315 = vunpack.c.l.b16 %v12236
    %v12316 = vunpack.c.h.b16 %v12236
    %v12317 = vunpack.c.l.b16 %v12237
    %v12318 = vunpack.c.h.b16 %v12237
    %v12319 = vunpack.c.l.b16 %v12238
    %v12320 = vunpack.c.h.b16 %v12238
    %v12321 = vunpack.c.l.b16 %v12239
    %v12322 = vunpack.c.h.b16 %v12239
    %v12323 = vunpack.c.l.b16 %v12240
    %v12324 = vunpack.c.h.b16 %v12240
    %v12325 = vunpack.c.l.b16 %v12241
    %v12326 = vunpack.c.h.b16 %v12241
    %v12327 = vunpack.c.l.b16 %v12242
    %v12328 = vunpack.c.h.b16 %v12242
    %v12329 = vunpack.c.l.b16 %v12243
    %v12330 = vunpack.c.h.b16 %v12243
    %v12331 = vunpack.c.l.b16 %v12244
    %v12332 = vunpack.c.h.b16 %v12244
    %v12333 = vunpack.c.l.b16 %v12245
    %v12334 = vunpack.c.h.b16 %v12245
    %v12335 = vunpack.c.l.b16 %v12246
    %v12336 = vunpack.c.h.b16 %v12246
    %v12337 = vunpack.c.l.b16 %v12247
    %v12338 = vunpack.c.h.b16 %v12247
    %v12339 = vunpack.c.l.b16 %v12248
    %v12340 = vunpack.c.h.b16 %v12248
    %v12341 = vunpack.c.l.b16 %v12249
    %v12342 = vunpack.c.h.b16 %v12249
    %v12343 = vunpack.c.l.b16 %v12250
    %v12344 = vunpack.c.h.b16 %v12250
    %v12345 = vunpack.c.l.b16 %v12251
    %v12346 = vunpack.c.h.b16 %v12251
    %v12347 = vunpack.c.l.b16 %v12252
    %v12348 = vunpack.c.h.b16 %v12252
    %v12349 = vunpack.c.l.b16 %v12253
    %v12350 = vunpack.c.h.b16 %v12253
    %v12351 = vunpack.c.l.b16 %v12254
    %v12352 = vunpack.c.h.b16 %v12254
    %v12353 = vunpack.c.l.b16 %v12255
    %v12354 = vunpack.c.h.b16 %v12255
    %v12355 = vunpack.c.l.b16 %v12256
    %v12356 = vunpack.c.h.b16 %v12256
    %v12357 = vunpack.c.l.b16 %v12257
    %v12358 = vunpack.c.h.b16 %v12257
    %v12359 = vunpack.c.l.b16 %v12258
    %v12360 = vunpack.c.h.b16 %v12258
    %v12361 = vunpack.c.l.b16 %v12259
    %v12362 = vunpack.c.h.b16 %v12259
    %v12363 = vunpack.c.l.b16 %v12260
    %v12364 = vunpack.c.h.b16 %v12260
    %v12365 = vunpack.c.l.b16 %v12261
    %v12366 = vunpack.c.h.b16 %v12261
    %v12367 = vunpack.c.l.b16 %v12262
    %v12368 = vunpack.c.h.b16 %v12262
    %v12369 = vunpack.c.l.b16 %v12263
    %v12370 = vunpack.c.h.b16 %v12263
    %v12371 = vunpack.c.l.b16 %v12264
    %v12372 = vunpack.c.h.b16 %v12264
    %v12373 = vpack.c.b16 %v12311, %v12309
    %v12374 = vpack.c.b16 %v12312, %v12310
    %v12375 = vpack.c.b16 %v12315, %v12313
    %v12376 = vpack.c.b16 %v12316, %v12314
    %v12377 = vpack.c.b16 %v12319, %v12317
    %v12378 = vpack.c.b16 %v12320, %v12318
    %v12379 = vpack.c.b16 %v12323, %v12321
    %v12380 = vpack.c.b16 %v12324, %v12322
    %v12381 = vpack.c.b16 %v12327, %v12325
    %v12382 = vpack.c.b16 %v12328, %v12326
    %v12383 = vpack.c.b16 %v12331, %v12329
    %v12384 = vpack.c.b16 %v12332, %v12330
    %v12385 = vpack.c.b16 %v12335, %v12333
    %v12386 = vpack.c.b16 %v12336, %v12334
    %v12387 = vpack.c.b16 %v12339, %v12337
    %v12388 = vpack.c.b16 %v12340, %v12338
    %v12389 = vpack.c.b16 %v12343, %v12341
    %v12390 = vpack.c.b16 %v12344, %v12342
    %v12391 = vpack.c.b16 %v12347, %v12345
    %v12392 = vpack.c.b16 %v12348, %v12346
    %v12393 = vpack.c.b16 %v12351, %v12349
    %v12394 = vpack.c.b16 %v12352, %v12350
    %v12395 = vpack.c.b16 %v12355, %v12353
    %v12396 = vpack.c.b16 %v12356, %v12354
    %v12397 = vpack.c.b16 %v12359, %v12357
    %v12398 = vpack.c.b16 %v12360, %v12358
    %v12399 = vpack.c.b16 %v12363, %v12361
    %v12400 = vpack.c.b16 %v12364, %v12362
    %v12401 = vpack.c.b16 %v12367, %v12365
    %v12402 = vpack.c.b16 %v12368, %v12366
    %v12403 = vpack.c.b16 %v12371, %v12369
    %v12404 = vpack.c.b16 %v12372, %v12370
    %12437 = vmatprep.subr.bf16.mxu0 %v12388
    %12438 = vmatpush1.bf16.msra.mxu0 %v12387
    %12439 = vmatprep.subr.bf16.mxu0 %v12386
    %12440 = vmatpush1.bf16.msra.mxu0 %v12385
    %12441 = vmatprep.subr.bf16.mxu0 %v12384
    %12442 = vmatpush1.bf16.msra.mxu0 %v12383
    %12443 = vmatprep.subr.bf16.mxu0 %v12382
    %12444 = vmatpush1.bf16.msra.mxu0 %v12381
    %12445 = vmatprep.subr.bf16.mxu0 %v12380
    %12446 = vmatpush1.bf16.msra.mxu0 %v12379
    %12447 = vmatprep.subr.bf16.mxu0 %v12378
    %12448 = vmatpush1.bf16.msra.mxu0 %v12377
    %12449 = vmatprep.subr.bf16.mxu0 %v12376
    %12450 = vmatpush1.bf16.msra.mxu0 %v12375
    %12451 = vmatprep.subr.bf16.mxu0 %v12374
    %12452 = vmatpush1.bf16.msra.mxu0 %v12373
    %12453 = vmatprep.subr.bf16.mxu0 %v12404
    %12454 = vmatpush2.bf16.msra.mxu0 %v12403
    %12455 = vmatprep.subr.bf16.mxu0 %v12402
    %12456 = vmatpush2.bf16.msra.mxu0 %v12401
    %12457 = vmatprep.subr.bf16.mxu0 %v12400
    %12458 = vmatpush2.bf16.msra.mxu0 %v12399
    %12459 = vmatprep.subr.bf16.mxu0 %v12398
    %12460 = vmatpush2.bf16.msra.mxu0 %v12397
    %12461 = vmatprep.subr.bf16.mxu0 %v12396
    %12462 = vmatpush2.bf16.msra.mxu0 %v12395
    %12463 = vmatprep.subr.bf16.mxu0 %v12394
    %12464 = vmatpush2.bf16.msra.mxu0 %v12393
    %12465 = vmatprep.subr.bf16.mxu0 %v12392
    %12466 = vmatpush2.bf16.msra.mxu0 %v12391
    %12467 = vmatprep.subr.bf16.mxu0 %v12390
    %12468 = vmatpush2.bf16.msra.mxu0 %v12389
    %12469 = vmatprep.mubr.bf16.mxu0 %v12218
    %12470 = vmatmul.mubr.bf16.gmra.mxu0 %v12217
    %v12471 = vpop.f32.mrf.mxu0
    %v12472 = vadd.f32 %v12270, %v12471
    %v12473 = vpop.f32.mrf.mxu0
    %v12474 = vadd.f32 %v12274, %v12473
    %v12475 = vpop.f32.mrf.mxu0
    %v12476 = vadd.f32 %v12270, %v12475
    %v12477 = vpop.f32.mrf.mxu0
    %v12478 = vadd.f32 %v12274, %v12477
    %12479 = vmatprep.mubr.bf16.mxu0 %v12220
    %12480 = vmatmul.mubr.bf16.gmra.mxu0 %v12219
    %v12481 = vpop.f32.mrf.mxu0
    %v12482 = vadd.f32 %v12270, %v12481
    %v12483 = vpop.f32.mrf.mxu0
    %v12484 = vadd.f32 %v12274, %v12483
    %v12485 = vpop.f32.mrf.mxu0
    %v12486 = vadd.f32 %v12270, %v12485
    %v12487 = vpop.f32.mrf.mxu0
    %v12488 = vadd.f32 %v12274, %v12487
    %12489 = vmatprep.mubr.bf16.mxu0 %v12222
    %12490 = vmatmul.mubr.bf16.gmra.mxu0 %v12221
    %v12491 = vpop.f32.mrf.mxu0
    %v12492 = vadd.f32 %v12270, %v12491
    %v12493 = vpop.f32.mrf.mxu0
    %v12494 = vadd.f32 %v12274, %v12493
    %v12495 = vpop.f32.mrf.mxu0
    %v12496 = vadd.f32 %v12270, %v12495
    %v12497 = vpop.f32.mrf.mxu0
    %v12498 = vadd.f32 %v12274, %v12497
    %12499 = vmatprep.mubr.bf16.mxu0 %v12224
    %12500 = vmatmul.mubr.bf16.gmra.mxu0 %v12223
    %v12501 = vpop.f32.mrf.mxu0
    %v12502 = vadd.f32 %v12270, %v12501
    %v12503 = vpop.f32.mrf.mxu0
    %v12504 = vadd.f32 %v12274, %v12503
    %v12505 = vpop.f32.mrf.mxu0
    %v12506 = vadd.f32 %v12270, %v12505
    %v12507 = vpop.f32.mrf.mxu0
    %v12508 = vadd.f32 %v12274, %v12507
    %12509 = vmatprep.mubr.bf16.mxu0 %v12226
    %12510 = vmatmul.mubr.bf16.gmra.mxu0 %v12225
    %v12511 = vpop.f32.mrf.mxu0
    %v12512 = vadd.f32 %v12270, %v12511
    %v12513 = vpop.f32.mrf.mxu0
    %v12514 = vadd.f32 %v12274, %v12513
    %v12515 = vpop.f32.mrf.mxu0
    %v12516 = vadd.f32 %v12270, %v12515
    %v12517 = vpop.f32.mrf.mxu0
    %v12518 = vadd.f32 %v12274, %v12517
    %12519 = vmatprep.mubr.bf16.mxu0 %v12228
    %12520 = vmatmul.mubr.bf16.gmra.mxu0 %v12227
    %v12521 = vpop.f32.mrf.mxu0
    %v12522 = vadd.f32 %v12270, %v12521
    %v12523 = vpop.f32.mrf.mxu0
    %v12524 = vadd.f32 %v12274, %v12523
    %v12525 = vpop.f32.mrf.mxu0
    %v12526 = vadd.f32 %v12270, %v12525
    %v12527 = vpop.f32.mrf.mxu0
    %v12528 = vadd.f32 %v12274, %v12527
    %12529 = vmatprep.mubr.bf16.mxu0 %v12230
    %12530 = vmatmul.mubr.bf16.gmra.mxu0 %v12229
    %v12531 = vpop.f32.mrf.mxu0
    %v12532 = vadd.f32 %v12270, %v12531
    %v12533 = vpop.f32.mrf.mxu0
    %v12534 = vadd.f32 %v12274, %v12533
    %v12535 = vpop.f32.mrf.mxu0
    %v12536 = vadd.f32 %v12270, %v12535
    %v12537 = vpop.f32.mrf.mxu0
    %v12538 = vadd.f32 %v12274, %v12537
    %12539 = vmatprep.mubr.bf16.mxu0 %v12232
    %12540 = vmatmul.mubr.bf16.gmra.mxu0 %v12231
    %v12541 = vpop.f32.mrf.mxu0
    %v12542 = vadd.f32 %v12270, %v12541
    %v12543 = vpop.f32.mrf.mxu0
    %v12544 = vadd.f32 %v12274, %v12543
    %v12545 = vpop.f32.mrf.mxu0
    %v12546 = vadd.f32 %v12270, %v12545
    %v12547 = vpop.f32.mrf.mxu0
    %v12548 = vadd.f32 %v12274, %v12547
    %12549 = vdwg.mxu0
    %v12550 = vmax.f32 %v12472, 0.0
    %v12551 = vmax.f32 %v12474, 0.0
    %v12552 = vmax.f32 %v12476, 0.0
    %v12553 = vmax.f32 %v12478, 0.0
    %v12554 = vmax.f32 %v12482, 0.0
    %v12555 = vmax.f32 %v12484, 0.0
    %v12556 = vmax.f32 %v12486, 0.0
    %v12557 = vmax.f32 %v12488, 0.0
    %v12558 = vmax.f32 %v12492, 0.0
    %v12559 = vmax.f32 %v12494, 0.0
    %v12560 = vmax.f32 %v12496, 0.0
    %v12561 = vmax.f32 %v12498, 0.0
    %v12562 = vmax.f32 %v12502, 0.0
    %v12563 = vmax.f32 %v12504, 0.0
    %v12564 = vmax.f32 %v12506, 0.0
    %v12565 = vmax.f32 %v12508, 0.0
    %v12566 = vmax.f32 %v12512, 0.0
    %v12567 = vmax.f32 %v12514, 0.0
    %v12568 = vmax.f32 %v12516, 0.0
    %v12569 = vmax.f32 %v12518, 0.0
    %v12570 = vmax.f32 %v12522, 0.0
    %v12571 = vmax.f32 %v12524, 0.0
    %v12572 = vmax.f32 %v12526, 0.0
    %v12573 = vmax.f32 %v12528, 0.0
    %v12574 = vmax.f32 %v12532, 0.0
    %v12575 = vmax.f32 %v12534, 0.0
    %v12576 = vmax.f32 %v12536, 0.0
    %v12577 = vmax.f32 %v12538, 0.0
    %v12578 = vmax.f32 %v12542, 0.0
    %v12579 = vmax.f32 %v12544, 0.0
    %v12580 = vmax.f32 %v12546, 0.0
    %v12581 = vmax.f32 %v12548, 0.0
    %v12582 = vadd.f32 %v12550, %v11820
    %v12583 = vadd.f32 %v12551, %v11821
    %v12584 = vadd.f32 %v12552, %v11822
    %v12585 = vadd.f32 %v12553, %v11823
    %v12586 = vadd.f32 %v12554, %v11824
    %v12587 = vadd.f32 %v12555, %v11825
    %v12588 = vadd.f32 %v12556, %v11826
    %v12589 = vadd.f32 %v12557, %v11827
    %v12590 = vadd.f32 %v12558, %v11828
    %v12591 = vadd.f32 %v12559, %v11829
    %v12592 = vadd.f32 %v12560, %v11830
    %v12593 = vadd.f32 %v12561, %v11831
    %v12594 = vadd.f32 %v12562, %v11832
    %v12595 = vadd.f32 %v12563, %v11833
    %v12596 = vadd.f32 %v12564, %v11834
    %v12597 = vadd.f32 %v12565, %v11835
    %v12598 = vadd.f32 %v12566, %v11836
    %v12599 = vadd.f32 %v12567, %v11837
    %v12600 = vadd.f32 %v12568, %v11838
    %v12601 = vadd.f32 %v12569, %v11839
    %v12602 = vadd.f32 %v12570, %v11840
    %v12603 = vadd.f32 %v12571, %v11841
    %v12604 = vadd.f32 %v12572, %v11842
    %v12605 = vadd.f32 %v12573, %v11843
    %v12606 = vadd.f32 %v12574, %v11844
    %v12607 = vadd.f32 %v12575, %v11845
    %v12608 = vadd.f32 %v12576, %v11846
    %v12609 = vadd.f32 %v12577, %v11847
    %v12610 = vadd.f32 %v12578, %v11848
    %v12611 = vadd.f32 %v12579, %v11849
    %v12612 = vadd.f32 %v12580, %v11850
    %v12613 = vadd.f32 %v12581, %v11851
    %v12614 = vpack.c.bf16 %v12584, %v12582
    %v12615 = vpack.c.bf16 %v12585, %v12583
    %v12616 = vpack.c.bf16 %v12588, %v12586
    %v12617 = vpack.c.bf16 %v12589, %v12587
    %v12618 = vpack.c.bf16 %v12592, %v12590
    %v12619 = vpack.c.bf16 %v12593, %v12591
    %v12620 = vpack.c.bf16 %v12596, %v12594
    %v12621 = vpack.c.bf16 %v12597, %v12595
    %v12622 = vpack.c.bf16 %v12600, %v12598
    %v12623 = vpack.c.bf16 %v12601, %v12599
    %v12624 = vpack.c.bf16 %v12604, %v12602
    %v12625 = vpack.c.bf16 %v12605, %v12603
    %v12626 = vpack.c.bf16 %v12608, %v12606
    %v12627 = vpack.c.bf16 %v12609, %v12607
    %v12628 = vpack.c.bf16 %v12612, %v12610
    %v12629 = vpack.c.bf16 %v12613, %v12611
    %v12630 = vld [vmem:[#allocation30] sm:$0xf]
    %v12631 = vld [vmem:[#allocation30 + $0x4] sm:$0xf]
    %v12632 = vld [vmem:[#allocation30 + $0x8] sm:$0xf]
    %v12633 = vld [vmem:[#allocation30 + $0xc] sm:$0xf]
    %v12634 = vld [vmem:[#allocation30 + $0x10] sm:$0xf]
    %v12635 = vld [vmem:[#allocation30 + $0x14] sm:$0xf]
    %v12636 = vld [vmem:[#allocation30 + $0x18] sm:$0xf]
    %v12637 = vld [vmem:[#allocation30 + $0x1c] sm:$0xf]
    %v12638 = vld [vmem:[#allocation30 + $0x20] sm:$0xf]
    %v12639 = vld [vmem:[#allocation30 + $0x24] sm:$0xf]
    %v12640 = vld [vmem:[#allocation30 + $0x28] sm:$0xf]
    %v12641 = vld [vmem:[#allocation30 + $0x2c] sm:$0xf]
    %v12642 = vld [vmem:[#allocation30 + $0x30] sm:$0xf]
    %v12643 = vld [vmem:[#allocation30 + $0x34] sm:$0xf]
    %v12644 = vld [vmem:[#allocation30 + $0x38] sm:$0xf]
    %v12645 = vld [vmem:[#allocation30 + $0x3c] sm:$0xf]
    %v12646 = vld [vmem:[#allocation30 + $0x40] sm:$0xf]
    %v12647 = vld [vmem:[#allocation30 + $0x44] sm:$0xf]
    %v12648 = vld [vmem:[#allocation30 + $0x48] sm:$0xf]
    %v12649 = vld [vmem:[#allocation30 + $0x4c] sm:$0xf]
    %v12650 = vld [vmem:[#allocation30 + $0x50] sm:$0xf]
    %v12651 = vld [vmem:[#allocation30 + $0x54] sm:$0xf]
    %v12652 = vld [vmem:[#allocation30 + $0x58] sm:$0xf]
    %v12653 = vld [vmem:[#allocation30 + $0x5c] sm:$0xf]
    %v12654 = vld [vmem:[#allocation30 + $0x60] sm:$0xf]
    %v12655 = vld [vmem:[#allocation30 + $0x64] sm:$0xf]
    %v12656 = vld [vmem:[#allocation30 + $0x68] sm:$0xf]
    %v12657 = vld [vmem:[#allocation30 + $0x6c] sm:$0xf]
    %v12658 = vld [vmem:[#allocation30 + $0x70] sm:$0xf]
    %v12659 = vld [vmem:[#allocation30 + $0x74] sm:$0xf]
    %v12660 = vld [vmem:[#allocation30 + $0x78] sm:$0xf]
    %v12661 = vld [vmem:[#allocation30 + $0x7c] sm:$0xf]
    %v12662 = vld [vmem:[#allocation31] sm:$0x1]
    %v12664 = vlaneseq
    %v12665 = vshrl.u32 %v12664, 7
    %v12666 = vsub.s32 0, %v12665
    %v12667 = vrot.slane %v12662, %v12666
    %v12701 = vunpack.c.l.b16 %v12630
    %v12702 = vunpack.c.l.b16 %v12631
    %v12703 = vunpack.c.l.b16 %v12632
    %v12704 = vunpack.c.l.b16 %v12633
    %v12705 = vunpack.c.l.b16 %v12634
    %v12706 = vunpack.c.l.b16 %v12635
    %v12707 = vunpack.c.l.b16 %v12636
    %v12708 = vunpack.c.l.b16 %v12637
    %v12709 = vunpack.c.l.b16 %v12638
    %v12710 = vunpack.c.l.b16 %v12639
    %v12711 = vunpack.c.l.b16 %v12640
    %v12712 = vunpack.c.l.b16 %v12641
    %v12713 = vunpack.c.l.b16 %v12642
    %v12714 = vunpack.c.l.b16 %v12643
    %v12715 = vunpack.c.l.b16 %v12644
    %v12716 = vunpack.c.l.b16 %v12645
    %v12717 = vunpack.c.l.b16 %v12646
    %v12718 = vunpack.c.l.b16 %v12647
    %v12719 = vunpack.c.l.b16 %v12648
    %v12720 = vunpack.c.l.b16 %v12649
    %v12721 = vunpack.c.l.b16 %v12650
    %v12722 = vunpack.c.l.b16 %v12651
    %v12723 = vunpack.c.l.b16 %v12652
    %v12724 = vunpack.c.l.b16 %v12653
    %v12725 = vunpack.c.l.b16 %v12654
    %v12726 = vunpack.c.l.b16 %v12655
    %v12727 = vunpack.c.l.b16 %v12656
    %v12728 = vunpack.c.l.b16 %v12657
    %v12729 = vunpack.c.l.b16 %v12658
    %v12730 = vunpack.c.l.b16 %v12659
    %v12731 = vunpack.c.l.b16 %v12660
    %v12732 = vunpack.c.l.b16 %v12661
    %v12733 = vpack.c.b16 %v12702, %v12701
    %v12734 = vpack.c.b16 %v12704, %v12703
    %v12735 = vpack.c.b16 %v12706, %v12705
    %v12736 = vpack.c.b16 %v12708, %v12707
    %v12737 = vpack.c.b16 %v12710, %v12709
    %v12738 = vpack.c.b16 %v12712, %v12711
    %v12739 = vpack.c.b16 %v12714, %v12713
    %v12740 = vpack.c.b16 %v12716, %v12715
    %v12741 = vpack.c.b16 %v12718, %v12717
    %v12742 = vpack.c.b16 %v12720, %v12719
    %v12743 = vpack.c.b16 %v12722, %v12721
    %v12744 = vpack.c.b16 %v12724, %v12723
    %v12745 = vpack.c.b16 %v12726, %v12725
    %v12746 = vpack.c.b16 %v12728, %v12727
    %v12747 = vpack.c.b16 %v12730, %v12729
    %v12748 = vpack.c.b16 %v12732, %v12731
    %12765 = vmatprep.subr.bf16.mxu0 0
    %12766 = vmatpush1.bf16.msra.mxu0 %v12740
    %12767 = vmatprep.subr.bf16.mxu0 0
    %12768 = vmatpush1.bf16.msra.mxu0 %v12739
    %12769 = vmatprep.subr.bf16.mxu0 0
    %12770 = vmatpush1.bf16.msra.mxu0 %v12738
    %12771 = vmatprep.subr.bf16.mxu0 0
    %12772 = vmatpush1.bf16.msra.mxu0 %v12737
    %12773 = vmatprep.subr.bf16.mxu0 0
    %12774 = vmatpush1.bf16.msra.mxu0 %v12736
    %12775 = vmatprep.subr.bf16.mxu0 0
    %12776 = vmatpush1.bf16.msra.mxu0 %v12735
    %12777 = vmatprep.subr.bf16.mxu0 0
    %12778 = vmatpush1.bf16.msra.mxu0 %v12734
    %12779 = vmatprep.subr.bf16.mxu0 0
    %12780 = vmatpush1.bf16.msra.mxu0 %v12733
    %12781 = vmatprep.subr.bf16.mxu0 0
    %12782 = vmatpush2.bf16.msra.mxu0 %v12748
    %12783 = vmatprep.subr.bf16.mxu0 0
    %12784 = vmatpush2.bf16.msra.mxu0 %v12747
    %12785 = vmatprep.subr.bf16.mxu0 0
    %12786 = vmatpush2.bf16.msra.mxu0 %v12746
    %12787 = vmatprep.subr.bf16.mxu0 0
    %12788 = vmatpush2.bf16.msra.mxu0 %v12745
    %12789 = vmatprep.subr.bf16.mxu0 0
    %12790 = vmatpush2.bf16.msra.mxu0 %v12744
    %12791 = vmatprep.subr.bf16.mxu0 0
    %12792 = vmatpush2.bf16.msra.mxu0 %v12743
    %12793 = vmatprep.subr.bf16.mxu0 0
    %12794 = vmatpush2.bf16.msra.mxu0 %v12742
    %12795 = vmatprep.subr.bf16.mxu0 0
    %12796 = vmatpush2.bf16.msra.mxu0 %v12741
    %12797 = vmatprep.mubr.bf16.mxu0 %v12615
    %12798 = vmatmul.mubr.bf16.gmra.mxu0 %v12614
    %v12799 = vpop.f32.mrf.mxu0
    %v12800 = vadd.f32 %v12667, %v12799
    %v12801 = vpop.f32.mrf.mxu0
    %v12802 = vpop.f32.mrf.mxu0
    %v12803 = vadd.f32 %v12667, %v12802
    %v12804 = vpop.f32.mrf.mxu0
    %12805 = vmatprep.mubr.bf16.mxu0 %v12617
    %12806 = vmatmul.mubr.bf16.gmra.mxu0 %v12616
    %v12807 = vpop.f32.mrf.mxu0
    %v12808 = vadd.f32 %v12667, %v12807
    %v12809 = vpop.f32.mrf.mxu0
    %v12810 = vpop.f32.mrf.mxu0
    %v12811 = vadd.f32 %v12667, %v12810
    %v12812 = vpop.f32.mrf.mxu0
    %12813 = vmatprep.mubr.bf16.mxu0 %v12619
    %12814 = vmatmul.mubr.bf16.gmra.mxu0 %v12618
    %v12815 = vpop.f32.mrf.mxu0
    %v12816 = vadd.f32 %v12667, %v12815
    %v12817 = vpop.f32.mrf.mxu0
    %v12818 = vpop.f32.mrf.mxu0
    %v12819 = vadd.f32 %v12667, %v12818
    %v12820 = vpop.f32.mrf.mxu0
    %12821 = vmatprep.mubr.bf16.mxu0 %v12621
    %12822 = vmatmul.mubr.bf16.gmra.mxu0 %v12620
    %v12823 = vpop.f32.mrf.mxu0
    %v12824 = vadd.f32 %v12667, %v12823
    %v12825 = vpop.f32.mrf.mxu0
    %v12826 = vpop.f32.mrf.mxu0
    %v12827 = vadd.f32 %v12667, %v12826
    %v12828 = vpop.f32.mrf.mxu0
    %12829 = vmatprep.mubr.bf16.mxu0 %v12623
    %12830 = vmatmul.mubr.bf16.gmra.mxu0 %v12622
    %v12831 = vpop.f32.mrf.mxu0
    %v12832 = vadd.f32 %v12667, %v12831
    %v12833 = vpop.f32.mrf.mxu0
    %v12834 = vpop.f32.mrf.mxu0
    %v12835 = vadd.f32 %v12667, %v12834
    %v12836 = vpop.f32.mrf.mxu0
    %12837 = vmatprep.mubr.bf16.mxu0 %v12625
    %12838 = vmatmul.mubr.bf16.gmra.mxu0 %v12624
    %v12839 = vpop.f32.mrf.mxu0
    %v12840 = vadd.f32 %v12667, %v12839
    %v12841 = vpop.f32.mrf.mxu0
    %v12842 = vpop.f32.mrf.mxu0
    %v12843 = vadd.f32 %v12667, %v12842
    %v12844 = vpop.f32.mrf.mxu0
    %12845 = vmatprep.mubr.bf16.mxu0 %v12627
    %12846 = vmatmul.mubr.bf16.gmra.mxu0 %v12626
    %v12847 = vpop.f32.mrf.mxu0
    %v12848 = vadd.f32 %v12667, %v12847
    %v12849 = vpop.f32.mrf.mxu0
    %v12850 = vpop.f32.mrf.mxu0
    %v12851 = vadd.f32 %v12667, %v12850
    %v12852 = vpop.f32.mrf.mxu0
    %12853 = vmatprep.mubr.bf16.mxu0 %v12629
    %12854 = vmatmul.mubr.bf16.gmra.mxu0 %v12628
    %v12855 = vpop.f32.mrf.mxu0
    %v12856 = vadd.f32 %v12667, %v12855
    %v12857 = vpop.f32.mrf.mxu0
    %v12858 = vpop.f32.mrf.mxu0
    %v12859 = vadd.f32 %v12667, %v12858
    %v12860 = vpop.f32.mrf.mxu0
    %12861 = vdwg.mxu0
    %12862 = vst [vmem:[%s21] sm:$0xff] %v12800
    %12863 = vst [vmem:[%s21 + $0x8] sm:$0xff] %v12803
    %12864 = vst [vmem:[%s21 + $0x10] sm:$0xff] %v12808
    %12865 = vst [vmem:[%s21 + $0x18] sm:$0xff] %v12811
    %12866 = vst [vmem:[%s21 + $0x20] sm:$0xff] %v12816
    %12867 = vst [vmem:[%s21 + $0x28] sm:$0xff] %v12819
    %12868 = vst [vmem:[%s21 + $0x30] sm:$0xff] %v12824
    %12869 = vst [vmem:[%s21 + $0x38] sm:$0xff] %v12827
    %12870 = vst [vmem:[%s21 + $0x40] sm:$0xff] %v12832
    %12871 = vst [vmem:[%s21 + $0x48] sm:$0xff] %v12835
    %12872 = vst [vmem:[%s21 + $0x50] sm:$0xff] %v12840
    %12873 = vst [vmem:[%s21 + $0x58] sm:$0xff] %v12843
    %12874 = vst [vmem:[%s21 + $0x60] sm:$0xff] %v12848
    %12875 = vst [vmem:[%s21 + $0x68] sm:$0xff] %v12851
    %12876 = vst [vmem:[%s21 + $0x70] sm:$0xff] %v12856
    %12877 = vst [vmem:[%s21 + $0x78] sm:$0xff] %v12859
    // Predicated region
    $region166: #{pv_net_forward.1} parent=1 // pred_check
      _
    $region167: #{pv_net_forward.1} parent=1 // pred_check_branch
      %12879 = sbr.rel (0) target = $region169
    $region168: #{pv_net_forward.1} parent=1 // pred_region
      _
    $region169: #{pv_net_forward.1} parent=1 // pred_fallthru
      _
    // Predicated region
    $region170: #{pv_net_forward.1} parent=1 // pred_check
      _
    $region171: #{pv_net_forward.1} parent=1 // pred_check_branch
      %12881 = sbr.rel (0) target = $region173
    $region172: #{pv_net_forward.1} parent=1 // pred_region
      _
    $region173: #{pv_net_forward.1} parent=1 // pred_fallthru
      _
    %12882 = vsyncpa [#allocation3], 1
    %12883 = vsyncpa [#allocation5], 1
    %12884 = vsyncpa [#allocation8], 1
    %12885 = vsyncpa [#allocation11], 1
    %12886 = vsyncpa [#allocation14], 1
    %12887 = vsyncpa [#allocation17], 1
    %12888 = vsyncpa [#allocation20], 1
    %12889 = vsyncpa [#allocation23], 1
    %12890 = vsyncpa [#allocation26], 1
    %12891 = vsyncpa [#allocation29], 1
    %12892 = vsyncpa [#allocation32], 1

</llo_original>
